<compile_context>
chip_gen: v6e
topology: v6e:2x2x1
jax: 0.10.0
libtpu: 0.0.40
codegen_flags: <defaults>
</compile_context>

<pallas_src>
import math

import jax
import jax.numpy as jnp
from jax.experimental import pallas as pl
from jax.experimental.pallas import tpu as pltpu


_PAD_OFF = 8  # sublane-aligned offset of the real pool1 data inside the padded scratch


# ----------------------------------------------------------------------------
# Fused kernel: one batch block per grid step
# ----------------------------------------------------------------------------
def _fused_cnn_kernel(xpad_ref, w1_ref, b1_ref, w2_ref, b2_ref, out_ref,
                      s1_ref, p1pad_ref, s2_ref):
    # xpad_ref : (Bblk, H+2, W+2, 1)   zero-padded input tile (NHWC, Cin=1)
    # w1_ref   : (9, 32)               conv1 taps, row k = dy*3 + dx
    # b1_ref   : (1, 32)
    # w2_ref   : (9, 32, 64)           conv2 taps, [k, cin, cout]
    # b2_ref   : (1, 64)
    # out_ref  : (Bblk, H//4, W//4, 64) pooled conv2 output (NHWC)
    # s1_ref   : scratch (Bblk, H//2, W, 32)                conv1 after H-pool
    # p1pad_ref: scratch (Bblk, H//2+2, W//2+_PAD_OFF+2, 32) zero-padded pool1
    # s2_ref   : scratch (Bblk, H//4, W//2, 64)             conv2 after H-pool
    Bblk, Hp, Wp, _ = xpad_ref.shape
    H, W = Hp - 2, Wp - 2
    H2, W2 = H // 2, W // 2
    H4, W4 = H2 // 2, W2 // 2
    C1 = w1_ref.shape[1]
    C2 = w2_ref.shape[2]

    # ---- conv1 (1->32, 3x3, SAME): 9 shifted VPU multiply-adds -------------
    acc1 = jnp.zeros((Bblk, H, W, C1), jnp.float32)
    for k in range(9):
        dy, dx = divmod(k, 3)
        patch = xpad_ref[:, dy:dy + H, dx:dx + W, :]           # (Bblk, H, W, 1)
        acc1 = acc1 + patch * w1_ref[k:k + 1, :]               # lane-broadcast of taps
    y1 = jnp.maximum(acc1 + b1_ref[...], 0.0)                  # (Bblk, H, W, C1)

    # ---- maxpool 2x2 #1: H via leading-dim reshape, W via stride-2 reads ----
    y1 = y1.reshape(Bblk, H2, 2, W, C1)
    s1_ref[...] = jnp.maximum(y1[:, :, 0], y1[:, :, 1])        # (Bblk, H2, W, C1)
    p1 = jnp.maximum(s1_ref[:, :, pl.ds(0, W2, 2), :],
                     s1_ref[:, :, pl.ds(1, W2, 2), :])         # (Bblk, H2, W2, C1)

    # ---- build zero-padded pool1 in VMEM (3x3 halo for conv2) --------------
    p1pad_ref[...] = jnp.zeros(p1pad_ref.shape, jnp.float32)
    p1pad_ref[:, 1:1 + H2, _PAD_OFF:_PAD_OFF + W2, :] = p1     # sublane-aligned store

    # ---- conv2 (32->64, 3x3, SAME): 9 accumulating MXU matmuls --------------
    R2 = Bblk * H2 * W2
    acc2 = jnp.zeros((R2, C2), jnp.float32)
    for k in range(9):
        dy, dx = divmod(k, 3)
        patch = p1pad_ref[:, dy:dy + H2,
                          _PAD_OFF - 1 + dx:_PAD_OFF - 1 + dx + W2, :]
        acc2 = acc2 + jnp.dot(patch.reshape(R2, C1), w2_ref[k],
                              preferred_element_type=jnp.float32)
    y2 = jnp.maximum(acc2 + b2_ref[...], 0.0)                  # (R2, C2)

    # ---- maxpool 2x2 #2 ------------------------------------------------------
    y2 = y2.reshape(Bblk, H4, 2, W2, C2)
    s2_ref[...] = jnp.maximum(y2[:, :, 0], y2[:, :, 1])        # (Bblk, H4, W2, C2)
    out_ref[...] = jnp.maximum(s2_ref[:, :, pl.ds(0, W4, 2), :],
                               s2_ref[:, :, pl.ds(1, W4, 2), :])


# ----------------------------------------------------------------------------
# Wrapper: batch-block selection, weight relayout, pallas_call plumbing
# ----------------------------------------------------------------------------
def _pick_block_b(B, H, W, vmem_budget_bytes):
    """Largest divisor of B whose per-grid-step VMEM footprint fits the budget."""
    rup = lambda n, m: ((n + m - 1) // m) * m
    Hp, Wp = H + 2, W + 2
    H2, W2, H4, W4 = H // 2, W // 2, H // 4, W // 4
    per_sample = 4 * (
        2 * Hp * rup(Wp, 8) * 128                        # x block (double-buffered)
        + 2 * H4 * rup(W4, 8) * 128                      # out block (double-buffered)
        + H2 * rup(W, 8) * 128                           # s1 scratch
        + (H2 + 2) * rup(W2 + _PAD_OFF + 2, 8) * 128     # p1pad scratch
        + H4 * rup(W2, 8) * 128                          # s2 scratch
        + H * rup(W, 8) * 128                            # conv1 accumulator spill
        + H2 * rup(W2, 8) * 128                          # conv2 accumulator spill
    )
    bb = max(1, min(B, vmem_budget_bytes // max(per_sample, 1)))
    while B % bb:
        bb -= 1
    return bb


def emotion_cnn_forward(x_nchw, params, *, block_b=None,
                        vmem_budget_bytes=8 * 1024 * 1024):
    B, Cin, H, W = x_nchw.shape
    assert Cin == 1, "EmotionCNN expects a single input channel"
    assert H % 4 == 0 and W % 4 == 0, "H and W must be multiples of 4 (two 2x2 pools)"
    H2, W2, H4, W4 = H // 2, W // 2, H // 4, W // 4
    C1, C2 = 32, 64

    if block_b is None:
        block_b = _pick_block_b(B, H, W, vmem_budget_bytes)
    assert B % block_b == 0

    # NCHW -> NHWC, explicit zero padding for conv1's SAME 3x3 window.
    x_nhwc = jnp.transpose(x_nchw, (0, 2, 3, 1))
    xpad = jnp.pad(x_nhwc, ((0, 0), (1, 1), (1, 1), (0, 0)))   # (B, H+2, W+2, 1)

    # PyTorch (Cout, Cin, 3, 3) -> tap-major layouts, k = dy*3 + dx.
    w1m = jnp.transpose(params["w1"], (2, 3, 1, 0)).reshape(9, C1)       # (9, 32)
    b1m = params["b1"].reshape(1, C1)
    w2m = jnp.transpose(params["w2"], (2, 3, 1, 0)).reshape(9, C1, C2)   # (9, 32, 64)
    b2m = params["b2"].reshape(1, C2)

    grid = (B // block_b,)
    out_nhwc = pl.pallas_call(
        _fused_cnn_kernel,
        out_shape=jax.ShapeDtypeStruct((B, H4, W4, C2), jnp.float32),
        grid_spec=pltpu.PrefetchScalarGridSpec(
            num_scalar_prefetch=0,
            grid=grid,
            in_specs=[
                pl.BlockSpec((block_b, H + 2, W + 2, 1), lambda b: (b, 0, 0, 0)),
                pl.BlockSpec((9, C1), lambda b: (0, 0)),
                pl.BlockSpec((1, C1), lambda b: (0, 0)),
                pl.BlockSpec((9, C1, C2), lambda b: (0, 0, 0)),
                pl.BlockSpec((1, C2), lambda b: (0, 0)),
            ],
            out_specs=pl.BlockSpec((block_b, H4, W4, C2), lambda b: (b, 0, 0, 0)),
            scratch_shapes=[
                pltpu.VMEM((block_b, H2, W, C1), jnp.float32),
                pltpu.VMEM((block_b, H2 + 2, W2 + _PAD_OFF + 2, C1), jnp.float32),
                pltpu.VMEM((block_b, H4, W2, C2), jnp.float32),
            ],
        ),
        compiler_params=pltpu.CompilerParams(
            dimension_semantics=("parallel",),
            vmem_limit_bytes=48 * 1024 * 1024,
        ),
    )(xpad, w1m, b1m, w2m, b2m)

    # TODO(synk): nn.Dropout(0.25) implemented as eval-mode identity (no PRNG mask).

    # Flatten in NCHW order to match torch's x.view(x.size(0), -1).
    return jnp.transpose(out_nhwc, (0, 3, 1, 2)).reshape(B, -1)


# ----------------------------------------------------------------------------
# Pure-JAX reference for correctness checking
# ----------------------------------------------------------------------------
def ref_forward(x_nchw, params):
    dn = ("NCHW", "OIHW", "NCHW")
    y = jax.lax.conv_general_dilated(x_nchw, params["w1"], (1, 1),
                                     ((1, 1), (1, 1)), dimension_numbers=dn)
    y = jax.nn.relu(y + params["b1"][None, :, None, None])
    y = jax.lax.reduce_window(y, -jnp.inf, jax.lax.max,
                              (1, 1, 2, 2), (1, 1, 2, 2), "VALID")
    y = jax.lax.conv_general_dilated(y, params["w2"], (1, 1),
                                     ((1, 1), (1, 1)), dimension_numbers=dn)
    y = jax.nn.relu(y + params["b2"][None, :, None, None])
    y = jax.lax.reduce_window(y, -jnp.inf, jax.lax.max,
                              (1, 1, 2, 2), (1, 1, 2, 2), "VALID")
    return y.reshape(y.shape[0], -1)


if __name__ == "__main__":
    key = jax.random.PRNGKey(0)
    k1, k2, k3, k4, k5 = jax.random.split(key, 5)

    # Deterministic synthetic parameters (PyTorch-like fan-in scaling).
    params = {
        "w1": jax.random.normal(k1, (32, 1, 3, 3), jnp.float32) / math.sqrt(9 * 1),
        "b1": jax.random.normal(k2, (32,), jnp.float32) * 0.1,
        "w2": jax.random.normal(k3, (64, 32, 3, 3), jnp.float32) / math.sqrt(9 * 32),
        "b2": jax.random.normal(k4, (64,), jnp.float32) * 0.1,
    }

    # Small NCHW input (single channel as the module requires). block_b=2 so the
    # batch grid actually iterates (grid = (2,)) and exercises the pipeline.
    B, H, W = 4, 16, 16
    x = jax.random.normal(k5, (B, 1, H, W), jnp.float32)

    out = emotion_cnn_forward(x, params, block_b=2)
    out = jax.block_until_ready(out)

    ref = ref_forward(x, params)
    assert out.shape == (B, 64 * (H // 4) * (W // 4)), out.shape
    max_err = float(jnp.max(jnp.abs(out - ref)))
    assert jnp.allclose(out, ref, atol=2e-4, rtol=2e-4), max_err

    print("KERNEL_OK")
</pallas_src>

<mosaic_0001>
module attributes {stable_mosaic.version = 11 : i64} {
  func.func @_fused_cnn_kernel(%arg0: i32, %arg1: memref<2x18x18x1xf32, #tpu.memory_space<vmem>>, %arg2: memref<9x32xf32, #tpu.memory_space<vmem>>, %arg3: memref<1x32xf32, #tpu.memory_space<vmem>>, %arg4: memref<9x32x64xf32, #tpu.memory_space<vmem>>, %arg5: memref<1x64xf32, #tpu.memory_space<vmem>>, %arg6: memref<2x4x4x64xf32, #tpu.memory_space<vmem>>, %arg7: memref<2x8x16x32xf32, #tpu.memory_space<vmem>>, %arg8: memref<2x10x18x32xf32, #tpu.memory_space<vmem>>, %arg9: memref<2x4x8x64xf32, #tpu.memory_space<vmem>>) attributes {dimension_semantics = [#tpu.dimension_semantics<parallel>], iteration_bounds = array<i64: 2>, scalar_prefetch = 0 : i64, scratch_operands = 3 : i64, tpu.core_type = #tpu.core_type<tc>, window_params = [{transform_indices = @transform_0, window_bounds = array<i64: 2, 18, 18, 1>}, {pipeline_mode = #tpu.pipeline_mode<synchronous>, transform_indices = @transform_1, window_bounds = array<i64: 9, 32>}, {pipeline_mode = #tpu.pipeline_mode<synchronous>, transform_indices = @transform_2, window_bounds = array<i64: 1, 32>}, {pipeline_mode = #tpu.pipeline_mode<synchronous>, transform_indices = @transform_3, window_bounds = array<i64: 9, 32, 64>}, {pipeline_mode = #tpu.pipeline_mode<synchronous>, transform_indices = @transform_4, window_bounds = array<i64: 1, 64>}, {transform_indices = @transform_5, window_bounds = array<i64: 2, 4, 4, 64>}]} {
    %cst = arith.constant 0.000000e+00 : f32
    %0 = vector.broadcast %cst : f32 to vector<2x16x16x32xf32>
    %c0 = arith.constant 0 : index
    %c0_0 = arith.constant 0 : index
    %c0_1 = arith.constant 0 : index
    %c0_2 = arith.constant 0 : index
    %1 = vector.load %arg1[%c0, %c0_0, %c0_1, %c0_2] : memref<2x18x18x1xf32, #tpu.memory_space<vmem>>, vector<2x16x16x1xf32>
    %c0_3 = arith.constant 0 : index
    %c0_4 = arith.constant 0 : index
    %2 = vector.load %arg2[%c0_3, %c0_4] : memref<9x32xf32, #tpu.memory_space<vmem>>, vector<1x32xf32>
    %3 = vector.shape_cast %2 : vector<1x32xf32> to vector<1x1x1x32xf32>
    %4 = vector.broadcast %1 : vector<2x16x16x1xf32> to vector<2x16x16x32xf32>
    %5 = vector.broadcast %3 : vector<1x1x1x32xf32> to vector<2x16x16x32xf32>
    %6 = arith.mulf %4, %5 : vector<2x16x16x32xf32>
    %7 = arith.addf %0, %6 : vector<2x16x16x32xf32>
    %c0_5 = arith.constant 0 : index
    %c0_6 = arith.constant 0 : index
    %c1 = arith.constant 1 : index
    %c0_7 = arith.constant 0 : index
    %8 = vector.load %arg1[%c0_5, %c0_6, %c1, %c0_7] : memref<2x18x18x1xf32, #tpu.memory_space<vmem>>, vector<2x16x16x1xf32>
    %c1_8 = arith.constant 1 : index
    %c0_9 = arith.constant 0 : index
    %9 = vector.load %arg2[%c1_8, %c0_9] : memref<9x32xf32, #tpu.memory_space<vmem>>, vector<1x32xf32>
    %10 = vector.shape_cast %9 : vector<1x32xf32> to vector<1x1x1x32xf32>
    %11 = vector.broadcast %8 : vector<2x16x16x1xf32> to vector<2x16x16x32xf32>
    %12 = vector.broadcast %10 : vector<1x1x1x32xf32> to vector<2x16x16x32xf32>
    %13 = arith.mulf %11, %12 : vector<2x16x16x32xf32>
    %14 = arith.addf %7, %13 : vector<2x16x16x32xf32>
    %c0_10 = arith.constant 0 : index
    %c0_11 = arith.constant 0 : index
    %c2 = arith.constant 2 : index
    %c0_12 = arith.constant 0 : index
    %15 = vector.load %arg1[%c0_10, %c0_11, %c2, %c0_12] : memref<2x18x18x1xf32, #tpu.memory_space<vmem>>, vector<2x16x16x1xf32>
    %c2_13 = arith.constant 2 : index
    %c0_14 = arith.constant 0 : index
    %16 = vector.load %arg2[%c2_13, %c0_14] : memref<9x32xf32, #tpu.memory_space<vmem>>, vector<1x32xf32>
    %17 = vector.shape_cast %16 : vector<1x32xf32> to vector<1x1x1x32xf32>
    %18 = vector.broadcast %15 : vector<2x16x16x1xf32> to vector<2x16x16x32xf32>
    %19 = vector.broadcast %17 : vector<1x1x1x32xf32> to vector<2x16x16x32xf32>
    %20 = arith.mulf %18, %19 : vector<2x16x16x32xf32>
    %21 = arith.addf %14, %20 : vector<2x16x16x32xf32>
    %c0_15 = arith.constant 0 : index
    %c1_16 = arith.constant 1 : index
    %c0_17 = arith.constant 0 : index
    %c0_18 = arith.constant 0 : index
    %22 = vector.load %arg1[%c0_15, %c1_16, %c0_17, %c0_18] : memref<2x18x18x1xf32, #tpu.memory_space<vmem>>, vector<2x16x16x1xf32>
    %c3 = arith.constant 3 : index
    %c0_19 = arith.constant 0 : index
    %23 = vector.load %arg2[%c3, %c0_19] : memref<9x32xf32, #tpu.memory_space<vmem>>, vector<1x32xf32>
    %24 = vector.shape_cast %23 : vector<1x32xf32> to vector<1x1x1x32xf32>
    %25 = vector.broadcast %22 : vector<2x16x16x1xf32> to vector<2x16x16x32xf32>
    %26 = vector.broadcast %24 : vector<1x1x1x32xf32> to vector<2x16x16x32xf32>
    %27 = arith.mulf %25, %26 : vector<2x16x16x32xf32>
    %28 = arith.addf %21, %27 : vector<2x16x16x32xf32>
    %c0_20 = arith.constant 0 : index
    %c1_21 = arith.constant 1 : index
    %c1_22 = arith.constant 1 : index
    %c0_23 = arith.constant 0 : index
    %29 = vector.load %arg1[%c0_20, %c1_21, %c1_22, %c0_23] : memref<2x18x18x1xf32, #tpu.memory_space<vmem>>, vector<2x16x16x1xf32>
    %c4 = arith.constant 4 : index
    %c0_24 = arith.constant 0 : index
    %30 = vector.load %arg2[%c4, %c0_24] : memref<9x32xf32, #tpu.memory_space<vmem>>, vector<1x32xf32>
    %31 = vector.shape_cast %30 : vector<1x32xf32> to vector<1x1x1x32xf32>
    %32 = vector.broadcast %29 : vector<2x16x16x1xf32> to vector<2x16x16x32xf32>
    %33 = vector.broadcast %31 : vector<1x1x1x32xf32> to vector<2x16x16x32xf32>
    %34 = arith.mulf %32, %33 : vector<2x16x16x32xf32>
    %35 = arith.addf %28, %34 : vector<2x16x16x32xf32>
    %c0_25 = arith.constant 0 : index
    %c1_26 = arith.constant 1 : index
    %c2_27 = arith.constant 2 : index
    %c0_28 = arith.constant 0 : index
    %36 = vector.load %arg1[%c0_25, %c1_26, %c2_27, %c0_28] : memref<2x18x18x1xf32, #tpu.memory_space<vmem>>, vector<2x16x16x1xf32>
    %c5 = arith.constant 5 : index
    %c0_29 = arith.constant 0 : index
    %37 = vector.load %arg2[%c5, %c0_29] : memref<9x32xf32, #tpu.memory_space<vmem>>, vector<1x32xf32>
    %38 = vector.shape_cast %37 : vector<1x32xf32> to vector<1x1x1x32xf32>
    %39 = vector.broadcast %36 : vector<2x16x16x1xf32> to vector<2x16x16x32xf32>
    %40 = vector.broadcast %38 : vector<1x1x1x32xf32> to vector<2x16x16x32xf32>
    %41 = arith.mulf %39, %40 : vector<2x16x16x32xf32>
    %42 = arith.addf %35, %41 : vector<2x16x16x32xf32>
    %c0_30 = arith.constant 0 : index
    %c2_31 = arith.constant 2 : index
    %c0_32 = arith.constant 0 : index
    %c0_33 = arith.constant 0 : index
    %43 = vector.load %arg1[%c0_30, %c2_31, %c0_32, %c0_33] : memref<2x18x18x1xf32, #tpu.memory_space<vmem>>, vector<2x16x16x1xf32>
    %c6 = arith.constant 6 : index
    %c0_34 = arith.constant 0 : index
    %44 = vector.load %arg2[%c6, %c0_34] : memref<9x32xf32, #tpu.memory_space<vmem>>, vector<1x32xf32>
    %45 = vector.shape_cast %44 : vector<1x32xf32> to vector<1x1x1x32xf32>
    %46 = vector.broadcast %43 : vector<2x16x16x1xf32> to vector<2x16x16x32xf32>
    %47 = vector.broadcast %45 : vector<1x1x1x32xf32> to vector<2x16x16x32xf32>
    %48 = arith.mulf %46, %47 : vector<2x16x16x32xf32>
    %49 = arith.addf %42, %48 : vector<2x16x16x32xf32>
    %c0_35 = arith.constant 0 : index
    %c2_36 = arith.constant 2 : index
    %c1_37 = arith.constant 1 : index
    %c0_38 = arith.constant 0 : index
    %50 = vector.load %arg1[%c0_35, %c2_36, %c1_37, %c0_38] : memref<2x18x18x1xf32, #tpu.memory_space<vmem>>, vector<2x16x16x1xf32>
    %c7 = arith.constant 7 : index
    %c0_39 = arith.constant 0 : index
    %51 = vector.load %arg2[%c7, %c0_39] : memref<9x32xf32, #tpu.memory_space<vmem>>, vector<1x32xf32>
    %52 = vector.shape_cast %51 : vector<1x32xf32> to vector<1x1x1x32xf32>
    %53 = vector.broadcast %50 : vector<2x16x16x1xf32> to vector<2x16x16x32xf32>
    %54 = vector.broadcast %52 : vector<1x1x1x32xf32> to vector<2x16x16x32xf32>
    %55 = arith.mulf %53, %54 : vector<2x16x16x32xf32>
    %56 = arith.addf %49, %55 : vector<2x16x16x32xf32>
    %c0_40 = arith.constant 0 : index
    %c2_41 = arith.constant 2 : index
    %c2_42 = arith.constant 2 : index
    %c0_43 = arith.constant 0 : index
    %57 = vector.load %arg1[%c0_40, %c2_41, %c2_42, %c0_43] : memref<2x18x18x1xf32, #tpu.memory_space<vmem>>, vector<2x16x16x1xf32>
    %c8 = arith.constant 8 : index
    %c0_44 = arith.constant 0 : index
    %58 = vector.load %arg2[%c8, %c0_44] : memref<9x32xf32, #tpu.memory_space<vmem>>, vector<1x32xf32>
    %59 = vector.shape_cast %58 : vector<1x32xf32> to vector<1x1x1x32xf32>
    %60 = vector.broadcast %57 : vector<2x16x16x1xf32> to vector<2x16x16x32xf32>
    %61 = vector.broadcast %59 : vector<1x1x1x32xf32> to vector<2x16x16x32xf32>
    %62 = arith.mulf %60, %61 : vector<2x16x16x32xf32>
    %63 = arith.addf %56, %62 : vector<2x16x16x32xf32>
    %c0_45 = arith.constant 0 : index
    %c0_46 = arith.constant 0 : index
    %64 = vector.load %arg3[%c0_45, %c0_46] : memref<1x32xf32, #tpu.memory_space<vmem>>, vector<1x32xf32>
    %65 = vector.shape_cast %64 : vector<1x32xf32> to vector<1x1x1x32xf32>
    %66 = vector.broadcast %65 : vector<1x1x1x32xf32> to vector<2x16x16x32xf32>
    %67 = arith.addf %63, %66 : vector<2x16x16x32xf32>
    %cst_47 = arith.constant 0.000000e+00 : f32
    %68 = vector.broadcast %cst_47 : f32 to vector<2x16x16x32xf32>
    %69 = arith.maximumf %67, %68 : vector<2x16x16x32xf32>
    %70 = vector.shape_cast %69 : vector<2x16x16x32xf32> to vector<2x8x2x16x32xf32>
    %71 = vector.extract_strided_slice %70 {offsets = [0, 0, 0, 0, 0], sizes = [2, 8, 1, 16, 32], strides = [1, 1, 1, 1, 1]} : vector<2x8x2x16x32xf32> to vector<2x8x1x16x32xf32>
    %72 = vector.shape_cast %71 : vector<2x8x1x16x32xf32> to vector<2x8x16x32xf32>
    %73 = vector.extract_strided_slice %70 {offsets = [0, 0, 1, 0, 0], sizes = [2, 8, 1, 16, 32], strides = [1, 1, 1, 1, 1]} : vector<2x8x2x16x32xf32> to vector<2x8x1x16x32xf32>
    %74 = vector.shape_cast %73 : vector<2x8x1x16x32xf32> to vector<2x8x16x32xf32>
    %75 = arith.maximumf %72, %74 : vector<2x8x16x32xf32>
    %c0_48 = arith.constant 0 : index
    %c0_49 = arith.constant 0 : index
    %c0_50 = arith.constant 0 : index
    %c0_51 = arith.constant 0 : index
    %76 = vector.load %arg7[%c0_48, %c0_49, %c0_50, %c0_51] : memref<2x8x16x32xf32, #tpu.memory_space<vmem>>, vector<2x8x16x32xf32>
    tpu.vector_store %arg7[%c0_48, %c0_49, %c0_50, %c0_51], %75 {strides = array<i32>} : memref<2x8x16x32xf32, #tpu.memory_space<vmem>>, vector<2x8x16x32xf32>,
    %c0_52 = arith.constant 0 : index
    %c0_53 = arith.constant 0 : index
    %c0_54 = arith.constant 0 : index
    %c0_55 = arith.constant 0 : index
    %77 = tpu.strided_load %arg7[%c0_52, %c0_53, %c0_54, %c0_55] {strides = array<i32: 1, 1, 2, 1>} : memref<2x8x16x32xf32, #tpu.memory_space<vmem>>, vector<2x8x8x32xf32>
    %c0_56 = arith.constant 0 : index
    %c0_57 = arith.constant 0 : index
    %c1_58 = arith.constant 1 : index
    %c0_59 = arith.constant 0 : index
    %78 = tpu.strided_load %arg7[%c0_56, %c0_57, %c1_58, %c0_59] {strides = array<i32: 1, 1, 2, 1>} : memref<2x8x16x32xf32, #tpu.memory_space<vmem>>, vector<2x8x8x32xf32>
    %79 = arith.maximumf %77, %78 : vector<2x8x8x32xf32>
    %cst_60 = arith.constant 0.000000e+00 : f32
    %80 = vector.broadcast %cst_60 : f32 to vector<2x10x18x32xf32>
    %c0_61 = arith.constant 0 : index
    %c0_62 = arith.constant 0 : index
    %c0_63 = arith.constant 0 : index
    %c0_64 = arith.constant 0 : index
    %81 = vector.load %arg8[%c0_61, %c0_62, %c0_63, %c0_64] : memref<2x10x18x32xf32, #tpu.memory_space<vmem>>, vector<2x10x18x32xf32>
    tpu.vector_store %arg8[%c0_61, %c0_62, %c0_63, %c0_64], %80 {strides = array<i32>} : memref<2x10x18x32xf32, #tpu.memory_space<vmem>>, vector<2x10x18x32xf32>,
    %c0_65 = arith.constant 0 : index
    %c1_66 = arith.constant 1 : index
    %c8_67 = arith.constant 8 : index
    %c0_68 = arith.constant 0 : index
    %82 = vector.load %arg8[%c0_65, %c1_66, %c8_67, %c0_68] : memref<2x10x18x32xf32, #tpu.memory_space<vmem>>, vector<2x8x8x32xf32>
    tpu.vector_store %arg8[%c0_65, %c1_66, %c8_67, %c0_68], %79 {strides = array<i32>} : memref<2x10x18x32xf32, #tpu.memory_space<vmem>>, vector<2x8x8x32xf32>,
    %cst_69 = arith.constant 0.000000e+00 : f32
    %83 = vector.broadcast %cst_69 : f32 to vector<128x64xf32>
    %c0_70 = arith.constant 0 : index
    %c0_71 = arith.constant 0 : index
    %c7_72 = arith.constant 7 : index
    %c0_73 = arith.constant 0 : index
    %84 = vector.load %arg8[%c0_70, %c0_71, %c7_72, %c0_73] : memref<2x10x18x32xf32, #tpu.memory_space<vmem>>, vector<2x8x8x32xf32>
    %85 = vector.shape_cast %84 : vector<2x8x8x32xf32> to vector<128x32xf32>
    %c0_74 = arith.constant 0 : index
    %c0_75 = arith.constant 0 : index
    %c0_76 = arith.constant 0 : index
    %86 = vector.load %arg4[%c0_74, %c0_75, %c0_76] : memref<9x32x64xf32, #tpu.memory_space<vmem>>, vector<1x32x64xf32>
    %87 = vector.shape_cast %86 : vector<1x32x64xf32> to vector<32x64xf32>
    %cst_77 = arith.constant dense<0.000000e+00> : vector<128x64xf32>
    %88 = tpu.matmul %85, %87, %cst_77 {dimension_numbers = #tpu.dot_dimension_numbers<[1], [0], [0], [1], [0, 0, 1, 1], [], []>} : vector<128x32xf32>, vector<32x64xf32>, vector<128x64xf32> -> vector<128x64xf32>
    %89 = arith.addf %83, %88 : vector<128x64xf32>
    %c0_78 = arith.constant 0 : index
    %c0_79 = arith.constant 0 : index
    %c8_80 = arith.constant 8 : index
    %c0_81 = arith.constant 0 : index
    %90 = vector.load %arg8[%c0_78, %c0_79, %c8_80, %c0_81] : memref<2x10x18x32xf32, #tpu.memory_space<vmem>>, vector<2x8x8x32xf32>
    %91 = vector.shape_cast %90 : vector<2x8x8x32xf32> to vector<128x32xf32>
    %c1_82 = arith.constant 1 : index
    %c0_83 = arith.constant 0 : index
    %c0_84 = arith.constant 0 : index
    %92 = vector.load %arg4[%c1_82, %c0_83, %c0_84] : memref<9x32x64xf32, #tpu.memory_space<vmem>>, vector<1x32x64xf32>
    %93 = vector.shape_cast %92 : vector<1x32x64xf32> to vector<32x64xf32>
    %cst_85 = arith.constant dense<0.000000e+00> : vector<128x64xf32>
    %94 = tpu.matmul %91, %93, %cst_85 {dimension_numbers = #tpu.dot_dimension_numbers<[1], [0], [0], [1], [0, 0, 1, 1], [], []>} : vector<128x32xf32>, vector<32x64xf32>, vector<128x64xf32> -> vector<128x64xf32>
    %95 = arith.addf %89, %94 : vector<128x64xf32>
    %c0_86 = arith.constant 0 : index
    %c0_87 = arith.constant 0 : index
    %c9 = arith.constant 9 : index
    %c0_88 = arith.constant 0 : index
    %96 = vector.load %arg8[%c0_86, %c0_87, %c9, %c0_88] : memref<2x10x18x32xf32, #tpu.memory_space<vmem>>, vector<2x8x8x32xf32>
    %97 = vector.shape_cast %96 : vector<2x8x8x32xf32> to vector<128x32xf32>
    %c2_89 = arith.constant 2 : index
    %c0_90 = arith.constant 0 : index
    %c0_91 = arith.constant 0 : index
    %98 = vector.load %arg4[%c2_89, %c0_90, %c0_91] : memref<9x32x64xf32, #tpu.memory_space<vmem>>, vector<1x32x64xf32>
    %99 = vector.shape_cast %98 : vector<1x32x64xf32> to vector<32x64xf32>
    %cst_92 = arith.constant dense<0.000000e+00> : vector<128x64xf32>
    %100 = tpu.matmul %97, %99, %cst_92 {dimension_numbers = #tpu.dot_dimension_numbers<[1], [0], [0], [1], [0, 0, 1, 1], [], []>} : vector<128x32xf32>, vector<32x64xf32>, vector<128x64xf32> -> vector<128x64xf32>
    %101 = arith.addf %95, %100 : vector<128x64xf32>
    %c0_93 = arith.constant 0 : index
    %c1_94 = arith.constant 1 : index
    %c7_95 = arith.constant 7 : index
    %c0_96 = arith.constant 0 : index
    %102 = vector.load %arg8[%c0_93, %c1_94, %c7_95, %c0_96] : memref<2x10x18x32xf32, #tpu.memory_space<vmem>>, vector<2x8x8x32xf32>
    %103 = vector.shape_cast %102 : vector<2x8x8x32xf32> to vector<128x32xf32>
    %c3_97 = arith.constant 3 : index
    %c0_98 = arith.constant 0 : index
    %c0_99 = arith.constant 0 : index
    %104 = vector.load %arg4[%c3_97, %c0_98, %c0_99] : memref<9x32x64xf32, #tpu.memory_space<vmem>>, vector<1x32x64xf32>
    %105 = vector.shape_cast %104 : vector<1x32x64xf32> to vector<32x64xf32>
    %cst_100 = arith.constant dense<0.000000e+00> : vector<128x64xf32>
    %106 = tpu.matmul %103, %105, %cst_100 {dimension_numbers = #tpu.dot_dimension_numbers<[1], [0], [0], [1], [0, 0, 1, 1], [], []>} : vector<128x32xf32>, vector<32x64xf32>, vector<128x64xf32> -> vector<128x64xf32>
    %107 = arith.addf %101, %106 : vector<128x64xf32>
    %c0_101 = arith.constant 0 : index
    %c1_102 = arith.constant 1 : index
    %c8_103 = arith.constant 8 : index
    %c0_104 = arith.constant 0 : index
    %108 = vector.load %arg8[%c0_101, %c1_102, %c8_103, %c0_104] : memref<2x10x18x32xf32, #tpu.memory_space<vmem>>, vector<2x8x8x32xf32>
    %109 = vector.shape_cast %108 : vector<2x8x8x32xf32> to vector<128x32xf32>
    %c4_105 = arith.constant 4 : index
    %c0_106 = arith.constant 0 : index
    %c0_107 = arith.constant 0 : index
    %110 = vector.load %arg4[%c4_105, %c0_106, %c0_107] : memref<9x32x64xf32, #tpu.memory_space<vmem>>, vector<1x32x64xf32>
    %111 = vector.shape_cast %110 : vector<1x32x64xf32> to vector<32x64xf32>
    %cst_108 = arith.constant dense<0.000000e+00> : vector<128x64xf32>
    %112 = tpu.matmul %109, %111, %cst_108 {dimension_numbers = #tpu.dot_dimension_numbers<[1], [0], [0], [1], [0, 0, 1, 1], [], []>} : vector<128x32xf32>, vector<32x64xf32>, vector<128x64xf32> -> vector<128x64xf32>
    %113 = arith.addf %107, %112 : vector<128x64xf32>
    %c0_109 = arith.constant 0 : index
    %c1_110 = arith.constant 1 : index
    %c9_111 = arith.constant 9 : index
    %c0_112 = arith.constant 0 : index
    %114 = vector.load %arg8[%c0_109, %c1_110, %c9_111, %c0_112] : memref<2x10x18x32xf32, #tpu.memory_space<vmem>>, vector<2x8x8x32xf32>
    %115 = vector.shape_cast %114 : vector<2x8x8x32xf32> to vector<128x32xf32>
    %c5_113 = arith.constant 5 : index
    %c0_114 = arith.constant 0 : index
    %c0_115 = arith.constant 0 : index
    %116 = vector.load %arg4[%c5_113, %c0_114, %c0_115] : memref<9x32x64xf32, #tpu.memory_space<vmem>>, vector<1x32x64xf32>
    %117 = vector.shape_cast %116 : vector<1x32x64xf32> to vector<32x64xf32>
    %cst_116 = arith.constant dense<0.000000e+00> : vector<128x64xf32>
    %118 = tpu.matmul %115, %117, %cst_116 {dimension_numbers = #tpu.dot_dimension_numbers<[1], [0], [0], [1], [0, 0, 1, 1], [], []>} : vector<128x32xf32>, vector<32x64xf32>, vector<128x64xf32> -> vector<128x64xf32>
    %119 = arith.addf %113, %118 : vector<128x64xf32>
    %c0_117 = arith.constant 0 : index
    %c2_118 = arith.constant 2 : index
    %c7_119 = arith.constant 7 : index
    %c0_120 = arith.constant 0 : index
    %120 = vector.load %arg8[%c0_117, %c2_118, %c7_119, %c0_120] : memref<2x10x18x32xf32, #tpu.memory_space<vmem>>, vector<2x8x8x32xf32>
    %121 = vector.shape_cast %120 : vector<2x8x8x32xf32> to vector<128x32xf32>
    %c6_121 = arith.constant 6 : index
    %c0_122 = arith.constant 0 : index
    %c0_123 = arith.constant 0 : index
    %122 = vector.load %arg4[%c6_121, %c0_122, %c0_123] : memref<9x32x64xf32, #tpu.memory_space<vmem>>, vector<1x32x64xf32>
    %123 = vector.shape_cast %122 : vector<1x32x64xf32> to vector<32x64xf32>
    %cst_124 = arith.constant dense<0.000000e+00> : vector<128x64xf32>
    %124 = tpu.matmul %121, %123, %cst_124 {dimension_numbers = #tpu.dot_dimension_numbers<[1], [0], [0], [1], [0, 0, 1, 1], [], []>} : vector<128x32xf32>, vector<32x64xf32>, vector<128x64xf32> -> vector<128x64xf32>
    %125 = arith.addf %119, %124 : vector<128x64xf32>
    %c0_125 = arith.constant 0 : index
    %c2_126 = arith.constant 2 : index
    %c8_127 = arith.constant 8 : index
    %c0_128 = arith.constant 0 : index
    %126 = vector.load %arg8[%c0_125, %c2_126, %c8_127, %c0_128] : memref<2x10x18x32xf32, #tpu.memory_space<vmem>>, vector<2x8x8x32xf32>
    %127 = vector.shape_cast %126 : vector<2x8x8x32xf32> to vector<128x32xf32>
    %c7_129 = arith.constant 7 : index
    %c0_130 = arith.constant 0 : index
    %c0_131 = arith.constant 0 : index
    %128 = vector.load %arg4[%c7_129, %c0_130, %c0_131] : memref<9x32x64xf32, #tpu.memory_space<vmem>>, vector<1x32x64xf32>
    %129 = vector.shape_cast %128 : vector<1x32x64xf32> to vector<32x64xf32>
    %cst_132 = arith.constant dense<0.000000e+00> : vector<128x64xf32>
    %130 = tpu.matmul %127, %129, %cst_132 {dimension_numbers = #tpu.dot_dimension_numbers<[1], [0], [0], [1], [0, 0, 1, 1], [], []>} : vector<128x32xf32>, vector<32x64xf32>, vector<128x64xf32> -> vector<128x64xf32>
    %131 = arith.addf %125, %130 : vector<128x64xf32>
    %c0_133 = arith.constant 0 : index
    %c2_134 = arith.constant 2 : index
    %c9_135 = arith.constant 9 : index
    %c0_136 = arith.constant 0 : index
    %132 = vector.load %arg8[%c0_133, %c2_134, %c9_135, %c0_136] : memref<2x10x18x32xf32, #tpu.memory_space<vmem>>, vector<2x8x8x32xf32>
    %133 = vector.shape_cast %132 : vector<2x8x8x32xf32> to vector<128x32xf32>
    %c8_137 = arith.constant 8 : index
    %c0_138 = arith.constant 0 : index
    %c0_139 = arith.constant 0 : index
    %134 = vector.load %arg4[%c8_137, %c0_138, %c0_139] : memref<9x32x64xf32, #tpu.memory_space<vmem>>, vector<1x32x64xf32>
    %135 = vector.shape_cast %134 : vector<1x32x64xf32> to vector<32x64xf32>
    %cst_140 = arith.constant dense<0.000000e+00> : vector<128x64xf32>
    %136 = tpu.matmul %133, %135, %cst_140 {dimension_numbers = #tpu.dot_dimension_numbers<[1], [0], [0], [1], [0, 0, 1, 1], [], []>} : vector<128x32xf32>, vector<32x64xf32>, vector<128x64xf32> -> vector<128x64xf32>
    %137 = arith.addf %131, %136 : vector<128x64xf32>
    %c0_141 = arith.constant 0 : index
    %c0_142 = arith.constant 0 : index
    %138 = vector.load %arg5[%c0_141, %c0_142] : memref<1x64xf32, #tpu.memory_space<vmem>>, vector<1x64xf32>
    %139 = vector.broadcast %138 : vector<1x64xf32> to vector<128x64xf32>
    %140 = arith.addf %137, %139 : vector<128x64xf32>
    %cst_143 = arith.constant 0.000000e+00 : f32
    %141 = vector.broadcast %cst_143 : f32 to vector<128x64xf32>
    %142 = arith.maximumf %140, %141 : vector<128x64xf32>
    %143 = vector.shape_cast %142 : vector<128x64xf32> to vector<2x4x2x8x64xf32>
    %144 = vector.extract_strided_slice %143 {offsets = [0, 0, 0, 0, 0], sizes = [2, 4, 1, 8, 64], strides = [1, 1, 1, 1, 1]} : vector<2x4x2x8x64xf32> to vector<2x4x1x8x64xf32>
    %145 = vector.shape_cast %144 : vector<2x4x1x8x64xf32> to vector<2x4x8x64xf32>
    %146 = vector.extract_strided_slice %143 {offsets = [0, 0, 1, 0, 0], sizes = [2, 4, 1, 8, 64], strides = [1, 1, 1, 1, 1]} : vector<2x4x2x8x64xf32> to vector<2x4x1x8x64xf32>
    %147 = vector.shape_cast %146 : vector<2x4x1x8x64xf32> to vector<2x4x8x64xf32>
    %148 = arith.maximumf %145, %147 : vector<2x4x8x64xf32>
    %c0_144 = arith.constant 0 : index
    %c0_145 = arith.constant 0 : index
    %c0_146 = arith.constant 0 : index
    %c0_147 = arith.constant 0 : index
    %149 = vector.load %arg9[%c0_144, %c0_145, %c0_146, %c0_147] : memref<2x4x8x64xf32, #tpu.memory_space<vmem>>, vector<2x4x8x64xf32>
    tpu.vector_store %arg9[%c0_144, %c0_145, %c0_146, %c0_147], %148 {strides = array<i32>} : memref<2x4x8x64xf32, #tpu.memory_space<vmem>>, vector<2x4x8x64xf32>,
    %c0_148 = arith.constant 0 : index
    %c0_149 = arith.constant 0 : index
    %c0_150 = arith.constant 0 : index
    %c0_151 = arith.constant 0 : index
    %150 = tpu.strided_load %arg9[%c0_148, %c0_149, %c0_150, %c0_151] {strides = array<i32: 1, 1, 2, 1>} : memref<2x4x8x64xf32, #tpu.memory_space<vmem>>, vector<2x4x4x64xf32>
    %c0_152 = arith.constant 0 : index
    %c0_153 = arith.constant 0 : index
    %c1_154 = arith.constant 1 : index
    %c0_155 = arith.constant 0 : index
    %151 = tpu.strided_load %arg9[%c0_152, %c0_153, %c1_154, %c0_155] {strides = array<i32: 1, 1, 2, 1>} : memref<2x4x8x64xf32, #tpu.memory_space<vmem>>, vector<2x4x4x64xf32>
    %152 = arith.maximumf %150, %151 : vector<2x4x4x64xf32>
    %c0_156 = arith.constant 0 : index
    %c0_157 = arith.constant 0 : index
    %c0_158 = arith.constant 0 : index
    %c0_159 = arith.constant 0 : index
    %153 = vector.load %arg6[%c0_156, %c0_157, %c0_158, %c0_159] : memref<2x4x4x64xf32, #tpu.memory_space<vmem>>, vector<2x4x4x64xf32>
    tpu.vector_store %arg6[%c0_156, %c0_157, %c0_158, %c0_159], %152 {strides = array<i32>} : memref<2x4x4x64xf32, #tpu.memory_space<vmem>>, vector<2x4x4x64xf32>,
    return
  }
  func.func @transform_0(%arg0: i32) -> (i32, i32, i32, i32) {
    %c0_i32 = arith.constant 0 : i32
    %c0_i32_0 = arith.constant 0 : i32
    %c0_i32_1 = arith.constant 0 : i32
    %c0_i32_2 = arith.constant 0 : i32
    return %arg0, %c0_i32, %c0_i32_0, %c0_i32_1 : i32, i32, i32, i32
  }
  func.func @transform_1(%arg0: i32) -> (i32, i32) {
    %c0_i32 = arith.constant 0 : i32
    %c0_i32_0 = arith.constant 0 : i32
    %c0_i32_1 = arith.constant 0 : i32
    return %c0_i32, %c0_i32_0 : i32, i32
  }
  func.func @transform_2(%arg0: i32) -> (i32, i32) {
    %c0_i32 = arith.constant 0 : i32
    %c0_i32_0 = arith.constant 0 : i32
    %c0_i32_1 = arith.constant 0 : i32
    return %c0_i32, %c0_i32_0 : i32, i32
  }
  func.func @transform_3(%arg0: i32) -> (i32, i32, i32) {
    %c0_i32 = arith.constant 0 : i32
    %c0_i32_0 = arith.constant 0 : i32
    %c0_i32_1 = arith.constant 0 : i32
    %c0_i32_2 = arith.constant 0 : i32
    return %c0_i32, %c0_i32_0, %c0_i32_1 : i32, i32, i32
  }
  func.func @transform_4(%arg0: i32) -> (i32, i32) {
    %c0_i32 = arith.constant 0 : i32
    %c0_i32_0 = arith.constant 0 : i32
    %c0_i32_1 = arith.constant 0 : i32
    return %c0_i32, %c0_i32_0 : i32, i32
  }
  func.func @transform_5(%arg0: i32) -> (i32, i32, i32, i32) {
    %c0_i32 = arith.constant 0 : i32
    %c0_i32_0 = arith.constant 0 : i32
    %c0_i32_1 = arith.constant 0 : i32
    %c0_i32_2 = arith.constant 0 : i32
    return %arg0, %c0_i32, %c0_i32_0, %c0_i32_1 : i32, i32, i32, i32
  }
}

</mosaic_0001>

<llo_original>
// kernel: tpu_custom_call.1
$region0: #{tpu_custom_call.1}
  #allocation0 [shape = 'u32[]', space=smem, size = 0x4, offset = 0x4, fixed_abs, tag = 'smem constant byte address 0x4 - core index']
  #allocation1 [shape = 'u32[144,128]{1,0:T(1,128)}', space=vmem, size = 0x12000, scoped, tag = 'internal scratch']
  #allocation2 [shape = 'f32[2,8,16,32]{3,2,1,0:T(8,128)}', space=vmem, size = 0x20000, scoped, tag = 'scratch operand']
  #allocation3 [shape = 'f32[2,10,18,32]{3,2,1,0:T(8,128)}', space=vmem, size = 0x3c000, scoped, tag = 'scratch operand']
  #allocation4 [shape = 'f32[2,4,8,64]{3,2,1,0:T(8,128)}', space=vmem, size = 0x8000, scoped, tag = 'scratch operand']
  %s0 = inlined_call_operand.vmem [shape: f32[4,18,18,1], index: 0, kind: input, shape index: {}]
  %s1 = inlined_call_operand.vmem [shape: f32[9,32], index: 1, kind: input, shape index: {}]
  %s2 = inlined_call_operand.vmem [shape: f32[1,32], index: 2, kind: input, shape index: {}]
  %s3 = inlined_call_operand.vmem [shape: f32[9,32,64], index: 3, kind: input, shape index: {}]
  %s4 = inlined_call_operand.vmem [shape: f32[1,64], index: 4, kind: input, shape index: {}]
  %s5 = inlined_call_operand.hbm [shape: f32[4,4,4,64], index: 5, kind: output, shape index: {}]
  %s6 = sld [smem:[#allocation0]]
  $region53: #{tpu_custom_call.1} parent=0
    _
  %s8 = ssub.s32 1, %s6
  %s9 = scalar_select 0, %s8, %s6
  $region1: #{tpu_custom_call.1} parent=0
    #allocation5 [shape = 'u8[32768]{0}', space=vmem, size = 0x8000, scoped, tag = 'output window, operand 0']
    #allocation6 [shape = 's32[2]{0}', space=sflag, size = 0x8, scoped, tag = 'scoped memory for tpu_custom_call.1']
    %10 = vsyncpa [#allocation6], 0
    %s11 = scalar_lea.sflag [#allocation6], 1
    %12 = vsyncpa %s11, 0
    loop: start=0, step=1, limit=4
    $region2: #{tpu_custom_call.1} parent=1 // loop_pre_header
      _
    $region3: #{tpu_custom_call.1} parent=1 // loop_header
      %s14 = sphi 0, %s18
      %p15 = scmp.ge.s32.totalorder %s14, 4
      %s24 = sphi 0, %s26
      %s27 = sphi 0, %s24
      %s28 = sphi 0, %s27
      %s44 = sphi 0, %s28
      %s48 = sphi 0, %s48
      %s50 = sphi 0, %s48
      %s51 = sphi 0, %s50
      %s65 = sphi 0, %s51
      %s69 = sphi 0, %s69
      %s71 = sphi 0, %s69
      %s72 = sphi 0, %s71
      %s86 = sphi 0, %s72
      %s90 = sphi 0, %s90
      %s92 = sphi 0, %s90
      %s93 = sphi 0, %s92
      %s107 = sphi 0, %s93
      %s111 = sphi 0, %s111
      %s113 = sphi 0, %s111
      %s114 = sphi 0, %s113
      %s128 = sphi 0, %s114
      %s134 = sphi 0, %s136
      %s137 = sphi 0, %s134
      %s138 = sphi 0, %s137
      %s154 = sphi 0, %s138
    $region4: #{tpu_custom_call.1} parent=1 // loop_header_branch
      %17 = sbr.rel (%p15) target = $region8
    $region5: #{tpu_custom_call.1} parent=1 // loop_body
      %s19 = ssub.s32 %s14, 1
      %s20 = ssub.s32 %s14, 2
      %s21 = sadd.s32 %s14, 1
      %s22 = ssub.s32 %s14, %s21
      %p23 = scmp.eq.s32.totalorder %s22, 0
      %s25 = sadd.s32 %s24, 1
      %s26 = scalar_select %p23, %s24, %s25
      %p29 = pneg %p23
      %p30 = scmp.eq.s32.totalorder %s14, 1
      %p31 = por %p29, %p30
      %p32 = scmp.ne.s32.totalorder %s24, %s27
      %p33 = scmp.eq.s32.totalorder %s14, 0
      %p34 = por %p32, %p33
      %p35 = scmp.ne.s32.totalorder %s24, %s27
      %p36 = scmp.eq.s32.totalorder %s19, 1
      %p37 = por %p35, %p36
      %p38 = scmp.ne.s32.totalorder %s27, %s28
      %p39 = scmp.eq.s32.totalorder %s19, 0
      %p40 = por %p38, %p39
      %p41 = scmp.ne.s32.totalorder %s27, %s28
      %p42 = scmp.eq.s32.totalorder %s20, 1
      %p43 = por %p41, %p42
      %p45 = scmp.ne.s32.totalorder %s28, %s44
      %p46 = scmp.eq.s32.totalorder %s20, 0
      %p47 = por %p45, %p46
      %s49 = sadd.s32 %s48, 1
      %p52 = scmp.eq.s32.totalorder %s14, 1
      %p53 = scmp.ne.s32.totalorder %s48, %s50
      %p54 = scmp.eq.s32.totalorder %s14, 0
      %p55 = por %p53, %p54
      %p56 = scmp.ne.s32.totalorder %s48, %s50
      %p57 = scmp.eq.s32.totalorder %s19, 1
      %p58 = por %p56, %p57
      %p59 = scmp.ne.s32.totalorder %s50, %s51
      %p60 = scmp.eq.s32.totalorder %s19, 0
      %p61 = por %p59, %p60
      %p62 = scmp.ne.s32.totalorder %s50, %s51
      %p63 = scmp.eq.s32.totalorder %s20, 1
      %p64 = por %p62, %p63
      %p66 = scmp.ne.s32.totalorder %s51, %s65
      %p67 = scmp.eq.s32.totalorder %s20, 0
      %p68 = por %p66, %p67
      %s70 = sadd.s32 %s69, 1
      %p73 = scmp.eq.s32.totalorder %s14, 1
      %p74 = scmp.ne.s32.totalorder %s69, %s71
      %p75 = scmp.eq.s32.totalorder %s14, 0
      %p76 = por %p74, %p75
      %p77 = scmp.ne.s32.totalorder %s69, %s71
      %p78 = scmp.eq.s32.totalorder %s19, 1
      %p79 = por %p77, %p78
      %p80 = scmp.ne.s32.totalorder %s71, %s72
      %p81 = scmp.eq.s32.totalorder %s19, 0
      %p82 = por %p80, %p81
      %p83 = scmp.ne.s32.totalorder %s71, %s72
      %p84 = scmp.eq.s32.totalorder %s20, 1
      %p85 = por %p83, %p84
      %p87 = scmp.ne.s32.totalorder %s72, %s86
      %p88 = scmp.eq.s32.totalorder %s20, 0
      %p89 = por %p87, %p88
      %s91 = sadd.s32 %s90, 1
      %p94 = scmp.eq.s32.totalorder %s14, 1
      %p95 = scmp.ne.s32.totalorder %s90, %s92
      %p96 = scmp.eq.s32.totalorder %s14, 0
      %p97 = por %p95, %p96
      %p98 = scmp.ne.s32.totalorder %s90, %s92
      %p99 = scmp.eq.s32.totalorder %s19, 1
      %p100 = por %p98, %p99
      %p101 = scmp.ne.s32.totalorder %s92, %s93
      %p102 = scmp.eq.s32.totalorder %s19, 0
      %p103 = por %p101, %p102
      %p104 = scmp.ne.s32.totalorder %s92, %s93
      %p105 = scmp.eq.s32.totalorder %s20, 1
      %p106 = por %p104, %p105
      %p108 = scmp.ne.s32.totalorder %s93, %s107
      %p109 = scmp.eq.s32.totalorder %s20, 0
      %p110 = por %p108, %p109
      %s112 = sadd.s32 %s111, 1
      %p115 = scmp.eq.s32.totalorder %s14, 1
      %p116 = scmp.ne.s32.totalorder %s111, %s113
      %p117 = scmp.eq.s32.totalorder %s14, 0
      %p118 = por %p116, %p117
      %p119 = scmp.ne.s32.totalorder %s111, %s113
      %p120 = scmp.eq.s32.totalorder %s19, 1
      %p121 = por %p119, %p120
      %p122 = scmp.ne.s32.totalorder %s113, %s114
      %p123 = scmp.eq.s32.totalorder %s19, 0
      %p124 = por %p122, %p123
      %p125 = scmp.ne.s32.totalorder %s113, %s114
      %p126 = scmp.eq.s32.totalorder %s20, 1
      %p127 = por %p125, %p126
      %p129 = scmp.ne.s32.totalorder %s114, %s128
      %p130 = scmp.eq.s32.totalorder %s20, 0
      %p131 = por %p129, %p130
      %s132 = ssub.s32 %s14, %s21
      %p133 = scmp.eq.s32.totalorder %s132, 0
      %s135 = sadd.s32 %s134, 1
      %s136 = scalar_select %p133, %s134, %s135
      %p139 = pneg %p133
      %p140 = scmp.eq.s32.totalorder %s14, 1
      %p141 = por %p139, %p140
      %p142 = scmp.ne.s32.totalorder %s134, %s137
      %p143 = scmp.eq.s32.totalorder %s14, 0
      %p144 = por %p142, %p143
      %p145 = scmp.ne.s32.totalorder %s134, %s137
      %p146 = scmp.eq.s32.totalorder %s19, 1
      %p147 = por %p145, %p146
      %p148 = scmp.ne.s32.totalorder %s137, %s138
      %p149 = scmp.eq.s32.totalorder %s19, 0
      %p150 = por %p148, %p149
      %p151 = scmp.ne.s32.totalorder %s137, %s138
      %p152 = scmp.eq.s32.totalorder %s20, 1
      %p153 = por %p151, %p152
      %p155 = scmp.ne.s32.totalorder %s138, %s154
      %p156 = scmp.eq.s32.totalorder %s20, 0
      %p157 = por %p155, %p156
      %p158 = scmp.le.s32.totalorder 1, %s14
      %p159 = scmp.lt.s32.totalorder %s14, 3
      %p160 = pnand %p158, %p159
      %p161 = pneg %p160
      // Predicated region
      $region9: #{tpu_custom_call.1} parent=5 // pred_check
        _
      $region10: #{tpu_custom_call.1} parent=5 // pred_check_branch
        %163 = sbr.rel (%p160) target = $region12
      $region11: #{tpu_custom_call.1} parent=5 // pred_region
        %s164 = ssub.s32 %s14, 1
        // Predicated region
        $region13: #{tpu_custom_call.1} parent=11 // pred_check
          %p165 = pneg %p61
        $region14: #{tpu_custom_call.1} parent=11 // pred_check_branch
          %167 = sbr.rel (%p165) target = $region16
        $region15: #{tpu_custom_call.1} parent=11 // pred_region
          _
        $region16: #{tpu_custom_call.1} parent=11 // pred_fallthru
          _
        // Predicated region
        $region17: #{tpu_custom_call.1} parent=11 // pred_check
          %p168 = pneg %p82
        $region18: #{tpu_custom_call.1} parent=11 // pred_check_branch
          %170 = sbr.rel (%p168) target = $region20
        $region19: #{tpu_custom_call.1} parent=11 // pred_region
          _
        $region20: #{tpu_custom_call.1} parent=11 // pred_fallthru
          _
        // Predicated region
        $region21: #{tpu_custom_call.1} parent=11 // pred_check
          %p171 = pneg %p103
        $region22: #{tpu_custom_call.1} parent=11 // pred_check_branch
          %173 = sbr.rel (%p171) target = $region24
        $region23: #{tpu_custom_call.1} parent=11 // pred_region
          _
        $region24: #{tpu_custom_call.1} parent=11 // pred_fallthru
          _
        // Predicated region
        $region25: #{tpu_custom_call.1} parent=11 // pred_check
          %p174 = pneg %p124
        $region26: #{tpu_custom_call.1} parent=11 // pred_check_branch
          %176 = sbr.rel (%p174) target = $region28
        $region27: #{tpu_custom_call.1} parent=11 // pred_region
          _
        $region28: #{tpu_custom_call.1} parent=11 // pred_fallthru
          _
      $region12: #{tpu_custom_call.1} parent=5 // pred_fallthru
        _
      %p177 = scmp.lt.s32.totalorder %s14, 2
      // Predicated region
      $region29: #{tpu_custom_call.1} parent=5 // pred_check
        %p178 = pneg %p177
      $region30: #{tpu_custom_call.1} parent=5 // pred_check_branch
        %180 = sbr.rel (%p178) target = $region32
      $region31: #{tpu_custom_call.1} parent=5 // pred_region
        // Predicated region
        $region33: #{tpu_custom_call.1} parent=31 // pred_check
          %p181 = pneg %p34
        $region34: #{tpu_custom_call.1} parent=31 // pred_check_branch
          %183 = sbr.rel (%p181) target = $region36
        $region35: #{tpu_custom_call.1} parent=31 // pred_region
          %s184 = smul.u32 2, %s14
          %p185 = scmp.lt.s32.totalorder %s184, 3
          %s186 = scalar_select %p185, %s184, 3
          %s187 = smul.addr %s186, 54
          %s188 = smul.addr %s187, 8
          %s189 = scalar_lea.vmem %s0, %s188
          %s190 = smul.u32 2, %s14
        $region36: #{tpu_custom_call.1} parent=31 // pred_fallthru
          _
      $region32: #{tpu_custom_call.1} parent=5 // pred_fallthru
        _
      %p191 = scmp.le.s32.totalorder 1, %s14
      %p192 = scmp.lt.s32.totalorder %s14, 3
      %p193 = pnand %p191, %p192
      %p194 = pneg %p193
      // Predicated region
      $region37: #{tpu_custom_call.1} parent=5 // pred_check
        _
      $region38: #{tpu_custom_call.1} parent=5 // pred_check_branch
        %196 = sbr.rel (%p193) target = $region40
      $region39: #{tpu_custom_call.1} parent=5 // pred_region
        %s197 = ssub.s32 %s14, 1
        %s198 = smul.u32 2, %s19
        %p199 = scmp.lt.s32.totalorder %s198, 3
        %s200 = scalar_select %p199, %s198, 3
        %s201 = smul.addr %s200, 54
        %s202 = smul.addr %s201, 8
        %s203 = scalar_lea.vmem %s0, %s202
        %p204 = pneg %p40
        %p205 = pneg %p37
        %p206 = pneg %p61
        %p207 = pneg %p58
        %p208 = pneg %p82
        %p209 = pneg %p79
        %p210 = pneg %p103
        %p211 = pneg %p100
        %p212 = pneg %p124
        %p213 = pneg %p121
        %p214 = pneg %p150
        %p215 = pneg %p147
        %s216 = sand.u32 %s137, 1
        %s217 = scalar_lea.sflag [#allocation6], %s216
        %s218 = sand.u32 %s137, 1
        %s219 = smul.addr %s218, 32
        %s220 = scalar_lea.vmem [#allocation5], %s219
        %s221 = smul.u32 2, %s19
        %p222 = scmp.lt.s32.totalorder %s221, 3
        %s223 = scalar_select %p222, %s221, 3
        %s224 = smul.addr %s223, 54
        %s225 = smul.addr %s224, 8
        %s226 = scalar_lea.vmem %s0, %s225
        %s227 = smul.u32 2, %s19
        %s228 = smul.u32 2, %s19
        %v229 = vld [vmem:[%s226] sm:$0xff]
        %v230 = vld [vmem:[%s226 + $0x8] sm:$0xff]
        %v231 = vld [vmem:[%s226 + $0x18] sm:$0xff]
        %v232 = vld [vmem:[%s226 + $0x20] sm:$0xff]
        %v233 = vld [vmem:[%s226 + $0x30] sm:$0xff]
        %v234 = vld [vmem:[%s226 + $0x38] sm:$0xff]
        %v235 = vld [vmem:[%s226 + $0x48] sm:$0xff]
        %v236 = vld [vmem:[%s226 + $0x50] sm:$0xff]
        %v237 = vld [vmem:[%s226 + $0x60] sm:$0xff]
        %v238 = vld [vmem:[%s226 + $0x68] sm:$0xff]
        %v239 = vld [vmem:[%s226 + $0x78] sm:$0xff]
        %v240 = vld [vmem:[%s226 + $0x80] sm:$0xff]
        %v241 = vld [vmem:[%s226 + $0x90] sm:$0xff]
        %v242 = vld [vmem:[%s226 + $0x98] sm:$0xff]
        %v243 = vld [vmem:[%s226 + $0xa8] sm:$0xff]
        %v244 = vld [vmem:[%s226 + $0xb0] sm:$0xff]
        %v245 = vld [vmem:[%s226 + $0xc0] sm:$0xff]
        %v246 = vld [vmem:[%s226 + $0xc8] sm:$0xff]
        %v247 = vld [vmem:[%s226 + $0xd8] sm:$0xff]
        %v248 = vld [vmem:[%s226 + $0xe0] sm:$0xff]
        %v249 = vld [vmem:[%s226 + $0xf0] sm:$0xff]
        %v250 = vld [vmem:[%s226 + $0xf8] sm:$0xff]
        %v251 = vld [vmem:[%s226 + $0x108] sm:$0xff]
        %v252 = vld [vmem:[%s226 + $0x110] sm:$0xff]
        %v253 = vld [vmem:[%s226 + $0x120] sm:$0xff]
        %v254 = vld [vmem:[%s226 + $0x128] sm:$0xff]
        %v255 = vld [vmem:[%s226 + $0x138] sm:$0xff]
        %v256 = vld [vmem:[%s226 + $0x140] sm:$0xff]
        %v257 = vld [vmem:[%s226 + $0x150] sm:$0xff]
        %v258 = vld [vmem:[%s226 + $0x158] sm:$0xff]
        %v259 = vld [vmem:[%s226 + $0x168] sm:$0xff]
        %v260 = vld [vmem:[%s226 + $0x170] sm:$0xff]
        %v261 = vld [vmem:[%s226 + $0x1b0] sm:$0xff]
        %v262 = vld [vmem:[%s226 + $0x1b8] sm:$0xff]
        %v263 = vld [vmem:[%s226 + $0x1c8] sm:$0xff]
        %v264 = vld [vmem:[%s226 + $0x1d0] sm:$0xff]
        %v265 = vld [vmem:[%s226 + $0x1e0] sm:$0xff]
        %v266 = vld [vmem:[%s226 + $0x1e8] sm:$0xff]
        %v267 = vld [vmem:[%s226 + $0x1f8] sm:$0xff]
        %v268 = vld [vmem:[%s226 + $0x200] sm:$0xff]
        %v269 = vld [vmem:[%s226 + $0x210] sm:$0xff]
        %v270 = vld [vmem:[%s226 + $0x218] sm:$0xff]
        %v271 = vld [vmem:[%s226 + $0x228] sm:$0xff]
        %v272 = vld [vmem:[%s226 + $0x230] sm:$0xff]
        %v273 = vld [vmem:[%s226 + $0x240] sm:$0xff]
        %v274 = vld [vmem:[%s226 + $0x248] sm:$0xff]
        %v275 = vld [vmem:[%s226 + $0x258] sm:$0xff]
        %v276 = vld [vmem:[%s226 + $0x260] sm:$0xff]
        %v277 = vld [vmem:[%s226 + $0x270] sm:$0xff]
        %v278 = vld [vmem:[%s226 + $0x278] sm:$0xff]
        %v279 = vld [vmem:[%s226 + $0x288] sm:$0xff]
        %v280 = vld [vmem:[%s226 + $0x290] sm:$0xff]
        %v281 = vld [vmem:[%s226 + $0x2a0] sm:$0xff]
        %v282 = vld [vmem:[%s226 + $0x2a8] sm:$0xff]
        %v283 = vld [vmem:[%s226 + $0x2b8] sm:$0xff]
        %v284 = vld [vmem:[%s226 + $0x2c0] sm:$0xff]
        %v285 = vld [vmem:[%s226 + $0x2d0] sm:$0xff]
        %v286 = vld [vmem:[%s226 + $0x2d8] sm:$0xff]
        %v287 = vld [vmem:[%s226 + $0x2e8] sm:$0xff]
        %v288 = vld [vmem:[%s226 + $0x2f0] sm:$0xff]
        %v289 = vld [vmem:[%s226 + $0x300] sm:$0xff]
        %v290 = vld [vmem:[%s226 + $0x308] sm:$0xff]
        %v291 = vld [vmem:[%s226 + $0x318] sm:$0xff]
        %v292 = vld [vmem:[%s226 + $0x320] sm:$0xff]
        %v293 = vld [vmem:[%s1] sm:$0x1]
        %295 = vset.pattern.permute.xlu0 0
        %296 = vperm.xlu0 %295, %v229
        %v297 = vpop.permute.xlu0 %296
        %300 = vset.pattern.permute.xlu0 0
        %301 = vperm.xlu0 %300, %v230
        %v302 = vpop.permute.xlu0 %301
        %305 = vset.pattern.permute.xlu0 0
        %306 = vperm.xlu0 %305, %v231
        %v307 = vpop.permute.xlu0 %306
        %310 = vset.pattern.permute.xlu0 0
        %311 = vperm.xlu0 %310, %v232
        %v312 = vpop.permute.xlu0 %311
        %315 = vset.pattern.permute.xlu0 0
        %316 = vperm.xlu0 %315, %v233
        %v317 = vpop.permute.xlu0 %316
        %320 = vset.pattern.permute.xlu0 0
        %321 = vperm.xlu0 %320, %v234
        %v322 = vpop.permute.xlu0 %321
        %325 = vset.pattern.permute.xlu0 0
        %326 = vperm.xlu0 %325, %v235
        %v327 = vpop.permute.xlu0 %326
        %330 = vset.pattern.permute.xlu0 0
        %331 = vperm.xlu0 %330, %v236
        %v332 = vpop.permute.xlu0 %331
        %335 = vset.pattern.permute.xlu0 0
        %336 = vperm.xlu0 %335, %v237
        %v337 = vpop.permute.xlu0 %336
        %340 = vset.pattern.permute.xlu0 0
        %341 = vperm.xlu0 %340, %v238
        %v342 = vpop.permute.xlu0 %341
        %345 = vset.pattern.permute.xlu0 0
        %346 = vperm.xlu0 %345, %v239
        %v347 = vpop.permute.xlu0 %346
        %350 = vset.pattern.permute.xlu0 0
        %351 = vperm.xlu0 %350, %v240
        %v352 = vpop.permute.xlu0 %351
        %355 = vset.pattern.permute.xlu0 0
        %356 = vperm.xlu0 %355, %v241
        %v357 = vpop.permute.xlu0 %356
        %360 = vset.pattern.permute.xlu0 0
        %361 = vperm.xlu0 %360, %v242
        %v362 = vpop.permute.xlu0 %361
        %365 = vset.pattern.permute.xlu0 0
        %366 = vperm.xlu0 %365, %v243
        %v367 = vpop.permute.xlu0 %366
        %370 = vset.pattern.permute.xlu0 0
        %371 = vperm.xlu0 %370, %v244
        %v372 = vpop.permute.xlu0 %371
        %375 = vset.pattern.permute.xlu0 0
        %376 = vperm.xlu0 %375, %v245
        %v377 = vpop.permute.xlu0 %376
        %380 = vset.pattern.permute.xlu0 0
        %381 = vperm.xlu0 %380, %v246
        %v382 = vpop.permute.xlu0 %381
        %385 = vset.pattern.permute.xlu0 0
        %386 = vperm.xlu0 %385, %v247
        %v387 = vpop.permute.xlu0 %386
        %390 = vset.pattern.permute.xlu0 0
        %391 = vperm.xlu0 %390, %v248
        %v392 = vpop.permute.xlu0 %391
        %395 = vset.pattern.permute.xlu0 0
        %396 = vperm.xlu0 %395, %v249
        %v397 = vpop.permute.xlu0 %396
        %400 = vset.pattern.permute.xlu0 0
        %401 = vperm.xlu0 %400, %v250
        %v402 = vpop.permute.xlu0 %401
        %405 = vset.pattern.permute.xlu0 0
        %406 = vperm.xlu0 %405, %v251
        %v407 = vpop.permute.xlu0 %406
        %410 = vset.pattern.permute.xlu0 0
        %411 = vperm.xlu0 %410, %v252
        %v412 = vpop.permute.xlu0 %411
        %415 = vset.pattern.permute.xlu0 0
        %416 = vperm.xlu0 %415, %v253
        %v417 = vpop.permute.xlu0 %416
        %420 = vset.pattern.permute.xlu0 0
        %421 = vperm.xlu0 %420, %v254
        %v422 = vpop.permute.xlu0 %421
        %425 = vset.pattern.permute.xlu0 0
        %426 = vperm.xlu0 %425, %v255
        %v427 = vpop.permute.xlu0 %426
        %430 = vset.pattern.permute.xlu0 0
        %431 = vperm.xlu0 %430, %v256
        %v432 = vpop.permute.xlu0 %431
        %435 = vset.pattern.permute.xlu0 0
        %436 = vperm.xlu0 %435, %v257
        %v437 = vpop.permute.xlu0 %436
        %440 = vset.pattern.permute.xlu0 0
        %441 = vperm.xlu0 %440, %v258
        %v442 = vpop.permute.xlu0 %441
        %445 = vset.pattern.permute.xlu0 0
        %446 = vperm.xlu0 %445, %v259
        %v447 = vpop.permute.xlu0 %446
        %450 = vset.pattern.permute.xlu0 0
        %451 = vperm.xlu0 %450, %v260
        %v452 = vpop.permute.xlu0 %451
        %455 = vset.pattern.permute.xlu0 0
        %456 = vperm.xlu0 %455, %v261
        %v457 = vpop.permute.xlu0 %456
        %460 = vset.pattern.permute.xlu0 0
        %461 = vperm.xlu0 %460, %v262
        %v462 = vpop.permute.xlu0 %461
        %465 = vset.pattern.permute.xlu0 0
        %466 = vperm.xlu0 %465, %v263
        %v467 = vpop.permute.xlu0 %466
        %470 = vset.pattern.permute.xlu0 0
        %471 = vperm.xlu0 %470, %v264
        %v472 = vpop.permute.xlu0 %471
        %475 = vset.pattern.permute.xlu0 0
        %476 = vperm.xlu0 %475, %v265
        %v477 = vpop.permute.xlu0 %476
        %480 = vset.pattern.permute.xlu0 0
        %481 = vperm.xlu0 %480, %v266
        %v482 = vpop.permute.xlu0 %481
        %485 = vset.pattern.permute.xlu0 0
        %486 = vperm.xlu0 %485, %v267
        %v487 = vpop.permute.xlu0 %486
        %490 = vset.pattern.permute.xlu0 0
        %491 = vperm.xlu0 %490, %v268
        %v492 = vpop.permute.xlu0 %491
        %495 = vset.pattern.permute.xlu0 0
        %496 = vperm.xlu0 %495, %v269
        %v497 = vpop.permute.xlu0 %496
        %500 = vset.pattern.permute.xlu0 0
        %501 = vperm.xlu0 %500, %v270
        %v502 = vpop.permute.xlu0 %501
        %505 = vset.pattern.permute.xlu0 0
        %506 = vperm.xlu0 %505, %v271
        %v507 = vpop.permute.xlu0 %506
        %510 = vset.pattern.permute.xlu0 0
        %511 = vperm.xlu0 %510, %v272
        %v512 = vpop.permute.xlu0 %511
        %515 = vset.pattern.permute.xlu0 0
        %516 = vperm.xlu0 %515, %v273
        %v517 = vpop.permute.xlu0 %516
        %520 = vset.pattern.permute.xlu0 0
        %521 = vperm.xlu0 %520, %v274
        %v522 = vpop.permute.xlu0 %521
        %525 = vset.pattern.permute.xlu0 0
        %526 = vperm.xlu0 %525, %v275
        %v527 = vpop.permute.xlu0 %526
        %530 = vset.pattern.permute.xlu0 0
        %531 = vperm.xlu0 %530, %v276
        %v532 = vpop.permute.xlu0 %531
        %535 = vset.pattern.permute.xlu0 0
        %536 = vperm.xlu0 %535, %v277
        %v537 = vpop.permute.xlu0 %536
        %540 = vset.pattern.permute.xlu0 0
        %541 = vperm.xlu0 %540, %v278
        %v542 = vpop.permute.xlu0 %541
        %545 = vset.pattern.permute.xlu0 0
        %546 = vperm.xlu0 %545, %v279
        %v547 = vpop.permute.xlu0 %546
        %550 = vset.pattern.permute.xlu0 0
        %551 = vperm.xlu0 %550, %v280
        %v552 = vpop.permute.xlu0 %551
        %555 = vset.pattern.permute.xlu0 0
        %556 = vperm.xlu0 %555, %v281
        %v557 = vpop.permute.xlu0 %556
        %560 = vset.pattern.permute.xlu0 0
        %561 = vperm.xlu0 %560, %v282
        %v562 = vpop.permute.xlu0 %561
        %565 = vset.pattern.permute.xlu0 0
        %566 = vperm.xlu0 %565, %v283
        %v567 = vpop.permute.xlu0 %566
        %570 = vset.pattern.permute.xlu0 0
        %571 = vperm.xlu0 %570, %v284
        %v572 = vpop.permute.xlu0 %571
        %575 = vset.pattern.permute.xlu0 0
        %576 = vperm.xlu0 %575, %v285
        %v577 = vpop.permute.xlu0 %576
        %580 = vset.pattern.permute.xlu0 0
        %581 = vperm.xlu0 %580, %v286
        %v582 = vpop.permute.xlu0 %581
        %585 = vset.pattern.permute.xlu0 0
        %586 = vperm.xlu0 %585, %v287
        %v587 = vpop.permute.xlu0 %586
        %590 = vset.pattern.permute.xlu0 0
        %591 = vperm.xlu0 %590, %v288
        %v592 = vpop.permute.xlu0 %591
        %595 = vset.pattern.permute.xlu0 0
        %596 = vperm.xlu0 %595, %v289
        %v597 = vpop.permute.xlu0 %596
        %600 = vset.pattern.permute.xlu0 0
        %601 = vperm.xlu0 %600, %v290
        %v602 = vpop.permute.xlu0 %601
        %605 = vset.pattern.permute.xlu0 0
        %606 = vperm.xlu0 %605, %v291
        %v607 = vpop.permute.xlu0 %606
        %610 = vset.pattern.permute.xlu0 0
        %611 = vperm.xlu0 %610, %v292
        %v612 = vpop.permute.xlu0 %611
        %v614 = vlaneseq
        %v615 = vshrl.u32 %v614, 7
        %v616 = vsub.s32 0, %v615
        %v617 = vrot.slane %v293, %v616
        %v618 = vmul.f32 %v297, %v617
        %v619 = vmul.f32 %v302, %v617
        %v620 = vmul.f32 %v307, %v617
        %v621 = vmul.f32 %v312, %v617
        %v622 = vmul.f32 %v317, %v617
        %v623 = vmul.f32 %v322, %v617
        %v624 = vmul.f32 %v327, %v617
        %v625 = vmul.f32 %v332, %v617
        %v626 = vmul.f32 %v337, %v617
        %v627 = vmul.f32 %v342, %v617
        %v628 = vmul.f32 %v347, %v617
        %v629 = vmul.f32 %v352, %v617
        %v630 = vmul.f32 %v357, %v617
        %v631 = vmul.f32 %v362, %v617
        %v632 = vmul.f32 %v367, %v617
        %v633 = vmul.f32 %v372, %v617
        %v634 = vmul.f32 %v377, %v617
        %v635 = vmul.f32 %v382, %v617
        %v636 = vmul.f32 %v387, %v617
        %v637 = vmul.f32 %v392, %v617
        %v638 = vmul.f32 %v397, %v617
        %v639 = vmul.f32 %v402, %v617
        %v640 = vmul.f32 %v407, %v617
        %v641 = vmul.f32 %v412, %v617
        %v642 = vmul.f32 %v417, %v617
        %v643 = vmul.f32 %v422, %v617
        %v644 = vmul.f32 %v427, %v617
        %v645 = vmul.f32 %v432, %v617
        %v646 = vmul.f32 %v437, %v617
        %v647 = vmul.f32 %v442, %v617
        %v648 = vmul.f32 %v447, %v617
        %v649 = vmul.f32 %v452, %v617
        %v650 = vmul.f32 %v457, %v617
        %v651 = vmul.f32 %v462, %v617
        %v652 = vmul.f32 %v467, %v617
        %v653 = vmul.f32 %v472, %v617
        %v654 = vmul.f32 %v477, %v617
        %v655 = vmul.f32 %v482, %v617
        %v656 = vmul.f32 %v487, %v617
        %v657 = vmul.f32 %v492, %v617
        %v658 = vmul.f32 %v497, %v617
        %v659 = vmul.f32 %v502, %v617
        %v660 = vmul.f32 %v507, %v617
        %v661 = vmul.f32 %v512, %v617
        %v662 = vmul.f32 %v517, %v617
        %v663 = vmul.f32 %v522, %v617
        %v664 = vmul.f32 %v527, %v617
        %v665 = vmul.f32 %v532, %v617
        %v666 = vmul.f32 %v537, %v617
        %v667 = vmul.f32 %v542, %v617
        %v668 = vmul.f32 %v547, %v617
        %v669 = vmul.f32 %v552, %v617
        %v670 = vmul.f32 %v557, %v617
        %v671 = vmul.f32 %v562, %v617
        %v672 = vmul.f32 %v567, %v617
        %v673 = vmul.f32 %v572, %v617
        %v674 = vmul.f32 %v577, %v617
        %v675 = vmul.f32 %v582, %v617
        %v676 = vmul.f32 %v587, %v617
        %v677 = vmul.f32 %v592, %v617
        %v678 = vmul.f32 %v597, %v617
        %v679 = vmul.f32 %v602, %v617
        %v680 = vmul.f32 %v607, %v617
        %v681 = vmul.f32 %v612, %v617
        %v682 = vadd.f32 %v618, 0.0
        %v683 = vadd.f32 %v619, 0.0
        %v684 = vadd.f32 %v620, 0.0
        %v685 = vadd.f32 %v621, 0.0
        %v686 = vadd.f32 %v622, 0.0
        %v687 = vadd.f32 %v623, 0.0
        %v688 = vadd.f32 %v624, 0.0
        %v689 = vadd.f32 %v625, 0.0
        %v690 = vadd.f32 %v626, 0.0
        %v691 = vadd.f32 %v627, 0.0
        %v692 = vadd.f32 %v628, 0.0
        %v693 = vadd.f32 %v629, 0.0
        %v694 = vadd.f32 %v630, 0.0
        %v695 = vadd.f32 %v631, 0.0
        %v696 = vadd.f32 %v632, 0.0
        %v697 = vadd.f32 %v633, 0.0
        %v698 = vadd.f32 %v634, 0.0
        %v699 = vadd.f32 %v635, 0.0
        %v700 = vadd.f32 %v636, 0.0
        %v701 = vadd.f32 %v637, 0.0
        %v702 = vadd.f32 %v638, 0.0
        %v703 = vadd.f32 %v639, 0.0
        %v704 = vadd.f32 %v640, 0.0
        %v705 = vadd.f32 %v641, 0.0
        %v706 = vadd.f32 %v642, 0.0
        %v707 = vadd.f32 %v643, 0.0
        %v708 = vadd.f32 %v644, 0.0
        %v709 = vadd.f32 %v645, 0.0
        %v710 = vadd.f32 %v646, 0.0
        %v711 = vadd.f32 %v647, 0.0
        %v712 = vadd.f32 %v648, 0.0
        %v713 = vadd.f32 %v649, 0.0
        %v714 = vadd.f32 %v650, 0.0
        %v715 = vadd.f32 %v651, 0.0
        %v716 = vadd.f32 %v652, 0.0
        %v717 = vadd.f32 %v653, 0.0
        %v718 = vadd.f32 %v654, 0.0
        %v719 = vadd.f32 %v655, 0.0
        %v720 = vadd.f32 %v656, 0.0
        %v721 = vadd.f32 %v657, 0.0
        %v722 = vadd.f32 %v658, 0.0
        %v723 = vadd.f32 %v659, 0.0
        %v724 = vadd.f32 %v660, 0.0
        %v725 = vadd.f32 %v661, 0.0
        %v726 = vadd.f32 %v662, 0.0
        %v727 = vadd.f32 %v663, 0.0
        %v728 = vadd.f32 %v664, 0.0
        %v729 = vadd.f32 %v665, 0.0
        %v730 = vadd.f32 %v666, 0.0
        %v731 = vadd.f32 %v667, 0.0
        %v732 = vadd.f32 %v668, 0.0
        %v733 = vadd.f32 %v669, 0.0
        %v734 = vadd.f32 %v670, 0.0
        %v735 = vadd.f32 %v671, 0.0
        %v736 = vadd.f32 %v672, 0.0
        %v737 = vadd.f32 %v673, 0.0
        %v738 = vadd.f32 %v674, 0.0
        %v739 = vadd.f32 %v675, 0.0
        %v740 = vadd.f32 %v676, 0.0
        %v741 = vadd.f32 %v677, 0.0
        %v742 = vadd.f32 %v678, 0.0
        %v743 = vadd.f32 %v679, 0.0
        %v744 = vadd.f32 %v680, 0.0
        %v745 = vadd.f32 %v681, 0.0
        %v746 = vld [vmem:[%s226 + $0x1] sm:$0xff]
        %v747 = vld [vmem:[%s226 + $0x9] sm:$0xff]
        %v748 = vld [vmem:[%s226 + $0x19] sm:$0xff]
        %v749 = vld [vmem:[%s226 + $0x21] sm:$0xff]
        %v750 = vld [vmem:[%s226 + $0x31] sm:$0xff]
        %v751 = vld [vmem:[%s226 + $0x39] sm:$0xff]
        %v752 = vld [vmem:[%s226 + $0x49] sm:$0xff]
        %v753 = vld [vmem:[%s226 + $0x51] sm:$0xff]
        %v754 = vld [vmem:[%s226 + $0x61] sm:$0xff]
        %v755 = vld [vmem:[%s226 + $0x69] sm:$0xff]
        %v756 = vld [vmem:[%s226 + $0x79] sm:$0xff]
        %v757 = vld [vmem:[%s226 + $0x81] sm:$0xff]
        %v758 = vld [vmem:[%s226 + $0x91] sm:$0xff]
        %v759 = vld [vmem:[%s226 + $0x99] sm:$0xff]
        %v760 = vld [vmem:[%s226 + $0xa9] sm:$0xff]
        %v761 = vld [vmem:[%s226 + $0xb1] sm:$0xff]
        %v762 = vld [vmem:[%s226 + $0xc1] sm:$0xff]
        %v763 = vld [vmem:[%s226 + $0xc9] sm:$0xff]
        %v764 = vld [vmem:[%s226 + $0xd9] sm:$0xff]
        %v765 = vld [vmem:[%s226 + $0xe1] sm:$0xff]
        %v766 = vld [vmem:[%s226 + $0xf1] sm:$0xff]
        %v767 = vld [vmem:[%s226 + $0xf9] sm:$0xff]
        %v768 = vld [vmem:[%s226 + $0x109] sm:$0xff]
        %v769 = vld [vmem:[%s226 + $0x111] sm:$0xff]
        %v770 = vld [vmem:[%s226 + $0x121] sm:$0xff]
        %v771 = vld [vmem:[%s226 + $0x129] sm:$0xff]
        %v772 = vld [vmem:[%s226 + $0x139] sm:$0xff]
        %v773 = vld [vmem:[%s226 + $0x141] sm:$0xff]
        %v774 = vld [vmem:[%s226 + $0x151] sm:$0xff]
        %v775 = vld [vmem:[%s226 + $0x159] sm:$0xff]
        %v776 = vld [vmem:[%s226 + $0x169] sm:$0xff]
        %v777 = vld [vmem:[%s226 + $0x171] sm:$0xff]
        %v778 = vld [vmem:[%s226 + $0x1b1] sm:$0xff]
        %v779 = vld [vmem:[%s226 + $0x1b9] sm:$0xff]
        %v780 = vld [vmem:[%s226 + $0x1c9] sm:$0xff]
        %v781 = vld [vmem:[%s226 + $0x1d1] sm:$0xff]
        %v782 = vld [vmem:[%s226 + $0x1e1] sm:$0xff]
        %v783 = vld [vmem:[%s226 + $0x1e9] sm:$0xff]
        %v784 = vld [vmem:[%s226 + $0x1f9] sm:$0xff]
        %v785 = vld [vmem:[%s226 + $0x201] sm:$0xff]
        %v786 = vld [vmem:[%s226 + $0x211] sm:$0xff]
        %v787 = vld [vmem:[%s226 + $0x219] sm:$0xff]
        %v788 = vld [vmem:[%s226 + $0x229] sm:$0xff]
        %v789 = vld [vmem:[%s226 + $0x231] sm:$0xff]
        %v790 = vld [vmem:[%s226 + $0x241] sm:$0xff]
        %v791 = vld [vmem:[%s226 + $0x249] sm:$0xff]
        %v792 = vld [vmem:[%s226 + $0x259] sm:$0xff]
        %v793 = vld [vmem:[%s226 + $0x261] sm:$0xff]
        %v794 = vld [vmem:[%s226 + $0x271] sm:$0xff]
        %v795 = vld [vmem:[%s226 + $0x279] sm:$0xff]
        %v796 = vld [vmem:[%s226 + $0x289] sm:$0xff]
        %v797 = vld [vmem:[%s226 + $0x291] sm:$0xff]
        %v798 = vld [vmem:[%s226 + $0x2a1] sm:$0xff]
        %v799 = vld [vmem:[%s226 + $0x2a9] sm:$0xff]
        %v800 = vld [vmem:[%s226 + $0x2b9] sm:$0xff]
        %v801 = vld [vmem:[%s226 + $0x2c1] sm:$0xff]
        %v802 = vld [vmem:[%s226 + $0x2d1] sm:$0xff]
        %v803 = vld [vmem:[%s226 + $0x2d9] sm:$0xff]
        %v804 = vld [vmem:[%s226 + $0x2e9] sm:$0xff]
        %v805 = vld [vmem:[%s226 + $0x2f1] sm:$0xff]
        %v806 = vld [vmem:[%s226 + $0x301] sm:$0xff]
        %v807 = vld [vmem:[%s226 + $0x309] sm:$0xff]
        %v808 = vld [vmem:[%s226 + $0x319] sm:$0xff]
        %v809 = vld [vmem:[%s226 + $0x321] sm:$0xff]
        %v810 = vld [vmem:[%s1 + $0x1] sm:$0x1]
        %812 = vset.pattern.permute.xlu0 0
        %813 = vperm.xlu0 %812, %v746
        %v814 = vpop.permute.xlu0 %813
        %817 = vset.pattern.permute.xlu0 0
        %818 = vperm.xlu0 %817, %v747
        %v819 = vpop.permute.xlu0 %818
        %822 = vset.pattern.permute.xlu0 0
        %823 = vperm.xlu0 %822, %v748
        %v824 = vpop.permute.xlu0 %823
        %827 = vset.pattern.permute.xlu0 0
        %828 = vperm.xlu0 %827, %v749
        %v829 = vpop.permute.xlu0 %828
        %832 = vset.pattern.permute.xlu0 0
        %833 = vperm.xlu0 %832, %v750
        %v834 = vpop.permute.xlu0 %833
        %837 = vset.pattern.permute.xlu0 0
        %838 = vperm.xlu0 %837, %v751
        %v839 = vpop.permute.xlu0 %838
        %842 = vset.pattern.permute.xlu0 0
        %843 = vperm.xlu0 %842, %v752
        %v844 = vpop.permute.xlu0 %843
        %847 = vset.pattern.permute.xlu0 0
        %848 = vperm.xlu0 %847, %v753
        %v849 = vpop.permute.xlu0 %848
        %852 = vset.pattern.permute.xlu0 0
        %853 = vperm.xlu0 %852, %v754
        %v854 = vpop.permute.xlu0 %853
        %857 = vset.pattern.permute.xlu0 0
        %858 = vperm.xlu0 %857, %v755
        %v859 = vpop.permute.xlu0 %858
        %862 = vset.pattern.permute.xlu0 0
        %863 = vperm.xlu0 %862, %v756
        %v864 = vpop.permute.xlu0 %863
        %867 = vset.pattern.permute.xlu0 0
        %868 = vperm.xlu0 %867, %v757
        %v869 = vpop.permute.xlu0 %868
        %872 = vset.pattern.permute.xlu0 0
        %873 = vperm.xlu0 %872, %v758
        %v874 = vpop.permute.xlu0 %873
        %877 = vset.pattern.permute.xlu0 0
        %878 = vperm.xlu0 %877, %v759
        %v879 = vpop.permute.xlu0 %878
        %882 = vset.pattern.permute.xlu0 0
        %883 = vperm.xlu0 %882, %v760
        %v884 = vpop.permute.xlu0 %883
        %887 = vset.pattern.permute.xlu0 0
        %888 = vperm.xlu0 %887, %v761
        %v889 = vpop.permute.xlu0 %888
        %892 = vset.pattern.permute.xlu0 0
        %893 = vperm.xlu0 %892, %v762
        %v894 = vpop.permute.xlu0 %893
        %897 = vset.pattern.permute.xlu0 0
        %898 = vperm.xlu0 %897, %v763
        %v899 = vpop.permute.xlu0 %898
        %902 = vset.pattern.permute.xlu0 0
        %903 = vperm.xlu0 %902, %v764
        %v904 = vpop.permute.xlu0 %903
        %907 = vset.pattern.permute.xlu0 0
        %908 = vperm.xlu0 %907, %v765
        %v909 = vpop.permute.xlu0 %908
        %912 = vset.pattern.permute.xlu0 0
        %913 = vperm.xlu0 %912, %v766
        %v914 = vpop.permute.xlu0 %913
        %917 = vset.pattern.permute.xlu0 0
        %918 = vperm.xlu0 %917, %v767
        %v919 = vpop.permute.xlu0 %918
        %922 = vset.pattern.permute.xlu0 0
        %923 = vperm.xlu0 %922, %v768
        %v924 = vpop.permute.xlu0 %923
        %927 = vset.pattern.permute.xlu0 0
        %928 = vperm.xlu0 %927, %v769
        %v929 = vpop.permute.xlu0 %928
        %932 = vset.pattern.permute.xlu0 0
        %933 = vperm.xlu0 %932, %v770
        %v934 = vpop.permute.xlu0 %933
        %937 = vset.pattern.permute.xlu0 0
        %938 = vperm.xlu0 %937, %v771
        %v939 = vpop.permute.xlu0 %938
        %942 = vset.pattern.permute.xlu0 0
        %943 = vperm.xlu0 %942, %v772
        %v944 = vpop.permute.xlu0 %943
        %947 = vset.pattern.permute.xlu0 0
        %948 = vperm.xlu0 %947, %v773
        %v949 = vpop.permute.xlu0 %948
        %952 = vset.pattern.permute.xlu0 0
        %953 = vperm.xlu0 %952, %v774
        %v954 = vpop.permute.xlu0 %953
        %957 = vset.pattern.permute.xlu0 0
        %958 = vperm.xlu0 %957, %v775
        %v959 = vpop.permute.xlu0 %958
        %962 = vset.pattern.permute.xlu0 0
        %963 = vperm.xlu0 %962, %v776
        %v964 = vpop.permute.xlu0 %963
        %967 = vset.pattern.permute.xlu0 0
        %968 = vperm.xlu0 %967, %v777
        %v969 = vpop.permute.xlu0 %968
        %972 = vset.pattern.permute.xlu0 0
        %973 = vperm.xlu0 %972, %v778
        %v974 = vpop.permute.xlu0 %973
        %977 = vset.pattern.permute.xlu0 0
        %978 = vperm.xlu0 %977, %v779
        %v979 = vpop.permute.xlu0 %978
        %982 = vset.pattern.permute.xlu0 0
        %983 = vperm.xlu0 %982, %v780
        %v984 = vpop.permute.xlu0 %983
        %987 = vset.pattern.permute.xlu0 0
        %988 = vperm.xlu0 %987, %v781
        %v989 = vpop.permute.xlu0 %988
        %992 = vset.pattern.permute.xlu0 0
        %993 = vperm.xlu0 %992, %v782
        %v994 = vpop.permute.xlu0 %993
        %997 = vset.pattern.permute.xlu0 0
        %998 = vperm.xlu0 %997, %v783
        %v999 = vpop.permute.xlu0 %998
        %1002 = vset.pattern.permute.xlu0 0
        %1003 = vperm.xlu0 %1002, %v784
        %v1004 = vpop.permute.xlu0 %1003
        %1007 = vset.pattern.permute.xlu0 0
        %1008 = vperm.xlu0 %1007, %v785
        %v1009 = vpop.permute.xlu0 %1008
        %1012 = vset.pattern.permute.xlu0 0
        %1013 = vperm.xlu0 %1012, %v786
        %v1014 = vpop.permute.xlu0 %1013
        %1017 = vset.pattern.permute.xlu0 0
        %1018 = vperm.xlu0 %1017, %v787
        %v1019 = vpop.permute.xlu0 %1018
        %1022 = vset.pattern.permute.xlu0 0
        %1023 = vperm.xlu0 %1022, %v788
        %v1024 = vpop.permute.xlu0 %1023
        %1027 = vset.pattern.permute.xlu0 0
        %1028 = vperm.xlu0 %1027, %v789
        %v1029 = vpop.permute.xlu0 %1028
        %1032 = vset.pattern.permute.xlu0 0
        %1033 = vperm.xlu0 %1032, %v790
        %v1034 = vpop.permute.xlu0 %1033
        %1037 = vset.pattern.permute.xlu0 0
        %1038 = vperm.xlu0 %1037, %v791
        %v1039 = vpop.permute.xlu0 %1038
        %1042 = vset.pattern.permute.xlu0 0
        %1043 = vperm.xlu0 %1042, %v792
        %v1044 = vpop.permute.xlu0 %1043
        %1047 = vset.pattern.permute.xlu0 0
        %1048 = vperm.xlu0 %1047, %v793
        %v1049 = vpop.permute.xlu0 %1048
        %1052 = vset.pattern.permute.xlu0 0
        %1053 = vperm.xlu0 %1052, %v794
        %v1054 = vpop.permute.xlu0 %1053
        %1057 = vset.pattern.permute.xlu0 0
        %1058 = vperm.xlu0 %1057, %v795
        %v1059 = vpop.permute.xlu0 %1058
        %1062 = vset.pattern.permute.xlu0 0
        %1063 = vperm.xlu0 %1062, %v796
        %v1064 = vpop.permute.xlu0 %1063
        %1067 = vset.pattern.permute.xlu0 0
        %1068 = vperm.xlu0 %1067, %v797
        %v1069 = vpop.permute.xlu0 %1068
        %1072 = vset.pattern.permute.xlu0 0
        %1073 = vperm.xlu0 %1072, %v798
        %v1074 = vpop.permute.xlu0 %1073
        %1077 = vset.pattern.permute.xlu0 0
        %1078 = vperm.xlu0 %1077, %v799
        %v1079 = vpop.permute.xlu0 %1078
        %1082 = vset.pattern.permute.xlu0 0
        %1083 = vperm.xlu0 %1082, %v800
        %v1084 = vpop.permute.xlu0 %1083
        %1087 = vset.pattern.permute.xlu0 0
        %1088 = vperm.xlu0 %1087, %v801
        %v1089 = vpop.permute.xlu0 %1088
        %1092 = vset.pattern.permute.xlu0 0
        %1093 = vperm.xlu0 %1092, %v802
        %v1094 = vpop.permute.xlu0 %1093
        %1097 = vset.pattern.permute.xlu0 0
        %1098 = vperm.xlu0 %1097, %v803
        %v1099 = vpop.permute.xlu0 %1098
        %1102 = vset.pattern.permute.xlu0 0
        %1103 = vperm.xlu0 %1102, %v804
        %v1104 = vpop.permute.xlu0 %1103
        %1107 = vset.pattern.permute.xlu0 0
        %1108 = vperm.xlu0 %1107, %v805
        %v1109 = vpop.permute.xlu0 %1108
        %1112 = vset.pattern.permute.xlu0 0
        %1113 = vperm.xlu0 %1112, %v806
        %v1114 = vpop.permute.xlu0 %1113
        %1117 = vset.pattern.permute.xlu0 0
        %1118 = vperm.xlu0 %1117, %v807
        %v1119 = vpop.permute.xlu0 %1118
        %1122 = vset.pattern.permute.xlu0 0
        %1123 = vperm.xlu0 %1122, %v808
        %v1124 = vpop.permute.xlu0 %1123
        %1127 = vset.pattern.permute.xlu0 0
        %1128 = vperm.xlu0 %1127, %v809
        %v1129 = vpop.permute.xlu0 %1128
        %v1131 = vlaneseq
        %v1132 = vshrl.u32 %v1131, 7
        %v1133 = vsub.s32 0, %v1132
        %v1134 = vrot.slane %v810, %v1133
        %v1135 = vmul.f32 %v814, %v1134
        %v1136 = vmul.f32 %v819, %v1134
        %v1137 = vmul.f32 %v824, %v1134
        %v1138 = vmul.f32 %v829, %v1134
        %v1139 = vmul.f32 %v834, %v1134
        %v1140 = vmul.f32 %v839, %v1134
        %v1141 = vmul.f32 %v844, %v1134
        %v1142 = vmul.f32 %v849, %v1134
        %v1143 = vmul.f32 %v854, %v1134
        %v1144 = vmul.f32 %v859, %v1134
        %v1145 = vmul.f32 %v864, %v1134
        %v1146 = vmul.f32 %v869, %v1134
        %v1147 = vmul.f32 %v874, %v1134
        %v1148 = vmul.f32 %v879, %v1134
        %v1149 = vmul.f32 %v884, %v1134
        %v1150 = vmul.f32 %v889, %v1134
        %v1151 = vmul.f32 %v894, %v1134
        %v1152 = vmul.f32 %v899, %v1134
        %v1153 = vmul.f32 %v904, %v1134
        %v1154 = vmul.f32 %v909, %v1134
        %v1155 = vmul.f32 %v914, %v1134
        %v1156 = vmul.f32 %v919, %v1134
        %v1157 = vmul.f32 %v924, %v1134
        %v1158 = vmul.f32 %v929, %v1134
        %v1159 = vmul.f32 %v934, %v1134
        %v1160 = vmul.f32 %v939, %v1134
        %v1161 = vmul.f32 %v944, %v1134
        %v1162 = vmul.f32 %v949, %v1134
        %v1163 = vmul.f32 %v954, %v1134
        %v1164 = vmul.f32 %v959, %v1134
        %v1165 = vmul.f32 %v964, %v1134
        %v1166 = vmul.f32 %v969, %v1134
        %v1167 = vmul.f32 %v974, %v1134
        %v1168 = vmul.f32 %v979, %v1134
        %v1169 = vmul.f32 %v984, %v1134
        %v1170 = vmul.f32 %v989, %v1134
        %v1171 = vmul.f32 %v994, %v1134
        %v1172 = vmul.f32 %v999, %v1134
        %v1173 = vmul.f32 %v1004, %v1134
        %v1174 = vmul.f32 %v1009, %v1134
        %v1175 = vmul.f32 %v1014, %v1134
        %v1176 = vmul.f32 %v1019, %v1134
        %v1177 = vmul.f32 %v1024, %v1134
        %v1178 = vmul.f32 %v1029, %v1134
        %v1179 = vmul.f32 %v1034, %v1134
        %v1180 = vmul.f32 %v1039, %v1134
        %v1181 = vmul.f32 %v1044, %v1134
        %v1182 = vmul.f32 %v1049, %v1134
        %v1183 = vmul.f32 %v1054, %v1134
        %v1184 = vmul.f32 %v1059, %v1134
        %v1185 = vmul.f32 %v1064, %v1134
        %v1186 = vmul.f32 %v1069, %v1134
        %v1187 = vmul.f32 %v1074, %v1134
        %v1188 = vmul.f32 %v1079, %v1134
        %v1189 = vmul.f32 %v1084, %v1134
        %v1190 = vmul.f32 %v1089, %v1134
        %v1191 = vmul.f32 %v1094, %v1134
        %v1192 = vmul.f32 %v1099, %v1134
        %v1193 = vmul.f32 %v1104, %v1134
        %v1194 = vmul.f32 %v1109, %v1134
        %v1195 = vmul.f32 %v1114, %v1134
        %v1196 = vmul.f32 %v1119, %v1134
        %v1197 = vmul.f32 %v1124, %v1134
        %v1198 = vmul.f32 %v1129, %v1134
        %v1199 = vadd.f32 %v682, %v1135
        %v1200 = vadd.f32 %v683, %v1136
        %v1201 = vadd.f32 %v684, %v1137
        %v1202 = vadd.f32 %v685, %v1138
        %v1203 = vadd.f32 %v686, %v1139
        %v1204 = vadd.f32 %v687, %v1140
        %v1205 = vadd.f32 %v688, %v1141
        %v1206 = vadd.f32 %v689, %v1142
        %v1207 = vadd.f32 %v690, %v1143
        %v1208 = vadd.f32 %v691, %v1144
        %v1209 = vadd.f32 %v692, %v1145
        %v1210 = vadd.f32 %v693, %v1146
        %v1211 = vadd.f32 %v694, %v1147
        %v1212 = vadd.f32 %v695, %v1148
        %v1213 = vadd.f32 %v696, %v1149
        %v1214 = vadd.f32 %v697, %v1150
        %v1215 = vadd.f32 %v698, %v1151
        %v1216 = vadd.f32 %v699, %v1152
        %v1217 = vadd.f32 %v700, %v1153
        %v1218 = vadd.f32 %v701, %v1154
        %v1219 = vadd.f32 %v702, %v1155
        %v1220 = vadd.f32 %v703, %v1156
        %v1221 = vadd.f32 %v704, %v1157
        %v1222 = vadd.f32 %v705, %v1158
        %v1223 = vadd.f32 %v706, %v1159
        %v1224 = vadd.f32 %v707, %v1160
        %v1225 = vadd.f32 %v708, %v1161
        %v1226 = vadd.f32 %v709, %v1162
        %v1227 = vadd.f32 %v710, %v1163
        %v1228 = vadd.f32 %v711, %v1164
        %v1229 = vadd.f32 %v712, %v1165
        %v1230 = vadd.f32 %v713, %v1166
        %v1231 = vadd.f32 %v714, %v1167
        %v1232 = vadd.f32 %v715, %v1168
        %v1233 = vadd.f32 %v716, %v1169
        %v1234 = vadd.f32 %v717, %v1170
        %v1235 = vadd.f32 %v718, %v1171
        %v1236 = vadd.f32 %v719, %v1172
        %v1237 = vadd.f32 %v720, %v1173
        %v1238 = vadd.f32 %v721, %v1174
        %v1239 = vadd.f32 %v722, %v1175
        %v1240 = vadd.f32 %v723, %v1176
        %v1241 = vadd.f32 %v724, %v1177
        %v1242 = vadd.f32 %v725, %v1178
        %v1243 = vadd.f32 %v726, %v1179
        %v1244 = vadd.f32 %v727, %v1180
        %v1245 = vadd.f32 %v728, %v1181
        %v1246 = vadd.f32 %v729, %v1182
        %v1247 = vadd.f32 %v730, %v1183
        %v1248 = vadd.f32 %v731, %v1184
        %v1249 = vadd.f32 %v732, %v1185
        %v1250 = vadd.f32 %v733, %v1186
        %v1251 = vadd.f32 %v734, %v1187
        %v1252 = vadd.f32 %v735, %v1188
        %v1253 = vadd.f32 %v736, %v1189
        %v1254 = vadd.f32 %v737, %v1190
        %v1255 = vadd.f32 %v738, %v1191
        %v1256 = vadd.f32 %v739, %v1192
        %v1257 = vadd.f32 %v740, %v1193
        %v1258 = vadd.f32 %v741, %v1194
        %v1259 = vadd.f32 %v742, %v1195
        %v1260 = vadd.f32 %v743, %v1196
        %v1261 = vadd.f32 %v744, %v1197
        %v1262 = vadd.f32 %v745, %v1198
        %v1263 = vld [vmem:[%s226 + $0x2] sm:$0xff]
        %v1264 = vld [vmem:[%s226 + $0xa] sm:$0xff]
        %v1265 = vld [vmem:[%s226 + $0x1a] sm:$0xff]
        %v1266 = vld [vmem:[%s226 + $0x22] sm:$0xff]
        %v1267 = vld [vmem:[%s226 + $0x32] sm:$0xff]
        %v1268 = vld [vmem:[%s226 + $0x3a] sm:$0xff]
        %v1269 = vld [vmem:[%s226 + $0x4a] sm:$0xff]
        %v1270 = vld [vmem:[%s226 + $0x52] sm:$0xff]
        %v1271 = vld [vmem:[%s226 + $0x62] sm:$0xff]
        %v1272 = vld [vmem:[%s226 + $0x6a] sm:$0xff]
        %v1273 = vld [vmem:[%s226 + $0x7a] sm:$0xff]
        %v1274 = vld [vmem:[%s226 + $0x82] sm:$0xff]
        %v1275 = vld [vmem:[%s226 + $0x92] sm:$0xff]
        %v1276 = vld [vmem:[%s226 + $0x9a] sm:$0xff]
        %v1277 = vld [vmem:[%s226 + $0xaa] sm:$0xff]
        %v1278 = vld [vmem:[%s226 + $0xb2] sm:$0xff]
        %v1279 = vld [vmem:[%s226 + $0xc2] sm:$0xff]
        %v1280 = vld [vmem:[%s226 + $0xca] sm:$0xff]
        %v1281 = vld [vmem:[%s226 + $0xda] sm:$0xff]
        %v1282 = vld [vmem:[%s226 + $0xe2] sm:$0xff]
        %v1283 = vld [vmem:[%s226 + $0xf2] sm:$0xff]
        %v1284 = vld [vmem:[%s226 + $0xfa] sm:$0xff]
        %v1285 = vld [vmem:[%s226 + $0x10a] sm:$0xff]
        %v1286 = vld [vmem:[%s226 + $0x112] sm:$0xff]
        %v1287 = vld [vmem:[%s226 + $0x122] sm:$0xff]
        %v1288 = vld [vmem:[%s226 + $0x12a] sm:$0xff]
        %v1289 = vld [vmem:[%s226 + $0x13a] sm:$0xff]
        %v1290 = vld [vmem:[%s226 + $0x142] sm:$0xff]
        %v1291 = vld [vmem:[%s226 + $0x152] sm:$0xff]
        %v1292 = vld [vmem:[%s226 + $0x15a] sm:$0xff]
        %v1293 = vld [vmem:[%s226 + $0x16a] sm:$0xff]
        %v1294 = vld [vmem:[%s226 + $0x172] sm:$0xff]
        %v1295 = vld [vmem:[%s226 + $0x1b2] sm:$0xff]
        %v1296 = vld [vmem:[%s226 + $0x1ba] sm:$0xff]
        %v1297 = vld [vmem:[%s226 + $0x1ca] sm:$0xff]
        %v1298 = vld [vmem:[%s226 + $0x1d2] sm:$0xff]
        %v1299 = vld [vmem:[%s226 + $0x1e2] sm:$0xff]
        %v1300 = vld [vmem:[%s226 + $0x1ea] sm:$0xff]
        %v1301 = vld [vmem:[%s226 + $0x1fa] sm:$0xff]
        %v1302 = vld [vmem:[%s226 + $0x202] sm:$0xff]
        %v1303 = vld [vmem:[%s226 + $0x212] sm:$0xff]
        %v1304 = vld [vmem:[%s226 + $0x21a] sm:$0xff]
        %v1305 = vld [vmem:[%s226 + $0x22a] sm:$0xff]
        %v1306 = vld [vmem:[%s226 + $0x232] sm:$0xff]
        %v1307 = vld [vmem:[%s226 + $0x242] sm:$0xff]
        %v1308 = vld [vmem:[%s226 + $0x24a] sm:$0xff]
        %v1309 = vld [vmem:[%s226 + $0x25a] sm:$0xff]
        %v1310 = vld [vmem:[%s226 + $0x262] sm:$0xff]
        %v1311 = vld [vmem:[%s226 + $0x272] sm:$0xff]
        %v1312 = vld [vmem:[%s226 + $0x27a] sm:$0xff]
        %v1313 = vld [vmem:[%s226 + $0x28a] sm:$0xff]
        %v1314 = vld [vmem:[%s226 + $0x292] sm:$0xff]
        %v1315 = vld [vmem:[%s226 + $0x2a2] sm:$0xff]
        %v1316 = vld [vmem:[%s226 + $0x2aa] sm:$0xff]
        %v1317 = vld [vmem:[%s226 + $0x2ba] sm:$0xff]
        %v1318 = vld [vmem:[%s226 + $0x2c2] sm:$0xff]
        %v1319 = vld [vmem:[%s226 + $0x2d2] sm:$0xff]
        %v1320 = vld [vmem:[%s226 + $0x2da] sm:$0xff]
        %v1321 = vld [vmem:[%s226 + $0x2ea] sm:$0xff]
        %v1322 = vld [vmem:[%s226 + $0x2f2] sm:$0xff]
        %v1323 = vld [vmem:[%s226 + $0x302] sm:$0xff]
        %v1324 = vld [vmem:[%s226 + $0x30a] sm:$0xff]
        %v1325 = vld [vmem:[%s226 + $0x31a] sm:$0xff]
        %v1326 = vld [vmem:[%s226 + $0x322] sm:$0xff]
        %v1327 = vld [vmem:[%s1 + $0x2] sm:$0x1]
        %1329 = vset.pattern.permute.xlu0 0
        %1330 = vperm.xlu0 %1329, %v1263
        %v1331 = vpop.permute.xlu0 %1330
        %1334 = vset.pattern.permute.xlu0 0
        %1335 = vperm.xlu0 %1334, %v1264
        %v1336 = vpop.permute.xlu0 %1335
        %1339 = vset.pattern.permute.xlu0 0
        %1340 = vperm.xlu0 %1339, %v1265
        %v1341 = vpop.permute.xlu0 %1340
        %1344 = vset.pattern.permute.xlu0 0
        %1345 = vperm.xlu0 %1344, %v1266
        %v1346 = vpop.permute.xlu0 %1345
        %1349 = vset.pattern.permute.xlu0 0
        %1350 = vperm.xlu0 %1349, %v1267
        %v1351 = vpop.permute.xlu0 %1350
        %1354 = vset.pattern.permute.xlu0 0
        %1355 = vperm.xlu0 %1354, %v1268
        %v1356 = vpop.permute.xlu0 %1355
        %1359 = vset.pattern.permute.xlu0 0
        %1360 = vperm.xlu0 %1359, %v1269
        %v1361 = vpop.permute.xlu0 %1360
        %1364 = vset.pattern.permute.xlu0 0
        %1365 = vperm.xlu0 %1364, %v1270
        %v1366 = vpop.permute.xlu0 %1365
        %1369 = vset.pattern.permute.xlu0 0
        %1370 = vperm.xlu0 %1369, %v1271
        %v1371 = vpop.permute.xlu0 %1370
        %1374 = vset.pattern.permute.xlu0 0
        %1375 = vperm.xlu0 %1374, %v1272
        %v1376 = vpop.permute.xlu0 %1375
        %1379 = vset.pattern.permute.xlu0 0
        %1380 = vperm.xlu0 %1379, %v1273
        %v1381 = vpop.permute.xlu0 %1380
        %1384 = vset.pattern.permute.xlu0 0
        %1385 = vperm.xlu0 %1384, %v1274
        %v1386 = vpop.permute.xlu0 %1385
        %1389 = vset.pattern.permute.xlu0 0
        %1390 = vperm.xlu0 %1389, %v1275
        %v1391 = vpop.permute.xlu0 %1390
        %1394 = vset.pattern.permute.xlu0 0
        %1395 = vperm.xlu0 %1394, %v1276
        %v1396 = vpop.permute.xlu0 %1395
        %1399 = vset.pattern.permute.xlu0 0
        %1400 = vperm.xlu0 %1399, %v1277
        %v1401 = vpop.permute.xlu0 %1400
        %1404 = vset.pattern.permute.xlu0 0
        %1405 = vperm.xlu0 %1404, %v1278
        %v1406 = vpop.permute.xlu0 %1405
        %1409 = vset.pattern.permute.xlu0 0
        %1410 = vperm.xlu0 %1409, %v1279
        %v1411 = vpop.permute.xlu0 %1410
        %1414 = vset.pattern.permute.xlu0 0
        %1415 = vperm.xlu0 %1414, %v1280
        %v1416 = vpop.permute.xlu0 %1415
        %1419 = vset.pattern.permute.xlu0 0
        %1420 = vperm.xlu0 %1419, %v1281
        %v1421 = vpop.permute.xlu0 %1420
        %1424 = vset.pattern.permute.xlu0 0
        %1425 = vperm.xlu0 %1424, %v1282
        %v1426 = vpop.permute.xlu0 %1425
        %1429 = vset.pattern.permute.xlu0 0
        %1430 = vperm.xlu0 %1429, %v1283
        %v1431 = vpop.permute.xlu0 %1430
        %1434 = vset.pattern.permute.xlu0 0
        %1435 = vperm.xlu0 %1434, %v1284
        %v1436 = vpop.permute.xlu0 %1435
        %1439 = vset.pattern.permute.xlu0 0
        %1440 = vperm.xlu0 %1439, %v1285
        %v1441 = vpop.permute.xlu0 %1440
        %1444 = vset.pattern.permute.xlu0 0
        %1445 = vperm.xlu0 %1444, %v1286
        %v1446 = vpop.permute.xlu0 %1445
        %1449 = vset.pattern.permute.xlu0 0
        %1450 = vperm.xlu0 %1449, %v1287
        %v1451 = vpop.permute.xlu0 %1450
        %1454 = vset.pattern.permute.xlu0 0
        %1455 = vperm.xlu0 %1454, %v1288
        %v1456 = vpop.permute.xlu0 %1455
        %1459 = vset.pattern.permute.xlu0 0
        %1460 = vperm.xlu0 %1459, %v1289
        %v1461 = vpop.permute.xlu0 %1460
        %1464 = vset.pattern.permute.xlu0 0
        %1465 = vperm.xlu0 %1464, %v1290
        %v1466 = vpop.permute.xlu0 %1465
        %1469 = vset.pattern.permute.xlu0 0
        %1470 = vperm.xlu0 %1469, %v1291
        %v1471 = vpop.permute.xlu0 %1470
        %1474 = vset.pattern.permute.xlu0 0
        %1475 = vperm.xlu0 %1474, %v1292
        %v1476 = vpop.permute.xlu0 %1475
        %1479 = vset.pattern.permute.xlu0 0
        %1480 = vperm.xlu0 %1479, %v1293
        %v1481 = vpop.permute.xlu0 %1480
        %1484 = vset.pattern.permute.xlu0 0
        %1485 = vperm.xlu0 %1484, %v1294
        %v1486 = vpop.permute.xlu0 %1485
        %1489 = vset.pattern.permute.xlu0 0
        %1490 = vperm.xlu0 %1489, %v1295
        %v1491 = vpop.permute.xlu0 %1490
        %1494 = vset.pattern.permute.xlu0 0
        %1495 = vperm.xlu0 %1494, %v1296
        %v1496 = vpop.permute.xlu0 %1495
        %1499 = vset.pattern.permute.xlu0 0
        %1500 = vperm.xlu0 %1499, %v1297
        %v1501 = vpop.permute.xlu0 %1500
        %1504 = vset.pattern.permute.xlu0 0
        %1505 = vperm.xlu0 %1504, %v1298
        %v1506 = vpop.permute.xlu0 %1505
        %1509 = vset.pattern.permute.xlu0 0
        %1510 = vperm.xlu0 %1509, %v1299
        %v1511 = vpop.permute.xlu0 %1510
        %1514 = vset.pattern.permute.xlu0 0
        %1515 = vperm.xlu0 %1514, %v1300
        %v1516 = vpop.permute.xlu0 %1515
        %1519 = vset.pattern.permute.xlu0 0
        %1520 = vperm.xlu0 %1519, %v1301
        %v1521 = vpop.permute.xlu0 %1520
        %1524 = vset.pattern.permute.xlu0 0
        %1525 = vperm.xlu0 %1524, %v1302
        %v1526 = vpop.permute.xlu0 %1525
        %1529 = vset.pattern.permute.xlu0 0
        %1530 = vperm.xlu0 %1529, %v1303
        %v1531 = vpop.permute.xlu0 %1530
        %1534 = vset.pattern.permute.xlu0 0
        %1535 = vperm.xlu0 %1534, %v1304
        %v1536 = vpop.permute.xlu0 %1535
        %1539 = vset.pattern.permute.xlu0 0
        %1540 = vperm.xlu0 %1539, %v1305
        %v1541 = vpop.permute.xlu0 %1540
        %1544 = vset.pattern.permute.xlu0 0
        %1545 = vperm.xlu0 %1544, %v1306
        %v1546 = vpop.permute.xlu0 %1545
        %1549 = vset.pattern.permute.xlu0 0
        %1550 = vperm.xlu0 %1549, %v1307
        %v1551 = vpop.permute.xlu0 %1550
        %1554 = vset.pattern.permute.xlu0 0
        %1555 = vperm.xlu0 %1554, %v1308
        %v1556 = vpop.permute.xlu0 %1555
        %1559 = vset.pattern.permute.xlu0 0
        %1560 = vperm.xlu0 %1559, %v1309
        %v1561 = vpop.permute.xlu0 %1560
        %1564 = vset.pattern.permute.xlu0 0
        %1565 = vperm.xlu0 %1564, %v1310
        %v1566 = vpop.permute.xlu0 %1565
        %1569 = vset.pattern.permute.xlu0 0
        %1570 = vperm.xlu0 %1569, %v1311
        %v1571 = vpop.permute.xlu0 %1570
        %1574 = vset.pattern.permute.xlu0 0
        %1575 = vperm.xlu0 %1574, %v1312
        %v1576 = vpop.permute.xlu0 %1575
        %1579 = vset.pattern.permute.xlu0 0
        %1580 = vperm.xlu0 %1579, %v1313
        %v1581 = vpop.permute.xlu0 %1580
        %1584 = vset.pattern.permute.xlu0 0
        %1585 = vperm.xlu0 %1584, %v1314
        %v1586 = vpop.permute.xlu0 %1585
        %1589 = vset.pattern.permute.xlu0 0
        %1590 = vperm.xlu0 %1589, %v1315
        %v1591 = vpop.permute.xlu0 %1590
        %1594 = vset.pattern.permute.xlu0 0
        %1595 = vperm.xlu0 %1594, %v1316
        %v1596 = vpop.permute.xlu0 %1595
        %1599 = vset.pattern.permute.xlu0 0
        %1600 = vperm.xlu0 %1599, %v1317
        %v1601 = vpop.permute.xlu0 %1600
        %1604 = vset.pattern.permute.xlu0 0
        %1605 = vperm.xlu0 %1604, %v1318
        %v1606 = vpop.permute.xlu0 %1605
        %1609 = vset.pattern.permute.xlu0 0
        %1610 = vperm.xlu0 %1609, %v1319
        %v1611 = vpop.permute.xlu0 %1610
        %1614 = vset.pattern.permute.xlu0 0
        %1615 = vperm.xlu0 %1614, %v1320
        %v1616 = vpop.permute.xlu0 %1615
        %1619 = vset.pattern.permute.xlu0 0
        %1620 = vperm.xlu0 %1619, %v1321
        %v1621 = vpop.permute.xlu0 %1620
        %1624 = vset.pattern.permute.xlu0 0
        %1625 = vperm.xlu0 %1624, %v1322
        %v1626 = vpop.permute.xlu0 %1625
        %1629 = vset.pattern.permute.xlu0 0
        %1630 = vperm.xlu0 %1629, %v1323
        %v1631 = vpop.permute.xlu0 %1630
        %1634 = vset.pattern.permute.xlu0 0
        %1635 = vperm.xlu0 %1634, %v1324
        %v1636 = vpop.permute.xlu0 %1635
        %1639 = vset.pattern.permute.xlu0 0
        %1640 = vperm.xlu0 %1639, %v1325
        %v1641 = vpop.permute.xlu0 %1640
        %1644 = vset.pattern.permute.xlu0 0
        %1645 = vperm.xlu0 %1644, %v1326
        %v1646 = vpop.permute.xlu0 %1645
        %v1648 = vlaneseq
        %v1649 = vshrl.u32 %v1648, 7
        %v1650 = vsub.s32 0, %v1649
        %v1651 = vrot.slane %v1327, %v1650
        %v1652 = vmul.f32 %v1331, %v1651
        %v1653 = vmul.f32 %v1336, %v1651
        %v1654 = vmul.f32 %v1341, %v1651
        %v1655 = vmul.f32 %v1346, %v1651
        %v1656 = vmul.f32 %v1351, %v1651
        %v1657 = vmul.f32 %v1356, %v1651
        %v1658 = vmul.f32 %v1361, %v1651
        %v1659 = vmul.f32 %v1366, %v1651
        %v1660 = vmul.f32 %v1371, %v1651
        %v1661 = vmul.f32 %v1376, %v1651
        %v1662 = vmul.f32 %v1381, %v1651
        %v1663 = vmul.f32 %v1386, %v1651
        %v1664 = vmul.f32 %v1391, %v1651
        %v1665 = vmul.f32 %v1396, %v1651
        %v1666 = vmul.f32 %v1401, %v1651
        %v1667 = vmul.f32 %v1406, %v1651
        %v1668 = vmul.f32 %v1411, %v1651
        %v1669 = vmul.f32 %v1416, %v1651
        %v1670 = vmul.f32 %v1421, %v1651
        %v1671 = vmul.f32 %v1426, %v1651
        %v1672 = vmul.f32 %v1431, %v1651
        %v1673 = vmul.f32 %v1436, %v1651
        %v1674 = vmul.f32 %v1441, %v1651
        %v1675 = vmul.f32 %v1446, %v1651
        %v1676 = vmul.f32 %v1451, %v1651
        %v1677 = vmul.f32 %v1456, %v1651
        %v1678 = vmul.f32 %v1461, %v1651
        %v1679 = vmul.f32 %v1466, %v1651
        %v1680 = vmul.f32 %v1471, %v1651
        %v1681 = vmul.f32 %v1476, %v1651
        %v1682 = vmul.f32 %v1481, %v1651
        %v1683 = vmul.f32 %v1486, %v1651
        %v1684 = vmul.f32 %v1491, %v1651
        %v1685 = vmul.f32 %v1496, %v1651
        %v1686 = vmul.f32 %v1501, %v1651
        %v1687 = vmul.f32 %v1506, %v1651
        %v1688 = vmul.f32 %v1511, %v1651
        %v1689 = vmul.f32 %v1516, %v1651
        %v1690 = vmul.f32 %v1521, %v1651
        %v1691 = vmul.f32 %v1526, %v1651
        %v1692 = vmul.f32 %v1531, %v1651
        %v1693 = vmul.f32 %v1536, %v1651
        %v1694 = vmul.f32 %v1541, %v1651
        %v1695 = vmul.f32 %v1546, %v1651
        %v1696 = vmul.f32 %v1551, %v1651
        %v1697 = vmul.f32 %v1556, %v1651
        %v1698 = vmul.f32 %v1561, %v1651
        %v1699 = vmul.f32 %v1566, %v1651
        %v1700 = vmul.f32 %v1571, %v1651
        %v1701 = vmul.f32 %v1576, %v1651
        %v1702 = vmul.f32 %v1581, %v1651
        %v1703 = vmul.f32 %v1586, %v1651
        %v1704 = vmul.f32 %v1591, %v1651
        %v1705 = vmul.f32 %v1596, %v1651
        %v1706 = vmul.f32 %v1601, %v1651
        %v1707 = vmul.f32 %v1606, %v1651
        %v1708 = vmul.f32 %v1611, %v1651
        %v1709 = vmul.f32 %v1616, %v1651
        %v1710 = vmul.f32 %v1621, %v1651
        %v1711 = vmul.f32 %v1626, %v1651
        %v1712 = vmul.f32 %v1631, %v1651
        %v1713 = vmul.f32 %v1636, %v1651
        %v1714 = vmul.f32 %v1641, %v1651
        %v1715 = vmul.f32 %v1646, %v1651
        %v1716 = vadd.f32 %v1199, %v1652
        %v1717 = vadd.f32 %v1200, %v1653
        %v1718 = vadd.f32 %v1201, %v1654
        %v1719 = vadd.f32 %v1202, %v1655
        %v1720 = vadd.f32 %v1203, %v1656
        %v1721 = vadd.f32 %v1204, %v1657
        %v1722 = vadd.f32 %v1205, %v1658
        %v1723 = vadd.f32 %v1206, %v1659
        %v1724 = vadd.f32 %v1207, %v1660
        %v1725 = vadd.f32 %v1208, %v1661
        %v1726 = vadd.f32 %v1209, %v1662
        %v1727 = vadd.f32 %v1210, %v1663
        %v1728 = vadd.f32 %v1211, %v1664
        %v1729 = vadd.f32 %v1212, %v1665
        %v1730 = vadd.f32 %v1213, %v1666
        %v1731 = vadd.f32 %v1214, %v1667
        %v1732 = vadd.f32 %v1215, %v1668
        %v1733 = vadd.f32 %v1216, %v1669
        %v1734 = vadd.f32 %v1217, %v1670
        %v1735 = vadd.f32 %v1218, %v1671
        %v1736 = vadd.f32 %v1219, %v1672
        %v1737 = vadd.f32 %v1220, %v1673
        %v1738 = vadd.f32 %v1221, %v1674
        %v1739 = vadd.f32 %v1222, %v1675
        %v1740 = vadd.f32 %v1223, %v1676
        %v1741 = vadd.f32 %v1224, %v1677
        %v1742 = vadd.f32 %v1225, %v1678
        %v1743 = vadd.f32 %v1226, %v1679
        %v1744 = vadd.f32 %v1227, %v1680
        %v1745 = vadd.f32 %v1228, %v1681
        %v1746 = vadd.f32 %v1229, %v1682
        %v1747 = vadd.f32 %v1230, %v1683
        %v1748 = vadd.f32 %v1231, %v1684
        %v1749 = vadd.f32 %v1232, %v1685
        %v1750 = vadd.f32 %v1233, %v1686
        %v1751 = vadd.f32 %v1234, %v1687
        %v1752 = vadd.f32 %v1235, %v1688
        %v1753 = vadd.f32 %v1236, %v1689
        %v1754 = vadd.f32 %v1237, %v1690
        %v1755 = vadd.f32 %v1238, %v1691
        %v1756 = vadd.f32 %v1239, %v1692
        %v1757 = vadd.f32 %v1240, %v1693
        %v1758 = vadd.f32 %v1241, %v1694
        %v1759 = vadd.f32 %v1242, %v1695
        %v1760 = vadd.f32 %v1243, %v1696
        %v1761 = vadd.f32 %v1244, %v1697
        %v1762 = vadd.f32 %v1245, %v1698
        %v1763 = vadd.f32 %v1246, %v1699
        %v1764 = vadd.f32 %v1247, %v1700
        %v1765 = vadd.f32 %v1248, %v1701
        %v1766 = vadd.f32 %v1249, %v1702
        %v1767 = vadd.f32 %v1250, %v1703
        %v1768 = vadd.f32 %v1251, %v1704
        %v1769 = vadd.f32 %v1252, %v1705
        %v1770 = vadd.f32 %v1253, %v1706
        %v1771 = vadd.f32 %v1254, %v1707
        %v1772 = vadd.f32 %v1255, %v1708
        %v1773 = vadd.f32 %v1256, %v1709
        %v1774 = vadd.f32 %v1257, %v1710
        %v1775 = vadd.f32 %v1258, %v1711
        %v1776 = vadd.f32 %v1259, %v1712
        %v1777 = vadd.f32 %v1260, %v1713
        %v1778 = vadd.f32 %v1261, %v1714
        %v1779 = vadd.f32 %v1262, %v1715
        %s1780 = scalar_lea.vmem %s226, 24
        %v1781 = vld [vmem:[%s1780] sm:$0xff]
        %v1782 = vld [vmem:[%s1780 + $0x8] sm:$0xff]
        %v1783 = vld [vmem:[%s1780 + $0x18] sm:$0xff]
        %v1784 = vld [vmem:[%s1780 + $0x20] sm:$0xff]
        %v1785 = vld [vmem:[%s1780 + $0x30] sm:$0xff]
        %v1786 = vld [vmem:[%s1780 + $0x38] sm:$0xff]
        %v1787 = vld [vmem:[%s1780 + $0x48] sm:$0xff]
        %v1788 = vld [vmem:[%s1780 + $0x50] sm:$0xff]
        %v1789 = vld [vmem:[%s1780 + $0x60] sm:$0xff]
        %v1790 = vld [vmem:[%s1780 + $0x68] sm:$0xff]
        %v1791 = vld [vmem:[%s1780 + $0x78] sm:$0xff]
        %v1792 = vld [vmem:[%s1780 + $0x80] sm:$0xff]
        %v1793 = vld [vmem:[%s1780 + $0x90] sm:$0xff]
        %v1794 = vld [vmem:[%s1780 + $0x98] sm:$0xff]
        %v1795 = vld [vmem:[%s1780 + $0xa8] sm:$0xff]
        %v1796 = vld [vmem:[%s1780 + $0xb0] sm:$0xff]
        %v1797 = vld [vmem:[%s1780 + $0xc0] sm:$0xff]
        %v1798 = vld [vmem:[%s1780 + $0xc8] sm:$0xff]
        %v1799 = vld [vmem:[%s1780 + $0xd8] sm:$0xff]
        %v1800 = vld [vmem:[%s1780 + $0xe0] sm:$0xff]
        %v1801 = vld [vmem:[%s1780 + $0xf0] sm:$0xff]
        %v1802 = vld [vmem:[%s1780 + $0xf8] sm:$0xff]
        %v1803 = vld [vmem:[%s1780 + $0x108] sm:$0xff]
        %v1804 = vld [vmem:[%s1780 + $0x110] sm:$0xff]
        %v1805 = vld [vmem:[%s1780 + $0x120] sm:$0xff]
        %v1806 = vld [vmem:[%s1780 + $0x128] sm:$0xff]
        %v1807 = vld [vmem:[%s1780 + $0x138] sm:$0xff]
        %v1808 = vld [vmem:[%s1780 + $0x140] sm:$0xff]
        %v1809 = vld [vmem:[%s1780 + $0x150] sm:$0xff]
        %v1810 = vld [vmem:[%s1780 + $0x158] sm:$0xff]
        %v1811 = vld [vmem:[%s1780 + $0x168] sm:$0xff]
        %v1812 = vld [vmem:[%s1780 + $0x170] sm:$0xff]
        %v1813 = vld [vmem:[%s1780 + $0x1b0] sm:$0xff]
        %v1814 = vld [vmem:[%s1780 + $0x1b8] sm:$0xff]
        %v1815 = vld [vmem:[%s1780 + $0x1c8] sm:$0xff]
        %v1816 = vld [vmem:[%s1780 + $0x1d0] sm:$0xff]
        %v1817 = vld [vmem:[%s1780 + $0x1e0] sm:$0xff]
        %v1818 = vld [vmem:[%s1780 + $0x1e8] sm:$0xff]
        %v1819 = vld [vmem:[%s1780 + $0x1f8] sm:$0xff]
        %v1820 = vld [vmem:[%s1780 + $0x200] sm:$0xff]
        %v1821 = vld [vmem:[%s1780 + $0x210] sm:$0xff]
        %v1822 = vld [vmem:[%s1780 + $0x218] sm:$0xff]
        %v1823 = vld [vmem:[%s1780 + $0x228] sm:$0xff]
        %v1824 = vld [vmem:[%s1780 + $0x230] sm:$0xff]
        %v1825 = vld [vmem:[%s1780 + $0x240] sm:$0xff]
        %v1826 = vld [vmem:[%s1780 + $0x248] sm:$0xff]
        %v1827 = vld [vmem:[%s1780 + $0x258] sm:$0xff]
        %v1828 = vld [vmem:[%s1780 + $0x260] sm:$0xff]
        %v1829 = vld [vmem:[%s1780 + $0x270] sm:$0xff]
        %v1830 = vld [vmem:[%s1780 + $0x278] sm:$0xff]
        %v1831 = vld [vmem:[%s1780 + $0x288] sm:$0xff]
        %v1832 = vld [vmem:[%s1780 + $0x290] sm:$0xff]
        %v1833 = vld [vmem:[%s1780 + $0x2a0] sm:$0xff]
        %v1834 = vld [vmem:[%s1780 + $0x2a8] sm:$0xff]
        %v1835 = vld [vmem:[%s1780 + $0x2b8] sm:$0xff]
        %v1836 = vld [vmem:[%s1780 + $0x2c0] sm:$0xff]
        %v1837 = vld [vmem:[%s1780 + $0x2d0] sm:$0xff]
        %v1838 = vld [vmem:[%s1780 + $0x2d8] sm:$0xff]
        %v1839 = vld [vmem:[%s1780 + $0x2e8] sm:$0xff]
        %v1840 = vld [vmem:[%s1780 + $0x2f0] sm:$0xff]
        %v1841 = vld [vmem:[%s1780 + $0x300] sm:$0xff]
        %v1842 = vld [vmem:[%s1780 + $0x308] sm:$0xff]
        %v1843 = vld [vmem:[%s1780 + $0x318] sm:$0xff]
        %v1844 = vld [vmem:[%s1780 + $0x320] sm:$0xff]
        %v1845 = vld [vmem:[%s1 + $0x3] sm:$0x1]
        %1847 = vset.pattern.permute.xlu0 0
        %1848 = vperm.xlu0 %1847, %v1781
        %v1849 = vpop.permute.xlu0 %1848
        %1852 = vset.pattern.permute.xlu0 0
        %1853 = vperm.xlu0 %1852, %v1782
        %v1854 = vpop.permute.xlu0 %1853
        %1857 = vset.pattern.permute.xlu0 0
        %1858 = vperm.xlu0 %1857, %v1783
        %v1859 = vpop.permute.xlu0 %1858
        %1862 = vset.pattern.permute.xlu0 0
        %1863 = vperm.xlu0 %1862, %v1784
        %v1864 = vpop.permute.xlu0 %1863
        %1867 = vset.pattern.permute.xlu0 0
        %1868 = vperm.xlu0 %1867, %v1785
        %v1869 = vpop.permute.xlu0 %1868
        %1872 = vset.pattern.permute.xlu0 0
        %1873 = vperm.xlu0 %1872, %v1786
        %v1874 = vpop.permute.xlu0 %1873
        %1877 = vset.pattern.permute.xlu0 0
        %1878 = vperm.xlu0 %1877, %v1787
        %v1879 = vpop.permute.xlu0 %1878
        %1882 = vset.pattern.permute.xlu0 0
        %1883 = vperm.xlu0 %1882, %v1788
        %v1884 = vpop.permute.xlu0 %1883
        %1887 = vset.pattern.permute.xlu0 0
        %1888 = vperm.xlu0 %1887, %v1789
        %v1889 = vpop.permute.xlu0 %1888
        %1892 = vset.pattern.permute.xlu0 0
        %1893 = vperm.xlu0 %1892, %v1790
        %v1894 = vpop.permute.xlu0 %1893
        %1897 = vset.pattern.permute.xlu0 0
        %1898 = vperm.xlu0 %1897, %v1791
        %v1899 = vpop.permute.xlu0 %1898
        %1902 = vset.pattern.permute.xlu0 0
        %1903 = vperm.xlu0 %1902, %v1792
        %v1904 = vpop.permute.xlu0 %1903
        %1907 = vset.pattern.permute.xlu0 0
        %1908 = vperm.xlu0 %1907, %v1793
        %v1909 = vpop.permute.xlu0 %1908
        %1912 = vset.pattern.permute.xlu0 0
        %1913 = vperm.xlu0 %1912, %v1794
        %v1914 = vpop.permute.xlu0 %1913
        %1917 = vset.pattern.permute.xlu0 0
        %1918 = vperm.xlu0 %1917, %v1795
        %v1919 = vpop.permute.xlu0 %1918
        %1922 = vset.pattern.permute.xlu0 0
        %1923 = vperm.xlu0 %1922, %v1796
        %v1924 = vpop.permute.xlu0 %1923
        %1927 = vset.pattern.permute.xlu0 0
        %1928 = vperm.xlu0 %1927, %v1797
        %v1929 = vpop.permute.xlu0 %1928
        %1932 = vset.pattern.permute.xlu0 0
        %1933 = vperm.xlu0 %1932, %v1798
        %v1934 = vpop.permute.xlu0 %1933
        %1937 = vset.pattern.permute.xlu0 0
        %1938 = vperm.xlu0 %1937, %v1799
        %v1939 = vpop.permute.xlu0 %1938
        %1942 = vset.pattern.permute.xlu0 0
        %1943 = vperm.xlu0 %1942, %v1800
        %v1944 = vpop.permute.xlu0 %1943
        %1947 = vset.pattern.permute.xlu0 0
        %1948 = vperm.xlu0 %1947, %v1801
        %v1949 = vpop.permute.xlu0 %1948
        %1952 = vset.pattern.permute.xlu0 0
        %1953 = vperm.xlu0 %1952, %v1802
        %v1954 = vpop.permute.xlu0 %1953
        %1957 = vset.pattern.permute.xlu0 0
        %1958 = vperm.xlu0 %1957, %v1803
        %v1959 = vpop.permute.xlu0 %1958
        %1962 = vset.pattern.permute.xlu0 0
        %1963 = vperm.xlu0 %1962, %v1804
        %v1964 = vpop.permute.xlu0 %1963
        %1967 = vset.pattern.permute.xlu0 0
        %1968 = vperm.xlu0 %1967, %v1805
        %v1969 = vpop.permute.xlu0 %1968
        %1972 = vset.pattern.permute.xlu0 0
        %1973 = vperm.xlu0 %1972, %v1806
        %v1974 = vpop.permute.xlu0 %1973
        %1977 = vset.pattern.permute.xlu0 0
        %1978 = vperm.xlu0 %1977, %v1807
        %v1979 = vpop.permute.xlu0 %1978
        %1982 = vset.pattern.permute.xlu0 0
        %1983 = vperm.xlu0 %1982, %v1808
        %v1984 = vpop.permute.xlu0 %1983
        %1987 = vset.pattern.permute.xlu0 0
        %1988 = vperm.xlu0 %1987, %v1809
        %v1989 = vpop.permute.xlu0 %1988
        %1992 = vset.pattern.permute.xlu0 0
        %1993 = vperm.xlu0 %1992, %v1810
        %v1994 = vpop.permute.xlu0 %1993
        %1997 = vset.pattern.permute.xlu0 0
        %1998 = vperm.xlu0 %1997, %v1811
        %v1999 = vpop.permute.xlu0 %1998
        %2002 = vset.pattern.permute.xlu0 0
        %2003 = vperm.xlu0 %2002, %v1812
        %v2004 = vpop.permute.xlu0 %2003
        %2007 = vset.pattern.permute.xlu0 0
        %2008 = vperm.xlu0 %2007, %v1813
        %v2009 = vpop.permute.xlu0 %2008
        %2012 = vset.pattern.permute.xlu0 0
        %2013 = vperm.xlu0 %2012, %v1814
        %v2014 = vpop.permute.xlu0 %2013
        %2017 = vset.pattern.permute.xlu0 0
        %2018 = vperm.xlu0 %2017, %v1815
        %v2019 = vpop.permute.xlu0 %2018
        %2022 = vset.pattern.permute.xlu0 0
        %2023 = vperm.xlu0 %2022, %v1816
        %v2024 = vpop.permute.xlu0 %2023
        %2027 = vset.pattern.permute.xlu0 0
        %2028 = vperm.xlu0 %2027, %v1817
        %v2029 = vpop.permute.xlu0 %2028
        %2032 = vset.pattern.permute.xlu0 0
        %2033 = vperm.xlu0 %2032, %v1818
        %v2034 = vpop.permute.xlu0 %2033
        %2037 = vset.pattern.permute.xlu0 0
        %2038 = vperm.xlu0 %2037, %v1819
        %v2039 = vpop.permute.xlu0 %2038
        %2042 = vset.pattern.permute.xlu0 0
        %2043 = vperm.xlu0 %2042, %v1820
        %v2044 = vpop.permute.xlu0 %2043
        %2047 = vset.pattern.permute.xlu0 0
        %2048 = vperm.xlu0 %2047, %v1821
        %v2049 = vpop.permute.xlu0 %2048
        %2052 = vset.pattern.permute.xlu0 0
        %2053 = vperm.xlu0 %2052, %v1822
        %v2054 = vpop.permute.xlu0 %2053
        %2057 = vset.pattern.permute.xlu0 0
        %2058 = vperm.xlu0 %2057, %v1823
        %v2059 = vpop.permute.xlu0 %2058
        %2062 = vset.pattern.permute.xlu0 0
        %2063 = vperm.xlu0 %2062, %v1824
        %v2064 = vpop.permute.xlu0 %2063
        %2067 = vset.pattern.permute.xlu0 0
        %2068 = vperm.xlu0 %2067, %v1825
        %v2069 = vpop.permute.xlu0 %2068
        %2072 = vset.pattern.permute.xlu0 0
        %2073 = vperm.xlu0 %2072, %v1826
        %v2074 = vpop.permute.xlu0 %2073
        %2077 = vset.pattern.permute.xlu0 0
        %2078 = vperm.xlu0 %2077, %v1827
        %v2079 = vpop.permute.xlu0 %2078
        %2082 = vset.pattern.permute.xlu0 0
        %2083 = vperm.xlu0 %2082, %v1828
        %v2084 = vpop.permute.xlu0 %2083
        %2087 = vset.pattern.permute.xlu0 0
        %2088 = vperm.xlu0 %2087, %v1829
        %v2089 = vpop.permute.xlu0 %2088
        %2092 = vset.pattern.permute.xlu0 0
        %2093 = vperm.xlu0 %2092, %v1830
        %v2094 = vpop.permute.xlu0 %2093
        %2097 = vset.pattern.permute.xlu0 0
        %2098 = vperm.xlu0 %2097, %v1831
        %v2099 = vpop.permute.xlu0 %2098
        %2102 = vset.pattern.permute.xlu0 0
        %2103 = vperm.xlu0 %2102, %v1832
        %v2104 = vpop.permute.xlu0 %2103
        %2107 = vset.pattern.permute.xlu0 0
        %2108 = vperm.xlu0 %2107, %v1833
        %v2109 = vpop.permute.xlu0 %2108
        %2112 = vset.pattern.permute.xlu0 0
        %2113 = vperm.xlu0 %2112, %v1834
        %v2114 = vpop.permute.xlu0 %2113
        %2117 = vset.pattern.permute.xlu0 0
        %2118 = vperm.xlu0 %2117, %v1835
        %v2119 = vpop.permute.xlu0 %2118
        %2122 = vset.pattern.permute.xlu0 0
        %2123 = vperm.xlu0 %2122, %v1836
        %v2124 = vpop.permute.xlu0 %2123
        %2127 = vset.pattern.permute.xlu0 0
        %2128 = vperm.xlu0 %2127, %v1837
        %v2129 = vpop.permute.xlu0 %2128
        %2132 = vset.pattern.permute.xlu0 0
        %2133 = vperm.xlu0 %2132, %v1838
        %v2134 = vpop.permute.xlu0 %2133
        %2137 = vset.pattern.permute.xlu0 0
        %2138 = vperm.xlu0 %2137, %v1839
        %v2139 = vpop.permute.xlu0 %2138
        %2142 = vset.pattern.permute.xlu0 0
        %2143 = vperm.xlu0 %2142, %v1840
        %v2144 = vpop.permute.xlu0 %2143
        %2147 = vset.pattern.permute.xlu0 0
        %2148 = vperm.xlu0 %2147, %v1841
        %v2149 = vpop.permute.xlu0 %2148
        %2152 = vset.pattern.permute.xlu0 0
        %2153 = vperm.xlu0 %2152, %v1842
        %v2154 = vpop.permute.xlu0 %2153
        %2157 = vset.pattern.permute.xlu0 0
        %2158 = vperm.xlu0 %2157, %v1843
        %v2159 = vpop.permute.xlu0 %2158
        %2162 = vset.pattern.permute.xlu0 0
        %2163 = vperm.xlu0 %2162, %v1844
        %v2164 = vpop.permute.xlu0 %2163
        %v2166 = vlaneseq
        %v2167 = vshrl.u32 %v2166, 7
        %v2168 = vsub.s32 0, %v2167
        %v2169 = vrot.slane %v1845, %v2168
        %v2170 = vmul.f32 %v1849, %v2169
        %v2171 = vmul.f32 %v1854, %v2169
        %v2172 = vmul.f32 %v1859, %v2169
        %v2173 = vmul.f32 %v1864, %v2169
        %v2174 = vmul.f32 %v1869, %v2169
        %v2175 = vmul.f32 %v1874, %v2169
        %v2176 = vmul.f32 %v1879, %v2169
        %v2177 = vmul.f32 %v1884, %v2169
        %v2178 = vmul.f32 %v1889, %v2169
        %v2179 = vmul.f32 %v1894, %v2169
        %v2180 = vmul.f32 %v1899, %v2169
        %v2181 = vmul.f32 %v1904, %v2169
        %v2182 = vmul.f32 %v1909, %v2169
        %v2183 = vmul.f32 %v1914, %v2169
        %v2184 = vmul.f32 %v1919, %v2169
        %v2185 = vmul.f32 %v1924, %v2169
        %v2186 = vmul.f32 %v1929, %v2169
        %v2187 = vmul.f32 %v1934, %v2169
        %v2188 = vmul.f32 %v1939, %v2169
        %v2189 = vmul.f32 %v1944, %v2169
        %v2190 = vmul.f32 %v1949, %v2169
        %v2191 = vmul.f32 %v1954, %v2169
        %v2192 = vmul.f32 %v1959, %v2169
        %v2193 = vmul.f32 %v1964, %v2169
        %v2194 = vmul.f32 %v1969, %v2169
        %v2195 = vmul.f32 %v1974, %v2169
        %v2196 = vmul.f32 %v1979, %v2169
        %v2197 = vmul.f32 %v1984, %v2169
        %v2198 = vmul.f32 %v1989, %v2169
        %v2199 = vmul.f32 %v1994, %v2169
        %v2200 = vmul.f32 %v1999, %v2169
        %v2201 = vmul.f32 %v2004, %v2169
        %v2202 = vmul.f32 %v2009, %v2169
        %v2203 = vmul.f32 %v2014, %v2169
        %v2204 = vmul.f32 %v2019, %v2169
        %v2205 = vmul.f32 %v2024, %v2169
        %v2206 = vmul.f32 %v2029, %v2169
        %v2207 = vmul.f32 %v2034, %v2169
        %v2208 = vmul.f32 %v2039, %v2169
        %v2209 = vmul.f32 %v2044, %v2169
        %v2210 = vmul.f32 %v2049, %v2169
        %v2211 = vmul.f32 %v2054, %v2169
        %v2212 = vmul.f32 %v2059, %v2169
        %v2213 = vmul.f32 %v2064, %v2169
        %v2214 = vmul.f32 %v2069, %v2169
        %v2215 = vmul.f32 %v2074, %v2169
        %v2216 = vmul.f32 %v2079, %v2169
        %v2217 = vmul.f32 %v2084, %v2169
        %v2218 = vmul.f32 %v2089, %v2169
        %v2219 = vmul.f32 %v2094, %v2169
        %v2220 = vmul.f32 %v2099, %v2169
        %v2221 = vmul.f32 %v2104, %v2169
        %v2222 = vmul.f32 %v2109, %v2169
        %v2223 = vmul.f32 %v2114, %v2169
        %v2224 = vmul.f32 %v2119, %v2169
        %v2225 = vmul.f32 %v2124, %v2169
        %v2226 = vmul.f32 %v2129, %v2169
        %v2227 = vmul.f32 %v2134, %v2169
        %v2228 = vmul.f32 %v2139, %v2169
        %v2229 = vmul.f32 %v2144, %v2169
        %v2230 = vmul.f32 %v2149, %v2169
        %v2231 = vmul.f32 %v2154, %v2169
        %v2232 = vmul.f32 %v2159, %v2169
        %v2233 = vmul.f32 %v2164, %v2169
        %v2234 = vadd.f32 %v1716, %v2170
        %v2235 = vadd.f32 %v1717, %v2171
        %v2236 = vadd.f32 %v1718, %v2172
        %v2237 = vadd.f32 %v1719, %v2173
        %v2238 = vadd.f32 %v1720, %v2174
        %v2239 = vadd.f32 %v1721, %v2175
        %v2240 = vadd.f32 %v1722, %v2176
        %v2241 = vadd.f32 %v1723, %v2177
        %v2242 = vadd.f32 %v1724, %v2178
        %v2243 = vadd.f32 %v1725, %v2179
        %v2244 = vadd.f32 %v1726, %v2180
        %v2245 = vadd.f32 %v1727, %v2181
        %v2246 = vadd.f32 %v1728, %v2182
        %v2247 = vadd.f32 %v1729, %v2183
        %v2248 = vadd.f32 %v1730, %v2184
        %v2249 = vadd.f32 %v1731, %v2185
        %v2250 = vadd.f32 %v1732, %v2186
        %v2251 = vadd.f32 %v1733, %v2187
        %v2252 = vadd.f32 %v1734, %v2188
        %v2253 = vadd.f32 %v1735, %v2189
        %v2254 = vadd.f32 %v1736, %v2190
        %v2255 = vadd.f32 %v1737, %v2191
        %v2256 = vadd.f32 %v1738, %v2192
        %v2257 = vadd.f32 %v1739, %v2193
        %v2258 = vadd.f32 %v1740, %v2194
        %v2259 = vadd.f32 %v1741, %v2195
        %v2260 = vadd.f32 %v1742, %v2196
        %v2261 = vadd.f32 %v1743, %v2197
        %v2262 = vadd.f32 %v1744, %v2198
        %v2263 = vadd.f32 %v1745, %v2199
        %v2264 = vadd.f32 %v1746, %v2200
        %v2265 = vadd.f32 %v1747, %v2201
        %v2266 = vadd.f32 %v1748, %v2202
        %v2267 = vadd.f32 %v1749, %v2203
        %v2268 = vadd.f32 %v1750, %v2204
        %v2269 = vadd.f32 %v1751, %v2205
        %v2270 = vadd.f32 %v1752, %v2206
        %v2271 = vadd.f32 %v1753, %v2207
        %v2272 = vadd.f32 %v1754, %v2208
        %v2273 = vadd.f32 %v1755, %v2209
        %v2274 = vadd.f32 %v1756, %v2210
        %v2275 = vadd.f32 %v1757, %v2211
        %v2276 = vadd.f32 %v1758, %v2212
        %v2277 = vadd.f32 %v1759, %v2213
        %v2278 = vadd.f32 %v1760, %v2214
        %v2279 = vadd.f32 %v1761, %v2215
        %v2280 = vadd.f32 %v1762, %v2216
        %v2281 = vadd.f32 %v1763, %v2217
        %v2282 = vadd.f32 %v1764, %v2218
        %v2283 = vadd.f32 %v1765, %v2219
        %v2284 = vadd.f32 %v1766, %v2220
        %v2285 = vadd.f32 %v1767, %v2221
        %v2286 = vadd.f32 %v1768, %v2222
        %v2287 = vadd.f32 %v1769, %v2223
        %v2288 = vadd.f32 %v1770, %v2224
        %v2289 = vadd.f32 %v1771, %v2225
        %v2290 = vadd.f32 %v1772, %v2226
        %v2291 = vadd.f32 %v1773, %v2227
        %v2292 = vadd.f32 %v1774, %v2228
        %v2293 = vadd.f32 %v1775, %v2229
        %v2294 = vadd.f32 %v1776, %v2230
        %v2295 = vadd.f32 %v1777, %v2231
        %v2296 = vadd.f32 %v1778, %v2232
        %v2297 = vadd.f32 %v1779, %v2233
        %v2298 = vld [vmem:[%s1780 + $0x1] sm:$0xff]
        %v2299 = vld [vmem:[%s1780 + $0x9] sm:$0xff]
        %v2300 = vld [vmem:[%s1780 + $0x19] sm:$0xff]
        %v2301 = vld [vmem:[%s1780 + $0x21] sm:$0xff]
        %v2302 = vld [vmem:[%s1780 + $0x31] sm:$0xff]
        %v2303 = vld [vmem:[%s1780 + $0x39] sm:$0xff]
        %v2304 = vld [vmem:[%s1780 + $0x49] sm:$0xff]
        %v2305 = vld [vmem:[%s1780 + $0x51] sm:$0xff]
        %v2306 = vld [vmem:[%s1780 + $0x61] sm:$0xff]
        %v2307 = vld [vmem:[%s1780 + $0x69] sm:$0xff]
        %v2308 = vld [vmem:[%s1780 + $0x79] sm:$0xff]
        %v2309 = vld [vmem:[%s1780 + $0x81] sm:$0xff]
        %v2310 = vld [vmem:[%s1780 + $0x91] sm:$0xff]
        %v2311 = vld [vmem:[%s1780 + $0x99] sm:$0xff]
        %v2312 = vld [vmem:[%s1780 + $0xa9] sm:$0xff]
        %v2313 = vld [vmem:[%s1780 + $0xb1] sm:$0xff]
        %v2314 = vld [vmem:[%s1780 + $0xc1] sm:$0xff]
        %v2315 = vld [vmem:[%s1780 + $0xc9] sm:$0xff]
        %v2316 = vld [vmem:[%s1780 + $0xd9] sm:$0xff]
        %v2317 = vld [vmem:[%s1780 + $0xe1] sm:$0xff]
        %v2318 = vld [vmem:[%s1780 + $0xf1] sm:$0xff]
        %v2319 = vld [vmem:[%s1780 + $0xf9] sm:$0xff]
        %v2320 = vld [vmem:[%s1780 + $0x109] sm:$0xff]
        %v2321 = vld [vmem:[%s1780 + $0x111] sm:$0xff]
        %v2322 = vld [vmem:[%s1780 + $0x121] sm:$0xff]
        %v2323 = vld [vmem:[%s1780 + $0x129] sm:$0xff]
        %v2324 = vld [vmem:[%s1780 + $0x139] sm:$0xff]
        %v2325 = vld [vmem:[%s1780 + $0x141] sm:$0xff]
        %v2326 = vld [vmem:[%s1780 + $0x151] sm:$0xff]
        %v2327 = vld [vmem:[%s1780 + $0x159] sm:$0xff]
        %v2328 = vld [vmem:[%s1780 + $0x169] sm:$0xff]
        %v2329 = vld [vmem:[%s1780 + $0x171] sm:$0xff]
        %v2330 = vld [vmem:[%s1780 + $0x1b1] sm:$0xff]
        %v2331 = vld [vmem:[%s1780 + $0x1b9] sm:$0xff]
        %v2332 = vld [vmem:[%s1780 + $0x1c9] sm:$0xff]
        %v2333 = vld [vmem:[%s1780 + $0x1d1] sm:$0xff]
        %v2334 = vld [vmem:[%s1780 + $0x1e1] sm:$0xff]
        %v2335 = vld [vmem:[%s1780 + $0x1e9] sm:$0xff]
        %v2336 = vld [vmem:[%s1780 + $0x1f9] sm:$0xff]
        %v2337 = vld [vmem:[%s1780 + $0x201] sm:$0xff]
        %v2338 = vld [vmem:[%s1780 + $0x211] sm:$0xff]
        %v2339 = vld [vmem:[%s1780 + $0x219] sm:$0xff]
        %v2340 = vld [vmem:[%s1780 + $0x229] sm:$0xff]
        %v2341 = vld [vmem:[%s1780 + $0x231] sm:$0xff]
        %v2342 = vld [vmem:[%s1780 + $0x241] sm:$0xff]
        %v2343 = vld [vmem:[%s1780 + $0x249] sm:$0xff]
        %v2344 = vld [vmem:[%s1780 + $0x259] sm:$0xff]
        %v2345 = vld [vmem:[%s1780 + $0x261] sm:$0xff]
        %v2346 = vld [vmem:[%s1780 + $0x271] sm:$0xff]
        %v2347 = vld [vmem:[%s1780 + $0x279] sm:$0xff]
        %v2348 = vld [vmem:[%s1780 + $0x289] sm:$0xff]
        %v2349 = vld [vmem:[%s1780 + $0x291] sm:$0xff]
        %v2350 = vld [vmem:[%s1780 + $0x2a1] sm:$0xff]
        %v2351 = vld [vmem:[%s1780 + $0x2a9] sm:$0xff]
        %v2352 = vld [vmem:[%s1780 + $0x2b9] sm:$0xff]
        %v2353 = vld [vmem:[%s1780 + $0x2c1] sm:$0xff]
        %v2354 = vld [vmem:[%s1780 + $0x2d1] sm:$0xff]
        %v2355 = vld [vmem:[%s1780 + $0x2d9] sm:$0xff]
        %v2356 = vld [vmem:[%s1780 + $0x2e9] sm:$0xff]
        %v2357 = vld [vmem:[%s1780 + $0x2f1] sm:$0xff]
        %v2358 = vld [vmem:[%s1780 + $0x301] sm:$0xff]
        %v2359 = vld [vmem:[%s1780 + $0x309] sm:$0xff]
        %v2360 = vld [vmem:[%s1780 + $0x319] sm:$0xff]
        %v2361 = vld [vmem:[%s1780 + $0x321] sm:$0xff]
        %v2362 = vld [vmem:[%s1 + $0x4] sm:$0x1]
        %2364 = vset.pattern.permute.xlu0 0
        %2365 = vperm.xlu0 %2364, %v2298
        %v2366 = vpop.permute.xlu0 %2365
        %2369 = vset.pattern.permute.xlu0 0
        %2370 = vperm.xlu0 %2369, %v2299
        %v2371 = vpop.permute.xlu0 %2370
        %2374 = vset.pattern.permute.xlu0 0
        %2375 = vperm.xlu0 %2374, %v2300
        %v2376 = vpop.permute.xlu0 %2375
        %2379 = vset.pattern.permute.xlu0 0
        %2380 = vperm.xlu0 %2379, %v2301
        %v2381 = vpop.permute.xlu0 %2380
        %2384 = vset.pattern.permute.xlu0 0
        %2385 = vperm.xlu0 %2384, %v2302
        %v2386 = vpop.permute.xlu0 %2385
        %2389 = vset.pattern.permute.xlu0 0
        %2390 = vperm.xlu0 %2389, %v2303
        %v2391 = vpop.permute.xlu0 %2390
        %2394 = vset.pattern.permute.xlu0 0
        %2395 = vperm.xlu0 %2394, %v2304
        %v2396 = vpop.permute.xlu0 %2395
        %2399 = vset.pattern.permute.xlu0 0
        %2400 = vperm.xlu0 %2399, %v2305
        %v2401 = vpop.permute.xlu0 %2400
        %2404 = vset.pattern.permute.xlu0 0
        %2405 = vperm.xlu0 %2404, %v2306
        %v2406 = vpop.permute.xlu0 %2405
        %2409 = vset.pattern.permute.xlu0 0
        %2410 = vperm.xlu0 %2409, %v2307
        %v2411 = vpop.permute.xlu0 %2410
        %2414 = vset.pattern.permute.xlu0 0
        %2415 = vperm.xlu0 %2414, %v2308
        %v2416 = vpop.permute.xlu0 %2415
        %2419 = vset.pattern.permute.xlu0 0
        %2420 = vperm.xlu0 %2419, %v2309
        %v2421 = vpop.permute.xlu0 %2420
        %2424 = vset.pattern.permute.xlu0 0
        %2425 = vperm.xlu0 %2424, %v2310
        %v2426 = vpop.permute.xlu0 %2425
        %2429 = vset.pattern.permute.xlu0 0
        %2430 = vperm.xlu0 %2429, %v2311
        %v2431 = vpop.permute.xlu0 %2430
        %2434 = vset.pattern.permute.xlu0 0
        %2435 = vperm.xlu0 %2434, %v2312
        %v2436 = vpop.permute.xlu0 %2435
        %2439 = vset.pattern.permute.xlu0 0
        %2440 = vperm.xlu0 %2439, %v2313
        %v2441 = vpop.permute.xlu0 %2440
        %2444 = vset.pattern.permute.xlu0 0
        %2445 = vperm.xlu0 %2444, %v2314
        %v2446 = vpop.permute.xlu0 %2445
        %2449 = vset.pattern.permute.xlu0 0
        %2450 = vperm.xlu0 %2449, %v2315
        %v2451 = vpop.permute.xlu0 %2450
        %2454 = vset.pattern.permute.xlu0 0
        %2455 = vperm.xlu0 %2454, %v2316
        %v2456 = vpop.permute.xlu0 %2455
        %2459 = vset.pattern.permute.xlu0 0
        %2460 = vperm.xlu0 %2459, %v2317
        %v2461 = vpop.permute.xlu0 %2460
        %2464 = vset.pattern.permute.xlu0 0
        %2465 = vperm.xlu0 %2464, %v2318
        %v2466 = vpop.permute.xlu0 %2465
        %2469 = vset.pattern.permute.xlu0 0
        %2470 = vperm.xlu0 %2469, %v2319
        %v2471 = vpop.permute.xlu0 %2470
        %2474 = vset.pattern.permute.xlu0 0
        %2475 = vperm.xlu0 %2474, %v2320
        %v2476 = vpop.permute.xlu0 %2475
        %2479 = vset.pattern.permute.xlu0 0
        %2480 = vperm.xlu0 %2479, %v2321
        %v2481 = vpop.permute.xlu0 %2480
        %2484 = vset.pattern.permute.xlu0 0
        %2485 = vperm.xlu0 %2484, %v2322
        %v2486 = vpop.permute.xlu0 %2485
        %2489 = vset.pattern.permute.xlu0 0
        %2490 = vperm.xlu0 %2489, %v2323
        %v2491 = vpop.permute.xlu0 %2490
        %2494 = vset.pattern.permute.xlu0 0
        %2495 = vperm.xlu0 %2494, %v2324
        %v2496 = vpop.permute.xlu0 %2495
        %2499 = vset.pattern.permute.xlu0 0
        %2500 = vperm.xlu0 %2499, %v2325
        %v2501 = vpop.permute.xlu0 %2500
        %2504 = vset.pattern.permute.xlu0 0
        %2505 = vperm.xlu0 %2504, %v2326
        %v2506 = vpop.permute.xlu0 %2505
        %2509 = vset.pattern.permute.xlu0 0
        %2510 = vperm.xlu0 %2509, %v2327
        %v2511 = vpop.permute.xlu0 %2510
        %2514 = vset.pattern.permute.xlu0 0
        %2515 = vperm.xlu0 %2514, %v2328
        %v2516 = vpop.permute.xlu0 %2515
        %2519 = vset.pattern.permute.xlu0 0
        %2520 = vperm.xlu0 %2519, %v2329
        %v2521 = vpop.permute.xlu0 %2520
        %2524 = vset.pattern.permute.xlu0 0
        %2525 = vperm.xlu0 %2524, %v2330
        %v2526 = vpop.permute.xlu0 %2525
        %2529 = vset.pattern.permute.xlu0 0
        %2530 = vperm.xlu0 %2529, %v2331
        %v2531 = vpop.permute.xlu0 %2530
        %2534 = vset.pattern.permute.xlu0 0
        %2535 = vperm.xlu0 %2534, %v2332
        %v2536 = vpop.permute.xlu0 %2535
        %2539 = vset.pattern.permute.xlu0 0
        %2540 = vperm.xlu0 %2539, %v2333
        %v2541 = vpop.permute.xlu0 %2540
        %2544 = vset.pattern.permute.xlu0 0
        %2545 = vperm.xlu0 %2544, %v2334
        %v2546 = vpop.permute.xlu0 %2545
        %2549 = vset.pattern.permute.xlu0 0
        %2550 = vperm.xlu0 %2549, %v2335
        %v2551 = vpop.permute.xlu0 %2550
        %2554 = vset.pattern.permute.xlu0 0
        %2555 = vperm.xlu0 %2554, %v2336
        %v2556 = vpop.permute.xlu0 %2555
        %2559 = vset.pattern.permute.xlu0 0
        %2560 = vperm.xlu0 %2559, %v2337
        %v2561 = vpop.permute.xlu0 %2560
        %2564 = vset.pattern.permute.xlu0 0
        %2565 = vperm.xlu0 %2564, %v2338
        %v2566 = vpop.permute.xlu0 %2565
        %2569 = vset.pattern.permute.xlu0 0
        %2570 = vperm.xlu0 %2569, %v2339
        %v2571 = vpop.permute.xlu0 %2570
        %2574 = vset.pattern.permute.xlu0 0
        %2575 = vperm.xlu0 %2574, %v2340
        %v2576 = vpop.permute.xlu0 %2575
        %2579 = vset.pattern.permute.xlu0 0
        %2580 = vperm.xlu0 %2579, %v2341
        %v2581 = vpop.permute.xlu0 %2580
        %2584 = vset.pattern.permute.xlu0 0
        %2585 = vperm.xlu0 %2584, %v2342
        %v2586 = vpop.permute.xlu0 %2585
        %2589 = vset.pattern.permute.xlu0 0
        %2590 = vperm.xlu0 %2589, %v2343
        %v2591 = vpop.permute.xlu0 %2590
        %2594 = vset.pattern.permute.xlu0 0
        %2595 = vperm.xlu0 %2594, %v2344
        %v2596 = vpop.permute.xlu0 %2595
        %2599 = vset.pattern.permute.xlu0 0
        %2600 = vperm.xlu0 %2599, %v2345
        %v2601 = vpop.permute.xlu0 %2600
        %2604 = vset.pattern.permute.xlu0 0
        %2605 = vperm.xlu0 %2604, %v2346
        %v2606 = vpop.permute.xlu0 %2605
        %2609 = vset.pattern.permute.xlu0 0
        %2610 = vperm.xlu0 %2609, %v2347
        %v2611 = vpop.permute.xlu0 %2610
        %2614 = vset.pattern.permute.xlu0 0
        %2615 = vperm.xlu0 %2614, %v2348
        %v2616 = vpop.permute.xlu0 %2615
        %2619 = vset.pattern.permute.xlu0 0
        %2620 = vperm.xlu0 %2619, %v2349
        %v2621 = vpop.permute.xlu0 %2620
        %2624 = vset.pattern.permute.xlu0 0
        %2625 = vperm.xlu0 %2624, %v2350
        %v2626 = vpop.permute.xlu0 %2625
        %2629 = vset.pattern.permute.xlu0 0
        %2630 = vperm.xlu0 %2629, %v2351
        %v2631 = vpop.permute.xlu0 %2630
        %2634 = vset.pattern.permute.xlu0 0
        %2635 = vperm.xlu0 %2634, %v2352
        %v2636 = vpop.permute.xlu0 %2635
        %2639 = vset.pattern.permute.xlu0 0
        %2640 = vperm.xlu0 %2639, %v2353
        %v2641 = vpop.permute.xlu0 %2640
        %2644 = vset.pattern.permute.xlu0 0
        %2645 = vperm.xlu0 %2644, %v2354
        %v2646 = vpop.permute.xlu0 %2645
        %2649 = vset.pattern.permute.xlu0 0
        %2650 = vperm.xlu0 %2649, %v2355
        %v2651 = vpop.permute.xlu0 %2650
        %2654 = vset.pattern.permute.xlu0 0
        %2655 = vperm.xlu0 %2654, %v2356
        %v2656 = vpop.permute.xlu0 %2655
        %2659 = vset.pattern.permute.xlu0 0
        %2660 = vperm.xlu0 %2659, %v2357
        %v2661 = vpop.permute.xlu0 %2660
        %2664 = vset.pattern.permute.xlu0 0
        %2665 = vperm.xlu0 %2664, %v2358
        %v2666 = vpop.permute.xlu0 %2665
        %2669 = vset.pattern.permute.xlu0 0
        %2670 = vperm.xlu0 %2669, %v2359
        %v2671 = vpop.permute.xlu0 %2670
        %2674 = vset.pattern.permute.xlu0 0
        %2675 = vperm.xlu0 %2674, %v2360
        %v2676 = vpop.permute.xlu0 %2675
        %2679 = vset.pattern.permute.xlu0 0
        %2680 = vperm.xlu0 %2679, %v2361
        %v2681 = vpop.permute.xlu0 %2680
        %v2683 = vlaneseq
        %v2684 = vshrl.u32 %v2683, 7
        %v2685 = vsub.s32 0, %v2684
        %v2686 = vrot.slane %v2362, %v2685
        %v2687 = vmul.f32 %v2366, %v2686
        %v2688 = vmul.f32 %v2371, %v2686
        %v2689 = vmul.f32 %v2376, %v2686
        %v2690 = vmul.f32 %v2381, %v2686
        %v2691 = vmul.f32 %v2386, %v2686
        %v2692 = vmul.f32 %v2391, %v2686
        %v2693 = vmul.f32 %v2396, %v2686
        %v2694 = vmul.f32 %v2401, %v2686
        %v2695 = vmul.f32 %v2406, %v2686
        %v2696 = vmul.f32 %v2411, %v2686
        %v2697 = vmul.f32 %v2416, %v2686
        %v2698 = vmul.f32 %v2421, %v2686
        %v2699 = vmul.f32 %v2426, %v2686
        %v2700 = vmul.f32 %v2431, %v2686
        %v2701 = vmul.f32 %v2436, %v2686
        %v2702 = vmul.f32 %v2441, %v2686
        %v2703 = vmul.f32 %v2446, %v2686
        %v2704 = vmul.f32 %v2451, %v2686
        %v2705 = vmul.f32 %v2456, %v2686
        %v2706 = vmul.f32 %v2461, %v2686
        %v2707 = vmul.f32 %v2466, %v2686
        %v2708 = vmul.f32 %v2471, %v2686
        %v2709 = vmul.f32 %v2476, %v2686
        %v2710 = vmul.f32 %v2481, %v2686
        %v2711 = vmul.f32 %v2486, %v2686
        %v2712 = vmul.f32 %v2491, %v2686
        %v2713 = vmul.f32 %v2496, %v2686
        %v2714 = vmul.f32 %v2501, %v2686
        %v2715 = vmul.f32 %v2506, %v2686
        %v2716 = vmul.f32 %v2511, %v2686
        %v2717 = vmul.f32 %v2516, %v2686
        %v2718 = vmul.f32 %v2521, %v2686
        %v2719 = vmul.f32 %v2526, %v2686
        %v2720 = vmul.f32 %v2531, %v2686
        %v2721 = vmul.f32 %v2536, %v2686
        %v2722 = vmul.f32 %v2541, %v2686
        %v2723 = vmul.f32 %v2546, %v2686
        %v2724 = vmul.f32 %v2551, %v2686
        %v2725 = vmul.f32 %v2556, %v2686
        %v2726 = vmul.f32 %v2561, %v2686
        %v2727 = vmul.f32 %v2566, %v2686
        %v2728 = vmul.f32 %v2571, %v2686
        %v2729 = vmul.f32 %v2576, %v2686
        %v2730 = vmul.f32 %v2581, %v2686
        %v2731 = vmul.f32 %v2586, %v2686
        %v2732 = vmul.f32 %v2591, %v2686
        %v2733 = vmul.f32 %v2596, %v2686
        %v2734 = vmul.f32 %v2601, %v2686
        %v2735 = vmul.f32 %v2606, %v2686
        %v2736 = vmul.f32 %v2611, %v2686
        %v2737 = vmul.f32 %v2616, %v2686
        %v2738 = vmul.f32 %v2621, %v2686
        %v2739 = vmul.f32 %v2626, %v2686
        %v2740 = vmul.f32 %v2631, %v2686
        %v2741 = vmul.f32 %v2636, %v2686
        %v2742 = vmul.f32 %v2641, %v2686
        %v2743 = vmul.f32 %v2646, %v2686
        %v2744 = vmul.f32 %v2651, %v2686
        %v2745 = vmul.f32 %v2656, %v2686
        %v2746 = vmul.f32 %v2661, %v2686
        %v2747 = vmul.f32 %v2666, %v2686
        %v2748 = vmul.f32 %v2671, %v2686
        %v2749 = vmul.f32 %v2676, %v2686
        %v2750 = vmul.f32 %v2681, %v2686
        %v2751 = vadd.f32 %v2234, %v2687
        %v2752 = vadd.f32 %v2235, %v2688
        %v2753 = vadd.f32 %v2236, %v2689
        %v2754 = vadd.f32 %v2237, %v2690
        %v2755 = vadd.f32 %v2238, %v2691
        %v2756 = vadd.f32 %v2239, %v2692
        %v2757 = vadd.f32 %v2240, %v2693
        %v2758 = vadd.f32 %v2241, %v2694
        %v2759 = vadd.f32 %v2242, %v2695
        %v2760 = vadd.f32 %v2243, %v2696
        %v2761 = vadd.f32 %v2244, %v2697
        %v2762 = vadd.f32 %v2245, %v2698
        %v2763 = vadd.f32 %v2246, %v2699
        %v2764 = vadd.f32 %v2247, %v2700
        %v2765 = vadd.f32 %v2248, %v2701
        %v2766 = vadd.f32 %v2249, %v2702
        %v2767 = vadd.f32 %v2250, %v2703
        %v2768 = vadd.f32 %v2251, %v2704
        %v2769 = vadd.f32 %v2252, %v2705
        %v2770 = vadd.f32 %v2253, %v2706
        %v2771 = vadd.f32 %v2254, %v2707
        %v2772 = vadd.f32 %v2255, %v2708
        %v2773 = vadd.f32 %v2256, %v2709
        %v2774 = vadd.f32 %v2257, %v2710
        %v2775 = vadd.f32 %v2258, %v2711
        %v2776 = vadd.f32 %v2259, %v2712
        %v2777 = vadd.f32 %v2260, %v2713
        %v2778 = vadd.f32 %v2261, %v2714
        %v2779 = vadd.f32 %v2262, %v2715
        %v2780 = vadd.f32 %v2263, %v2716
        %v2781 = vadd.f32 %v2264, %v2717
        %v2782 = vadd.f32 %v2265, %v2718
        %v2783 = vadd.f32 %v2266, %v2719
        %v2784 = vadd.f32 %v2267, %v2720
        %v2785 = vadd.f32 %v2268, %v2721
        %v2786 = vadd.f32 %v2269, %v2722
        %v2787 = vadd.f32 %v2270, %v2723
        %v2788 = vadd.f32 %v2271, %v2724
        %v2789 = vadd.f32 %v2272, %v2725
        %v2790 = vadd.f32 %v2273, %v2726
        %v2791 = vadd.f32 %v2274, %v2727
        %v2792 = vadd.f32 %v2275, %v2728
        %v2793 = vadd.f32 %v2276, %v2729
        %v2794 = vadd.f32 %v2277, %v2730
        %v2795 = vadd.f32 %v2278, %v2731
        %v2796 = vadd.f32 %v2279, %v2732
        %v2797 = vadd.f32 %v2280, %v2733
        %v2798 = vadd.f32 %v2281, %v2734
        %v2799 = vadd.f32 %v2282, %v2735
        %v2800 = vadd.f32 %v2283, %v2736
        %v2801 = vadd.f32 %v2284, %v2737
        %v2802 = vadd.f32 %v2285, %v2738
        %v2803 = vadd.f32 %v2286, %v2739
        %v2804 = vadd.f32 %v2287, %v2740
        %v2805 = vadd.f32 %v2288, %v2741
        %v2806 = vadd.f32 %v2289, %v2742
        %v2807 = vadd.f32 %v2290, %v2743
        %v2808 = vadd.f32 %v2291, %v2744
        %v2809 = vadd.f32 %v2292, %v2745
        %v2810 = vadd.f32 %v2293, %v2746
        %v2811 = vadd.f32 %v2294, %v2747
        %v2812 = vadd.f32 %v2295, %v2748
        %v2813 = vadd.f32 %v2296, %v2749
        %v2814 = vadd.f32 %v2297, %v2750
        %v2815 = vld [vmem:[%s1780 + $0x2] sm:$0xff]
        %v2816 = vld [vmem:[%s1780 + $0xa] sm:$0xff]
        %v2817 = vld [vmem:[%s1780 + $0x1a] sm:$0xff]
        %v2818 = vld [vmem:[%s1780 + $0x22] sm:$0xff]
        %v2819 = vld [vmem:[%s1780 + $0x32] sm:$0xff]
        %v2820 = vld [vmem:[%s1780 + $0x3a] sm:$0xff]
        %v2821 = vld [vmem:[%s1780 + $0x4a] sm:$0xff]
        %v2822 = vld [vmem:[%s1780 + $0x52] sm:$0xff]
        %v2823 = vld [vmem:[%s1780 + $0x62] sm:$0xff]
        %v2824 = vld [vmem:[%s1780 + $0x6a] sm:$0xff]
        %v2825 = vld [vmem:[%s1780 + $0x7a] sm:$0xff]
        %v2826 = vld [vmem:[%s1780 + $0x82] sm:$0xff]
        %v2827 = vld [vmem:[%s1780 + $0x92] sm:$0xff]
        %v2828 = vld [vmem:[%s1780 + $0x9a] sm:$0xff]
        %v2829 = vld [vmem:[%s1780 + $0xaa] sm:$0xff]
        %v2830 = vld [vmem:[%s1780 + $0xb2] sm:$0xff]
        %v2831 = vld [vmem:[%s1780 + $0xc2] sm:$0xff]
        %v2832 = vld [vmem:[%s1780 + $0xca] sm:$0xff]
        %v2833 = vld [vmem:[%s1780 + $0xda] sm:$0xff]
        %v2834 = vld [vmem:[%s1780 + $0xe2] sm:$0xff]
        %v2835 = vld [vmem:[%s1780 + $0xf2] sm:$0xff]
        %v2836 = vld [vmem:[%s1780 + $0xfa] sm:$0xff]
        %v2837 = vld [vmem:[%s1780 + $0x10a] sm:$0xff]
        %v2838 = vld [vmem:[%s1780 + $0x112] sm:$0xff]
        %v2839 = vld [vmem:[%s1780 + $0x122] sm:$0xff]
        %v2840 = vld [vmem:[%s1780 + $0x12a] sm:$0xff]
        %v2841 = vld [vmem:[%s1780 + $0x13a] sm:$0xff]
        %v2842 = vld [vmem:[%s1780 + $0x142] sm:$0xff]
        %v2843 = vld [vmem:[%s1780 + $0x152] sm:$0xff]
        %v2844 = vld [vmem:[%s1780 + $0x15a] sm:$0xff]
        %v2845 = vld [vmem:[%s1780 + $0x16a] sm:$0xff]
        %v2846 = vld [vmem:[%s1780 + $0x172] sm:$0xff]
        %v2847 = vld [vmem:[%s1780 + $0x1b2] sm:$0xff]
        %v2848 = vld [vmem:[%s1780 + $0x1ba] sm:$0xff]
        %v2849 = vld [vmem:[%s1780 + $0x1ca] sm:$0xff]
        %v2850 = vld [vmem:[%s1780 + $0x1d2] sm:$0xff]
        %v2851 = vld [vmem:[%s1780 + $0x1e2] sm:$0xff]
        %v2852 = vld [vmem:[%s1780 + $0x1ea] sm:$0xff]
        %v2853 = vld [vmem:[%s1780 + $0x1fa] sm:$0xff]
        %v2854 = vld [vmem:[%s1780 + $0x202] sm:$0xff]
        %v2855 = vld [vmem:[%s1780 + $0x212] sm:$0xff]
        %v2856 = vld [vmem:[%s1780 + $0x21a] sm:$0xff]
        %v2857 = vld [vmem:[%s1780 + $0x22a] sm:$0xff]
        %v2858 = vld [vmem:[%s1780 + $0x232] sm:$0xff]
        %v2859 = vld [vmem:[%s1780 + $0x242] sm:$0xff]
        %v2860 = vld [vmem:[%s1780 + $0x24a] sm:$0xff]
        %v2861 = vld [vmem:[%s1780 + $0x25a] sm:$0xff]
        %v2862 = vld [vmem:[%s1780 + $0x262] sm:$0xff]
        %v2863 = vld [vmem:[%s1780 + $0x272] sm:$0xff]
        %v2864 = vld [vmem:[%s1780 + $0x27a] sm:$0xff]
        %v2865 = vld [vmem:[%s1780 + $0x28a] sm:$0xff]
        %v2866 = vld [vmem:[%s1780 + $0x292] sm:$0xff]
        %v2867 = vld [vmem:[%s1780 + $0x2a2] sm:$0xff]
        %v2868 = vld [vmem:[%s1780 + $0x2aa] sm:$0xff]
        %v2869 = vld [vmem:[%s1780 + $0x2ba] sm:$0xff]
        %v2870 = vld [vmem:[%s1780 + $0x2c2] sm:$0xff]
        %v2871 = vld [vmem:[%s1780 + $0x2d2] sm:$0xff]
        %v2872 = vld [vmem:[%s1780 + $0x2da] sm:$0xff]
        %v2873 = vld [vmem:[%s1780 + $0x2ea] sm:$0xff]
        %v2874 = vld [vmem:[%s1780 + $0x2f2] sm:$0xff]
        %v2875 = vld [vmem:[%s1780 + $0x302] sm:$0xff]
        %v2876 = vld [vmem:[%s1780 + $0x30a] sm:$0xff]
        %v2877 = vld [vmem:[%s1780 + $0x31a] sm:$0xff]
        %v2878 = vld [vmem:[%s1780 + $0x322] sm:$0xff]
        %v2879 = vld [vmem:[%s1 + $0x5] sm:$0x1]
        %2881 = vset.pattern.permute.xlu0 0
        %2882 = vperm.xlu0 %2881, %v2815
        %v2883 = vpop.permute.xlu0 %2882
        %2886 = vset.pattern.permute.xlu0 0
        %2887 = vperm.xlu0 %2886, %v2816
        %v2888 = vpop.permute.xlu0 %2887
        %2891 = vset.pattern.permute.xlu0 0
        %2892 = vperm.xlu0 %2891, %v2817
        %v2893 = vpop.permute.xlu0 %2892
        %2896 = vset.pattern.permute.xlu0 0
        %2897 = vperm.xlu0 %2896, %v2818
        %v2898 = vpop.permute.xlu0 %2897
        %2901 = vset.pattern.permute.xlu0 0
        %2902 = vperm.xlu0 %2901, %v2819
        %v2903 = vpop.permute.xlu0 %2902
        %2906 = vset.pattern.permute.xlu0 0
        %2907 = vperm.xlu0 %2906, %v2820
        %v2908 = vpop.permute.xlu0 %2907
        %2911 = vset.pattern.permute.xlu0 0
        %2912 = vperm.xlu0 %2911, %v2821
        %v2913 = vpop.permute.xlu0 %2912
        %2916 = vset.pattern.permute.xlu0 0
        %2917 = vperm.xlu0 %2916, %v2822
        %v2918 = vpop.permute.xlu0 %2917
        %2921 = vset.pattern.permute.xlu0 0
        %2922 = vperm.xlu0 %2921, %v2823
        %v2923 = vpop.permute.xlu0 %2922
        %2926 = vset.pattern.permute.xlu0 0
        %2927 = vperm.xlu0 %2926, %v2824
        %v2928 = vpop.permute.xlu0 %2927
        %2931 = vset.pattern.permute.xlu0 0
        %2932 = vperm.xlu0 %2931, %v2825
        %v2933 = vpop.permute.xlu0 %2932
        %2936 = vset.pattern.permute.xlu0 0
        %2937 = vperm.xlu0 %2936, %v2826
        %v2938 = vpop.permute.xlu0 %2937
        %2941 = vset.pattern.permute.xlu0 0
        %2942 = vperm.xlu0 %2941, %v2827
        %v2943 = vpop.permute.xlu0 %2942
        %2946 = vset.pattern.permute.xlu0 0
        %2947 = vperm.xlu0 %2946, %v2828
        %v2948 = vpop.permute.xlu0 %2947
        %2951 = vset.pattern.permute.xlu0 0
        %2952 = vperm.xlu0 %2951, %v2829
        %v2953 = vpop.permute.xlu0 %2952
        %2956 = vset.pattern.permute.xlu0 0
        %2957 = vperm.xlu0 %2956, %v2830
        %v2958 = vpop.permute.xlu0 %2957
        %2961 = vset.pattern.permute.xlu0 0
        %2962 = vperm.xlu0 %2961, %v2831
        %v2963 = vpop.permute.xlu0 %2962
        %2966 = vset.pattern.permute.xlu0 0
        %2967 = vperm.xlu0 %2966, %v2832
        %v2968 = vpop.permute.xlu0 %2967
        %2971 = vset.pattern.permute.xlu0 0
        %2972 = vperm.xlu0 %2971, %v2833
        %v2973 = vpop.permute.xlu0 %2972
        %2976 = vset.pattern.permute.xlu0 0
        %2977 = vperm.xlu0 %2976, %v2834
        %v2978 = vpop.permute.xlu0 %2977
        %2981 = vset.pattern.permute.xlu0 0
        %2982 = vperm.xlu0 %2981, %v2835
        %v2983 = vpop.permute.xlu0 %2982
        %2986 = vset.pattern.permute.xlu0 0
        %2987 = vperm.xlu0 %2986, %v2836
        %v2988 = vpop.permute.xlu0 %2987
        %2991 = vset.pattern.permute.xlu0 0
        %2992 = vperm.xlu0 %2991, %v2837
        %v2993 = vpop.permute.xlu0 %2992
        %2996 = vset.pattern.permute.xlu0 0
        %2997 = vperm.xlu0 %2996, %v2838
        %v2998 = vpop.permute.xlu0 %2997
        %3001 = vset.pattern.permute.xlu0 0
        %3002 = vperm.xlu0 %3001, %v2839
        %v3003 = vpop.permute.xlu0 %3002
        %3006 = vset.pattern.permute.xlu0 0
        %3007 = vperm.xlu0 %3006, %v2840
        %v3008 = vpop.permute.xlu0 %3007
        %3011 = vset.pattern.permute.xlu0 0
        %3012 = vperm.xlu0 %3011, %v2841
        %v3013 = vpop.permute.xlu0 %3012
        %3016 = vset.pattern.permute.xlu0 0
        %3017 = vperm.xlu0 %3016, %v2842
        %v3018 = vpop.permute.xlu0 %3017
        %3021 = vset.pattern.permute.xlu0 0
        %3022 = vperm.xlu0 %3021, %v2843
        %v3023 = vpop.permute.xlu0 %3022
        %3026 = vset.pattern.permute.xlu0 0
        %3027 = vperm.xlu0 %3026, %v2844
        %v3028 = vpop.permute.xlu0 %3027
        %3031 = vset.pattern.permute.xlu0 0
        %3032 = vperm.xlu0 %3031, %v2845
        %v3033 = vpop.permute.xlu0 %3032
        %3036 = vset.pattern.permute.xlu0 0
        %3037 = vperm.xlu0 %3036, %v2846
        %v3038 = vpop.permute.xlu0 %3037
        %3041 = vset.pattern.permute.xlu0 0
        %3042 = vperm.xlu0 %3041, %v2847
        %v3043 = vpop.permute.xlu0 %3042
        %3046 = vset.pattern.permute.xlu0 0
        %3047 = vperm.xlu0 %3046, %v2848
        %v3048 = vpop.permute.xlu0 %3047
        %3051 = vset.pattern.permute.xlu0 0
        %3052 = vperm.xlu0 %3051, %v2849
        %v3053 = vpop.permute.xlu0 %3052
        %3056 = vset.pattern.permute.xlu0 0
        %3057 = vperm.xlu0 %3056, %v2850
        %v3058 = vpop.permute.xlu0 %3057
        %3061 = vset.pattern.permute.xlu0 0
        %3062 = vperm.xlu0 %3061, %v2851
        %v3063 = vpop.permute.xlu0 %3062
        %3066 = vset.pattern.permute.xlu0 0
        %3067 = vperm.xlu0 %3066, %v2852
        %v3068 = vpop.permute.xlu0 %3067
        %3071 = vset.pattern.permute.xlu0 0
        %3072 = vperm.xlu0 %3071, %v2853
        %v3073 = vpop.permute.xlu0 %3072
        %3076 = vset.pattern.permute.xlu0 0
        %3077 = vperm.xlu0 %3076, %v2854
        %v3078 = vpop.permute.xlu0 %3077
        %3081 = vset.pattern.permute.xlu0 0
        %3082 = vperm.xlu0 %3081, %v2855
        %v3083 = vpop.permute.xlu0 %3082
        %3086 = vset.pattern.permute.xlu0 0
        %3087 = vperm.xlu0 %3086, %v2856
        %v3088 = vpop.permute.xlu0 %3087
        %3091 = vset.pattern.permute.xlu0 0
        %3092 = vperm.xlu0 %3091, %v2857
        %v3093 = vpop.permute.xlu0 %3092
        %3096 = vset.pattern.permute.xlu0 0
        %3097 = vperm.xlu0 %3096, %v2858
        %v3098 = vpop.permute.xlu0 %3097
        %3101 = vset.pattern.permute.xlu0 0
        %3102 = vperm.xlu0 %3101, %v2859
        %v3103 = vpop.permute.xlu0 %3102
        %3106 = vset.pattern.permute.xlu0 0
        %3107 = vperm.xlu0 %3106, %v2860
        %v3108 = vpop.permute.xlu0 %3107
        %3111 = vset.pattern.permute.xlu0 0
        %3112 = vperm.xlu0 %3111, %v2861
        %v3113 = vpop.permute.xlu0 %3112
        %3116 = vset.pattern.permute.xlu0 0
        %3117 = vperm.xlu0 %3116, %v2862
        %v3118 = vpop.permute.xlu0 %3117
        %3121 = vset.pattern.permute.xlu0 0
        %3122 = vperm.xlu0 %3121, %v2863
        %v3123 = vpop.permute.xlu0 %3122
        %3126 = vset.pattern.permute.xlu0 0
        %3127 = vperm.xlu0 %3126, %v2864
        %v3128 = vpop.permute.xlu0 %3127
        %3131 = vset.pattern.permute.xlu0 0
        %3132 = vperm.xlu0 %3131, %v2865
        %v3133 = vpop.permute.xlu0 %3132
        %3136 = vset.pattern.permute.xlu0 0
        %3137 = vperm.xlu0 %3136, %v2866
        %v3138 = vpop.permute.xlu0 %3137
        %3141 = vset.pattern.permute.xlu0 0
        %3142 = vperm.xlu0 %3141, %v2867
        %v3143 = vpop.permute.xlu0 %3142
        %3146 = vset.pattern.permute.xlu0 0
        %3147 = vperm.xlu0 %3146, %v2868
        %v3148 = vpop.permute.xlu0 %3147
        %3151 = vset.pattern.permute.xlu0 0
        %3152 = vperm.xlu0 %3151, %v2869
        %v3153 = vpop.permute.xlu0 %3152
        %3156 = vset.pattern.permute.xlu0 0
        %3157 = vperm.xlu0 %3156, %v2870
        %v3158 = vpop.permute.xlu0 %3157
        %3161 = vset.pattern.permute.xlu0 0
        %3162 = vperm.xlu0 %3161, %v2871
        %v3163 = vpop.permute.xlu0 %3162
        %3166 = vset.pattern.permute.xlu0 0
        %3167 = vperm.xlu0 %3166, %v2872
        %v3168 = vpop.permute.xlu0 %3167
        %3171 = vset.pattern.permute.xlu0 0
        %3172 = vperm.xlu0 %3171, %v2873
        %v3173 = vpop.permute.xlu0 %3172
        %3176 = vset.pattern.permute.xlu0 0
        %3177 = vperm.xlu0 %3176, %v2874
        %v3178 = vpop.permute.xlu0 %3177
        %3181 = vset.pattern.permute.xlu0 0
        %3182 = vperm.xlu0 %3181, %v2875
        %v3183 = vpop.permute.xlu0 %3182
        %3186 = vset.pattern.permute.xlu0 0
        %3187 = vperm.xlu0 %3186, %v2876
        %v3188 = vpop.permute.xlu0 %3187
        %3191 = vset.pattern.permute.xlu0 0
        %3192 = vperm.xlu0 %3191, %v2877
        %v3193 = vpop.permute.xlu0 %3192
        %3196 = vset.pattern.permute.xlu0 0
        %3197 = vperm.xlu0 %3196, %v2878
        %v3198 = vpop.permute.xlu0 %3197
        %v3200 = vlaneseq
        %v3201 = vshrl.u32 %v3200, 7
        %v3202 = vsub.s32 0, %v3201
        %v3203 = vrot.slane %v2879, %v3202
        %v3204 = vmul.f32 %v2883, %v3203
        %v3205 = vmul.f32 %v2888, %v3203
        %v3206 = vmul.f32 %v2893, %v3203
        %v3207 = vmul.f32 %v2898, %v3203
        %v3208 = vmul.f32 %v2903, %v3203
        %v3209 = vmul.f32 %v2908, %v3203
        %v3210 = vmul.f32 %v2913, %v3203
        %v3211 = vmul.f32 %v2918, %v3203
        %v3212 = vmul.f32 %v2923, %v3203
        %v3213 = vmul.f32 %v2928, %v3203
        %v3214 = vmul.f32 %v2933, %v3203
        %v3215 = vmul.f32 %v2938, %v3203
        %v3216 = vmul.f32 %v2943, %v3203
        %v3217 = vmul.f32 %v2948, %v3203
        %v3218 = vmul.f32 %v2953, %v3203
        %v3219 = vmul.f32 %v2958, %v3203
        %v3220 = vmul.f32 %v2963, %v3203
        %v3221 = vmul.f32 %v2968, %v3203
        %v3222 = vmul.f32 %v2973, %v3203
        %v3223 = vmul.f32 %v2978, %v3203
        %v3224 = vmul.f32 %v2983, %v3203
        %v3225 = vmul.f32 %v2988, %v3203
        %v3226 = vmul.f32 %v2993, %v3203
        %v3227 = vmul.f32 %v2998, %v3203
        %v3228 = vmul.f32 %v3003, %v3203
        %v3229 = vmul.f32 %v3008, %v3203
        %v3230 = vmul.f32 %v3013, %v3203
        %v3231 = vmul.f32 %v3018, %v3203
        %v3232 = vmul.f32 %v3023, %v3203
        %v3233 = vmul.f32 %v3028, %v3203
        %v3234 = vmul.f32 %v3033, %v3203
        %v3235 = vmul.f32 %v3038, %v3203
        %v3236 = vmul.f32 %v3043, %v3203
        %v3237 = vmul.f32 %v3048, %v3203
        %v3238 = vmul.f32 %v3053, %v3203
        %v3239 = vmul.f32 %v3058, %v3203
        %v3240 = vmul.f32 %v3063, %v3203
        %v3241 = vmul.f32 %v3068, %v3203
        %v3242 = vmul.f32 %v3073, %v3203
        %v3243 = vmul.f32 %v3078, %v3203
        %v3244 = vmul.f32 %v3083, %v3203
        %v3245 = vmul.f32 %v3088, %v3203
        %v3246 = vmul.f32 %v3093, %v3203
        %v3247 = vmul.f32 %v3098, %v3203
        %v3248 = vmul.f32 %v3103, %v3203
        %v3249 = vmul.f32 %v3108, %v3203
        %v3250 = vmul.f32 %v3113, %v3203
        %v3251 = vmul.f32 %v3118, %v3203
        %v3252 = vmul.f32 %v3123, %v3203
        %v3253 = vmul.f32 %v3128, %v3203
        %v3254 = vmul.f32 %v3133, %v3203
        %v3255 = vmul.f32 %v3138, %v3203
        %v3256 = vmul.f32 %v3143, %v3203
        %v3257 = vmul.f32 %v3148, %v3203
        %v3258 = vmul.f32 %v3153, %v3203
        %v3259 = vmul.f32 %v3158, %v3203
        %v3260 = vmul.f32 %v3163, %v3203
        %v3261 = vmul.f32 %v3168, %v3203
        %v3262 = vmul.f32 %v3173, %v3203
        %v3263 = vmul.f32 %v3178, %v3203
        %v3264 = vmul.f32 %v3183, %v3203
        %v3265 = vmul.f32 %v3188, %v3203
        %v3266 = vmul.f32 %v3193, %v3203
        %v3267 = vmul.f32 %v3198, %v3203
        %v3268 = vadd.f32 %v2751, %v3204
        %v3269 = vadd.f32 %v2752, %v3205
        %v3270 = vadd.f32 %v2753, %v3206
        %v3271 = vadd.f32 %v2754, %v3207
        %v3272 = vadd.f32 %v2755, %v3208
        %v3273 = vadd.f32 %v2756, %v3209
        %v3274 = vadd.f32 %v2757, %v3210
        %v3275 = vadd.f32 %v2758, %v3211
        %v3276 = vadd.f32 %v2759, %v3212
        %v3277 = vadd.f32 %v2760, %v3213
        %v3278 = vadd.f32 %v2761, %v3214
        %v3279 = vadd.f32 %v2762, %v3215
        %v3280 = vadd.f32 %v2763, %v3216
        %v3281 = vadd.f32 %v2764, %v3217
        %v3282 = vadd.f32 %v2765, %v3218
        %v3283 = vadd.f32 %v2766, %v3219
        %v3284 = vadd.f32 %v2767, %v3220
        %v3285 = vadd.f32 %v2768, %v3221
        %v3286 = vadd.f32 %v2769, %v3222
        %v3287 = vadd.f32 %v2770, %v3223
        %v3288 = vadd.f32 %v2771, %v3224
        %v3289 = vadd.f32 %v2772, %v3225
        %v3290 = vadd.f32 %v2773, %v3226
        %v3291 = vadd.f32 %v2774, %v3227
        %v3292 = vadd.f32 %v2775, %v3228
        %v3293 = vadd.f32 %v2776, %v3229
        %v3294 = vadd.f32 %v2777, %v3230
        %v3295 = vadd.f32 %v2778, %v3231
        %v3296 = vadd.f32 %v2779, %v3232
        %v3297 = vadd.f32 %v2780, %v3233
        %v3298 = vadd.f32 %v2781, %v3234
        %v3299 = vadd.f32 %v2782, %v3235
        %v3300 = vadd.f32 %v2783, %v3236
        %v3301 = vadd.f32 %v2784, %v3237
        %v3302 = vadd.f32 %v2785, %v3238
        %v3303 = vadd.f32 %v2786, %v3239
        %v3304 = vadd.f32 %v2787, %v3240
        %v3305 = vadd.f32 %v2788, %v3241
        %v3306 = vadd.f32 %v2789, %v3242
        %v3307 = vadd.f32 %v2790, %v3243
        %v3308 = vadd.f32 %v2791, %v3244
        %v3309 = vadd.f32 %v2792, %v3245
        %v3310 = vadd.f32 %v2793, %v3246
        %v3311 = vadd.f32 %v2794, %v3247
        %v3312 = vadd.f32 %v2795, %v3248
        %v3313 = vadd.f32 %v2796, %v3249
        %v3314 = vadd.f32 %v2797, %v3250
        %v3315 = vadd.f32 %v2798, %v3251
        %v3316 = vadd.f32 %v2799, %v3252
        %v3317 = vadd.f32 %v2800, %v3253
        %v3318 = vadd.f32 %v2801, %v3254
        %v3319 = vadd.f32 %v2802, %v3255
        %v3320 = vadd.f32 %v2803, %v3256
        %v3321 = vadd.f32 %v2804, %v3257
        %v3322 = vadd.f32 %v2805, %v3258
        %v3323 = vadd.f32 %v2806, %v3259
        %v3324 = vadd.f32 %v2807, %v3260
        %v3325 = vadd.f32 %v2808, %v3261
        %v3326 = vadd.f32 %v2809, %v3262
        %v3327 = vadd.f32 %v2810, %v3263
        %v3328 = vadd.f32 %v2811, %v3264
        %v3329 = vadd.f32 %v2812, %v3265
        %v3330 = vadd.f32 %v2813, %v3266
        %v3331 = vadd.f32 %v2814, %v3267
        %s3332 = scalar_lea.vmem %s226, 48
        %v3333 = vld [vmem:[%s3332] sm:$0xff]
        %v3334 = vld [vmem:[%s3332 + $0x8] sm:$0xff]
        %v3335 = vld [vmem:[%s3332 + $0x18] sm:$0xff]
        %v3336 = vld [vmem:[%s3332 + $0x20] sm:$0xff]
        %v3337 = vld [vmem:[%s3332 + $0x30] sm:$0xff]
        %v3338 = vld [vmem:[%s3332 + $0x38] sm:$0xff]
        %v3339 = vld [vmem:[%s3332 + $0x48] sm:$0xff]
        %v3340 = vld [vmem:[%s3332 + $0x50] sm:$0xff]
        %v3341 = vld [vmem:[%s3332 + $0x60] sm:$0xff]
        %v3342 = vld [vmem:[%s3332 + $0x68] sm:$0xff]
        %v3343 = vld [vmem:[%s3332 + $0x78] sm:$0xff]
        %v3344 = vld [vmem:[%s3332 + $0x80] sm:$0xff]
        %v3345 = vld [vmem:[%s3332 + $0x90] sm:$0xff]
        %v3346 = vld [vmem:[%s3332 + $0x98] sm:$0xff]
        %v3347 = vld [vmem:[%s3332 + $0xa8] sm:$0xff]
        %v3348 = vld [vmem:[%s3332 + $0xb0] sm:$0xff]
        %v3349 = vld [vmem:[%s3332 + $0xc0] sm:$0xff]
        %v3350 = vld [vmem:[%s3332 + $0xc8] sm:$0xff]
        %v3351 = vld [vmem:[%s3332 + $0xd8] sm:$0xff]
        %v3352 = vld [vmem:[%s3332 + $0xe0] sm:$0xff]
        %v3353 = vld [vmem:[%s3332 + $0xf0] sm:$0xff]
        %v3354 = vld [vmem:[%s3332 + $0xf8] sm:$0xff]
        %v3355 = vld [vmem:[%s3332 + $0x108] sm:$0xff]
        %v3356 = vld [vmem:[%s3332 + $0x110] sm:$0xff]
        %v3357 = vld [vmem:[%s3332 + $0x120] sm:$0xff]
        %v3358 = vld [vmem:[%s3332 + $0x128] sm:$0xff]
        %v3359 = vld [vmem:[%s3332 + $0x138] sm:$0xff]
        %v3360 = vld [vmem:[%s3332 + $0x140] sm:$0xff]
        %v3361 = vld [vmem:[%s3332 + $0x150] sm:$0xff]
        %v3362 = vld [vmem:[%s3332 + $0x158] sm:$0xff]
        %v3363 = vld [vmem:[%s3332 + $0x168] sm:$0xff]
        %v3364 = vld [vmem:[%s3332 + $0x170] sm:$0xff]
        %v3365 = vld [vmem:[%s3332 + $0x1b0] sm:$0xff]
        %v3366 = vld [vmem:[%s3332 + $0x1b8] sm:$0xff]
        %v3367 = vld [vmem:[%s3332 + $0x1c8] sm:$0xff]
        %v3368 = vld [vmem:[%s3332 + $0x1d0] sm:$0xff]
        %v3369 = vld [vmem:[%s3332 + $0x1e0] sm:$0xff]
        %v3370 = vld [vmem:[%s3332 + $0x1e8] sm:$0xff]
        %v3371 = vld [vmem:[%s3332 + $0x1f8] sm:$0xff]
        %v3372 = vld [vmem:[%s3332 + $0x200] sm:$0xff]
        %v3373 = vld [vmem:[%s3332 + $0x210] sm:$0xff]
        %v3374 = vld [vmem:[%s3332 + $0x218] sm:$0xff]
        %v3375 = vld [vmem:[%s3332 + $0x228] sm:$0xff]
        %v3376 = vld [vmem:[%s3332 + $0x230] sm:$0xff]
        %v3377 = vld [vmem:[%s3332 + $0x240] sm:$0xff]
        %v3378 = vld [vmem:[%s3332 + $0x248] sm:$0xff]
        %v3379 = vld [vmem:[%s3332 + $0x258] sm:$0xff]
        %v3380 = vld [vmem:[%s3332 + $0x260] sm:$0xff]
        %v3381 = vld [vmem:[%s3332 + $0x270] sm:$0xff]
        %v3382 = vld [vmem:[%s3332 + $0x278] sm:$0xff]
        %v3383 = vld [vmem:[%s3332 + $0x288] sm:$0xff]
        %v3384 = vld [vmem:[%s3332 + $0x290] sm:$0xff]
        %v3385 = vld [vmem:[%s3332 + $0x2a0] sm:$0xff]
        %v3386 = vld [vmem:[%s3332 + $0x2a8] sm:$0xff]
        %v3387 = vld [vmem:[%s3332 + $0x2b8] sm:$0xff]
        %v3388 = vld [vmem:[%s3332 + $0x2c0] sm:$0xff]
        %v3389 = vld [vmem:[%s3332 + $0x2d0] sm:$0xff]
        %v3390 = vld [vmem:[%s3332 + $0x2d8] sm:$0xff]
        %v3391 = vld [vmem:[%s3332 + $0x2e8] sm:$0xff]
        %v3392 = vld [vmem:[%s3332 + $0x2f0] sm:$0xff]
        %v3393 = vld [vmem:[%s3332 + $0x300] sm:$0xff]
        %v3394 = vld [vmem:[%s3332 + $0x308] sm:$0xff]
        %v3395 = vld [vmem:[%s3332 + $0x318] sm:$0xff]
        %v3396 = vld [vmem:[%s3332 + $0x320] sm:$0xff]
        %v3397 = vld [vmem:[%s1 + $0x6] sm:$0x1]
        %3399 = vset.pattern.permute.xlu0 0
        %3400 = vperm.xlu0 %3399, %v3333
        %v3401 = vpop.permute.xlu0 %3400
        %3404 = vset.pattern.permute.xlu0 0
        %3405 = vperm.xlu0 %3404, %v3334
        %v3406 = vpop.permute.xlu0 %3405
        %3409 = vset.pattern.permute.xlu0 0
        %3410 = vperm.xlu0 %3409, %v3335
        %v3411 = vpop.permute.xlu0 %3410
        %3414 = vset.pattern.permute.xlu0 0
        %3415 = vperm.xlu0 %3414, %v3336
        %v3416 = vpop.permute.xlu0 %3415
        %3419 = vset.pattern.permute.xlu0 0
        %3420 = vperm.xlu0 %3419, %v3337
        %v3421 = vpop.permute.xlu0 %3420
        %3424 = vset.pattern.permute.xlu0 0
        %3425 = vperm.xlu0 %3424, %v3338
        %v3426 = vpop.permute.xlu0 %3425
        %3429 = vset.pattern.permute.xlu0 0
        %3430 = vperm.xlu0 %3429, %v3339
        %v3431 = vpop.permute.xlu0 %3430
        %3434 = vset.pattern.permute.xlu0 0
        %3435 = vperm.xlu0 %3434, %v3340
        %v3436 = vpop.permute.xlu0 %3435
        %3439 = vset.pattern.permute.xlu0 0
        %3440 = vperm.xlu0 %3439, %v3341
        %v3441 = vpop.permute.xlu0 %3440
        %3444 = vset.pattern.permute.xlu0 0
        %3445 = vperm.xlu0 %3444, %v3342
        %v3446 = vpop.permute.xlu0 %3445
        %3449 = vset.pattern.permute.xlu0 0
        %3450 = vperm.xlu0 %3449, %v3343
        %v3451 = vpop.permute.xlu0 %3450
        %3454 = vset.pattern.permute.xlu0 0
        %3455 = vperm.xlu0 %3454, %v3344
        %v3456 = vpop.permute.xlu0 %3455
        %3459 = vset.pattern.permute.xlu0 0
        %3460 = vperm.xlu0 %3459, %v3345
        %v3461 = vpop.permute.xlu0 %3460
        %3464 = vset.pattern.permute.xlu0 0
        %3465 = vperm.xlu0 %3464, %v3346
        %v3466 = vpop.permute.xlu0 %3465
        %3469 = vset.pattern.permute.xlu0 0
        %3470 = vperm.xlu0 %3469, %v3347
        %v3471 = vpop.permute.xlu0 %3470
        %3474 = vset.pattern.permute.xlu0 0
        %3475 = vperm.xlu0 %3474, %v3348
        %v3476 = vpop.permute.xlu0 %3475
        %3479 = vset.pattern.permute.xlu0 0
        %3480 = vperm.xlu0 %3479, %v3349
        %v3481 = vpop.permute.xlu0 %3480
        %3484 = vset.pattern.permute.xlu0 0
        %3485 = vperm.xlu0 %3484, %v3350
        %v3486 = vpop.permute.xlu0 %3485
        %3489 = vset.pattern.permute.xlu0 0
        %3490 = vperm.xlu0 %3489, %v3351
        %v3491 = vpop.permute.xlu0 %3490
        %3494 = vset.pattern.permute.xlu0 0
        %3495 = vperm.xlu0 %3494, %v3352
        %v3496 = vpop.permute.xlu0 %3495
        %3499 = vset.pattern.permute.xlu0 0
        %3500 = vperm.xlu0 %3499, %v3353
        %v3501 = vpop.permute.xlu0 %3500
        %3504 = vset.pattern.permute.xlu0 0
        %3505 = vperm.xlu0 %3504, %v3354
        %v3506 = vpop.permute.xlu0 %3505
        %3509 = vset.pattern.permute.xlu0 0
        %3510 = vperm.xlu0 %3509, %v3355
        %v3511 = vpop.permute.xlu0 %3510
        %3514 = vset.pattern.permute.xlu0 0
        %3515 = vperm.xlu0 %3514, %v3356
        %v3516 = vpop.permute.xlu0 %3515
        %3519 = vset.pattern.permute.xlu0 0
        %3520 = vperm.xlu0 %3519, %v3357
        %v3521 = vpop.permute.xlu0 %3520
        %3524 = vset.pattern.permute.xlu0 0
        %3525 = vperm.xlu0 %3524, %v3358
        %v3526 = vpop.permute.xlu0 %3525
        %3529 = vset.pattern.permute.xlu0 0
        %3530 = vperm.xlu0 %3529, %v3359
        %v3531 = vpop.permute.xlu0 %3530
        %3534 = vset.pattern.permute.xlu0 0
        %3535 = vperm.xlu0 %3534, %v3360
        %v3536 = vpop.permute.xlu0 %3535
        %3539 = vset.pattern.permute.xlu0 0
        %3540 = vperm.xlu0 %3539, %v3361
        %v3541 = vpop.permute.xlu0 %3540
        %3544 = vset.pattern.permute.xlu0 0
        %3545 = vperm.xlu0 %3544, %v3362
        %v3546 = vpop.permute.xlu0 %3545
        %3549 = vset.pattern.permute.xlu0 0
        %3550 = vperm.xlu0 %3549, %v3363
        %v3551 = vpop.permute.xlu0 %3550
        %3554 = vset.pattern.permute.xlu0 0
        %3555 = vperm.xlu0 %3554, %v3364
        %v3556 = vpop.permute.xlu0 %3555
        %3559 = vset.pattern.permute.xlu0 0
        %3560 = vperm.xlu0 %3559, %v3365
        %v3561 = vpop.permute.xlu0 %3560
        %3564 = vset.pattern.permute.xlu0 0
        %3565 = vperm.xlu0 %3564, %v3366
        %v3566 = vpop.permute.xlu0 %3565
        %3569 = vset.pattern.permute.xlu0 0
        %3570 = vperm.xlu0 %3569, %v3367
        %v3571 = vpop.permute.xlu0 %3570
        %3574 = vset.pattern.permute.xlu0 0
        %3575 = vperm.xlu0 %3574, %v3368
        %v3576 = vpop.permute.xlu0 %3575
        %3579 = vset.pattern.permute.xlu0 0
        %3580 = vperm.xlu0 %3579, %v3369
        %v3581 = vpop.permute.xlu0 %3580
        %3584 = vset.pattern.permute.xlu0 0
        %3585 = vperm.xlu0 %3584, %v3370
        %v3586 = vpop.permute.xlu0 %3585
        %3589 = vset.pattern.permute.xlu0 0
        %3590 = vperm.xlu0 %3589, %v3371
        %v3591 = vpop.permute.xlu0 %3590
        %3594 = vset.pattern.permute.xlu0 0
        %3595 = vperm.xlu0 %3594, %v3372
        %v3596 = vpop.permute.xlu0 %3595
        %3599 = vset.pattern.permute.xlu0 0
        %3600 = vperm.xlu0 %3599, %v3373
        %v3601 = vpop.permute.xlu0 %3600
        %3604 = vset.pattern.permute.xlu0 0
        %3605 = vperm.xlu0 %3604, %v3374
        %v3606 = vpop.permute.xlu0 %3605
        %3609 = vset.pattern.permute.xlu0 0
        %3610 = vperm.xlu0 %3609, %v3375
        %v3611 = vpop.permute.xlu0 %3610
        %3614 = vset.pattern.permute.xlu0 0
        %3615 = vperm.xlu0 %3614, %v3376
        %v3616 = vpop.permute.xlu0 %3615
        %3619 = vset.pattern.permute.xlu0 0
        %3620 = vperm.xlu0 %3619, %v3377
        %v3621 = vpop.permute.xlu0 %3620
        %3624 = vset.pattern.permute.xlu0 0
        %3625 = vperm.xlu0 %3624, %v3378
        %v3626 = vpop.permute.xlu0 %3625
        %3629 = vset.pattern.permute.xlu0 0
        %3630 = vperm.xlu0 %3629, %v3379
        %v3631 = vpop.permute.xlu0 %3630
        %3634 = vset.pattern.permute.xlu0 0
        %3635 = vperm.xlu0 %3634, %v3380
        %v3636 = vpop.permute.xlu0 %3635
        %3639 = vset.pattern.permute.xlu0 0
        %3640 = vperm.xlu0 %3639, %v3381
        %v3641 = vpop.permute.xlu0 %3640
        %3644 = vset.pattern.permute.xlu0 0
        %3645 = vperm.xlu0 %3644, %v3382
        %v3646 = vpop.permute.xlu0 %3645
        %3649 = vset.pattern.permute.xlu0 0
        %3650 = vperm.xlu0 %3649, %v3383
        %v3651 = vpop.permute.xlu0 %3650
        %3654 = vset.pattern.permute.xlu0 0
        %3655 = vperm.xlu0 %3654, %v3384
        %v3656 = vpop.permute.xlu0 %3655
        %3659 = vset.pattern.permute.xlu0 0
        %3660 = vperm.xlu0 %3659, %v3385
        %v3661 = vpop.permute.xlu0 %3660
        %3664 = vset.pattern.permute.xlu0 0
        %3665 = vperm.xlu0 %3664, %v3386
        %v3666 = vpop.permute.xlu0 %3665
        %3669 = vset.pattern.permute.xlu0 0
        %3670 = vperm.xlu0 %3669, %v3387
        %v3671 = vpop.permute.xlu0 %3670
        %3674 = vset.pattern.permute.xlu0 0
        %3675 = vperm.xlu0 %3674, %v3388
        %v3676 = vpop.permute.xlu0 %3675
        %3679 = vset.pattern.permute.xlu0 0
        %3680 = vperm.xlu0 %3679, %v3389
        %v3681 = vpop.permute.xlu0 %3680
        %3684 = vset.pattern.permute.xlu0 0
        %3685 = vperm.xlu0 %3684, %v3390
        %v3686 = vpop.permute.xlu0 %3685
        %3689 = vset.pattern.permute.xlu0 0
        %3690 = vperm.xlu0 %3689, %v3391
        %v3691 = vpop.permute.xlu0 %3690
        %3694 = vset.pattern.permute.xlu0 0
        %3695 = vperm.xlu0 %3694, %v3392
        %v3696 = vpop.permute.xlu0 %3695
        %3699 = vset.pattern.permute.xlu0 0
        %3700 = vperm.xlu0 %3699, %v3393
        %v3701 = vpop.permute.xlu0 %3700
        %3704 = vset.pattern.permute.xlu0 0
        %3705 = vperm.xlu0 %3704, %v3394
        %v3706 = vpop.permute.xlu0 %3705
        %3709 = vset.pattern.permute.xlu0 0
        %3710 = vperm.xlu0 %3709, %v3395
        %v3711 = vpop.permute.xlu0 %3710
        %3714 = vset.pattern.permute.xlu0 0
        %3715 = vperm.xlu0 %3714, %v3396
        %v3716 = vpop.permute.xlu0 %3715
        %v3718 = vlaneseq
        %v3719 = vshrl.u32 %v3718, 7
        %v3720 = vsub.s32 0, %v3719
        %v3721 = vrot.slane %v3397, %v3720
        %v3722 = vmul.f32 %v3401, %v3721
        %v3723 = vmul.f32 %v3406, %v3721
        %v3724 = vmul.f32 %v3411, %v3721
        %v3725 = vmul.f32 %v3416, %v3721
        %v3726 = vmul.f32 %v3421, %v3721
        %v3727 = vmul.f32 %v3426, %v3721
        %v3728 = vmul.f32 %v3431, %v3721
        %v3729 = vmul.f32 %v3436, %v3721
        %v3730 = vmul.f32 %v3441, %v3721
        %v3731 = vmul.f32 %v3446, %v3721
        %v3732 = vmul.f32 %v3451, %v3721
        %v3733 = vmul.f32 %v3456, %v3721
        %v3734 = vmul.f32 %v3461, %v3721
        %v3735 = vmul.f32 %v3466, %v3721
        %v3736 = vmul.f32 %v3471, %v3721
        %v3737 = vmul.f32 %v3476, %v3721
        %v3738 = vmul.f32 %v3481, %v3721
        %v3739 = vmul.f32 %v3486, %v3721
        %v3740 = vmul.f32 %v3491, %v3721
        %v3741 = vmul.f32 %v3496, %v3721
        %v3742 = vmul.f32 %v3501, %v3721
        %v3743 = vmul.f32 %v3506, %v3721
        %v3744 = vmul.f32 %v3511, %v3721
        %v3745 = vmul.f32 %v3516, %v3721
        %v3746 = vmul.f32 %v3521, %v3721
        %v3747 = vmul.f32 %v3526, %v3721
        %v3748 = vmul.f32 %v3531, %v3721
        %v3749 = vmul.f32 %v3536, %v3721
        %v3750 = vmul.f32 %v3541, %v3721
        %v3751 = vmul.f32 %v3546, %v3721
        %v3752 = vmul.f32 %v3551, %v3721
        %v3753 = vmul.f32 %v3556, %v3721
        %v3754 = vmul.f32 %v3561, %v3721
        %v3755 = vmul.f32 %v3566, %v3721
        %v3756 = vmul.f32 %v3571, %v3721
        %v3757 = vmul.f32 %v3576, %v3721
        %v3758 = vmul.f32 %v3581, %v3721
        %v3759 = vmul.f32 %v3586, %v3721
        %v3760 = vmul.f32 %v3591, %v3721
        %v3761 = vmul.f32 %v3596, %v3721
        %v3762 = vmul.f32 %v3601, %v3721
        %v3763 = vmul.f32 %v3606, %v3721
        %v3764 = vmul.f32 %v3611, %v3721
        %v3765 = vmul.f32 %v3616, %v3721
        %v3766 = vmul.f32 %v3621, %v3721
        %v3767 = vmul.f32 %v3626, %v3721
        %v3768 = vmul.f32 %v3631, %v3721
        %v3769 = vmul.f32 %v3636, %v3721
        %v3770 = vmul.f32 %v3641, %v3721
        %v3771 = vmul.f32 %v3646, %v3721
        %v3772 = vmul.f32 %v3651, %v3721
        %v3773 = vmul.f32 %v3656, %v3721
        %v3774 = vmul.f32 %v3661, %v3721
        %v3775 = vmul.f32 %v3666, %v3721
        %v3776 = vmul.f32 %v3671, %v3721
        %v3777 = vmul.f32 %v3676, %v3721
        %v3778 = vmul.f32 %v3681, %v3721
        %v3779 = vmul.f32 %v3686, %v3721
        %v3780 = vmul.f32 %v3691, %v3721
        %v3781 = vmul.f32 %v3696, %v3721
        %v3782 = vmul.f32 %v3701, %v3721
        %v3783 = vmul.f32 %v3706, %v3721
        %v3784 = vmul.f32 %v3711, %v3721
        %v3785 = vmul.f32 %v3716, %v3721
        %v3786 = vadd.f32 %v3268, %v3722
        %v3787 = vadd.f32 %v3269, %v3723
        %v3788 = vadd.f32 %v3270, %v3724
        %v3789 = vadd.f32 %v3271, %v3725
        %v3790 = vadd.f32 %v3272, %v3726
        %v3791 = vadd.f32 %v3273, %v3727
        %v3792 = vadd.f32 %v3274, %v3728
        %v3793 = vadd.f32 %v3275, %v3729
        %v3794 = vadd.f32 %v3276, %v3730
        %v3795 = vadd.f32 %v3277, %v3731
        %v3796 = vadd.f32 %v3278, %v3732
        %v3797 = vadd.f32 %v3279, %v3733
        %v3798 = vadd.f32 %v3280, %v3734
        %v3799 = vadd.f32 %v3281, %v3735
        %v3800 = vadd.f32 %v3282, %v3736
        %v3801 = vadd.f32 %v3283, %v3737
        %v3802 = vadd.f32 %v3284, %v3738
        %v3803 = vadd.f32 %v3285, %v3739
        %v3804 = vadd.f32 %v3286, %v3740
        %v3805 = vadd.f32 %v3287, %v3741
        %v3806 = vadd.f32 %v3288, %v3742
        %v3807 = vadd.f32 %v3289, %v3743
        %v3808 = vadd.f32 %v3290, %v3744
        %v3809 = vadd.f32 %v3291, %v3745
        %v3810 = vadd.f32 %v3292, %v3746
        %v3811 = vadd.f32 %v3293, %v3747
        %v3812 = vadd.f32 %v3294, %v3748
        %v3813 = vadd.f32 %v3295, %v3749
        %v3814 = vadd.f32 %v3296, %v3750
        %v3815 = vadd.f32 %v3297, %v3751
        %v3816 = vadd.f32 %v3298, %v3752
        %v3817 = vadd.f32 %v3299, %v3753
        %v3818 = vadd.f32 %v3300, %v3754
        %v3819 = vadd.f32 %v3301, %v3755
        %v3820 = vadd.f32 %v3302, %v3756
        %v3821 = vadd.f32 %v3303, %v3757
        %v3822 = vadd.f32 %v3304, %v3758
        %v3823 = vadd.f32 %v3305, %v3759
        %v3824 = vadd.f32 %v3306, %v3760
        %v3825 = vadd.f32 %v3307, %v3761
        %v3826 = vadd.f32 %v3308, %v3762
        %v3827 = vadd.f32 %v3309, %v3763
        %v3828 = vadd.f32 %v3310, %v3764
        %v3829 = vadd.f32 %v3311, %v3765
        %v3830 = vadd.f32 %v3312, %v3766
        %v3831 = vadd.f32 %v3313, %v3767
        %v3832 = vadd.f32 %v3314, %v3768
        %v3833 = vadd.f32 %v3315, %v3769
        %v3834 = vadd.f32 %v3316, %v3770
        %v3835 = vadd.f32 %v3317, %v3771
        %v3836 = vadd.f32 %v3318, %v3772
        %v3837 = vadd.f32 %v3319, %v3773
        %v3838 = vadd.f32 %v3320, %v3774
        %v3839 = vadd.f32 %v3321, %v3775
        %v3840 = vadd.f32 %v3322, %v3776
        %v3841 = vadd.f32 %v3323, %v3777
        %v3842 = vadd.f32 %v3324, %v3778
        %v3843 = vadd.f32 %v3325, %v3779
        %v3844 = vadd.f32 %v3326, %v3780
        %v3845 = vadd.f32 %v3327, %v3781
        %v3846 = vadd.f32 %v3328, %v3782
        %v3847 = vadd.f32 %v3329, %v3783
        %v3848 = vadd.f32 %v3330, %v3784
        %v3849 = vadd.f32 %v3331, %v3785
        %v3850 = vld [vmem:[%s3332 + $0x1] sm:$0xff]
        %v3851 = vld [vmem:[%s3332 + $0x9] sm:$0xff]
        %v3852 = vld [vmem:[%s3332 + $0x19] sm:$0xff]
        %v3853 = vld [vmem:[%s3332 + $0x21] sm:$0xff]
        %v3854 = vld [vmem:[%s3332 + $0x31] sm:$0xff]
        %v3855 = vld [vmem:[%s3332 + $0x39] sm:$0xff]
        %v3856 = vld [vmem:[%s3332 + $0x49] sm:$0xff]
        %v3857 = vld [vmem:[%s3332 + $0x51] sm:$0xff]
        %v3858 = vld [vmem:[%s3332 + $0x61] sm:$0xff]
        %v3859 = vld [vmem:[%s3332 + $0x69] sm:$0xff]
        %v3860 = vld [vmem:[%s3332 + $0x79] sm:$0xff]
        %v3861 = vld [vmem:[%s3332 + $0x81] sm:$0xff]
        %v3862 = vld [vmem:[%s3332 + $0x91] sm:$0xff]
        %v3863 = vld [vmem:[%s3332 + $0x99] sm:$0xff]
        %v3864 = vld [vmem:[%s3332 + $0xa9] sm:$0xff]
        %v3865 = vld [vmem:[%s3332 + $0xb1] sm:$0xff]
        %v3866 = vld [vmem:[%s3332 + $0xc1] sm:$0xff]
        %v3867 = vld [vmem:[%s3332 + $0xc9] sm:$0xff]
        %v3868 = vld [vmem:[%s3332 + $0xd9] sm:$0xff]
        %v3869 = vld [vmem:[%s3332 + $0xe1] sm:$0xff]
        %v3870 = vld [vmem:[%s3332 + $0xf1] sm:$0xff]
        %v3871 = vld [vmem:[%s3332 + $0xf9] sm:$0xff]
        %v3872 = vld [vmem:[%s3332 + $0x109] sm:$0xff]
        %v3873 = vld [vmem:[%s3332 + $0x111] sm:$0xff]
        %v3874 = vld [vmem:[%s3332 + $0x121] sm:$0xff]
        %v3875 = vld [vmem:[%s3332 + $0x129] sm:$0xff]
        %v3876 = vld [vmem:[%s3332 + $0x139] sm:$0xff]
        %v3877 = vld [vmem:[%s3332 + $0x141] sm:$0xff]
        %v3878 = vld [vmem:[%s3332 + $0x151] sm:$0xff]
        %v3879 = vld [vmem:[%s3332 + $0x159] sm:$0xff]
        %v3880 = vld [vmem:[%s3332 + $0x169] sm:$0xff]
        %v3881 = vld [vmem:[%s3332 + $0x171] sm:$0xff]
        %v3882 = vld [vmem:[%s3332 + $0x1b1] sm:$0xff]
        %v3883 = vld [vmem:[%s3332 + $0x1b9] sm:$0xff]
        %v3884 = vld [vmem:[%s3332 + $0x1c9] sm:$0xff]
        %v3885 = vld [vmem:[%s3332 + $0x1d1] sm:$0xff]
        %v3886 = vld [vmem:[%s3332 + $0x1e1] sm:$0xff]
        %v3887 = vld [vmem:[%s3332 + $0x1e9] sm:$0xff]
        %v3888 = vld [vmem:[%s3332 + $0x1f9] sm:$0xff]
        %v3889 = vld [vmem:[%s3332 + $0x201] sm:$0xff]
        %v3890 = vld [vmem:[%s3332 + $0x211] sm:$0xff]
        %v3891 = vld [vmem:[%s3332 + $0x219] sm:$0xff]
        %v3892 = vld [vmem:[%s3332 + $0x229] sm:$0xff]
        %v3893 = vld [vmem:[%s3332 + $0x231] sm:$0xff]
        %v3894 = vld [vmem:[%s3332 + $0x241] sm:$0xff]
        %v3895 = vld [vmem:[%s3332 + $0x249] sm:$0xff]
        %v3896 = vld [vmem:[%s3332 + $0x259] sm:$0xff]
        %v3897 = vld [vmem:[%s3332 + $0x261] sm:$0xff]
        %v3898 = vld [vmem:[%s3332 + $0x271] sm:$0xff]
        %v3899 = vld [vmem:[%s3332 + $0x279] sm:$0xff]
        %v3900 = vld [vmem:[%s3332 + $0x289] sm:$0xff]
        %v3901 = vld [vmem:[%s3332 + $0x291] sm:$0xff]
        %v3902 = vld [vmem:[%s3332 + $0x2a1] sm:$0xff]
        %v3903 = vld [vmem:[%s3332 + $0x2a9] sm:$0xff]
        %v3904 = vld [vmem:[%s3332 + $0x2b9] sm:$0xff]
        %v3905 = vld [vmem:[%s3332 + $0x2c1] sm:$0xff]
        %v3906 = vld [vmem:[%s3332 + $0x2d1] sm:$0xff]
        %v3907 = vld [vmem:[%s3332 + $0x2d9] sm:$0xff]
        %v3908 = vld [vmem:[%s3332 + $0x2e9] sm:$0xff]
        %v3909 = vld [vmem:[%s3332 + $0x2f1] sm:$0xff]
        %v3910 = vld [vmem:[%s3332 + $0x301] sm:$0xff]
        %v3911 = vld [vmem:[%s3332 + $0x309] sm:$0xff]
        %v3912 = vld [vmem:[%s3332 + $0x319] sm:$0xff]
        %v3913 = vld [vmem:[%s3332 + $0x321] sm:$0xff]
        %v3914 = vld [vmem:[%s1 + $0x7] sm:$0x1]
        %3916 = vset.pattern.permute.xlu0 0
        %3917 = vperm.xlu0 %3916, %v3850
        %v3918 = vpop.permute.xlu0 %3917
        %3921 = vset.pattern.permute.xlu0 0
        %3922 = vperm.xlu0 %3921, %v3851
        %v3923 = vpop.permute.xlu0 %3922
        %3926 = vset.pattern.permute.xlu0 0
        %3927 = vperm.xlu0 %3926, %v3852
        %v3928 = vpop.permute.xlu0 %3927
        %3931 = vset.pattern.permute.xlu0 0
        %3932 = vperm.xlu0 %3931, %v3853
        %v3933 = vpop.permute.xlu0 %3932
        %3936 = vset.pattern.permute.xlu0 0
        %3937 = vperm.xlu0 %3936, %v3854
        %v3938 = vpop.permute.xlu0 %3937
        %3941 = vset.pattern.permute.xlu0 0
        %3942 = vperm.xlu0 %3941, %v3855
        %v3943 = vpop.permute.xlu0 %3942
        %3946 = vset.pattern.permute.xlu0 0
        %3947 = vperm.xlu0 %3946, %v3856
        %v3948 = vpop.permute.xlu0 %3947
        %3951 = vset.pattern.permute.xlu0 0
        %3952 = vperm.xlu0 %3951, %v3857
        %v3953 = vpop.permute.xlu0 %3952
        %3956 = vset.pattern.permute.xlu0 0
        %3957 = vperm.xlu0 %3956, %v3858
        %v3958 = vpop.permute.xlu0 %3957
        %3961 = vset.pattern.permute.xlu0 0
        %3962 = vperm.xlu0 %3961, %v3859
        %v3963 = vpop.permute.xlu0 %3962
        %3966 = vset.pattern.permute.xlu0 0
        %3967 = vperm.xlu0 %3966, %v3860
        %v3968 = vpop.permute.xlu0 %3967
        %3971 = vset.pattern.permute.xlu0 0
        %3972 = vperm.xlu0 %3971, %v3861
        %v3973 = vpop.permute.xlu0 %3972
        %3976 = vset.pattern.permute.xlu0 0
        %3977 = vperm.xlu0 %3976, %v3862
        %v3978 = vpop.permute.xlu0 %3977
        %3981 = vset.pattern.permute.xlu0 0
        %3982 = vperm.xlu0 %3981, %v3863
        %v3983 = vpop.permute.xlu0 %3982
        %3986 = vset.pattern.permute.xlu0 0
        %3987 = vperm.xlu0 %3986, %v3864
        %v3988 = vpop.permute.xlu0 %3987
        %3991 = vset.pattern.permute.xlu0 0
        %3992 = vperm.xlu0 %3991, %v3865
        %v3993 = vpop.permute.xlu0 %3992
        %3996 = vset.pattern.permute.xlu0 0
        %3997 = vperm.xlu0 %3996, %v3866
        %v3998 = vpop.permute.xlu0 %3997
        %4001 = vset.pattern.permute.xlu0 0
        %4002 = vperm.xlu0 %4001, %v3867
        %v4003 = vpop.permute.xlu0 %4002
        %4006 = vset.pattern.permute.xlu0 0
        %4007 = vperm.xlu0 %4006, %v3868
        %v4008 = vpop.permute.xlu0 %4007
        %4011 = vset.pattern.permute.xlu0 0
        %4012 = vperm.xlu0 %4011, %v3869
        %v4013 = vpop.permute.xlu0 %4012
        %4016 = vset.pattern.permute.xlu0 0
        %4017 = vperm.xlu0 %4016, %v3870
        %v4018 = vpop.permute.xlu0 %4017
        %4021 = vset.pattern.permute.xlu0 0
        %4022 = vperm.xlu0 %4021, %v3871
        %v4023 = vpop.permute.xlu0 %4022
        %4026 = vset.pattern.permute.xlu0 0
        %4027 = vperm.xlu0 %4026, %v3872
        %v4028 = vpop.permute.xlu0 %4027
        %4031 = vset.pattern.permute.xlu0 0
        %4032 = vperm.xlu0 %4031, %v3873
        %v4033 = vpop.permute.xlu0 %4032
        %4036 = vset.pattern.permute.xlu0 0
        %4037 = vperm.xlu0 %4036, %v3874
        %v4038 = vpop.permute.xlu0 %4037
        %4041 = vset.pattern.permute.xlu0 0
        %4042 = vperm.xlu0 %4041, %v3875
        %v4043 = vpop.permute.xlu0 %4042
        %4046 = vset.pattern.permute.xlu0 0
        %4047 = vperm.xlu0 %4046, %v3876
        %v4048 = vpop.permute.xlu0 %4047
        %4051 = vset.pattern.permute.xlu0 0
        %4052 = vperm.xlu0 %4051, %v3877
        %v4053 = vpop.permute.xlu0 %4052
        %4056 = vset.pattern.permute.xlu0 0
        %4057 = vperm.xlu0 %4056, %v3878
        %v4058 = vpop.permute.xlu0 %4057
        %4061 = vset.pattern.permute.xlu0 0
        %4062 = vperm.xlu0 %4061, %v3879
        %v4063 = vpop.permute.xlu0 %4062
        %4066 = vset.pattern.permute.xlu0 0
        %4067 = vperm.xlu0 %4066, %v3880
        %v4068 = vpop.permute.xlu0 %4067
        %4071 = vset.pattern.permute.xlu0 0
        %4072 = vperm.xlu0 %4071, %v3881
        %v4073 = vpop.permute.xlu0 %4072
        %4076 = vset.pattern.permute.xlu0 0
        %4077 = vperm.xlu0 %4076, %v3882
        %v4078 = vpop.permute.xlu0 %4077
        %4081 = vset.pattern.permute.xlu0 0
        %4082 = vperm.xlu0 %4081, %v3883
        %v4083 = vpop.permute.xlu0 %4082
        %4086 = vset.pattern.permute.xlu0 0
        %4087 = vperm.xlu0 %4086, %v3884
        %v4088 = vpop.permute.xlu0 %4087
        %4091 = vset.pattern.permute.xlu0 0
        %4092 = vperm.xlu0 %4091, %v3885
        %v4093 = vpop.permute.xlu0 %4092
        %4096 = vset.pattern.permute.xlu0 0
        %4097 = vperm.xlu0 %4096, %v3886
        %v4098 = vpop.permute.xlu0 %4097
        %4101 = vset.pattern.permute.xlu0 0
        %4102 = vperm.xlu0 %4101, %v3887
        %v4103 = vpop.permute.xlu0 %4102
        %4106 = vset.pattern.permute.xlu0 0
        %4107 = vperm.xlu0 %4106, %v3888
        %v4108 = vpop.permute.xlu0 %4107
        %4111 = vset.pattern.permute.xlu0 0
        %4112 = vperm.xlu0 %4111, %v3889
        %v4113 = vpop.permute.xlu0 %4112
        %4116 = vset.pattern.permute.xlu0 0
        %4117 = vperm.xlu0 %4116, %v3890
        %v4118 = vpop.permute.xlu0 %4117
        %4121 = vset.pattern.permute.xlu0 0
        %4122 = vperm.xlu0 %4121, %v3891
        %v4123 = vpop.permute.xlu0 %4122
        %4126 = vset.pattern.permute.xlu0 0
        %4127 = vperm.xlu0 %4126, %v3892
        %v4128 = vpop.permute.xlu0 %4127
        %4131 = vset.pattern.permute.xlu0 0
        %4132 = vperm.xlu0 %4131, %v3893
        %v4133 = vpop.permute.xlu0 %4132
        %4136 = vset.pattern.permute.xlu0 0
        %4137 = vperm.xlu0 %4136, %v3894
        %v4138 = vpop.permute.xlu0 %4137
        %4141 = vset.pattern.permute.xlu0 0
        %4142 = vperm.xlu0 %4141, %v3895
        %v4143 = vpop.permute.xlu0 %4142
        %4146 = vset.pattern.permute.xlu0 0
        %4147 = vperm.xlu0 %4146, %v3896
        %v4148 = vpop.permute.xlu0 %4147
        %4151 = vset.pattern.permute.xlu0 0
        %4152 = vperm.xlu0 %4151, %v3897
        %v4153 = vpop.permute.xlu0 %4152
        %4156 = vset.pattern.permute.xlu0 0
        %4157 = vperm.xlu0 %4156, %v3898
        %v4158 = vpop.permute.xlu0 %4157
        %4161 = vset.pattern.permute.xlu0 0
        %4162 = vperm.xlu0 %4161, %v3899
        %v4163 = vpop.permute.xlu0 %4162
        %4166 = vset.pattern.permute.xlu0 0
        %4167 = vperm.xlu0 %4166, %v3900
        %v4168 = vpop.permute.xlu0 %4167
        %4171 = vset.pattern.permute.xlu0 0
        %4172 = vperm.xlu0 %4171, %v3901
        %v4173 = vpop.permute.xlu0 %4172
        %4176 = vset.pattern.permute.xlu0 0
        %4177 = vperm.xlu0 %4176, %v3902
        %v4178 = vpop.permute.xlu0 %4177
        %4181 = vset.pattern.permute.xlu0 0
        %4182 = vperm.xlu0 %4181, %v3903
        %v4183 = vpop.permute.xlu0 %4182
        %4186 = vset.pattern.permute.xlu0 0
        %4187 = vperm.xlu0 %4186, %v3904
        %v4188 = vpop.permute.xlu0 %4187
        %4191 = vset.pattern.permute.xlu0 0
        %4192 = vperm.xlu0 %4191, %v3905
        %v4193 = vpop.permute.xlu0 %4192
        %4196 = vset.pattern.permute.xlu0 0
        %4197 = vperm.xlu0 %4196, %v3906
        %v4198 = vpop.permute.xlu0 %4197
        %4201 = vset.pattern.permute.xlu0 0
        %4202 = vperm.xlu0 %4201, %v3907
        %v4203 = vpop.permute.xlu0 %4202
        %4206 = vset.pattern.permute.xlu0 0
        %4207 = vperm.xlu0 %4206, %v3908
        %v4208 = vpop.permute.xlu0 %4207
        %4211 = vset.pattern.permute.xlu0 0
        %4212 = vperm.xlu0 %4211, %v3909
        %v4213 = vpop.permute.xlu0 %4212
        %4216 = vset.pattern.permute.xlu0 0
        %4217 = vperm.xlu0 %4216, %v3910
        %v4218 = vpop.permute.xlu0 %4217
        %4221 = vset.pattern.permute.xlu0 0
        %4222 = vperm.xlu0 %4221, %v3911
        %v4223 = vpop.permute.xlu0 %4222
        %4226 = vset.pattern.permute.xlu0 0
        %4227 = vperm.xlu0 %4226, %v3912
        %v4228 = vpop.permute.xlu0 %4227
        %4231 = vset.pattern.permute.xlu0 0
        %4232 = vperm.xlu0 %4231, %v3913
        %v4233 = vpop.permute.xlu0 %4232
        %v4235 = vlaneseq
        %v4236 = vshrl.u32 %v4235, 7
        %v4237 = vsub.s32 0, %v4236
        %v4238 = vrot.slane %v3914, %v4237
        %v4239 = vmul.f32 %v3918, %v4238
        %v4240 = vmul.f32 %v3923, %v4238
        %v4241 = vmul.f32 %v3928, %v4238
        %v4242 = vmul.f32 %v3933, %v4238
        %v4243 = vmul.f32 %v3938, %v4238
        %v4244 = vmul.f32 %v3943, %v4238
        %v4245 = vmul.f32 %v3948, %v4238
        %v4246 = vmul.f32 %v3953, %v4238
        %v4247 = vmul.f32 %v3958, %v4238
        %v4248 = vmul.f32 %v3963, %v4238
        %v4249 = vmul.f32 %v3968, %v4238
        %v4250 = vmul.f32 %v3973, %v4238
        %v4251 = vmul.f32 %v3978, %v4238
        %v4252 = vmul.f32 %v3983, %v4238
        %v4253 = vmul.f32 %v3988, %v4238
        %v4254 = vmul.f32 %v3993, %v4238
        %v4255 = vmul.f32 %v3998, %v4238
        %v4256 = vmul.f32 %v4003, %v4238
        %v4257 = vmul.f32 %v4008, %v4238
        %v4258 = vmul.f32 %v4013, %v4238
        %v4259 = vmul.f32 %v4018, %v4238
        %v4260 = vmul.f32 %v4023, %v4238
        %v4261 = vmul.f32 %v4028, %v4238
        %v4262 = vmul.f32 %v4033, %v4238
        %v4263 = vmul.f32 %v4038, %v4238
        %v4264 = vmul.f32 %v4043, %v4238
        %v4265 = vmul.f32 %v4048, %v4238
        %v4266 = vmul.f32 %v4053, %v4238
        %v4267 = vmul.f32 %v4058, %v4238
        %v4268 = vmul.f32 %v4063, %v4238
        %v4269 = vmul.f32 %v4068, %v4238
        %v4270 = vmul.f32 %v4073, %v4238
        %v4271 = vmul.f32 %v4078, %v4238
        %v4272 = vmul.f32 %v4083, %v4238
        %v4273 = vmul.f32 %v4088, %v4238
        %v4274 = vmul.f32 %v4093, %v4238
        %v4275 = vmul.f32 %v4098, %v4238
        %v4276 = vmul.f32 %v4103, %v4238
        %v4277 = vmul.f32 %v4108, %v4238
        %v4278 = vmul.f32 %v4113, %v4238
        %v4279 = vmul.f32 %v4118, %v4238
        %v4280 = vmul.f32 %v4123, %v4238
        %v4281 = vmul.f32 %v4128, %v4238
        %v4282 = vmul.f32 %v4133, %v4238
        %v4283 = vmul.f32 %v4138, %v4238
        %v4284 = vmul.f32 %v4143, %v4238
        %v4285 = vmul.f32 %v4148, %v4238
        %v4286 = vmul.f32 %v4153, %v4238
        %v4287 = vmul.f32 %v4158, %v4238
        %v4288 = vmul.f32 %v4163, %v4238
        %v4289 = vmul.f32 %v4168, %v4238
        %v4290 = vmul.f32 %v4173, %v4238
        %v4291 = vmul.f32 %v4178, %v4238
        %v4292 = vmul.f32 %v4183, %v4238
        %v4293 = vmul.f32 %v4188, %v4238
        %v4294 = vmul.f32 %v4193, %v4238
        %v4295 = vmul.f32 %v4198, %v4238
        %v4296 = vmul.f32 %v4203, %v4238
        %v4297 = vmul.f32 %v4208, %v4238
        %v4298 = vmul.f32 %v4213, %v4238
        %v4299 = vmul.f32 %v4218, %v4238
        %v4300 = vmul.f32 %v4223, %v4238
        %v4301 = vmul.f32 %v4228, %v4238
        %v4302 = vmul.f32 %v4233, %v4238
        %v4303 = vadd.f32 %v3786, %v4239
        %v4304 = vadd.f32 %v3787, %v4240
        %v4305 = vadd.f32 %v3788, %v4241
        %v4306 = vadd.f32 %v3789, %v4242
        %v4307 = vadd.f32 %v3790, %v4243
        %v4308 = vadd.f32 %v3791, %v4244
        %v4309 = vadd.f32 %v3792, %v4245
        %v4310 = vadd.f32 %v3793, %v4246
        %v4311 = vadd.f32 %v3794, %v4247
        %v4312 = vadd.f32 %v3795, %v4248
        %v4313 = vadd.f32 %v3796, %v4249
        %v4314 = vadd.f32 %v3797, %v4250
        %v4315 = vadd.f32 %v3798, %v4251
        %v4316 = vadd.f32 %v3799, %v4252
        %v4317 = vadd.f32 %v3800, %v4253
        %v4318 = vadd.f32 %v3801, %v4254
        %v4319 = vadd.f32 %v3802, %v4255
        %v4320 = vadd.f32 %v3803, %v4256
        %v4321 = vadd.f32 %v3804, %v4257
        %v4322 = vadd.f32 %v3805, %v4258
        %v4323 = vadd.f32 %v3806, %v4259
        %v4324 = vadd.f32 %v3807, %v4260
        %v4325 = vadd.f32 %v3808, %v4261
        %v4326 = vadd.f32 %v3809, %v4262
        %v4327 = vadd.f32 %v3810, %v4263
        %v4328 = vadd.f32 %v3811, %v4264
        %v4329 = vadd.f32 %v3812, %v4265
        %v4330 = vadd.f32 %v3813, %v4266
        %v4331 = vadd.f32 %v3814, %v4267
        %v4332 = vadd.f32 %v3815, %v4268
        %v4333 = vadd.f32 %v3816, %v4269
        %v4334 = vadd.f32 %v3817, %v4270
        %v4335 = vadd.f32 %v3818, %v4271
        %v4336 = vadd.f32 %v3819, %v4272
        %v4337 = vadd.f32 %v3820, %v4273
        %v4338 = vadd.f32 %v3821, %v4274
        %v4339 = vadd.f32 %v3822, %v4275
        %v4340 = vadd.f32 %v3823, %v4276
        %v4341 = vadd.f32 %v3824, %v4277
        %v4342 = vadd.f32 %v3825, %v4278
        %v4343 = vadd.f32 %v3826, %v4279
        %v4344 = vadd.f32 %v3827, %v4280
        %v4345 = vadd.f32 %v3828, %v4281
        %v4346 = vadd.f32 %v3829, %v4282
        %v4347 = vadd.f32 %v3830, %v4283
        %v4348 = vadd.f32 %v3831, %v4284
        %v4349 = vadd.f32 %v3832, %v4285
        %v4350 = vadd.f32 %v3833, %v4286
        %v4351 = vadd.f32 %v3834, %v4287
        %v4352 = vadd.f32 %v3835, %v4288
        %v4353 = vadd.f32 %v3836, %v4289
        %v4354 = vadd.f32 %v3837, %v4290
        %v4355 = vadd.f32 %v3838, %v4291
        %v4356 = vadd.f32 %v3839, %v4292
        %v4357 = vadd.f32 %v3840, %v4293
        %v4358 = vadd.f32 %v3841, %v4294
        %v4359 = vadd.f32 %v3842, %v4295
        %v4360 = vadd.f32 %v3843, %v4296
        %v4361 = vadd.f32 %v3844, %v4297
        %v4362 = vadd.f32 %v3845, %v4298
        %v4363 = vadd.f32 %v3846, %v4299
        %v4364 = vadd.f32 %v3847, %v4300
        %v4365 = vadd.f32 %v3848, %v4301
        %v4366 = vadd.f32 %v3849, %v4302
        %v4367 = vld [vmem:[%s3332 + $0x2] sm:$0xff]
        %v4368 = vld [vmem:[%s3332 + $0xa] sm:$0xff]
        %v4369 = vld [vmem:[%s3332 + $0x1a] sm:$0xff]
        %v4370 = vld [vmem:[%s3332 + $0x22] sm:$0xff]
        %v4371 = vld [vmem:[%s3332 + $0x32] sm:$0xff]
        %v4372 = vld [vmem:[%s3332 + $0x3a] sm:$0xff]
        %v4373 = vld [vmem:[%s3332 + $0x4a] sm:$0xff]
        %v4374 = vld [vmem:[%s3332 + $0x52] sm:$0xff]
        %v4375 = vld [vmem:[%s3332 + $0x62] sm:$0xff]
        %v4376 = vld [vmem:[%s3332 + $0x6a] sm:$0xff]
        %v4377 = vld [vmem:[%s3332 + $0x7a] sm:$0xff]
        %v4378 = vld [vmem:[%s3332 + $0x82] sm:$0xff]
        %v4379 = vld [vmem:[%s3332 + $0x92] sm:$0xff]
        %v4380 = vld [vmem:[%s3332 + $0x9a] sm:$0xff]
        %v4381 = vld [vmem:[%s3332 + $0xaa] sm:$0xff]
        %v4382 = vld [vmem:[%s3332 + $0xb2] sm:$0xff]
        %v4383 = vld [vmem:[%s3332 + $0xc2] sm:$0xff]
        %v4384 = vld [vmem:[%s3332 + $0xca] sm:$0xff]
        %v4385 = vld [vmem:[%s3332 + $0xda] sm:$0xff]
        %v4386 = vld [vmem:[%s3332 + $0xe2] sm:$0xff]
        %v4387 = vld [vmem:[%s3332 + $0xf2] sm:$0xff]
        %v4388 = vld [vmem:[%s3332 + $0xfa] sm:$0xff]
        %v4389 = vld [vmem:[%s3332 + $0x10a] sm:$0xff]
        %v4390 = vld [vmem:[%s3332 + $0x112] sm:$0xff]
        %v4391 = vld [vmem:[%s3332 + $0x122] sm:$0xff]
        %v4392 = vld [vmem:[%s3332 + $0x12a] sm:$0xff]
        %v4393 = vld [vmem:[%s3332 + $0x13a] sm:$0xff]
        %v4394 = vld [vmem:[%s3332 + $0x142] sm:$0xff]
        %v4395 = vld [vmem:[%s3332 + $0x152] sm:$0xff]
        %v4396 = vld [vmem:[%s3332 + $0x15a] sm:$0xff]
        %v4397 = vld [vmem:[%s3332 + $0x16a] sm:$0xff]
        %v4398 = vld [vmem:[%s3332 + $0x172] sm:$0xff]
        %v4399 = vld [vmem:[%s3332 + $0x1b2] sm:$0xff]
        %v4400 = vld [vmem:[%s3332 + $0x1ba] sm:$0xff]
        %v4401 = vld [vmem:[%s3332 + $0x1ca] sm:$0xff]
        %v4402 = vld [vmem:[%s3332 + $0x1d2] sm:$0xff]
        %v4403 = vld [vmem:[%s3332 + $0x1e2] sm:$0xff]
        %v4404 = vld [vmem:[%s3332 + $0x1ea] sm:$0xff]
        %v4405 = vld [vmem:[%s3332 + $0x1fa] sm:$0xff]
        %v4406 = vld [vmem:[%s3332 + $0x202] sm:$0xff]
        %v4407 = vld [vmem:[%s3332 + $0x212] sm:$0xff]
        %v4408 = vld [vmem:[%s3332 + $0x21a] sm:$0xff]
        %v4409 = vld [vmem:[%s3332 + $0x22a] sm:$0xff]
        %v4410 = vld [vmem:[%s3332 + $0x232] sm:$0xff]
        %v4411 = vld [vmem:[%s3332 + $0x242] sm:$0xff]
        %v4412 = vld [vmem:[%s3332 + $0x24a] sm:$0xff]
        %v4413 = vld [vmem:[%s3332 + $0x25a] sm:$0xff]
        %v4414 = vld [vmem:[%s3332 + $0x262] sm:$0xff]
        %v4415 = vld [vmem:[%s3332 + $0x272] sm:$0xff]
        %v4416 = vld [vmem:[%s3332 + $0x27a] sm:$0xff]
        %v4417 = vld [vmem:[%s3332 + $0x28a] sm:$0xff]
        %v4418 = vld [vmem:[%s3332 + $0x292] sm:$0xff]
        %v4419 = vld [vmem:[%s3332 + $0x2a2] sm:$0xff]
        %v4420 = vld [vmem:[%s3332 + $0x2aa] sm:$0xff]
        %v4421 = vld [vmem:[%s3332 + $0x2ba] sm:$0xff]
        %v4422 = vld [vmem:[%s3332 + $0x2c2] sm:$0xff]
        %v4423 = vld [vmem:[%s3332 + $0x2d2] sm:$0xff]
        %v4424 = vld [vmem:[%s3332 + $0x2da] sm:$0xff]
        %v4425 = vld [vmem:[%s3332 + $0x2ea] sm:$0xff]
        %v4426 = vld [vmem:[%s3332 + $0x2f2] sm:$0xff]
        %v4427 = vld [vmem:[%s3332 + $0x302] sm:$0xff]
        %v4428 = vld [vmem:[%s3332 + $0x30a] sm:$0xff]
        %v4429 = vld [vmem:[%s3332 + $0x31a] sm:$0xff]
        %v4430 = vld [vmem:[%s3332 + $0x322] sm:$0xff]
        %v4431 = vld [vmem:[%s1 + $0x8] sm:$0x1]
        %4433 = vset.pattern.permute.xlu0 0
        %4434 = vperm.xlu0 %4433, %v4367
        %v4435 = vpop.permute.xlu0 %4434
        %4438 = vset.pattern.permute.xlu0 0
        %4439 = vperm.xlu0 %4438, %v4368
        %v4440 = vpop.permute.xlu0 %4439
        %4443 = vset.pattern.permute.xlu0 0
        %4444 = vperm.xlu0 %4443, %v4369
        %v4445 = vpop.permute.xlu0 %4444
        %4448 = vset.pattern.permute.xlu0 0
        %4449 = vperm.xlu0 %4448, %v4370
        %v4450 = vpop.permute.xlu0 %4449
        %4453 = vset.pattern.permute.xlu0 0
        %4454 = vperm.xlu0 %4453, %v4371
        %v4455 = vpop.permute.xlu0 %4454
        %4458 = vset.pattern.permute.xlu0 0
        %4459 = vperm.xlu0 %4458, %v4372
        %v4460 = vpop.permute.xlu0 %4459
        %4463 = vset.pattern.permute.xlu0 0
        %4464 = vperm.xlu0 %4463, %v4373
        %v4465 = vpop.permute.xlu0 %4464
        %4468 = vset.pattern.permute.xlu0 0
        %4469 = vperm.xlu0 %4468, %v4374
        %v4470 = vpop.permute.xlu0 %4469
        %4473 = vset.pattern.permute.xlu0 0
        %4474 = vperm.xlu0 %4473, %v4375
        %v4475 = vpop.permute.xlu0 %4474
        %4478 = vset.pattern.permute.xlu0 0
        %4479 = vperm.xlu0 %4478, %v4376
        %v4480 = vpop.permute.xlu0 %4479
        %4483 = vset.pattern.permute.xlu0 0
        %4484 = vperm.xlu0 %4483, %v4377
        %v4485 = vpop.permute.xlu0 %4484
        %4488 = vset.pattern.permute.xlu0 0
        %4489 = vperm.xlu0 %4488, %v4378
        %v4490 = vpop.permute.xlu0 %4489
        %4493 = vset.pattern.permute.xlu0 0
        %4494 = vperm.xlu0 %4493, %v4379
        %v4495 = vpop.permute.xlu0 %4494
        %4498 = vset.pattern.permute.xlu0 0
        %4499 = vperm.xlu0 %4498, %v4380
        %v4500 = vpop.permute.xlu0 %4499
        %4503 = vset.pattern.permute.xlu0 0
        %4504 = vperm.xlu0 %4503, %v4381
        %v4505 = vpop.permute.xlu0 %4504
        %4508 = vset.pattern.permute.xlu0 0
        %4509 = vperm.xlu0 %4508, %v4382
        %v4510 = vpop.permute.xlu0 %4509
        %4513 = vset.pattern.permute.xlu0 0
        %4514 = vperm.xlu0 %4513, %v4383
        %v4515 = vpop.permute.xlu0 %4514
        %4518 = vset.pattern.permute.xlu0 0
        %4519 = vperm.xlu0 %4518, %v4384
        %v4520 = vpop.permute.xlu0 %4519
        %4523 = vset.pattern.permute.xlu0 0
        %4524 = vperm.xlu0 %4523, %v4385
        %v4525 = vpop.permute.xlu0 %4524
        %4528 = vset.pattern.permute.xlu0 0
        %4529 = vperm.xlu0 %4528, %v4386
        %v4530 = vpop.permute.xlu0 %4529
        %4533 = vset.pattern.permute.xlu0 0
        %4534 = vperm.xlu0 %4533, %v4387
        %v4535 = vpop.permute.xlu0 %4534
        %4538 = vset.pattern.permute.xlu0 0
        %4539 = vperm.xlu0 %4538, %v4388
        %v4540 = vpop.permute.xlu0 %4539
        %4543 = vset.pattern.permute.xlu0 0
        %4544 = vperm.xlu0 %4543, %v4389
        %v4545 = vpop.permute.xlu0 %4544
        %4548 = vset.pattern.permute.xlu0 0
        %4549 = vperm.xlu0 %4548, %v4390
        %v4550 = vpop.permute.xlu0 %4549
        %4553 = vset.pattern.permute.xlu0 0
        %4554 = vperm.xlu0 %4553, %v4391
        %v4555 = vpop.permute.xlu0 %4554
        %4558 = vset.pattern.permute.xlu0 0
        %4559 = vperm.xlu0 %4558, %v4392
        %v4560 = vpop.permute.xlu0 %4559
        %4563 = vset.pattern.permute.xlu0 0
        %4564 = vperm.xlu0 %4563, %v4393
        %v4565 = vpop.permute.xlu0 %4564
        %4568 = vset.pattern.permute.xlu0 0
        %4569 = vperm.xlu0 %4568, %v4394
        %v4570 = vpop.permute.xlu0 %4569
        %4573 = vset.pattern.permute.xlu0 0
        %4574 = vperm.xlu0 %4573, %v4395
        %v4575 = vpop.permute.xlu0 %4574
        %4578 = vset.pattern.permute.xlu0 0
        %4579 = vperm.xlu0 %4578, %v4396
        %v4580 = vpop.permute.xlu0 %4579
        %4583 = vset.pattern.permute.xlu0 0
        %4584 = vperm.xlu0 %4583, %v4397
        %v4585 = vpop.permute.xlu0 %4584
        %4588 = vset.pattern.permute.xlu0 0
        %4589 = vperm.xlu0 %4588, %v4398
        %v4590 = vpop.permute.xlu0 %4589
        %4593 = vset.pattern.permute.xlu0 0
        %4594 = vperm.xlu0 %4593, %v4399
        %v4595 = vpop.permute.xlu0 %4594
        %4598 = vset.pattern.permute.xlu0 0
        %4599 = vperm.xlu0 %4598, %v4400
        %v4600 = vpop.permute.xlu0 %4599
        %4603 = vset.pattern.permute.xlu0 0
        %4604 = vperm.xlu0 %4603, %v4401
        %v4605 = vpop.permute.xlu0 %4604
        %4608 = vset.pattern.permute.xlu0 0
        %4609 = vperm.xlu0 %4608, %v4402
        %v4610 = vpop.permute.xlu0 %4609
        %4613 = vset.pattern.permute.xlu0 0
        %4614 = vperm.xlu0 %4613, %v4403
        %v4615 = vpop.permute.xlu0 %4614
        %4618 = vset.pattern.permute.xlu0 0
        %4619 = vperm.xlu0 %4618, %v4404
        %v4620 = vpop.permute.xlu0 %4619
        %4623 = vset.pattern.permute.xlu0 0
        %4624 = vperm.xlu0 %4623, %v4405
        %v4625 = vpop.permute.xlu0 %4624
        %4628 = vset.pattern.permute.xlu0 0
        %4629 = vperm.xlu0 %4628, %v4406
        %v4630 = vpop.permute.xlu0 %4629
        %4633 = vset.pattern.permute.xlu0 0
        %4634 = vperm.xlu0 %4633, %v4407
        %v4635 = vpop.permute.xlu0 %4634
        %4638 = vset.pattern.permute.xlu0 0
        %4639 = vperm.xlu0 %4638, %v4408
        %v4640 = vpop.permute.xlu0 %4639
        %4643 = vset.pattern.permute.xlu0 0
        %4644 = vperm.xlu0 %4643, %v4409
        %v4645 = vpop.permute.xlu0 %4644
        %4648 = vset.pattern.permute.xlu0 0
        %4649 = vperm.xlu0 %4648, %v4410
        %v4650 = vpop.permute.xlu0 %4649
        %4653 = vset.pattern.permute.xlu0 0
        %4654 = vperm.xlu0 %4653, %v4411
        %v4655 = vpop.permute.xlu0 %4654
        %4658 = vset.pattern.permute.xlu0 0
        %4659 = vperm.xlu0 %4658, %v4412
        %v4660 = vpop.permute.xlu0 %4659
        %4663 = vset.pattern.permute.xlu0 0
        %4664 = vperm.xlu0 %4663, %v4413
        %v4665 = vpop.permute.xlu0 %4664
        %4668 = vset.pattern.permute.xlu0 0
        %4669 = vperm.xlu0 %4668, %v4414
        %v4670 = vpop.permute.xlu0 %4669
        %4673 = vset.pattern.permute.xlu0 0
        %4674 = vperm.xlu0 %4673, %v4415
        %v4675 = vpop.permute.xlu0 %4674
        %4678 = vset.pattern.permute.xlu0 0
        %4679 = vperm.xlu0 %4678, %v4416
        %v4680 = vpop.permute.xlu0 %4679
        %4683 = vset.pattern.permute.xlu0 0
        %4684 = vperm.xlu0 %4683, %v4417
        %v4685 = vpop.permute.xlu0 %4684
        %4688 = vset.pattern.permute.xlu0 0
        %4689 = vperm.xlu0 %4688, %v4418
        %v4690 = vpop.permute.xlu0 %4689
        %4693 = vset.pattern.permute.xlu0 0
        %4694 = vperm.xlu0 %4693, %v4419
        %v4695 = vpop.permute.xlu0 %4694
        %4698 = vset.pattern.permute.xlu0 0
        %4699 = vperm.xlu0 %4698, %v4420
        %v4700 = vpop.permute.xlu0 %4699
        %4703 = vset.pattern.permute.xlu0 0
        %4704 = vperm.xlu0 %4703, %v4421
        %v4705 = vpop.permute.xlu0 %4704
        %4708 = vset.pattern.permute.xlu0 0
        %4709 = vperm.xlu0 %4708, %v4422
        %v4710 = vpop.permute.xlu0 %4709
        %4713 = vset.pattern.permute.xlu0 0
        %4714 = vperm.xlu0 %4713, %v4423
        %v4715 = vpop.permute.xlu0 %4714
        %4718 = vset.pattern.permute.xlu0 0
        %4719 = vperm.xlu0 %4718, %v4424
        %v4720 = vpop.permute.xlu0 %4719
        %4723 = vset.pattern.permute.xlu0 0
        %4724 = vperm.xlu0 %4723, %v4425
        %v4725 = vpop.permute.xlu0 %4724
        %4728 = vset.pattern.permute.xlu0 0
        %4729 = vperm.xlu0 %4728, %v4426
        %v4730 = vpop.permute.xlu0 %4729
        %4733 = vset.pattern.permute.xlu0 0
        %4734 = vperm.xlu0 %4733, %v4427
        %v4735 = vpop.permute.xlu0 %4734
        %4738 = vset.pattern.permute.xlu0 0
        %4739 = vperm.xlu0 %4738, %v4428
        %v4740 = vpop.permute.xlu0 %4739
        %4743 = vset.pattern.permute.xlu0 0
        %4744 = vperm.xlu0 %4743, %v4429
        %v4745 = vpop.permute.xlu0 %4744
        %4748 = vset.pattern.permute.xlu0 0
        %4749 = vperm.xlu0 %4748, %v4430
        %v4750 = vpop.permute.xlu0 %4749
        %v4752 = vlaneseq
        %v4753 = vshrl.u32 %v4752, 7
        %v4754 = vsub.s32 0, %v4753
        %v4755 = vrot.slane %v4431, %v4754
        %v4756 = vmul.f32 %v4435, %v4755
        %v4757 = vmul.f32 %v4440, %v4755
        %v4758 = vmul.f32 %v4445, %v4755
        %v4759 = vmul.f32 %v4450, %v4755
        %v4760 = vmul.f32 %v4455, %v4755
        %v4761 = vmul.f32 %v4460, %v4755
        %v4762 = vmul.f32 %v4465, %v4755
        %v4763 = vmul.f32 %v4470, %v4755
        %v4764 = vmul.f32 %v4475, %v4755
        %v4765 = vmul.f32 %v4480, %v4755
        %v4766 = vmul.f32 %v4485, %v4755
        %v4767 = vmul.f32 %v4490, %v4755
        %v4768 = vmul.f32 %v4495, %v4755
        %v4769 = vmul.f32 %v4500, %v4755
        %v4770 = vmul.f32 %v4505, %v4755
        %v4771 = vmul.f32 %v4510, %v4755
        %v4772 = vmul.f32 %v4515, %v4755
        %v4773 = vmul.f32 %v4520, %v4755
        %v4774 = vmul.f32 %v4525, %v4755
        %v4775 = vmul.f32 %v4530, %v4755
        %v4776 = vmul.f32 %v4535, %v4755
        %v4777 = vmul.f32 %v4540, %v4755
        %v4778 = vmul.f32 %v4545, %v4755
        %v4779 = vmul.f32 %v4550, %v4755
        %v4780 = vmul.f32 %v4555, %v4755
        %v4781 = vmul.f32 %v4560, %v4755
        %v4782 = vmul.f32 %v4565, %v4755
        %v4783 = vmul.f32 %v4570, %v4755
        %v4784 = vmul.f32 %v4575, %v4755
        %v4785 = vmul.f32 %v4580, %v4755
        %v4786 = vmul.f32 %v4585, %v4755
        %v4787 = vmul.f32 %v4590, %v4755
        %v4788 = vmul.f32 %v4595, %v4755
        %v4789 = vmul.f32 %v4600, %v4755
        %v4790 = vmul.f32 %v4605, %v4755
        %v4791 = vmul.f32 %v4610, %v4755
        %v4792 = vmul.f32 %v4615, %v4755
        %v4793 = vmul.f32 %v4620, %v4755
        %v4794 = vmul.f32 %v4625, %v4755
        %v4795 = vmul.f32 %v4630, %v4755
        %v4796 = vmul.f32 %v4635, %v4755
        %v4797 = vmul.f32 %v4640, %v4755
        %v4798 = vmul.f32 %v4645, %v4755
        %v4799 = vmul.f32 %v4650, %v4755
        %v4800 = vmul.f32 %v4655, %v4755
        %v4801 = vmul.f32 %v4660, %v4755
        %v4802 = vmul.f32 %v4665, %v4755
        %v4803 = vmul.f32 %v4670, %v4755
        %v4804 = vmul.f32 %v4675, %v4755
        %v4805 = vmul.f32 %v4680, %v4755
        %v4806 = vmul.f32 %v4685, %v4755
        %v4807 = vmul.f32 %v4690, %v4755
        %v4808 = vmul.f32 %v4695, %v4755
        %v4809 = vmul.f32 %v4700, %v4755
        %v4810 = vmul.f32 %v4705, %v4755
        %v4811 = vmul.f32 %v4710, %v4755
        %v4812 = vmul.f32 %v4715, %v4755
        %v4813 = vmul.f32 %v4720, %v4755
        %v4814 = vmul.f32 %v4725, %v4755
        %v4815 = vmul.f32 %v4730, %v4755
        %v4816 = vmul.f32 %v4735, %v4755
        %v4817 = vmul.f32 %v4740, %v4755
        %v4818 = vmul.f32 %v4745, %v4755
        %v4819 = vmul.f32 %v4750, %v4755
        %v4820 = vadd.f32 %v4303, %v4756
        %v4821 = vadd.f32 %v4304, %v4757
        %v4822 = vadd.f32 %v4305, %v4758
        %v4823 = vadd.f32 %v4306, %v4759
        %v4824 = vadd.f32 %v4307, %v4760
        %v4825 = vadd.f32 %v4308, %v4761
        %v4826 = vadd.f32 %v4309, %v4762
        %v4827 = vadd.f32 %v4310, %v4763
        %v4828 = vadd.f32 %v4311, %v4764
        %v4829 = vadd.f32 %v4312, %v4765
        %v4830 = vadd.f32 %v4313, %v4766
        %v4831 = vadd.f32 %v4314, %v4767
        %v4832 = vadd.f32 %v4315, %v4768
        %v4833 = vadd.f32 %v4316, %v4769
        %v4834 = vadd.f32 %v4317, %v4770
        %v4835 = vadd.f32 %v4318, %v4771
        %v4836 = vadd.f32 %v4319, %v4772
        %v4837 = vadd.f32 %v4320, %v4773
        %v4838 = vadd.f32 %v4321, %v4774
        %v4839 = vadd.f32 %v4322, %v4775
        %v4840 = vadd.f32 %v4323, %v4776
        %v4841 = vadd.f32 %v4324, %v4777
        %v4842 = vadd.f32 %v4325, %v4778
        %v4843 = vadd.f32 %v4326, %v4779
        %v4844 = vadd.f32 %v4327, %v4780
        %v4845 = vadd.f32 %v4328, %v4781
        %v4846 = vadd.f32 %v4329, %v4782
        %v4847 = vadd.f32 %v4330, %v4783
        %v4848 = vadd.f32 %v4331, %v4784
        %v4849 = vadd.f32 %v4332, %v4785
        %v4850 = vadd.f32 %v4333, %v4786
        %v4851 = vadd.f32 %v4334, %v4787
        %v4852 = vadd.f32 %v4335, %v4788
        %v4853 = vadd.f32 %v4336, %v4789
        %v4854 = vadd.f32 %v4337, %v4790
        %v4855 = vadd.f32 %v4338, %v4791
        %v4856 = vadd.f32 %v4339, %v4792
        %v4857 = vadd.f32 %v4340, %v4793
        %v4858 = vadd.f32 %v4341, %v4794
        %v4859 = vadd.f32 %v4342, %v4795
        %v4860 = vadd.f32 %v4343, %v4796
        %v4861 = vadd.f32 %v4344, %v4797
        %v4862 = vadd.f32 %v4345, %v4798
        %v4863 = vadd.f32 %v4346, %v4799
        %v4864 = vadd.f32 %v4347, %v4800
        %v4865 = vadd.f32 %v4348, %v4801
        %v4866 = vadd.f32 %v4349, %v4802
        %v4867 = vadd.f32 %v4350, %v4803
        %v4868 = vadd.f32 %v4351, %v4804
        %v4869 = vadd.f32 %v4352, %v4805
        %v4870 = vadd.f32 %v4353, %v4806
        %v4871 = vadd.f32 %v4354, %v4807
        %v4872 = vadd.f32 %v4355, %v4808
        %v4873 = vadd.f32 %v4356, %v4809
        %v4874 = vadd.f32 %v4357, %v4810
        %v4875 = vadd.f32 %v4358, %v4811
        %v4876 = vadd.f32 %v4359, %v4812
        %v4877 = vadd.f32 %v4360, %v4813
        %v4878 = vadd.f32 %v4361, %v4814
        %v4879 = vadd.f32 %v4362, %v4815
        %v4880 = vadd.f32 %v4363, %v4816
        %v4881 = vadd.f32 %v4364, %v4817
        %v4882 = vadd.f32 %v4365, %v4818
        %v4883 = vadd.f32 %v4366, %v4819
        %v4884 = vld [vmem:[%s2] sm:$0x1]
        %v4886 = vlaneseq
        %v4887 = vshrl.u32 %v4886, 7
        %v4888 = vsub.s32 0, %v4887
        %v4889 = vrot.slane %v4884, %v4888
        %v4891 = vadd.f32 %v4820, %v4889
        %v4892 = vadd.f32 %v4821, %v4889
        %v4893 = vadd.f32 %v4822, %v4889
        %v4894 = vadd.f32 %v4823, %v4889
        %v4895 = vadd.f32 %v4824, %v4889
        %v4896 = vadd.f32 %v4825, %v4889
        %v4897 = vadd.f32 %v4826, %v4889
        %v4898 = vadd.f32 %v4827, %v4889
        %v4899 = vadd.f32 %v4828, %v4889
        %v4900 = vadd.f32 %v4829, %v4889
        %v4901 = vadd.f32 %v4830, %v4889
        %v4902 = vadd.f32 %v4831, %v4889
        %v4903 = vadd.f32 %v4832, %v4889
        %v4904 = vadd.f32 %v4833, %v4889
        %v4905 = vadd.f32 %v4834, %v4889
        %v4906 = vadd.f32 %v4835, %v4889
        %v4907 = vadd.f32 %v4836, %v4889
        %v4908 = vadd.f32 %v4837, %v4889
        %v4909 = vadd.f32 %v4838, %v4889
        %v4910 = vadd.f32 %v4839, %v4889
        %v4911 = vadd.f32 %v4840, %v4889
        %v4912 = vadd.f32 %v4841, %v4889
        %v4913 = vadd.f32 %v4842, %v4889
        %v4914 = vadd.f32 %v4843, %v4889
        %v4915 = vadd.f32 %v4844, %v4889
        %v4916 = vadd.f32 %v4845, %v4889
        %v4917 = vadd.f32 %v4846, %v4889
        %v4918 = vadd.f32 %v4847, %v4889
        %v4919 = vadd.f32 %v4848, %v4889
        %v4920 = vadd.f32 %v4849, %v4889
        %v4921 = vadd.f32 %v4850, %v4889
        %v4922 = vadd.f32 %v4851, %v4889
        %v4923 = vadd.f32 %v4852, %v4889
        %v4924 = vadd.f32 %v4853, %v4889
        %v4925 = vadd.f32 %v4854, %v4889
        %v4926 = vadd.f32 %v4855, %v4889
        %v4927 = vadd.f32 %v4856, %v4889
        %v4928 = vadd.f32 %v4857, %v4889
        %v4929 = vadd.f32 %v4858, %v4889
        %v4930 = vadd.f32 %v4859, %v4889
        %v4931 = vadd.f32 %v4860, %v4889
        %v4932 = vadd.f32 %v4861, %v4889
        %v4933 = vadd.f32 %v4862, %v4889
        %v4934 = vadd.f32 %v4863, %v4889
        %v4935 = vadd.f32 %v4864, %v4889
        %v4936 = vadd.f32 %v4865, %v4889
        %v4937 = vadd.f32 %v4866, %v4889
        %v4938 = vadd.f32 %v4867, %v4889
        %v4939 = vadd.f32 %v4868, %v4889
        %v4940 = vadd.f32 %v4869, %v4889
        %v4941 = vadd.f32 %v4870, %v4889
        %v4942 = vadd.f32 %v4871, %v4889
        %v4943 = vadd.f32 %v4872, %v4889
        %v4944 = vadd.f32 %v4873, %v4889
        %v4945 = vadd.f32 %v4874, %v4889
        %v4946 = vadd.f32 %v4875, %v4889
        %v4947 = vadd.f32 %v4876, %v4889
        %v4948 = vadd.f32 %v4877, %v4889
        %v4949 = vadd.f32 %v4878, %v4889
        %v4950 = vadd.f32 %v4879, %v4889
        %v4951 = vadd.f32 %v4880, %v4889
        %v4952 = vadd.f32 %v4881, %v4889
        %v4953 = vadd.f32 %v4882, %v4889
        %v4954 = vadd.f32 %v4883, %v4889
        %v4955 = vmax.f32 %v4891, 0.0
        %v4956 = vmax.f32 %v4892, 0.0
        %v4957 = vmax.f32 %v4893, 0.0
        %v4958 = vmax.f32 %v4894, 0.0
        %v4959 = vmax.f32 %v4895, 0.0
        %v4960 = vmax.f32 %v4896, 0.0
        %v4961 = vmax.f32 %v4897, 0.0
        %v4962 = vmax.f32 %v4898, 0.0
        %v4963 = vmax.f32 %v4899, 0.0
        %v4964 = vmax.f32 %v4900, 0.0
        %v4965 = vmax.f32 %v4901, 0.0
        %v4966 = vmax.f32 %v4902, 0.0
        %v4967 = vmax.f32 %v4903, 0.0
        %v4968 = vmax.f32 %v4904, 0.0
        %v4969 = vmax.f32 %v4905, 0.0
        %v4970 = vmax.f32 %v4906, 0.0
        %v4971 = vmax.f32 %v4907, 0.0
        %v4972 = vmax.f32 %v4908, 0.0
        %v4973 = vmax.f32 %v4909, 0.0
        %v4974 = vmax.f32 %v4910, 0.0
        %v4975 = vmax.f32 %v4911, 0.0
        %v4976 = vmax.f32 %v4912, 0.0
        %v4977 = vmax.f32 %v4913, 0.0
        %v4978 = vmax.f32 %v4914, 0.0
        %v4979 = vmax.f32 %v4915, 0.0
        %v4980 = vmax.f32 %v4916, 0.0
        %v4981 = vmax.f32 %v4917, 0.0
        %v4982 = vmax.f32 %v4918, 0.0
        %v4983 = vmax.f32 %v4919, 0.0
        %v4984 = vmax.f32 %v4920, 0.0
        %v4985 = vmax.f32 %v4921, 0.0
        %v4986 = vmax.f32 %v4922, 0.0
        %v4987 = vmax.f32 %v4923, 0.0
        %v4988 = vmax.f32 %v4924, 0.0
        %v4989 = vmax.f32 %v4925, 0.0
        %v4990 = vmax.f32 %v4926, 0.0
        %v4991 = vmax.f32 %v4927, 0.0
        %v4992 = vmax.f32 %v4928, 0.0
        %v4993 = vmax.f32 %v4929, 0.0
        %v4994 = vmax.f32 %v4930, 0.0
        %v4995 = vmax.f32 %v4931, 0.0
        %v4996 = vmax.f32 %v4932, 0.0
        %v4997 = vmax.f32 %v4933, 0.0
        %v4998 = vmax.f32 %v4934, 0.0
        %v4999 = vmax.f32 %v4935, 0.0
        %v5000 = vmax.f32 %v4936, 0.0
        %v5001 = vmax.f32 %v4937, 0.0
        %v5002 = vmax.f32 %v4938, 0.0
        %v5003 = vmax.f32 %v4939, 0.0
        %v5004 = vmax.f32 %v4940, 0.0
        %v5005 = vmax.f32 %v4941, 0.0
        %v5006 = vmax.f32 %v4942, 0.0
        %v5007 = vmax.f32 %v4943, 0.0
        %v5008 = vmax.f32 %v4944, 0.0
        %v5009 = vmax.f32 %v4945, 0.0
        %v5010 = vmax.f32 %v4946, 0.0
        %v5011 = vmax.f32 %v4947, 0.0
        %v5012 = vmax.f32 %v4948, 0.0
        %v5013 = vmax.f32 %v4949, 0.0
        %v5014 = vmax.f32 %v4950, 0.0
        %v5015 = vmax.f32 %v4951, 0.0
        %v5016 = vmax.f32 %v4952, 0.0
        %v5017 = vmax.f32 %v4953, 0.0
        %v5018 = vmax.f32 %v4954, 0.0
        %v5019 = vmax.f32 %v4955, %v4957
        %v5020 = vmax.f32 %v4956, %v4958
        %v5021 = vmax.f32 %v4959, %v4961
        %v5022 = vmax.f32 %v4960, %v4962
        %v5023 = vmax.f32 %v4963, %v4965
        %v5024 = vmax.f32 %v4964, %v4966
        %v5025 = vmax.f32 %v4967, %v4969
        %v5026 = vmax.f32 %v4968, %v4970
        %v5027 = vmax.f32 %v4971, %v4973
        %v5028 = vmax.f32 %v4972, %v4974
        %v5029 = vmax.f32 %v4975, %v4977
        %v5030 = vmax.f32 %v4976, %v4978
        %v5031 = vmax.f32 %v4979, %v4981
        %v5032 = vmax.f32 %v4980, %v4982
        %v5033 = vmax.f32 %v4983, %v4985
        %v5034 = vmax.f32 %v4984, %v4986
        %v5035 = vmax.f32 %v4987, %v4989
        %v5036 = vmax.f32 %v4988, %v4990
        %v5037 = vmax.f32 %v4991, %v4993
        %v5038 = vmax.f32 %v4992, %v4994
        %v5039 = vmax.f32 %v4995, %v4997
        %v5040 = vmax.f32 %v4996, %v4998
        %v5041 = vmax.f32 %v4999, %v5001
        %v5042 = vmax.f32 %v5000, %v5002
        %v5043 = vmax.f32 %v5003, %v5005
        %v5044 = vmax.f32 %v5004, %v5006
        %v5045 = vmax.f32 %v5007, %v5009
        %v5046 = vmax.f32 %v5008, %v5010
        %v5047 = vmax.f32 %v5011, %v5013
        %v5048 = vmax.f32 %v5012, %v5014
        %v5049 = vmax.f32 %v5015, %v5017
        %v5050 = vmax.f32 %v5016, %v5018
        %vm5051 = vcmask 261120
        %5052 = vst.msk [vmem:[#allocation2] sm:$0xff] %vm5051, %v5019
        %5053 = vst.msk [vmem:[#allocation2 + $0x8] sm:$0xff] %vm5051, %v5020
        %5054 = vst.msk [vmem:[#allocation2 + $0x10] sm:$0xff] %vm5051, %v5021
        %5055 = vst.msk [vmem:[#allocation2 + $0x18] sm:$0xff] %vm5051, %v5022
        %5056 = vst.msk [vmem:[#allocation2 + $0x20] sm:$0xff] %vm5051, %v5023
        %5057 = vst.msk [vmem:[#allocation2 + $0x28] sm:$0xff] %vm5051, %v5024
        %5058 = vst.msk [vmem:[#allocation2 + $0x30] sm:$0xff] %vm5051, %v5025
        %5059 = vst.msk [vmem:[#allocation2 + $0x38] sm:$0xff] %vm5051, %v5026
        %5060 = vst.msk [vmem:[#allocation2 + $0x40] sm:$0xff] %vm5051, %v5027
        %5061 = vst.msk [vmem:[#allocation2 + $0x48] sm:$0xff] %vm5051, %v5028
        %5062 = vst.msk [vmem:[#allocation2 + $0x50] sm:$0xff] %vm5051, %v5029
        %5063 = vst.msk [vmem:[#allocation2 + $0x58] sm:$0xff] %vm5051, %v5030
        %5064 = vst.msk [vmem:[#allocation2 + $0x60] sm:$0xff] %vm5051, %v5031
        %5065 = vst.msk [vmem:[#allocation2 + $0x68] sm:$0xff] %vm5051, %v5032
        %5066 = vst.msk [vmem:[#allocation2 + $0x70] sm:$0xff] %vm5051, %v5033
        %5067 = vst.msk [vmem:[#allocation2 + $0x78] sm:$0xff] %vm5051, %v5034
        %5068 = vst.msk [vmem:[#allocation2 + $0x80] sm:$0xff] %vm5051, %v5035
        %5069 = vst.msk [vmem:[#allocation2 + $0x88] sm:$0xff] %vm5051, %v5036
        %5070 = vst.msk [vmem:[#allocation2 + $0x90] sm:$0xff] %vm5051, %v5037
        %5071 = vst.msk [vmem:[#allocation2 + $0x98] sm:$0xff] %vm5051, %v5038
        %5072 = vst.msk [vmem:[#allocation2 + $0xa0] sm:$0xff] %vm5051, %v5039
        %5073 = vst.msk [vmem:[#allocation2 + $0xa8] sm:$0xff] %vm5051, %v5040
        %5074 = vst.msk [vmem:[#allocation2 + $0xb0] sm:$0xff] %vm5051, %v5041
        %5075 = vst.msk [vmem:[#allocation2 + $0xb8] sm:$0xff] %vm5051, %v5042
        %5076 = vst.msk [vmem:[#allocation2 + $0xc0] sm:$0xff] %vm5051, %v5043
        %5077 = vst.msk [vmem:[#allocation2 + $0xc8] sm:$0xff] %vm5051, %v5044
        %5078 = vst.msk [vmem:[#allocation2 + $0xd0] sm:$0xff] %vm5051, %v5045
        %5079 = vst.msk [vmem:[#allocation2 + $0xd8] sm:$0xff] %vm5051, %v5046
        %5080 = vst.msk [vmem:[#allocation2 + $0xe0] sm:$0xff] %vm5051, %v5047
        %5081 = vst.msk [vmem:[#allocation2 + $0xe8] sm:$0xff] %vm5051, %v5048
        %5082 = vst.msk [vmem:[#allocation2 + $0xf0] sm:$0xff] %vm5051, %v5049
        %5083 = vst.msk [vmem:[#allocation2 + $0xf8] sm:$0xff] %vm5051, %v5050
        %v5084 = vld [vmem:[#allocation2] ss:$2 sm:$0xff]
        %s5085 = scalar_lea.vmem [#allocation2], 16
        %v5086 = vld [vmem:[%s5085] ss:$2 sm:$0xff]
        %s5087 = scalar_lea.vmem [#allocation2], 32
        %v5088 = vld [vmem:[%s5087] ss:$2 sm:$0xff]
        %s5089 = scalar_lea.vmem [#allocation2], 48
        %v5090 = vld [vmem:[%s5089] ss:$2 sm:$0xff]
        %s5091 = scalar_lea.vmem [#allocation2], 64
        %v5092 = vld [vmem:[%s5091] ss:$2 sm:$0xff]
        %s5093 = scalar_lea.vmem [#allocation2], 80
        %v5094 = vld [vmem:[%s5093] ss:$2 sm:$0xff]
        %s5095 = scalar_lea.vmem [#allocation2], 96
        %v5096 = vld [vmem:[%s5095] ss:$2 sm:$0xff]
        %s5097 = scalar_lea.vmem [#allocation2], 112
        %v5098 = vld [vmem:[%s5097] ss:$2 sm:$0xff]
        %s5099 = scalar_lea.vmem [#allocation2], 128
        %v5100 = vld [vmem:[%s5099] ss:$2 sm:$0xff]
        %s5101 = scalar_lea.vmem [#allocation2], 144
        %v5102 = vld [vmem:[%s5101] ss:$2 sm:$0xff]
        %s5103 = scalar_lea.vmem [#allocation2], 160
        %v5104 = vld [vmem:[%s5103] ss:$2 sm:$0xff]
        %s5105 = scalar_lea.vmem [#allocation2], 176
        %v5106 = vld [vmem:[%s5105] ss:$2 sm:$0xff]
        %s5107 = scalar_lea.vmem [#allocation2], 192
        %v5108 = vld [vmem:[%s5107] ss:$2 sm:$0xff]
        %s5109 = scalar_lea.vmem [#allocation2], 208
        %v5110 = vld [vmem:[%s5109] ss:$2 sm:$0xff]
        %s5111 = scalar_lea.vmem [#allocation2], 224
        %v5112 = vld [vmem:[%s5111] ss:$2 sm:$0xff]
        %s5113 = scalar_lea.vmem [#allocation2], 240
        %v5114 = vld [vmem:[%s5113] ss:$2 sm:$0xff]
        %s5115 = scalar_lea.vmem [#allocation2], 1
        %v5116 = vld [vmem:[%s5115] ss:$2 sm:$0xff]
        %s5117 = scalar_lea.vmem [#allocation2], 17
        %v5118 = vld [vmem:[%s5117] ss:$2 sm:$0xff]
        %s5119 = scalar_lea.vmem [#allocation2], 33
        %v5120 = vld [vmem:[%s5119] ss:$2 sm:$0xff]
        %s5121 = scalar_lea.vmem [#allocation2], 49
        %v5122 = vld [vmem:[%s5121] ss:$2 sm:$0xff]
        %s5123 = scalar_lea.vmem [#allocation2], 65
        %v5124 = vld [vmem:[%s5123] ss:$2 sm:$0xff]
        %s5125 = scalar_lea.vmem [#allocation2], 81
        %v5126 = vld [vmem:[%s5125] ss:$2 sm:$0xff]
        %s5127 = scalar_lea.vmem [#allocation2], 97
        %v5128 = vld [vmem:[%s5127] ss:$2 sm:$0xff]
        %s5129 = scalar_lea.vmem [#allocation2], 113
        %v5130 = vld [vmem:[%s5129] ss:$2 sm:$0xff]
        %s5131 = scalar_lea.vmem [#allocation2], 129
        %v5132 = vld [vmem:[%s5131] ss:$2 sm:$0xff]
        %s5133 = scalar_lea.vmem [#allocation2], 145
        %v5134 = vld [vmem:[%s5133] ss:$2 sm:$0xff]
        %s5135 = scalar_lea.vmem [#allocation2], 161
        %v5136 = vld [vmem:[%s5135] ss:$2 sm:$0xff]
        %s5137 = scalar_lea.vmem [#allocation2], 177
        %v5138 = vld [vmem:[%s5137] ss:$2 sm:$0xff]
        %s5139 = scalar_lea.vmem [#allocation2], 193
        %v5140 = vld [vmem:[%s5139] ss:$2 sm:$0xff]
        %s5141 = scalar_lea.vmem [#allocation2], 209
        %v5142 = vld [vmem:[%s5141] ss:$2 sm:$0xff]
        %s5143 = scalar_lea.vmem [#allocation2], 225
        %v5144 = vld [vmem:[%s5143] ss:$2 sm:$0xff]
        %s5145 = scalar_lea.vmem [#allocation2], 241
        %v5146 = vld [vmem:[%s5145] ss:$2 sm:$0xff]
        %v5147 = vmax.f32 %v5084, %v5116
        %v5148 = vmax.f32 %v5086, %v5118
        %v5149 = vmax.f32 %v5088, %v5120
        %v5150 = vmax.f32 %v5090, %v5122
        %v5151 = vmax.f32 %v5092, %v5124
        %v5152 = vmax.f32 %v5094, %v5126
        %v5153 = vmax.f32 %v5096, %v5128
        %v5154 = vmax.f32 %v5098, %v5130
        %v5155 = vmax.f32 %v5100, %v5132
        %v5156 = vmax.f32 %v5102, %v5134
        %v5157 = vmax.f32 %v5104, %v5136
        %v5158 = vmax.f32 %v5106, %v5138
        %v5159 = vmax.f32 %v5108, %v5140
        %v5160 = vmax.f32 %v5110, %v5142
        %v5161 = vmax.f32 %v5112, %v5144
        %v5162 = vmax.f32 %v5114, %v5146
        %5163 = vst.msk [vmem:[#allocation3] sm:$0xff] %vm5051, 0.0
        %5164 = vst.msk [vmem:[#allocation3 + $0x8] sm:$0xff] %vm5051, 0.0
        %vm5165 = vcmask 254976
        %5166 = vst.msk [vmem:[#allocation3 + $0x10] sm:$0x3] %vm5165, 0.0
        %5167 = vst.msk [vmem:[#allocation3 + $0x18] sm:$0xff] %vm5051, 0.0
        %5168 = vst.msk [vmem:[#allocation3 + $0x20] sm:$0xff] %vm5051, 0.0
        %5169 = vst.msk [vmem:[#allocation3 + $0x28] sm:$0x3] %vm5165, 0.0
        %5170 = vst.msk [vmem:[#allocation3 + $0x30] sm:$0xff] %vm5051, 0.0
        %5171 = vst.msk [vmem:[#allocation3 + $0x38] sm:$0xff] %vm5051, 0.0
        %5172 = vst.msk [vmem:[#allocation3 + $0x40] sm:$0x3] %vm5165, 0.0
        %5173 = vst.msk [vmem:[#allocation3 + $0x48] sm:$0xff] %vm5051, 0.0
        %5174 = vst.msk [vmem:[#allocation3 + $0x50] sm:$0xff] %vm5051, 0.0
        %5175 = vst.msk [vmem:[#allocation3 + $0x58] sm:$0x3] %vm5165, 0.0
        %5176 = vst.msk [vmem:[#allocation3 + $0x60] sm:$0xff] %vm5051, 0.0
        %5177 = vst.msk [vmem:[#allocation3 + $0x68] sm:$0xff] %vm5051, 0.0
        %5178 = vst.msk [vmem:[#allocation3 + $0x70] sm:$0x3] %vm5165, 0.0
        %5179 = vst.msk [vmem:[#allocation3 + $0x78] sm:$0xff] %vm5051, 0.0
        %5180 = vst.msk [vmem:[#allocation3 + $0x80] sm:$0xff] %vm5051, 0.0
        %5181 = vst.msk [vmem:[#allocation3 + $0x88] sm:$0x3] %vm5165, 0.0
        %5182 = vst.msk [vmem:[#allocation3 + $0x90] sm:$0xff] %vm5051, 0.0
        %5183 = vst.msk [vmem:[#allocation3 + $0x98] sm:$0xff] %vm5051, 0.0
        %5184 = vst.msk [vmem:[#allocation3 + $0xa0] sm:$0x3] %vm5165, 0.0
        %5185 = vst.msk [vmem:[#allocation3 + $0xa8] sm:$0xff] %vm5051, 0.0
        %5186 = vst.msk [vmem:[#allocation3 + $0xb0] sm:$0xff] %vm5051, 0.0
        %5187 = vst.msk [vmem:[#allocation3 + $0xb8] sm:$0x3] %vm5165, 0.0
        %5188 = vst.msk [vmem:[#allocation3 + $0xc0] sm:$0xff] %vm5051, 0.0
        %5189 = vst.msk [vmem:[#allocation3 + $0xc8] sm:$0xff] %vm5051, 0.0
        %5190 = vst.msk [vmem:[#allocation3 + $0xd0] sm:$0x3] %vm5165, 0.0
        %5191 = vst.msk [vmem:[#allocation3 + $0xd8] sm:$0xff] %vm5051, 0.0
        %5192 = vst.msk [vmem:[#allocation3 + $0xe0] sm:$0xff] %vm5051, 0.0
        %5193 = vst.msk [vmem:[#allocation3 + $0xe8] sm:$0x3] %vm5165, 0.0
        %5194 = vst.msk [vmem:[#allocation3 + $0xf0] sm:$0xff] %vm5051, 0.0
        %5195 = vst.msk [vmem:[#allocation3 + $0xf8] sm:$0xff] %vm5051, 0.0
        %5196 = vst.msk [vmem:[#allocation3 + $0x100] sm:$0x3] %vm5165, 0.0
        %5197 = vst.msk [vmem:[#allocation3 + $0x108] sm:$0xff] %vm5051, 0.0
        %5198 = vst.msk [vmem:[#allocation3 + $0x110] sm:$0xff] %vm5051, 0.0
        %5199 = vst.msk [vmem:[#allocation3 + $0x118] sm:$0x3] %vm5165, 0.0
        %5200 = vst.msk [vmem:[#allocation3 + $0x120] sm:$0xff] %vm5051, 0.0
        %5201 = vst.msk [vmem:[#allocation3 + $0x128] sm:$0xff] %vm5051, 0.0
        %5202 = vst.msk [vmem:[#allocation3 + $0x130] sm:$0x3] %vm5165, 0.0
        %5203 = vst.msk [vmem:[#allocation3 + $0x138] sm:$0xff] %vm5051, 0.0
        %5204 = vst.msk [vmem:[#allocation3 + $0x140] sm:$0xff] %vm5051, 0.0
        %5205 = vst.msk [vmem:[#allocation3 + $0x148] sm:$0x3] %vm5165, 0.0
        %5206 = vst.msk [vmem:[#allocation3 + $0x150] sm:$0xff] %vm5051, 0.0
        %5207 = vst.msk [vmem:[#allocation3 + $0x158] sm:$0xff] %vm5051, 0.0
        %5208 = vst.msk [vmem:[#allocation3 + $0x160] sm:$0x3] %vm5165, 0.0
        %5209 = vst.msk [vmem:[#allocation3 + $0x168] sm:$0xff] %vm5051, 0.0
        %5210 = vst.msk [vmem:[#allocation3 + $0x170] sm:$0xff] %vm5051, 0.0
        %5211 = vst.msk [vmem:[#allocation3 + $0x178] sm:$0x3] %vm5165, 0.0
        %5212 = vst.msk [vmem:[#allocation3 + $0x180] sm:$0xff] %vm5051, 0.0
        %5213 = vst.msk [vmem:[#allocation3 + $0x188] sm:$0xff] %vm5051, 0.0
        %5214 = vst.msk [vmem:[#allocation3 + $0x190] sm:$0x3] %vm5165, 0.0
        %5215 = vst.msk [vmem:[#allocation3 + $0x198] sm:$0xff] %vm5051, 0.0
        %5216 = vst.msk [vmem:[#allocation3 + $0x1a0] sm:$0xff] %vm5051, 0.0
        %5217 = vst.msk [vmem:[#allocation3 + $0x1a8] sm:$0x3] %vm5165, 0.0
        %5218 = vst.msk [vmem:[#allocation3 + $0x1b0] sm:$0xff] %vm5051, 0.0
        %5219 = vst.msk [vmem:[#allocation3 + $0x1b8] sm:$0xff] %vm5051, 0.0
        %5220 = vst.msk [vmem:[#allocation3 + $0x1c0] sm:$0x3] %vm5165, 0.0
        %5221 = vst.msk [vmem:[#allocation3 + $0x1c8] sm:$0xff] %vm5051, 0.0
        %5222 = vst.msk [vmem:[#allocation3 + $0x1d0] sm:$0xff] %vm5051, 0.0
        %5223 = vst.msk [vmem:[#allocation3 + $0x1d8] sm:$0x3] %vm5165, 0.0
        %s5224 = scalar_lea.vmem [#allocation3], 24
        %5225 = vst.msk [vmem:[%s5224 + $0x8] sm:$0xff] %vm5051, %v5147
        %5226 = vst.msk [vmem:[%s5224 + $0x20] sm:$0xff] %vm5051, %v5148
        %5227 = vst.msk [vmem:[%s5224 + $0x38] sm:$0xff] %vm5051, %v5149
        %5228 = vst.msk [vmem:[%s5224 + $0x50] sm:$0xff] %vm5051, %v5150
        %5229 = vst.msk [vmem:[%s5224 + $0x68] sm:$0xff] %vm5051, %v5151
        %5230 = vst.msk [vmem:[%s5224 + $0x80] sm:$0xff] %vm5051, %v5152
        %5231 = vst.msk [vmem:[%s5224 + $0x98] sm:$0xff] %vm5051, %v5153
        %5232 = vst.msk [vmem:[%s5224 + $0xb0] sm:$0xff] %vm5051, %v5154
        %5233 = vst.msk [vmem:[%s5224 + $0xf8] sm:$0xff] %vm5051, %v5155
        %5234 = vst.msk [vmem:[%s5224 + $0x110] sm:$0xff] %vm5051, %v5156
        %5235 = vst.msk [vmem:[%s5224 + $0x128] sm:$0xff] %vm5051, %v5157
        %5236 = vst.msk [vmem:[%s5224 + $0x140] sm:$0xff] %vm5051, %v5158
        %5237 = vst.msk [vmem:[%s5224 + $0x158] sm:$0xff] %vm5051, %v5159
        %5238 = vst.msk [vmem:[%s5224 + $0x170] sm:$0xff] %vm5051, %v5160
        %5239 = vst.msk [vmem:[%s5224 + $0x188] sm:$0xff] %vm5051, %v5161
        %5240 = vst.msk [vmem:[%s5224 + $0x1a0] sm:$0xff] %vm5051, %v5162
        %v5241 = vld [vmem:[#allocation3 + $0x7] sm:$0xff]
        %v5242 = vld [vmem:[#allocation3 + $0x1f] sm:$0xff]
        %v5243 = vld [vmem:[#allocation3 + $0x37] sm:$0xff]
        %v5244 = vld [vmem:[#allocation3 + $0x4f] sm:$0xff]
        %v5245 = vld [vmem:[#allocation3 + $0x67] sm:$0xff]
        %v5246 = vld [vmem:[#allocation3 + $0x7f] sm:$0xff]
        %v5247 = vld [vmem:[#allocation3 + $0x97] sm:$0xff]
        %v5248 = vld [vmem:[#allocation3 + $0xaf] sm:$0xff]
        %v5249 = vld [vmem:[#allocation3 + $0xf7] sm:$0xff]
        %v5250 = vld [vmem:[#allocation3 + $0x10f] sm:$0xff]
        %v5251 = vld [vmem:[#allocation3 + $0x127] sm:$0xff]
        %v5252 = vld [vmem:[#allocation3 + $0x13f] sm:$0xff]
        %v5253 = vld [vmem:[#allocation3 + $0x157] sm:$0xff]
        %v5254 = vld [vmem:[#allocation3 + $0x16f] sm:$0xff]
        %v5255 = vld [vmem:[#allocation3 + $0x187] sm:$0xff]
        %v5256 = vld [vmem:[#allocation3 + $0x19f] sm:$0xff]
        %v5257 = vld [vmem:[%s3] sm:$0xff]
        %v5258 = vld [vmem:[%s3 + $0x8] sm:$0xff]
        %v5259 = vld [vmem:[%s3 + $0x10] sm:$0xff]
        %v5260 = vld [vmem:[%s3 + $0x18] sm:$0xff]
        %v5261 = vld [vmem:[#allocation3 + $0x8] sm:$0xff]
        %v5262 = vld [vmem:[#allocation3 + $0x20] sm:$0xff]
        %v5263 = vld [vmem:[#allocation3 + $0x38] sm:$0xff]
        %v5264 = vld [vmem:[#allocation3 + $0x50] sm:$0xff]
        %v5265 = vld [vmem:[#allocation3 + $0x68] sm:$0xff]
        %v5266 = vld [vmem:[#allocation3 + $0x80] sm:$0xff]
        %v5267 = vld [vmem:[#allocation3 + $0x98] sm:$0xff]
        %v5268 = vld [vmem:[#allocation3 + $0xb0] sm:$0xff]
        %v5269 = vld [vmem:[#allocation3 + $0xf8] sm:$0xff]
        %v5270 = vld [vmem:[#allocation3 + $0x110] sm:$0xff]
        %v5271 = vld [vmem:[#allocation3 + $0x128] sm:$0xff]
        %v5272 = vld [vmem:[#allocation3 + $0x140] sm:$0xff]
        %v5273 = vld [vmem:[#allocation3 + $0x158] sm:$0xff]
        %v5274 = vld [vmem:[#allocation3 + $0x170] sm:$0xff]
        %v5275 = vld [vmem:[#allocation3 + $0x188] sm:$0xff]
        %v5276 = vld [vmem:[#allocation3 + $0x1a0] sm:$0xff]
        %s5277 = scalar_lea.vmem %s3, 32
        %v5278 = vld [vmem:[%s5277] sm:$0xff]
        %v5279 = vld [vmem:[%s5277 + $0x8] sm:$0xff]
        %v5280 = vld [vmem:[%s5277 + $0x10] sm:$0xff]
        %v5281 = vld [vmem:[%s5277 + $0x18] sm:$0xff]
        %v5283 = vsel %vm5051, %v5261, 0
        %v5286 = vsel %vm5051, %v5262, 0
        %v5289 = vsel %vm5051, %v5263, 0
        %v5292 = vsel %vm5051, %v5264, 0
        %v5295 = vsel %vm5051, %v5265, 0
        %v5298 = vsel %vm5051, %v5266, 0
        %v5301 = vsel %vm5051, %v5267, 0
        %v5304 = vsel %vm5051, %v5268, 0
        %v5307 = vsel %vm5051, %v5269, 0
        %v5310 = vsel %vm5051, %v5270, 0
        %v5313 = vsel %vm5051, %v5271, 0
        %v5316 = vsel %vm5051, %v5272, 0
        %v5319 = vsel %vm5051, %v5273, 0
        %v5322 = vsel %vm5051, %v5274, 0
        %v5325 = vsel %vm5051, %v5275, 0
        %v5328 = vsel %vm5051, %v5276, 0
        %5330 = vmatprep.subr.mxu0 0.0
        %5331 = vmatpush1.msra.mxu0 0.0
        %5332 = vmatprep.subr.mxu0 0.0
        %5333 = vmatpush1.msra.mxu0 0.0
        %5334 = vmatprep.subr.mxu0 0.0
        %5335 = vmatpush1.msra.mxu0 0.0
        %5336 = vmatprep.subr.mxu0 0.0
        %5337 = vmatpush1.msra.mxu0 0.0
        %5338 = vmatprep.subr.mxu0 0.0
        %5339 = vmatpush1.msra.mxu0 0.0
        %5340 = vmatprep.subr.mxu0 0.0
        %5341 = vmatpush1.msra.mxu0 0.0
        %5342 = vmatprep.subr.mxu0 0.0
        %5343 = vmatpush1.msra.mxu0 0.0
        %5344 = vmatprep.subr.mxu0 0.0
        %5345 = vmatpush1.msra.mxu0 0.0
        %5346 = vmatprep.subr.mxu0 0.0
        %5347 = vmatpush1.msra.mxu0 0.0
        %5348 = vmatprep.subr.mxu0 0.0
        %5349 = vmatpush1.msra.mxu0 0.0
        %5350 = vmatprep.subr.mxu0 0.0
        %5351 = vmatpush1.msra.mxu0 0.0
        %5352 = vmatprep.subr.mxu0 0.0
        %5353 = vmatpush1.msra.mxu0 0.0
        %5354 = vmatprep.subr.mxu0 0.0
        %5355 = vmatpush1.msra.mxu0 %v5281
        %5356 = vmatprep.subr.mxu0 0.0
        %5357 = vmatpush1.msra.mxu0 %v5280
        %5358 = vmatprep.subr.mxu0 0.0
        %5359 = vmatpush1.msra.mxu0 %v5279
        %5360 = vmatprep.subr.mxu0 0.0
        %5361 = vmatpush1.msra.mxu0 %v5278
        %5362 = vmatprep.subr.mxu0 0.0
        %5363 = vmatpush2.msra.mxu0 0.0
        %5364 = vmatprep.subr.mxu0 0.0
        %5365 = vmatpush2.msra.mxu0 0.0
        %5366 = vmatprep.subr.mxu0 0.0
        %5367 = vmatpush2.msra.mxu0 0.0
        %5368 = vmatprep.subr.mxu0 0.0
        %5369 = vmatpush2.msra.mxu0 0.0
        %5370 = vmatprep.subr.mxu0 0.0
        %5371 = vmatpush2.msra.mxu0 0.0
        %5372 = vmatprep.subr.mxu0 0.0
        %5373 = vmatpush2.msra.mxu0 0.0
        %5374 = vmatprep.subr.mxu0 0.0
        %5375 = vmatpush2.msra.mxu0 0.0
        %5376 = vmatprep.subr.mxu0 0.0
        %5377 = vmatpush2.msra.mxu0 0.0
        %5378 = vmatprep.subr.mxu0 0.0
        %5379 = vmatpush2.msra.mxu0 0.0
        %5380 = vmatprep.subr.mxu0 0.0
        %5381 = vmatpush2.msra.mxu0 0.0
        %5382 = vmatprep.subr.mxu0 0.0
        %5383 = vmatpush2.msra.mxu0 0.0
        %5384 = vmatprep.subr.mxu0 0.0
        %5385 = vmatpush2.msra.mxu0 0.0
        %5386 = vmatprep.subr.mxu0 0.0
        %5387 = vmatpush2.msra.mxu0 0.0
        %5388 = vmatprep.subr.mxu0 0.0
        %5389 = vmatpush2.msra.mxu0 0.0
        %5390 = vmatprep.subr.mxu0 0.0
        %5391 = vmatpush2.msra.mxu0 0.0
        %5392 = vmatprep.subr.mxu0 0.0
        %5393 = vmatpush2.msra.mxu0 0.0
        %5394 = vmatprep.mubr.f32.mxu0 0.0
        %5395 = vmatmul.mubr.f32.gmra.mxu0 %v5283
        %v5396 = vpop.f32.mrf.mxu0
        %v5397 = vadd.f32 0.0, %v5396
        %v5398 = vpop.f32.mrf.mxu0
        %5399 = vmatprep.mubr.f32.mxu0 0.0
        %5400 = vmatmul.mubr.f32.gmra.mxu0 %v5286
        %v5401 = vpop.f32.mrf.mxu0
        %v5402 = vadd.f32 0.0, %v5401
        %v5403 = vpop.f32.mrf.mxu0
        %5404 = vmatprep.mubr.f32.mxu0 0.0
        %5405 = vmatmul.mubr.f32.gmra.mxu0 %v5289
        %v5406 = vpop.f32.mrf.mxu0
        %v5407 = vadd.f32 0.0, %v5406
        %v5408 = vpop.f32.mrf.mxu0
        %5409 = vmatprep.mubr.f32.mxu0 0.0
        %5410 = vmatmul.mubr.f32.gmra.mxu0 %v5292
        %v5411 = vpop.f32.mrf.mxu0
        %v5412 = vadd.f32 0.0, %v5411
        %v5413 = vpop.f32.mrf.mxu0
        %5414 = vmatprep.mubr.f32.mxu0 0.0
        %5415 = vmatmul.mubr.f32.gmra.mxu0 %v5295
        %v5416 = vpop.f32.mrf.mxu0
        %v5417 = vadd.f32 0.0, %v5416
        %v5418 = vpop.f32.mrf.mxu0
        %5419 = vmatprep.mubr.f32.mxu0 0.0
        %5420 = vmatmul.mubr.f32.gmra.mxu0 %v5298
        %v5421 = vpop.f32.mrf.mxu0
        %v5422 = vadd.f32 0.0, %v5421
        %v5423 = vpop.f32.mrf.mxu0
        %5424 = vmatprep.mubr.f32.mxu0 0.0
        %5425 = vmatmul.mubr.f32.gmra.mxu0 %v5301
        %v5426 = vpop.f32.mrf.mxu0
        %v5427 = vadd.f32 0.0, %v5426
        %v5428 = vpop.f32.mrf.mxu0
        %5429 = vmatprep.mubr.f32.mxu0 0.0
        %5430 = vmatmul.mubr.f32.gmra.mxu0 %v5304
        %v5431 = vpop.f32.mrf.mxu0
        %v5432 = vadd.f32 0.0, %v5431
        %v5433 = vpop.f32.mrf.mxu0
        %5434 = vmatprep.mubr.f32.mxu0 0.0
        %5435 = vmatmul.mubr.f32.gmra.mxu0 %v5307
        %v5436 = vpop.f32.mrf.mxu0
        %v5437 = vadd.f32 0.0, %v5436
        %v5438 = vpop.f32.mrf.mxu0
        %5439 = vmatprep.mubr.f32.mxu0 0.0
        %5440 = vmatmul.mubr.f32.gmra.mxu0 %v5310
        %v5441 = vpop.f32.mrf.mxu0
        %v5442 = vadd.f32 0.0, %v5441
        %v5443 = vpop.f32.mrf.mxu0
        %5444 = vmatprep.mubr.f32.mxu0 0.0
        %5445 = vmatmul.mubr.f32.gmra.mxu0 %v5313
        %v5446 = vpop.f32.mrf.mxu0
        %v5447 = vadd.f32 0.0, %v5446
        %v5448 = vpop.f32.mrf.mxu0
        %5449 = vmatprep.mubr.f32.mxu0 0.0
        %5450 = vmatmul.mubr.f32.gmra.mxu0 %v5316
        %v5451 = vpop.f32.mrf.mxu0
        %v5452 = vadd.f32 0.0, %v5451
        %v5453 = vpop.f32.mrf.mxu0
        %5454 = vmatprep.mubr.f32.mxu0 0.0
        %5455 = vmatmul.mubr.f32.gmra.mxu0 %v5319
        %v5456 = vpop.f32.mrf.mxu0
        %v5457 = vadd.f32 0.0, %v5456
        %v5458 = vpop.f32.mrf.mxu0
        %5459 = vmatprep.mubr.f32.mxu0 0.0
        %5460 = vmatmul.mubr.f32.gmra.mxu0 %v5322
        %v5461 = vpop.f32.mrf.mxu0
        %v5462 = vadd.f32 0.0, %v5461
        %v5463 = vpop.f32.mrf.mxu0
        %5464 = vmatprep.mubr.f32.mxu0 0.0
        %5465 = vmatmul.mubr.f32.gmra.mxu0 %v5325
        %v5466 = vpop.f32.mrf.mxu0
        %v5467 = vadd.f32 0.0, %v5466
        %v5468 = vpop.f32.mrf.mxu0
        %5469 = vmatprep.mubr.f32.mxu0 0.0
        %5470 = vmatmul.mubr.f32.gmra.mxu0 %v5328
        %v5471 = vpop.f32.mrf.mxu0
        %v5472 = vadd.f32 0.0, %v5471
        %v5473 = vpop.f32.mrf.mxu0
        %5474 = vdwg.mxu0
        %v5476 = vsel %vm5051, %v5241, 0
        %v5479 = vsel %vm5051, %v5242, 0
        %v5482 = vsel %vm5051, %v5243, 0
        %v5485 = vsel %vm5051, %v5244, 0
        %v5488 = vsel %vm5051, %v5245, 0
        %v5491 = vsel %vm5051, %v5246, 0
        %v5494 = vsel %vm5051, %v5247, 0
        %v5497 = vsel %vm5051, %v5248, 0
        %v5500 = vsel %vm5051, %v5249, 0
        %v5503 = vsel %vm5051, %v5250, 0
        %v5506 = vsel %vm5051, %v5251, 0
        %v5509 = vsel %vm5051, %v5252, 0
        %v5512 = vsel %vm5051, %v5253, 0
        %v5515 = vsel %vm5051, %v5254, 0
        %v5518 = vsel %vm5051, %v5255, 0
        %v5521 = vsel %vm5051, %v5256, 0
        %5523 = vmatprep.subr.mxu0 0.0
        %5524 = vmatpush1.msra.mxu0 0.0
        %5525 = vmatprep.subr.mxu0 0.0
        %5526 = vmatpush1.msra.mxu0 0.0
        %5527 = vmatprep.subr.mxu0 0.0
        %5528 = vmatpush1.msra.mxu0 0.0
        %5529 = vmatprep.subr.mxu0 0.0
        %5530 = vmatpush1.msra.mxu0 0.0
        %5531 = vmatprep.subr.mxu0 0.0
        %5532 = vmatpush1.msra.mxu0 0.0
        %5533 = vmatprep.subr.mxu0 0.0
        %5534 = vmatpush1.msra.mxu0 0.0
        %5535 = vmatprep.subr.mxu0 0.0
        %5536 = vmatpush1.msra.mxu0 0.0
        %5537 = vmatprep.subr.mxu0 0.0
        %5538 = vmatpush1.msra.mxu0 0.0
        %5539 = vmatprep.subr.mxu0 0.0
        %5540 = vmatpush1.msra.mxu0 0.0
        %5541 = vmatprep.subr.mxu0 0.0
        %5542 = vmatpush1.msra.mxu0 0.0
        %5543 = vmatprep.subr.mxu0 0.0
        %5544 = vmatpush1.msra.mxu0 0.0
        %5545 = vmatprep.subr.mxu0 0.0
        %5546 = vmatpush1.msra.mxu0 0.0
        %5547 = vmatprep.subr.mxu0 0.0
        %5548 = vmatpush1.msra.mxu0 %v5260
        %5549 = vmatprep.subr.mxu0 0.0
        %5550 = vmatpush1.msra.mxu0 %v5259
        %5551 = vmatprep.subr.mxu0 0.0
        %5552 = vmatpush1.msra.mxu0 %v5258
        %5553 = vmatprep.subr.mxu0 0.0
        %5554 = vmatpush1.msra.mxu0 %v5257
        %5555 = vmatprep.subr.mxu0 0.0
        %5556 = vmatpush2.msra.mxu0 0.0
        %5557 = vmatprep.subr.mxu0 0.0
        %5558 = vmatpush2.msra.mxu0 0.0
        %5559 = vmatprep.subr.mxu0 0.0
        %5560 = vmatpush2.msra.mxu0 0.0
        %5561 = vmatprep.subr.mxu0 0.0
        %5562 = vmatpush2.msra.mxu0 0.0
        %5563 = vmatprep.subr.mxu0 0.0
        %5564 = vmatpush2.msra.mxu0 0.0
        %5565 = vmatprep.subr.mxu0 0.0
        %5566 = vmatpush2.msra.mxu0 0.0
        %5567 = vmatprep.subr.mxu0 0.0
        %5568 = vmatpush2.msra.mxu0 0.0
        %5569 = vmatprep.subr.mxu0 0.0
        %5570 = vmatpush2.msra.mxu0 0.0
        %5571 = vmatprep.subr.mxu0 0.0
        %5572 = vmatpush2.msra.mxu0 0.0
        %5573 = vmatprep.subr.mxu0 0.0
        %5574 = vmatpush2.msra.mxu0 0.0
        %5575 = vmatprep.subr.mxu0 0.0
        %5576 = vmatpush2.msra.mxu0 0.0
        %5577 = vmatprep.subr.mxu0 0.0
        %5578 = vmatpush2.msra.mxu0 0.0
        %5579 = vmatprep.subr.mxu0 0.0
        %5580 = vmatpush2.msra.mxu0 0.0
        %5581 = vmatprep.subr.mxu0 0.0
        %5582 = vmatpush2.msra.mxu0 0.0
        %5583 = vmatprep.subr.mxu0 0.0
        %5584 = vmatpush2.msra.mxu0 0.0
        %5585 = vmatprep.subr.mxu0 0.0
        %5586 = vmatpush2.msra.mxu0 0.0
        %5587 = vmatprep.mubr.f32.mxu0 0.0
        %5588 = vmatmul.mubr.f32.gmra.mxu0 %v5476
        %v5589 = vpop.f32.mrf.mxu0
        %v5590 = vadd.f32 %v5397, %v5589
        %v5591 = vpop.f32.mrf.mxu0
        %5592 = vmatprep.mubr.f32.mxu0 0.0
        %5593 = vmatmul.mubr.f32.gmra.mxu0 %v5479
        %v5594 = vpop.f32.mrf.mxu0
        %v5595 = vadd.f32 %v5402, %v5594
        %v5596 = vpop.f32.mrf.mxu0
        %5597 = vmatprep.mubr.f32.mxu0 0.0
        %5598 = vmatmul.mubr.f32.gmra.mxu0 %v5482
        %v5599 = vpop.f32.mrf.mxu0
        %v5600 = vadd.f32 %v5407, %v5599
        %v5601 = vpop.f32.mrf.mxu0
        %5602 = vmatprep.mubr.f32.mxu0 0.0
        %5603 = vmatmul.mubr.f32.gmra.mxu0 %v5485
        %v5604 = vpop.f32.mrf.mxu0
        %v5605 = vadd.f32 %v5412, %v5604
        %v5606 = vpop.f32.mrf.mxu0
        %5607 = vmatprep.mubr.f32.mxu0 0.0
        %5608 = vmatmul.mubr.f32.gmra.mxu0 %v5488
        %v5609 = vpop.f32.mrf.mxu0
        %v5610 = vadd.f32 %v5417, %v5609
        %v5611 = vpop.f32.mrf.mxu0
        %5612 = vmatprep.mubr.f32.mxu0 0.0
        %5613 = vmatmul.mubr.f32.gmra.mxu0 %v5491
        %v5614 = vpop.f32.mrf.mxu0
        %v5615 = vadd.f32 %v5422, %v5614
        %v5616 = vpop.f32.mrf.mxu0
        %5617 = vmatprep.mubr.f32.mxu0 0.0
        %5618 = vmatmul.mubr.f32.gmra.mxu0 %v5494
        %v5619 = vpop.f32.mrf.mxu0
        %v5620 = vadd.f32 %v5427, %v5619
        %v5621 = vpop.f32.mrf.mxu0
        %5622 = vmatprep.mubr.f32.mxu0 0.0
        %5623 = vmatmul.mubr.f32.gmra.mxu0 %v5497
        %v5624 = vpop.f32.mrf.mxu0
        %v5625 = vadd.f32 %v5432, %v5624
        %v5626 = vpop.f32.mrf.mxu0
        %5627 = vmatprep.mubr.f32.mxu0 0.0
        %5628 = vmatmul.mubr.f32.gmra.mxu0 %v5500
        %v5629 = vpop.f32.mrf.mxu0
        %v5630 = vadd.f32 %v5437, %v5629
        %v5631 = vpop.f32.mrf.mxu0
        %5632 = vmatprep.mubr.f32.mxu0 0.0
        %5633 = vmatmul.mubr.f32.gmra.mxu0 %v5503
        %v5634 = vpop.f32.mrf.mxu0
        %v5635 = vadd.f32 %v5442, %v5634
        %v5636 = vpop.f32.mrf.mxu0
        %5637 = vmatprep.mubr.f32.mxu0 0.0
        %5638 = vmatmul.mubr.f32.gmra.mxu0 %v5506
        %v5639 = vpop.f32.mrf.mxu0
        %v5640 = vadd.f32 %v5447, %v5639
        %v5641 = vpop.f32.mrf.mxu0
        %5642 = vmatprep.mubr.f32.mxu0 0.0
        %5643 = vmatmul.mubr.f32.gmra.mxu0 %v5509
        %v5644 = vpop.f32.mrf.mxu0
        %v5645 = vadd.f32 %v5452, %v5644
        %v5646 = vpop.f32.mrf.mxu0
        %5647 = vmatprep.mubr.f32.mxu0 0.0
        %5648 = vmatmul.mubr.f32.gmra.mxu0 %v5512
        %v5649 = vpop.f32.mrf.mxu0
        %v5650 = vadd.f32 %v5457, %v5649
        %v5651 = vpop.f32.mrf.mxu0
        %5652 = vmatprep.mubr.f32.mxu0 0.0
        %5653 = vmatmul.mubr.f32.gmra.mxu0 %v5515
        %v5654 = vpop.f32.mrf.mxu0
        %v5655 = vadd.f32 %v5462, %v5654
        %v5656 = vpop.f32.mrf.mxu0
        %5657 = vmatprep.mubr.f32.mxu0 0.0
        %5658 = vmatmul.mubr.f32.gmra.mxu0 %v5518
        %v5659 = vpop.f32.mrf.mxu0
        %v5660 = vadd.f32 %v5467, %v5659
        %v5661 = vpop.f32.mrf.mxu0
        %5662 = vmatprep.mubr.f32.mxu0 0.0
        %5663 = vmatmul.mubr.f32.gmra.mxu0 %v5521
        %v5664 = vpop.f32.mrf.mxu0
        %v5665 = vadd.f32 %v5472, %v5664
        %v5666 = vpop.f32.mrf.mxu0
        %5667 = vdwg.mxu0
        %v5668 = vld [vmem:[#allocation3 + $0x9] sm:$0xff]
        %v5669 = vld [vmem:[#allocation3 + $0x21] sm:$0xff]
        %v5670 = vld [vmem:[#allocation3 + $0x39] sm:$0xff]
        %v5671 = vld [vmem:[#allocation3 + $0x51] sm:$0xff]
        %v5672 = vld [vmem:[#allocation3 + $0x69] sm:$0xff]
        %v5673 = vld [vmem:[#allocation3 + $0x81] sm:$0xff]
        %v5674 = vld [vmem:[#allocation3 + $0x99] sm:$0xff]
        %v5675 = vld [vmem:[#allocation3 + $0xb1] sm:$0xff]
        %v5676 = vld [vmem:[#allocation3 + $0xf9] sm:$0xff]
        %v5677 = vld [vmem:[#allocation3 + $0x111] sm:$0xff]
        %v5678 = vld [vmem:[#allocation3 + $0x129] sm:$0xff]
        %v5679 = vld [vmem:[#allocation3 + $0x141] sm:$0xff]
        %v5680 = vld [vmem:[#allocation3 + $0x159] sm:$0xff]
        %v5681 = vld [vmem:[#allocation3 + $0x171] sm:$0xff]
        %v5682 = vld [vmem:[#allocation3 + $0x189] sm:$0xff]
        %v5683 = vld [vmem:[#allocation3 + $0x1a1] sm:$0xff]
        %s5684 = scalar_lea.vmem %s3, 64
        %v5685 = vld [vmem:[%s5684] sm:$0xff]
        %v5686 = vld [vmem:[%s5684 + $0x8] sm:$0xff]
        %v5687 = vld [vmem:[%s5684 + $0x10] sm:$0xff]
        %v5688 = vld [vmem:[%s5684 + $0x18] sm:$0xff]
        %v5690 = vsel %vm5051, %v5668, 0
        %v5693 = vsel %vm5051, %v5669, 0
        %v5696 = vsel %vm5051, %v5670, 0
        %v5699 = vsel %vm5051, %v5671, 0
        %v5702 = vsel %vm5051, %v5672, 0
        %v5705 = vsel %vm5051, %v5673, 0
        %v5708 = vsel %vm5051, %v5674, 0
        %v5711 = vsel %vm5051, %v5675, 0
        %v5714 = vsel %vm5051, %v5676, 0
        %v5717 = vsel %vm5051, %v5677, 0
        %v5720 = vsel %vm5051, %v5678, 0
        %v5723 = vsel %vm5051, %v5679, 0
        %v5726 = vsel %vm5051, %v5680, 0
        %v5729 = vsel %vm5051, %v5681, 0
        %v5732 = vsel %vm5051, %v5682, 0
        %v5735 = vsel %vm5051, %v5683, 0
        %5737 = vmatprep.subr.mxu0 0.0
        %5738 = vmatpush1.msra.mxu0 0.0
        %5739 = vmatprep.subr.mxu0 0.0
        %5740 = vmatpush1.msra.mxu0 0.0
        %5741 = vmatprep.subr.mxu0 0.0
        %5742 = vmatpush1.msra.mxu0 0.0
        %5743 = vmatprep.subr.mxu0 0.0
        %5744 = vmatpush1.msra.mxu0 0.0
        %5745 = vmatprep.subr.mxu0 0.0
        %5746 = vmatpush1.msra.mxu0 0.0
        %5747 = vmatprep.subr.mxu0 0.0
        %5748 = vmatpush1.msra.mxu0 0.0
        %5749 = vmatprep.subr.mxu0 0.0
        %5750 = vmatpush1.msra.mxu0 0.0
        %5751 = vmatprep.subr.mxu0 0.0
        %5752 = vmatpush1.msra.mxu0 0.0
        %5753 = vmatprep.subr.mxu0 0.0
        %5754 = vmatpush1.msra.mxu0 0.0
        %5755 = vmatprep.subr.mxu0 0.0
        %5756 = vmatpush1.msra.mxu0 0.0
        %5757 = vmatprep.subr.mxu0 0.0
        %5758 = vmatpush1.msra.mxu0 0.0
        %5759 = vmatprep.subr.mxu0 0.0
        %5760 = vmatpush1.msra.mxu0 0.0
        %5761 = vmatprep.subr.mxu0 0.0
        %5762 = vmatpush1.msra.mxu0 %v5688
        %5763 = vmatprep.subr.mxu0 0.0
        %5764 = vmatpush1.msra.mxu0 %v5687
        %5765 = vmatprep.subr.mxu0 0.0
        %5766 = vmatpush1.msra.mxu0 %v5686
        %5767 = vmatprep.subr.mxu0 0.0
        %5768 = vmatpush1.msra.mxu0 %v5685
        %5769 = vmatprep.subr.mxu0 0.0
        %5770 = vmatpush2.msra.mxu0 0.0
        %5771 = vmatprep.subr.mxu0 0.0
        %5772 = vmatpush2.msra.mxu0 0.0
        %5773 = vmatprep.subr.mxu0 0.0
        %5774 = vmatpush2.msra.mxu0 0.0
        %5775 = vmatprep.subr.mxu0 0.0
        %5776 = vmatpush2.msra.mxu0 0.0
        %5777 = vmatprep.subr.mxu0 0.0
        %5778 = vmatpush2.msra.mxu0 0.0
        %5779 = vmatprep.subr.mxu0 0.0
        %5780 = vmatpush2.msra.mxu0 0.0
        %5781 = vmatprep.subr.mxu0 0.0
        %5782 = vmatpush2.msra.mxu0 0.0
        %5783 = vmatprep.subr.mxu0 0.0
        %5784 = vmatpush2.msra.mxu0 0.0
        %5785 = vmatprep.subr.mxu0 0.0
        %5786 = vmatpush2.msra.mxu0 0.0
        %5787 = vmatprep.subr.mxu0 0.0
        %5788 = vmatpush2.msra.mxu0 0.0
        %5789 = vmatprep.subr.mxu0 0.0
        %5790 = vmatpush2.msra.mxu0 0.0
        %5791 = vmatprep.subr.mxu0 0.0
        %5792 = vmatpush2.msra.mxu0 0.0
        %5793 = vmatprep.subr.mxu0 0.0
        %5794 = vmatpush2.msra.mxu0 0.0
        %5795 = vmatprep.subr.mxu0 0.0
        %5796 = vmatpush2.msra.mxu0 0.0
        %5797 = vmatprep.subr.mxu0 0.0
        %5798 = vmatpush2.msra.mxu0 0.0
        %5799 = vmatprep.subr.mxu0 0.0
        %5800 = vmatpush2.msra.mxu0 0.0
        %5801 = vmatprep.mubr.f32.mxu0 0.0
        %5802 = vmatmul.mubr.f32.gmra.mxu0 %v5690
        %v5803 = vpop.f32.mrf.mxu0
        %v5804 = vadd.f32 0.0, %v5803
        %v5805 = vpop.f32.mrf.mxu0
        %5806 = vmatprep.mubr.f32.mxu0 0.0
        %5807 = vmatmul.mubr.f32.gmra.mxu0 %v5693
        %v5808 = vpop.f32.mrf.mxu0
        %v5809 = vadd.f32 0.0, %v5808
        %v5810 = vpop.f32.mrf.mxu0
        %5811 = vmatprep.mubr.f32.mxu0 0.0
        %5812 = vmatmul.mubr.f32.gmra.mxu0 %v5696
        %v5813 = vpop.f32.mrf.mxu0
        %v5814 = vadd.f32 0.0, %v5813
        %v5815 = vpop.f32.mrf.mxu0
        %5816 = vmatprep.mubr.f32.mxu0 0.0
        %5817 = vmatmul.mubr.f32.gmra.mxu0 %v5699
        %v5818 = vpop.f32.mrf.mxu0
        %v5819 = vadd.f32 0.0, %v5818
        %v5820 = vpop.f32.mrf.mxu0
        %5821 = vmatprep.mubr.f32.mxu0 0.0
        %5822 = vmatmul.mubr.f32.gmra.mxu0 %v5702
        %v5823 = vpop.f32.mrf.mxu0
        %v5824 = vadd.f32 0.0, %v5823
        %v5825 = vpop.f32.mrf.mxu0
        %5826 = vmatprep.mubr.f32.mxu0 0.0
        %5827 = vmatmul.mubr.f32.gmra.mxu0 %v5705
        %v5828 = vpop.f32.mrf.mxu0
        %v5829 = vadd.f32 0.0, %v5828
        %v5830 = vpop.f32.mrf.mxu0
        %5831 = vmatprep.mubr.f32.mxu0 0.0
        %5832 = vmatmul.mubr.f32.gmra.mxu0 %v5708
        %v5833 = vpop.f32.mrf.mxu0
        %v5834 = vadd.f32 0.0, %v5833
        %v5835 = vpop.f32.mrf.mxu0
        %5836 = vmatprep.mubr.f32.mxu0 0.0
        %5837 = vmatmul.mubr.f32.gmra.mxu0 %v5711
        %v5838 = vpop.f32.mrf.mxu0
        %v5839 = vadd.f32 0.0, %v5838
        %v5840 = vpop.f32.mrf.mxu0
        %5841 = vmatprep.mubr.f32.mxu0 0.0
        %5842 = vmatmul.mubr.f32.gmra.mxu0 %v5714
        %v5843 = vpop.f32.mrf.mxu0
        %v5844 = vadd.f32 0.0, %v5843
        %v5845 = vpop.f32.mrf.mxu0
        %5846 = vmatprep.mubr.f32.mxu0 0.0
        %5847 = vmatmul.mubr.f32.gmra.mxu0 %v5717
        %v5848 = vpop.f32.mrf.mxu0
        %v5849 = vadd.f32 0.0, %v5848
        %v5850 = vpop.f32.mrf.mxu0
        %5851 = vmatprep.mubr.f32.mxu0 0.0
        %5852 = vmatmul.mubr.f32.gmra.mxu0 %v5720
        %v5853 = vpop.f32.mrf.mxu0
        %v5854 = vadd.f32 0.0, %v5853
        %v5855 = vpop.f32.mrf.mxu0
        %5856 = vmatprep.mubr.f32.mxu0 0.0
        %5857 = vmatmul.mubr.f32.gmra.mxu0 %v5723
        %v5858 = vpop.f32.mrf.mxu0
        %v5859 = vadd.f32 0.0, %v5858
        %v5860 = vpop.f32.mrf.mxu0
        %5861 = vmatprep.mubr.f32.mxu0 0.0
        %5862 = vmatmul.mubr.f32.gmra.mxu0 %v5726
        %v5863 = vpop.f32.mrf.mxu0
        %v5864 = vadd.f32 0.0, %v5863
        %v5865 = vpop.f32.mrf.mxu0
        %5866 = vmatprep.mubr.f32.mxu0 0.0
        %5867 = vmatmul.mubr.f32.gmra.mxu0 %v5729
        %v5868 = vpop.f32.mrf.mxu0
        %v5869 = vadd.f32 0.0, %v5868
        %v5870 = vpop.f32.mrf.mxu0
        %5871 = vmatprep.mubr.f32.mxu0 0.0
        %5872 = vmatmul.mubr.f32.gmra.mxu0 %v5732
        %v5873 = vpop.f32.mrf.mxu0
        %v5874 = vadd.f32 0.0, %v5873
        %v5875 = vpop.f32.mrf.mxu0
        %5876 = vmatprep.mubr.f32.mxu0 0.0
        %5877 = vmatmul.mubr.f32.gmra.mxu0 %v5735
        %v5878 = vpop.f32.mrf.mxu0
        %v5879 = vadd.f32 0.0, %v5878
        %v5880 = vpop.f32.mrf.mxu0
        %5881 = vdwg.mxu0
        %v5882 = vadd.f32 %v5590, %v5804
        %v5883 = vadd.f32 %v5595, %v5809
        %v5884 = vadd.f32 %v5600, %v5814
        %v5885 = vadd.f32 %v5605, %v5819
        %v5886 = vadd.f32 %v5610, %v5824
        %v5887 = vadd.f32 %v5615, %v5829
        %v5888 = vadd.f32 %v5620, %v5834
        %v5889 = vadd.f32 %v5625, %v5839
        %v5890 = vadd.f32 %v5630, %v5844
        %v5891 = vadd.f32 %v5635, %v5849
        %v5892 = vadd.f32 %v5640, %v5854
        %v5893 = vadd.f32 %v5645, %v5859
        %v5894 = vadd.f32 %v5650, %v5864
        %v5895 = vadd.f32 %v5655, %v5869
        %v5896 = vadd.f32 %v5660, %v5874
        %v5897 = vadd.f32 %v5665, %v5879
        %v5898 = vld [vmem:[%s5224 + $0x7] sm:$0xff]
        %v5899 = vld [vmem:[%s5224 + $0x1f] sm:$0xff]
        %v5900 = vld [vmem:[%s5224 + $0x37] sm:$0xff]
        %v5901 = vld [vmem:[%s5224 + $0x4f] sm:$0xff]
        %v5902 = vld [vmem:[%s5224 + $0x67] sm:$0xff]
        %v5903 = vld [vmem:[%s5224 + $0x7f] sm:$0xff]
        %v5904 = vld [vmem:[%s5224 + $0x97] sm:$0xff]
        %v5905 = vld [vmem:[%s5224 + $0xaf] sm:$0xff]
        %v5906 = vld [vmem:[%s5224 + $0xf7] sm:$0xff]
        %v5907 = vld [vmem:[%s5224 + $0x10f] sm:$0xff]
        %v5908 = vld [vmem:[%s5224 + $0x127] sm:$0xff]
        %v5909 = vld [vmem:[%s5224 + $0x13f] sm:$0xff]
        %v5910 = vld [vmem:[%s5224 + $0x157] sm:$0xff]
        %v5911 = vld [vmem:[%s5224 + $0x16f] sm:$0xff]
        %v5912 = vld [vmem:[%s5224 + $0x187] sm:$0xff]
        %v5913 = vld [vmem:[%s5224 + $0x19f] sm:$0xff]
        %s5914 = scalar_lea.vmem %s3, 96
        %v5915 = vld [vmem:[%s5914] sm:$0xff]
        %v5916 = vld [vmem:[%s5914 + $0x8] sm:$0xff]
        %v5917 = vld [vmem:[%s5914 + $0x10] sm:$0xff]
        %v5918 = vld [vmem:[%s5914 + $0x18] sm:$0xff]
        %v5920 = vsel %vm5051, %v5898, 0
        %v5923 = vsel %vm5051, %v5899, 0
        %v5926 = vsel %vm5051, %v5900, 0
        %v5929 = vsel %vm5051, %v5901, 0
        %v5932 = vsel %vm5051, %v5902, 0
        %v5935 = vsel %vm5051, %v5903, 0
        %v5938 = vsel %vm5051, %v5904, 0
        %v5941 = vsel %vm5051, %v5905, 0
        %v5944 = vsel %vm5051, %v5906, 0
        %v5947 = vsel %vm5051, %v5907, 0
        %v5950 = vsel %vm5051, %v5908, 0
        %v5953 = vsel %vm5051, %v5909, 0
        %v5956 = vsel %vm5051, %v5910, 0
        %v5959 = vsel %vm5051, %v5911, 0
        %v5962 = vsel %vm5051, %v5912, 0
        %v5965 = vsel %vm5051, %v5913, 0
        %5967 = vmatprep.subr.mxu0 0.0
        %5968 = vmatpush1.msra.mxu0 0.0
        %5969 = vmatprep.subr.mxu0 0.0
        %5970 = vmatpush1.msra.mxu0 0.0
        %5971 = vmatprep.subr.mxu0 0.0
        %5972 = vmatpush1.msra.mxu0 0.0
        %5973 = vmatprep.subr.mxu0 0.0
        %5974 = vmatpush1.msra.mxu0 0.0
        %5975 = vmatprep.subr.mxu0 0.0
        %5976 = vmatpush1.msra.mxu0 0.0
        %5977 = vmatprep.subr.mxu0 0.0
        %5978 = vmatpush1.msra.mxu0 0.0
        %5979 = vmatprep.subr.mxu0 0.0
        %5980 = vmatpush1.msra.mxu0 0.0
        %5981 = vmatprep.subr.mxu0 0.0
        %5982 = vmatpush1.msra.mxu0 0.0
        %5983 = vmatprep.subr.mxu0 0.0
        %5984 = vmatpush1.msra.mxu0 0.0
        %5985 = vmatprep.subr.mxu0 0.0
        %5986 = vmatpush1.msra.mxu0 0.0
        %5987 = vmatprep.subr.mxu0 0.0
        %5988 = vmatpush1.msra.mxu0 0.0
        %5989 = vmatprep.subr.mxu0 0.0
        %5990 = vmatpush1.msra.mxu0 0.0
        %5991 = vmatprep.subr.mxu0 0.0
        %5992 = vmatpush1.msra.mxu0 %v5918
        %5993 = vmatprep.subr.mxu0 0.0
        %5994 = vmatpush1.msra.mxu0 %v5917
        %5995 = vmatprep.subr.mxu0 0.0
        %5996 = vmatpush1.msra.mxu0 %v5916
        %5997 = vmatprep.subr.mxu0 0.0
        %5998 = vmatpush1.msra.mxu0 %v5915
        %5999 = vmatprep.subr.mxu0 0.0
        %6000 = vmatpush2.msra.mxu0 0.0
        %6001 = vmatprep.subr.mxu0 0.0
        %6002 = vmatpush2.msra.mxu0 0.0
        %6003 = vmatprep.subr.mxu0 0.0
        %6004 = vmatpush2.msra.mxu0 0.0
        %6005 = vmatprep.subr.mxu0 0.0
        %6006 = vmatpush2.msra.mxu0 0.0
        %6007 = vmatprep.subr.mxu0 0.0
        %6008 = vmatpush2.msra.mxu0 0.0
        %6009 = vmatprep.subr.mxu0 0.0
        %6010 = vmatpush2.msra.mxu0 0.0
        %6011 = vmatprep.subr.mxu0 0.0
        %6012 = vmatpush2.msra.mxu0 0.0
        %6013 = vmatprep.subr.mxu0 0.0
        %6014 = vmatpush2.msra.mxu0 0.0
        %6015 = vmatprep.subr.mxu0 0.0
        %6016 = vmatpush2.msra.mxu0 0.0
        %6017 = vmatprep.subr.mxu0 0.0
        %6018 = vmatpush2.msra.mxu0 0.0
        %6019 = vmatprep.subr.mxu0 0.0
        %6020 = vmatpush2.msra.mxu0 0.0
        %6021 = vmatprep.subr.mxu0 0.0
        %6022 = vmatpush2.msra.mxu0 0.0
        %6023 = vmatprep.subr.mxu0 0.0
        %6024 = vmatpush2.msra.mxu0 0.0
        %6025 = vmatprep.subr.mxu0 0.0
        %6026 = vmatpush2.msra.mxu0 0.0
        %6027 = vmatprep.subr.mxu0 0.0
        %6028 = vmatpush2.msra.mxu0 0.0
        %6029 = vmatprep.subr.mxu0 0.0
        %6030 = vmatpush2.msra.mxu0 0.0
        %6031 = vmatprep.mubr.f32.mxu0 0.0
        %6032 = vmatmul.mubr.f32.gmra.mxu0 %v5920
        %v6033 = vpop.f32.mrf.mxu0
        %v6034 = vadd.f32 0.0, %v6033
        %v6035 = vpop.f32.mrf.mxu0
        %6036 = vmatprep.mubr.f32.mxu0 0.0
        %6037 = vmatmul.mubr.f32.gmra.mxu0 %v5923
        %v6038 = vpop.f32.mrf.mxu0
        %v6039 = vadd.f32 0.0, %v6038
        %v6040 = vpop.f32.mrf.mxu0
        %6041 = vmatprep.mubr.f32.mxu0 0.0
        %6042 = vmatmul.mubr.f32.gmra.mxu0 %v5926
        %v6043 = vpop.f32.mrf.mxu0
        %v6044 = vadd.f32 0.0, %v6043
        %v6045 = vpop.f32.mrf.mxu0
        %6046 = vmatprep.mubr.f32.mxu0 0.0
        %6047 = vmatmul.mubr.f32.gmra.mxu0 %v5929
        %v6048 = vpop.f32.mrf.mxu0
        %v6049 = vadd.f32 0.0, %v6048
        %v6050 = vpop.f32.mrf.mxu0
        %6051 = vmatprep.mubr.f32.mxu0 0.0
        %6052 = vmatmul.mubr.f32.gmra.mxu0 %v5932
        %v6053 = vpop.f32.mrf.mxu0
        %v6054 = vadd.f32 0.0, %v6053
        %v6055 = vpop.f32.mrf.mxu0
        %6056 = vmatprep.mubr.f32.mxu0 0.0
        %6057 = vmatmul.mubr.f32.gmra.mxu0 %v5935
        %v6058 = vpop.f32.mrf.mxu0
        %v6059 = vadd.f32 0.0, %v6058
        %v6060 = vpop.f32.mrf.mxu0
        %6061 = vmatprep.mubr.f32.mxu0 0.0
        %6062 = vmatmul.mubr.f32.gmra.mxu0 %v5938
        %v6063 = vpop.f32.mrf.mxu0
        %v6064 = vadd.f32 0.0, %v6063
        %v6065 = vpop.f32.mrf.mxu0
        %6066 = vmatprep.mubr.f32.mxu0 0.0
        %6067 = vmatmul.mubr.f32.gmra.mxu0 %v5941
        %v6068 = vpop.f32.mrf.mxu0
        %v6069 = vadd.f32 0.0, %v6068
        %v6070 = vpop.f32.mrf.mxu0
        %6071 = vmatprep.mubr.f32.mxu0 0.0
        %6072 = vmatmul.mubr.f32.gmra.mxu0 %v5944
        %v6073 = vpop.f32.mrf.mxu0
        %v6074 = vadd.f32 0.0, %v6073
        %v6075 = vpop.f32.mrf.mxu0
        %6076 = vmatprep.mubr.f32.mxu0 0.0
        %6077 = vmatmul.mubr.f32.gmra.mxu0 %v5947
        %v6078 = vpop.f32.mrf.mxu0
        %v6079 = vadd.f32 0.0, %v6078
        %v6080 = vpop.f32.mrf.mxu0
        %6081 = vmatprep.mubr.f32.mxu0 0.0
        %6082 = vmatmul.mubr.f32.gmra.mxu0 %v5950
        %v6083 = vpop.f32.mrf.mxu0
        %v6084 = vadd.f32 0.0, %v6083
        %v6085 = vpop.f32.mrf.mxu0
        %6086 = vmatprep.mubr.f32.mxu0 0.0
        %6087 = vmatmul.mubr.f32.gmra.mxu0 %v5953
        %v6088 = vpop.f32.mrf.mxu0
        %v6089 = vadd.f32 0.0, %v6088
        %v6090 = vpop.f32.mrf.mxu0
        %6091 = vmatprep.mubr.f32.mxu0 0.0
        %6092 = vmatmul.mubr.f32.gmra.mxu0 %v5956
        %v6093 = vpop.f32.mrf.mxu0
        %v6094 = vadd.f32 0.0, %v6093
        %v6095 = vpop.f32.mrf.mxu0
        %6096 = vmatprep.mubr.f32.mxu0 0.0
        %6097 = vmatmul.mubr.f32.gmra.mxu0 %v5959
        %v6098 = vpop.f32.mrf.mxu0
        %v6099 = vadd.f32 0.0, %v6098
        %v6100 = vpop.f32.mrf.mxu0
        %6101 = vmatprep.mubr.f32.mxu0 0.0
        %6102 = vmatmul.mubr.f32.gmra.mxu0 %v5962
        %v6103 = vpop.f32.mrf.mxu0
        %v6104 = vadd.f32 0.0, %v6103
        %v6105 = vpop.f32.mrf.mxu0
        %6106 = vmatprep.mubr.f32.mxu0 0.0
        %6107 = vmatmul.mubr.f32.gmra.mxu0 %v5965
        %v6108 = vpop.f32.mrf.mxu0
        %v6109 = vadd.f32 0.0, %v6108
        %v6110 = vpop.f32.mrf.mxu0
        %6111 = vdwg.mxu0
        %v6112 = vadd.f32 %v5882, %v6034
        %v6113 = vadd.f32 %v5883, %v6039
        %v6114 = vadd.f32 %v5884, %v6044
        %v6115 = vadd.f32 %v5885, %v6049
        %v6116 = vadd.f32 %v5886, %v6054
        %v6117 = vadd.f32 %v5887, %v6059
        %v6118 = vadd.f32 %v5888, %v6064
        %v6119 = vadd.f32 %v5889, %v6069
        %v6120 = vadd.f32 %v5890, %v6074
        %v6121 = vadd.f32 %v5891, %v6079
        %v6122 = vadd.f32 %v5892, %v6084
        %v6123 = vadd.f32 %v5893, %v6089
        %v6124 = vadd.f32 %v5894, %v6094
        %v6125 = vadd.f32 %v5895, %v6099
        %v6126 = vadd.f32 %v5896, %v6104
        %v6127 = vadd.f32 %v5897, %v6109
        %v6128 = vld [vmem:[%s5224 + $0x8] sm:$0xff]
        %v6129 = vld [vmem:[%s5224 + $0x20] sm:$0xff]
        %v6130 = vld [vmem:[%s5224 + $0x38] sm:$0xff]
        %v6131 = vld [vmem:[%s5224 + $0x50] sm:$0xff]
        %v6132 = vld [vmem:[%s5224 + $0x68] sm:$0xff]
        %v6133 = vld [vmem:[%s5224 + $0x80] sm:$0xff]
        %v6134 = vld [vmem:[%s5224 + $0x98] sm:$0xff]
        %v6135 = vld [vmem:[%s5224 + $0xb0] sm:$0xff]
        %v6136 = vld [vmem:[%s5224 + $0xf8] sm:$0xff]
        %v6137 = vld [vmem:[%s5224 + $0x110] sm:$0xff]
        %v6138 = vld [vmem:[%s5224 + $0x128] sm:$0xff]
        %v6139 = vld [vmem:[%s5224 + $0x140] sm:$0xff]
        %v6140 = vld [vmem:[%s5224 + $0x158] sm:$0xff]
        %v6141 = vld [vmem:[%s5224 + $0x170] sm:$0xff]
        %v6142 = vld [vmem:[%s5224 + $0x188] sm:$0xff]
        %v6143 = vld [vmem:[%s5224 + $0x1a0] sm:$0xff]
        %s6144 = scalar_lea.vmem %s3, 128
        %v6145 = vld [vmem:[%s6144] sm:$0xff]
        %v6146 = vld [vmem:[%s6144 + $0x8] sm:$0xff]
        %v6147 = vld [vmem:[%s6144 + $0x10] sm:$0xff]
        %v6148 = vld [vmem:[%s6144 + $0x18] sm:$0xff]
        %v6150 = vsel %vm5051, %v6128, 0
        %v6153 = vsel %vm5051, %v6129, 0
        %v6156 = vsel %vm5051, %v6130, 0
        %v6159 = vsel %vm5051, %v6131, 0
        %v6162 = vsel %vm5051, %v6132, 0
        %v6165 = vsel %vm5051, %v6133, 0
        %v6168 = vsel %vm5051, %v6134, 0
        %v6171 = vsel %vm5051, %v6135, 0
        %v6174 = vsel %vm5051, %v6136, 0
        %v6177 = vsel %vm5051, %v6137, 0
        %v6180 = vsel %vm5051, %v6138, 0
        %v6183 = vsel %vm5051, %v6139, 0
        %v6186 = vsel %vm5051, %v6140, 0
        %v6189 = vsel %vm5051, %v6141, 0
        %v6192 = vsel %vm5051, %v6142, 0
        %v6195 = vsel %vm5051, %v6143, 0
        %6197 = vmatprep.subr.mxu0 0.0
        %6198 = vmatpush1.msra.mxu0 0.0
        %6199 = vmatprep.subr.mxu0 0.0
        %6200 = vmatpush1.msra.mxu0 0.0
        %6201 = vmatprep.subr.mxu0 0.0
        %6202 = vmatpush1.msra.mxu0 0.0
        %6203 = vmatprep.subr.mxu0 0.0
        %6204 = vmatpush1.msra.mxu0 0.0
        %6205 = vmatprep.subr.mxu0 0.0
        %6206 = vmatpush1.msra.mxu0 0.0
        %6207 = vmatprep.subr.mxu0 0.0
        %6208 = vmatpush1.msra.mxu0 0.0
        %6209 = vmatprep.subr.mxu0 0.0
        %6210 = vmatpush1.msra.mxu0 0.0
        %6211 = vmatprep.subr.mxu0 0.0
        %6212 = vmatpush1.msra.mxu0 0.0
        %6213 = vmatprep.subr.mxu0 0.0
        %6214 = vmatpush1.msra.mxu0 0.0
        %6215 = vmatprep.subr.mxu0 0.0
        %6216 = vmatpush1.msra.mxu0 0.0
        %6217 = vmatprep.subr.mxu0 0.0
        %6218 = vmatpush1.msra.mxu0 0.0
        %6219 = vmatprep.subr.mxu0 0.0
        %6220 = vmatpush1.msra.mxu0 0.0
        %6221 = vmatprep.subr.mxu0 0.0
        %6222 = vmatpush1.msra.mxu0 %v6148
        %6223 = vmatprep.subr.mxu0 0.0
        %6224 = vmatpush1.msra.mxu0 %v6147
        %6225 = vmatprep.subr.mxu0 0.0
        %6226 = vmatpush1.msra.mxu0 %v6146
        %6227 = vmatprep.subr.mxu0 0.0
        %6228 = vmatpush1.msra.mxu0 %v6145
        %6229 = vmatprep.subr.mxu0 0.0
        %6230 = vmatpush2.msra.mxu0 0.0
        %6231 = vmatprep.subr.mxu0 0.0
        %6232 = vmatpush2.msra.mxu0 0.0
        %6233 = vmatprep.subr.mxu0 0.0
        %6234 = vmatpush2.msra.mxu0 0.0
        %6235 = vmatprep.subr.mxu0 0.0
        %6236 = vmatpush2.msra.mxu0 0.0
        %6237 = vmatprep.subr.mxu0 0.0
        %6238 = vmatpush2.msra.mxu0 0.0
        %6239 = vmatprep.subr.mxu0 0.0
        %6240 = vmatpush2.msra.mxu0 0.0
        %6241 = vmatprep.subr.mxu0 0.0
        %6242 = vmatpush2.msra.mxu0 0.0
        %6243 = vmatprep.subr.mxu0 0.0
        %6244 = vmatpush2.msra.mxu0 0.0
        %6245 = vmatprep.subr.mxu0 0.0
        %6246 = vmatpush2.msra.mxu0 0.0
        %6247 = vmatprep.subr.mxu0 0.0
        %6248 = vmatpush2.msra.mxu0 0.0
        %6249 = vmatprep.subr.mxu0 0.0
        %6250 = vmatpush2.msra.mxu0 0.0
        %6251 = vmatprep.subr.mxu0 0.0
        %6252 = vmatpush2.msra.mxu0 0.0
        %6253 = vmatprep.subr.mxu0 0.0
        %6254 = vmatpush2.msra.mxu0 0.0
        %6255 = vmatprep.subr.mxu0 0.0
        %6256 = vmatpush2.msra.mxu0 0.0
        %6257 = vmatprep.subr.mxu0 0.0
        %6258 = vmatpush2.msra.mxu0 0.0
        %6259 = vmatprep.subr.mxu0 0.0
        %6260 = vmatpush2.msra.mxu0 0.0
        %6261 = vmatprep.mubr.f32.mxu0 0.0
        %6262 = vmatmul.mubr.f32.gmra.mxu0 %v6150
        %v6263 = vpop.f32.mrf.mxu0
        %v6264 = vadd.f32 0.0, %v6263
        %v6265 = vpop.f32.mrf.mxu0
        %6266 = vmatprep.mubr.f32.mxu0 0.0
        %6267 = vmatmul.mubr.f32.gmra.mxu0 %v6153
        %v6268 = vpop.f32.mrf.mxu0
        %v6269 = vadd.f32 0.0, %v6268
        %v6270 = vpop.f32.mrf.mxu0
        %6271 = vmatprep.mubr.f32.mxu0 0.0
        %6272 = vmatmul.mubr.f32.gmra.mxu0 %v6156
        %v6273 = vpop.f32.mrf.mxu0
        %v6274 = vadd.f32 0.0, %v6273
        %v6275 = vpop.f32.mrf.mxu0
        %6276 = vmatprep.mubr.f32.mxu0 0.0
        %6277 = vmatmul.mubr.f32.gmra.mxu0 %v6159
        %v6278 = vpop.f32.mrf.mxu0
        %v6279 = vadd.f32 0.0, %v6278
        %v6280 = vpop.f32.mrf.mxu0
        %6281 = vmatprep.mubr.f32.mxu0 0.0
        %6282 = vmatmul.mubr.f32.gmra.mxu0 %v6162
        %v6283 = vpop.f32.mrf.mxu0
        %v6284 = vadd.f32 0.0, %v6283
        %v6285 = vpop.f32.mrf.mxu0
        %6286 = vmatprep.mubr.f32.mxu0 0.0
        %6287 = vmatmul.mubr.f32.gmra.mxu0 %v6165
        %v6288 = vpop.f32.mrf.mxu0
        %v6289 = vadd.f32 0.0, %v6288
        %v6290 = vpop.f32.mrf.mxu0
        %6291 = vmatprep.mubr.f32.mxu0 0.0
        %6292 = vmatmul.mubr.f32.gmra.mxu0 %v6168
        %v6293 = vpop.f32.mrf.mxu0
        %v6294 = vadd.f32 0.0, %v6293
        %v6295 = vpop.f32.mrf.mxu0
        %6296 = vmatprep.mubr.f32.mxu0 0.0
        %6297 = vmatmul.mubr.f32.gmra.mxu0 %v6171
        %v6298 = vpop.f32.mrf.mxu0
        %v6299 = vadd.f32 0.0, %v6298
        %v6300 = vpop.f32.mrf.mxu0
        %6301 = vmatprep.mubr.f32.mxu0 0.0
        %6302 = vmatmul.mubr.f32.gmra.mxu0 %v6174
        %v6303 = vpop.f32.mrf.mxu0
        %v6304 = vadd.f32 0.0, %v6303
        %v6305 = vpop.f32.mrf.mxu0
        %6306 = vmatprep.mubr.f32.mxu0 0.0
        %6307 = vmatmul.mubr.f32.gmra.mxu0 %v6177
        %v6308 = vpop.f32.mrf.mxu0
        %v6309 = vadd.f32 0.0, %v6308
        %v6310 = vpop.f32.mrf.mxu0
        %6311 = vmatprep.mubr.f32.mxu0 0.0
        %6312 = vmatmul.mubr.f32.gmra.mxu0 %v6180
        %v6313 = vpop.f32.mrf.mxu0
        %v6314 = vadd.f32 0.0, %v6313
        %v6315 = vpop.f32.mrf.mxu0
        %6316 = vmatprep.mubr.f32.mxu0 0.0
        %6317 = vmatmul.mubr.f32.gmra.mxu0 %v6183
        %v6318 = vpop.f32.mrf.mxu0
        %v6319 = vadd.f32 0.0, %v6318
        %v6320 = vpop.f32.mrf.mxu0
        %6321 = vmatprep.mubr.f32.mxu0 0.0
        %6322 = vmatmul.mubr.f32.gmra.mxu0 %v6186
        %v6323 = vpop.f32.mrf.mxu0
        %v6324 = vadd.f32 0.0, %v6323
        %v6325 = vpop.f32.mrf.mxu0
        %6326 = vmatprep.mubr.f32.mxu0 0.0
        %6327 = vmatmul.mubr.f32.gmra.mxu0 %v6189
        %v6328 = vpop.f32.mrf.mxu0
        %v6329 = vadd.f32 0.0, %v6328
        %v6330 = vpop.f32.mrf.mxu0
        %6331 = vmatprep.mubr.f32.mxu0 0.0
        %6332 = vmatmul.mubr.f32.gmra.mxu0 %v6192
        %v6333 = vpop.f32.mrf.mxu0
        %v6334 = vadd.f32 0.0, %v6333
        %v6335 = vpop.f32.mrf.mxu0
        %6336 = vmatprep.mubr.f32.mxu0 0.0
        %6337 = vmatmul.mubr.f32.gmra.mxu0 %v6195
        %v6338 = vpop.f32.mrf.mxu0
        %v6339 = vadd.f32 0.0, %v6338
        %v6340 = vpop.f32.mrf.mxu0
        %6341 = vdwg.mxu0
        %v6342 = vadd.f32 %v6112, %v6264
        %v6343 = vadd.f32 %v6113, %v6269
        %v6344 = vadd.f32 %v6114, %v6274
        %v6345 = vadd.f32 %v6115, %v6279
        %v6346 = vadd.f32 %v6116, %v6284
        %v6347 = vadd.f32 %v6117, %v6289
        %v6348 = vadd.f32 %v6118, %v6294
        %v6349 = vadd.f32 %v6119, %v6299
        %v6350 = vadd.f32 %v6120, %v6304
        %v6351 = vadd.f32 %v6121, %v6309
        %v6352 = vadd.f32 %v6122, %v6314
        %v6353 = vadd.f32 %v6123, %v6319
        %v6354 = vadd.f32 %v6124, %v6324
        %v6355 = vadd.f32 %v6125, %v6329
        %v6356 = vadd.f32 %v6126, %v6334
        %v6357 = vadd.f32 %v6127, %v6339
        %v6358 = vld [vmem:[%s5224 + $0x9] sm:$0xff]
        %v6359 = vld [vmem:[%s5224 + $0x21] sm:$0xff]
        %v6360 = vld [vmem:[%s5224 + $0x39] sm:$0xff]
        %v6361 = vld [vmem:[%s5224 + $0x51] sm:$0xff]
        %v6362 = vld [vmem:[%s5224 + $0x69] sm:$0xff]
        %v6363 = vld [vmem:[%s5224 + $0x81] sm:$0xff]
        %v6364 = vld [vmem:[%s5224 + $0x99] sm:$0xff]
        %v6365 = vld [vmem:[%s5224 + $0xb1] sm:$0xff]
        %v6366 = vld [vmem:[%s5224 + $0xf9] sm:$0xff]
        %v6367 = vld [vmem:[%s5224 + $0x111] sm:$0xff]
        %v6368 = vld [vmem:[%s5224 + $0x129] sm:$0xff]
        %v6369 = vld [vmem:[%s5224 + $0x141] sm:$0xff]
        %v6370 = vld [vmem:[%s5224 + $0x159] sm:$0xff]
        %v6371 = vld [vmem:[%s5224 + $0x171] sm:$0xff]
        %v6372 = vld [vmem:[%s5224 + $0x189] sm:$0xff]
        %v6373 = vld [vmem:[%s5224 + $0x1a1] sm:$0xff]
        %s6374 = scalar_lea.vmem %s3, 160
        %v6375 = vld [vmem:[%s6374] sm:$0xff]
        %v6376 = vld [vmem:[%s6374 + $0x8] sm:$0xff]
        %v6377 = vld [vmem:[%s6374 + $0x10] sm:$0xff]
        %v6378 = vld [vmem:[%s6374 + $0x18] sm:$0xff]
        %v6380 = vsel %vm5051, %v6358, 0
        %v6383 = vsel %vm5051, %v6359, 0
        %v6386 = vsel %vm5051, %v6360, 0
        %v6389 = vsel %vm5051, %v6361, 0
        %v6392 = vsel %vm5051, %v6362, 0
        %v6395 = vsel %vm5051, %v6363, 0
        %v6398 = vsel %vm5051, %v6364, 0
        %v6401 = vsel %vm5051, %v6365, 0
        %v6404 = vsel %vm5051, %v6366, 0
        %v6407 = vsel %vm5051, %v6367, 0
        %v6410 = vsel %vm5051, %v6368, 0
        %v6413 = vsel %vm5051, %v6369, 0
        %v6416 = vsel %vm5051, %v6370, 0
        %v6419 = vsel %vm5051, %v6371, 0
        %v6422 = vsel %vm5051, %v6372, 0
        %v6425 = vsel %vm5051, %v6373, 0
        %6427 = vmatprep.subr.mxu0 0.0
        %6428 = vmatpush1.msra.mxu0 0.0
        %6429 = vmatprep.subr.mxu0 0.0
        %6430 = vmatpush1.msra.mxu0 0.0
        %6431 = vmatprep.subr.mxu0 0.0
        %6432 = vmatpush1.msra.mxu0 0.0
        %6433 = vmatprep.subr.mxu0 0.0
        %6434 = vmatpush1.msra.mxu0 0.0
        %6435 = vmatprep.subr.mxu0 0.0
        %6436 = vmatpush1.msra.mxu0 0.0
        %6437 = vmatprep.subr.mxu0 0.0
        %6438 = vmatpush1.msra.mxu0 0.0
        %6439 = vmatprep.subr.mxu0 0.0
        %6440 = vmatpush1.msra.mxu0 0.0
        %6441 = vmatprep.subr.mxu0 0.0
        %6442 = vmatpush1.msra.mxu0 0.0
        %6443 = vmatprep.subr.mxu0 0.0
        %6444 = vmatpush1.msra.mxu0 0.0
        %6445 = vmatprep.subr.mxu0 0.0
        %6446 = vmatpush1.msra.mxu0 0.0
        %6447 = vmatprep.subr.mxu0 0.0
        %6448 = vmatpush1.msra.mxu0 0.0
        %6449 = vmatprep.subr.mxu0 0.0
        %6450 = vmatpush1.msra.mxu0 0.0
        %6451 = vmatprep.subr.mxu0 0.0
        %6452 = vmatpush1.msra.mxu0 %v6378
        %6453 = vmatprep.subr.mxu0 0.0
        %6454 = vmatpush1.msra.mxu0 %v6377
        %6455 = vmatprep.subr.mxu0 0.0
        %6456 = vmatpush1.msra.mxu0 %v6376
        %6457 = vmatprep.subr.mxu0 0.0
        %6458 = vmatpush1.msra.mxu0 %v6375
        %6459 = vmatprep.subr.mxu0 0.0
        %6460 = vmatpush2.msra.mxu0 0.0
        %6461 = vmatprep.subr.mxu0 0.0
        %6462 = vmatpush2.msra.mxu0 0.0
        %6463 = vmatprep.subr.mxu0 0.0
        %6464 = vmatpush2.msra.mxu0 0.0
        %6465 = vmatprep.subr.mxu0 0.0
        %6466 = vmatpush2.msra.mxu0 0.0
        %6467 = vmatprep.subr.mxu0 0.0
        %6468 = vmatpush2.msra.mxu0 0.0
        %6469 = vmatprep.subr.mxu0 0.0
        %6470 = vmatpush2.msra.mxu0 0.0
        %6471 = vmatprep.subr.mxu0 0.0
        %6472 = vmatpush2.msra.mxu0 0.0
        %6473 = vmatprep.subr.mxu0 0.0
        %6474 = vmatpush2.msra.mxu0 0.0
        %6475 = vmatprep.subr.mxu0 0.0
        %6476 = vmatpush2.msra.mxu0 0.0
        %6477 = vmatprep.subr.mxu0 0.0
        %6478 = vmatpush2.msra.mxu0 0.0
        %6479 = vmatprep.subr.mxu0 0.0
        %6480 = vmatpush2.msra.mxu0 0.0
        %6481 = vmatprep.subr.mxu0 0.0
        %6482 = vmatpush2.msra.mxu0 0.0
        %6483 = vmatprep.subr.mxu0 0.0
        %6484 = vmatpush2.msra.mxu0 0.0
        %6485 = vmatprep.subr.mxu0 0.0
        %6486 = vmatpush2.msra.mxu0 0.0
        %6487 = vmatprep.subr.mxu0 0.0
        %6488 = vmatpush2.msra.mxu0 0.0
        %6489 = vmatprep.subr.mxu0 0.0
        %6490 = vmatpush2.msra.mxu0 0.0
        %6491 = vmatprep.mubr.f32.mxu0 0.0
        %6492 = vmatmul.mubr.f32.gmra.mxu0 %v6380
        %v6493 = vpop.f32.mrf.mxu0
        %v6494 = vadd.f32 0.0, %v6493
        %v6495 = vpop.f32.mrf.mxu0
        %6496 = vmatprep.mubr.f32.mxu0 0.0
        %6497 = vmatmul.mubr.f32.gmra.mxu0 %v6383
        %v6498 = vpop.f32.mrf.mxu0
        %v6499 = vadd.f32 0.0, %v6498
        %v6500 = vpop.f32.mrf.mxu0
        %6501 = vmatprep.mubr.f32.mxu0 0.0
        %6502 = vmatmul.mubr.f32.gmra.mxu0 %v6386
        %v6503 = vpop.f32.mrf.mxu0
        %v6504 = vadd.f32 0.0, %v6503
        %v6505 = vpop.f32.mrf.mxu0
        %6506 = vmatprep.mubr.f32.mxu0 0.0
        %6507 = vmatmul.mubr.f32.gmra.mxu0 %v6389
        %v6508 = vpop.f32.mrf.mxu0
        %v6509 = vadd.f32 0.0, %v6508
        %v6510 = vpop.f32.mrf.mxu0
        %6511 = vmatprep.mubr.f32.mxu0 0.0
        %6512 = vmatmul.mubr.f32.gmra.mxu0 %v6392
        %v6513 = vpop.f32.mrf.mxu0
        %v6514 = vadd.f32 0.0, %v6513
        %v6515 = vpop.f32.mrf.mxu0
        %6516 = vmatprep.mubr.f32.mxu0 0.0
        %6517 = vmatmul.mubr.f32.gmra.mxu0 %v6395
        %v6518 = vpop.f32.mrf.mxu0
        %v6519 = vadd.f32 0.0, %v6518
        %v6520 = vpop.f32.mrf.mxu0
        %6521 = vmatprep.mubr.f32.mxu0 0.0
        %6522 = vmatmul.mubr.f32.gmra.mxu0 %v6398
        %v6523 = vpop.f32.mrf.mxu0
        %v6524 = vadd.f32 0.0, %v6523
        %v6525 = vpop.f32.mrf.mxu0
        %6526 = vmatprep.mubr.f32.mxu0 0.0
        %6527 = vmatmul.mubr.f32.gmra.mxu0 %v6401
        %v6528 = vpop.f32.mrf.mxu0
        %v6529 = vadd.f32 0.0, %v6528
        %v6530 = vpop.f32.mrf.mxu0
        %6531 = vmatprep.mubr.f32.mxu0 0.0
        %6532 = vmatmul.mubr.f32.gmra.mxu0 %v6404
        %v6533 = vpop.f32.mrf.mxu0
        %v6534 = vadd.f32 0.0, %v6533
        %v6535 = vpop.f32.mrf.mxu0
        %6536 = vmatprep.mubr.f32.mxu0 0.0
        %6537 = vmatmul.mubr.f32.gmra.mxu0 %v6407
        %v6538 = vpop.f32.mrf.mxu0
        %v6539 = vadd.f32 0.0, %v6538
        %v6540 = vpop.f32.mrf.mxu0
        %6541 = vmatprep.mubr.f32.mxu0 0.0
        %6542 = vmatmul.mubr.f32.gmra.mxu0 %v6410
        %v6543 = vpop.f32.mrf.mxu0
        %v6544 = vadd.f32 0.0, %v6543
        %v6545 = vpop.f32.mrf.mxu0
        %6546 = vmatprep.mubr.f32.mxu0 0.0
        %6547 = vmatmul.mubr.f32.gmra.mxu0 %v6413
        %v6548 = vpop.f32.mrf.mxu0
        %v6549 = vadd.f32 0.0, %v6548
        %v6550 = vpop.f32.mrf.mxu0
        %6551 = vmatprep.mubr.f32.mxu0 0.0
        %6552 = vmatmul.mubr.f32.gmra.mxu0 %v6416
        %v6553 = vpop.f32.mrf.mxu0
        %v6554 = vadd.f32 0.0, %v6553
        %v6555 = vpop.f32.mrf.mxu0
        %6556 = vmatprep.mubr.f32.mxu0 0.0
        %6557 = vmatmul.mubr.f32.gmra.mxu0 %v6419
        %v6558 = vpop.f32.mrf.mxu0
        %v6559 = vadd.f32 0.0, %v6558
        %v6560 = vpop.f32.mrf.mxu0
        %6561 = vmatprep.mubr.f32.mxu0 0.0
        %6562 = vmatmul.mubr.f32.gmra.mxu0 %v6422
        %v6563 = vpop.f32.mrf.mxu0
        %v6564 = vadd.f32 0.0, %v6563
        %v6565 = vpop.f32.mrf.mxu0
        %6566 = vmatprep.mubr.f32.mxu0 0.0
        %6567 = vmatmul.mubr.f32.gmra.mxu0 %v6425
        %v6568 = vpop.f32.mrf.mxu0
        %v6569 = vadd.f32 0.0, %v6568
        %v6570 = vpop.f32.mrf.mxu0
        %6571 = vdwg.mxu0
        %v6572 = vadd.f32 %v6342, %v6494
        %v6573 = vadd.f32 %v6343, %v6499
        %v6574 = vadd.f32 %v6344, %v6504
        %v6575 = vadd.f32 %v6345, %v6509
        %v6576 = vadd.f32 %v6346, %v6514
        %v6577 = vadd.f32 %v6347, %v6519
        %v6578 = vadd.f32 %v6348, %v6524
        %v6579 = vadd.f32 %v6349, %v6529
        %v6580 = vadd.f32 %v6350, %v6534
        %v6581 = vadd.f32 %v6351, %v6539
        %v6582 = vadd.f32 %v6352, %v6544
        %v6583 = vadd.f32 %v6353, %v6549
        %v6584 = vadd.f32 %v6354, %v6554
        %v6585 = vadd.f32 %v6355, %v6559
        %v6586 = vadd.f32 %v6356, %v6564
        %v6587 = vadd.f32 %v6357, %v6569
        %s6588 = scalar_lea.vmem [#allocation3], 48
        %v6589 = vld [vmem:[%s6588 + $0x7] sm:$0xff]
        %v6590 = vld [vmem:[%s6588 + $0x1f] sm:$0xff]
        %v6591 = vld [vmem:[%s6588 + $0x37] sm:$0xff]
        %v6592 = vld [vmem:[%s6588 + $0x4f] sm:$0xff]
        %v6593 = vld [vmem:[%s6588 + $0x67] sm:$0xff]
        %v6594 = vld [vmem:[%s6588 + $0x7f] sm:$0xff]
        %v6595 = vld [vmem:[%s6588 + $0x97] sm:$0xff]
        %v6596 = vld [vmem:[%s6588 + $0xaf] sm:$0xff]
        %v6597 = vld [vmem:[%s6588 + $0xf7] sm:$0xff]
        %v6598 = vld [vmem:[%s6588 + $0x10f] sm:$0xff]
        %v6599 = vld [vmem:[%s6588 + $0x127] sm:$0xff]
        %v6600 = vld [vmem:[%s6588 + $0x13f] sm:$0xff]
        %v6601 = vld [vmem:[%s6588 + $0x157] sm:$0xff]
        %v6602 = vld [vmem:[%s6588 + $0x16f] sm:$0xff]
        %v6603 = vld [vmem:[%s6588 + $0x187] sm:$0xff]
        %v6604 = vld [vmem:[%s6588 + $0x19f] sm:$0xff]
        %s6605 = scalar_lea.vmem %s3, 192
        %v6606 = vld [vmem:[%s6605] sm:$0xff]
        %v6607 = vld [vmem:[%s6605 + $0x8] sm:$0xff]
        %v6608 = vld [vmem:[%s6605 + $0x10] sm:$0xff]
        %v6609 = vld [vmem:[%s6605 + $0x18] sm:$0xff]
        %v6611 = vsel %vm5051, %v6589, 0
        %v6614 = vsel %vm5051, %v6590, 0
        %v6617 = vsel %vm5051, %v6591, 0
        %v6620 = vsel %vm5051, %v6592, 0
        %v6623 = vsel %vm5051, %v6593, 0
        %v6626 = vsel %vm5051, %v6594, 0
        %v6629 = vsel %vm5051, %v6595, 0
        %v6632 = vsel %vm5051, %v6596, 0
        %v6635 = vsel %vm5051, %v6597, 0
        %v6638 = vsel %vm5051, %v6598, 0
        %v6641 = vsel %vm5051, %v6599, 0
        %v6644 = vsel %vm5051, %v6600, 0
        %v6647 = vsel %vm5051, %v6601, 0
        %v6650 = vsel %vm5051, %v6602, 0
        %v6653 = vsel %vm5051, %v6603, 0
        %v6656 = vsel %vm5051, %v6604, 0
        %6658 = vmatprep.subr.mxu0 0.0
        %6659 = vmatpush1.msra.mxu0 0.0
        %6660 = vmatprep.subr.mxu0 0.0
        %6661 = vmatpush1.msra.mxu0 0.0
        %6662 = vmatprep.subr.mxu0 0.0
        %6663 = vmatpush1.msra.mxu0 0.0
        %6664 = vmatprep.subr.mxu0 0.0
        %6665 = vmatpush1.msra.mxu0 0.0
        %6666 = vmatprep.subr.mxu0 0.0
        %6667 = vmatpush1.msra.mxu0 0.0
        %6668 = vmatprep.subr.mxu0 0.0
        %6669 = vmatpush1.msra.mxu0 0.0
        %6670 = vmatprep.subr.mxu0 0.0
        %6671 = vmatpush1.msra.mxu0 0.0
        %6672 = vmatprep.subr.mxu0 0.0
        %6673 = vmatpush1.msra.mxu0 0.0
        %6674 = vmatprep.subr.mxu0 0.0
        %6675 = vmatpush1.msra.mxu0 0.0
        %6676 = vmatprep.subr.mxu0 0.0
        %6677 = vmatpush1.msra.mxu0 0.0
        %6678 = vmatprep.subr.mxu0 0.0
        %6679 = vmatpush1.msra.mxu0 0.0
        %6680 = vmatprep.subr.mxu0 0.0
        %6681 = vmatpush1.msra.mxu0 0.0
        %6682 = vmatprep.subr.mxu0 0.0
        %6683 = vmatpush1.msra.mxu0 %v6609
        %6684 = vmatprep.subr.mxu0 0.0
        %6685 = vmatpush1.msra.mxu0 %v6608
        %6686 = vmatprep.subr.mxu0 0.0
        %6687 = vmatpush1.msra.mxu0 %v6607
        %6688 = vmatprep.subr.mxu0 0.0
        %6689 = vmatpush1.msra.mxu0 %v6606
        %6690 = vmatprep.subr.mxu0 0.0
        %6691 = vmatpush2.msra.mxu0 0.0
        %6692 = vmatprep.subr.mxu0 0.0
        %6693 = vmatpush2.msra.mxu0 0.0
        %6694 = vmatprep.subr.mxu0 0.0
        %6695 = vmatpush2.msra.mxu0 0.0
        %6696 = vmatprep.subr.mxu0 0.0
        %6697 = vmatpush2.msra.mxu0 0.0
        %6698 = vmatprep.subr.mxu0 0.0
        %6699 = vmatpush2.msra.mxu0 0.0
        %6700 = vmatprep.subr.mxu0 0.0
        %6701 = vmatpush2.msra.mxu0 0.0
        %6702 = vmatprep.subr.mxu0 0.0
        %6703 = vmatpush2.msra.mxu0 0.0
        %6704 = vmatprep.subr.mxu0 0.0
        %6705 = vmatpush2.msra.mxu0 0.0
        %6706 = vmatprep.subr.mxu0 0.0
        %6707 = vmatpush2.msra.mxu0 0.0
        %6708 = vmatprep.subr.mxu0 0.0
        %6709 = vmatpush2.msra.mxu0 0.0
        %6710 = vmatprep.subr.mxu0 0.0
        %6711 = vmatpush2.msra.mxu0 0.0
        %6712 = vmatprep.subr.mxu0 0.0
        %6713 = vmatpush2.msra.mxu0 0.0
        %6714 = vmatprep.subr.mxu0 0.0
        %6715 = vmatpush2.msra.mxu0 0.0
        %6716 = vmatprep.subr.mxu0 0.0
        %6717 = vmatpush2.msra.mxu0 0.0
        %6718 = vmatprep.subr.mxu0 0.0
        %6719 = vmatpush2.msra.mxu0 0.0
        %6720 = vmatprep.subr.mxu0 0.0
        %6721 = vmatpush2.msra.mxu0 0.0
        %6722 = vmatprep.mubr.f32.mxu0 0.0
        %6723 = vmatmul.mubr.f32.gmra.mxu0 %v6611
        %v6724 = vpop.f32.mrf.mxu0
        %v6725 = vadd.f32 0.0, %v6724
        %v6726 = vpop.f32.mrf.mxu0
        %6727 = vmatprep.mubr.f32.mxu0 0.0
        %6728 = vmatmul.mubr.f32.gmra.mxu0 %v6614
        %v6729 = vpop.f32.mrf.mxu0
        %v6730 = vadd.f32 0.0, %v6729
        %v6731 = vpop.f32.mrf.mxu0
        %6732 = vmatprep.mubr.f32.mxu0 0.0
        %6733 = vmatmul.mubr.f32.gmra.mxu0 %v6617
        %v6734 = vpop.f32.mrf.mxu0
        %v6735 = vadd.f32 0.0, %v6734
        %v6736 = vpop.f32.mrf.mxu0
        %6737 = vmatprep.mubr.f32.mxu0 0.0
        %6738 = vmatmul.mubr.f32.gmra.mxu0 %v6620
        %v6739 = vpop.f32.mrf.mxu0
        %v6740 = vadd.f32 0.0, %v6739
        %v6741 = vpop.f32.mrf.mxu0
        %6742 = vmatprep.mubr.f32.mxu0 0.0
        %6743 = vmatmul.mubr.f32.gmra.mxu0 %v6623
        %v6744 = vpop.f32.mrf.mxu0
        %v6745 = vadd.f32 0.0, %v6744
        %v6746 = vpop.f32.mrf.mxu0
        %6747 = vmatprep.mubr.f32.mxu0 0.0
        %6748 = vmatmul.mubr.f32.gmra.mxu0 %v6626
        %v6749 = vpop.f32.mrf.mxu0
        %v6750 = vadd.f32 0.0, %v6749
        %v6751 = vpop.f32.mrf.mxu0
        %6752 = vmatprep.mubr.f32.mxu0 0.0
        %6753 = vmatmul.mubr.f32.gmra.mxu0 %v6629
        %v6754 = vpop.f32.mrf.mxu0
        %v6755 = vadd.f32 0.0, %v6754
        %v6756 = vpop.f32.mrf.mxu0
        %6757 = vmatprep.mubr.f32.mxu0 0.0
        %6758 = vmatmul.mubr.f32.gmra.mxu0 %v6632
        %v6759 = vpop.f32.mrf.mxu0
        %v6760 = vadd.f32 0.0, %v6759
        %v6761 = vpop.f32.mrf.mxu0
        %6762 = vmatprep.mubr.f32.mxu0 0.0
        %6763 = vmatmul.mubr.f32.gmra.mxu0 %v6635
        %v6764 = vpop.f32.mrf.mxu0
        %v6765 = vadd.f32 0.0, %v6764
        %v6766 = vpop.f32.mrf.mxu0
        %6767 = vmatprep.mubr.f32.mxu0 0.0
        %6768 = vmatmul.mubr.f32.gmra.mxu0 %v6638
        %v6769 = vpop.f32.mrf.mxu0
        %v6770 = vadd.f32 0.0, %v6769
        %v6771 = vpop.f32.mrf.mxu0
        %6772 = vmatprep.mubr.f32.mxu0 0.0
        %6773 = vmatmul.mubr.f32.gmra.mxu0 %v6641
        %v6774 = vpop.f32.mrf.mxu0
        %v6775 = vadd.f32 0.0, %v6774
        %v6776 = vpop.f32.mrf.mxu0
        %6777 = vmatprep.mubr.f32.mxu0 0.0
        %6778 = vmatmul.mubr.f32.gmra.mxu0 %v6644
        %v6779 = vpop.f32.mrf.mxu0
        %v6780 = vadd.f32 0.0, %v6779
        %v6781 = vpop.f32.mrf.mxu0
        %6782 = vmatprep.mubr.f32.mxu0 0.0
        %6783 = vmatmul.mubr.f32.gmra.mxu0 %v6647
        %v6784 = vpop.f32.mrf.mxu0
        %v6785 = vadd.f32 0.0, %v6784
        %v6786 = vpop.f32.mrf.mxu0
        %6787 = vmatprep.mubr.f32.mxu0 0.0
        %6788 = vmatmul.mubr.f32.gmra.mxu0 %v6650
        %v6789 = vpop.f32.mrf.mxu0
        %v6790 = vadd.f32 0.0, %v6789
        %v6791 = vpop.f32.mrf.mxu0
        %6792 = vmatprep.mubr.f32.mxu0 0.0
        %6793 = vmatmul.mubr.f32.gmra.mxu0 %v6653
        %v6794 = vpop.f32.mrf.mxu0
        %v6795 = vadd.f32 0.0, %v6794
        %v6796 = vpop.f32.mrf.mxu0
        %6797 = vmatprep.mubr.f32.mxu0 0.0
        %6798 = vmatmul.mubr.f32.gmra.mxu0 %v6656
        %v6799 = vpop.f32.mrf.mxu0
        %v6800 = vadd.f32 0.0, %v6799
        %v6801 = vpop.f32.mrf.mxu0
        %6802 = vdwg.mxu0
        %v6803 = vadd.f32 %v6572, %v6725
        %v6804 = vadd.f32 %v6573, %v6730
        %v6805 = vadd.f32 %v6574, %v6735
        %v6806 = vadd.f32 %v6575, %v6740
        %v6807 = vadd.f32 %v6576, %v6745
        %v6808 = vadd.f32 %v6577, %v6750
        %v6809 = vadd.f32 %v6578, %v6755
        %v6810 = vadd.f32 %v6579, %v6760
        %v6811 = vadd.f32 %v6580, %v6765
        %v6812 = vadd.f32 %v6581, %v6770
        %v6813 = vadd.f32 %v6582, %v6775
        %v6814 = vadd.f32 %v6583, %v6780
        %v6815 = vadd.f32 %v6584, %v6785
        %v6816 = vadd.f32 %v6585, %v6790
        %v6817 = vadd.f32 %v6586, %v6795
        %v6818 = vadd.f32 %v6587, %v6800
        %v6819 = vld [vmem:[%s6588 + $0x8] sm:$0xff]
        %v6820 = vld [vmem:[%s6588 + $0x20] sm:$0xff]
        %v6821 = vld [vmem:[%s6588 + $0x38] sm:$0xff]
        %v6822 = vld [vmem:[%s6588 + $0x50] sm:$0xff]
        %v6823 = vld [vmem:[%s6588 + $0x68] sm:$0xff]
        %v6824 = vld [vmem:[%s6588 + $0x80] sm:$0xff]
        %v6825 = vld [vmem:[%s6588 + $0x98] sm:$0xff]
        %v6826 = vld [vmem:[%s6588 + $0xb0] sm:$0xff]
        %v6827 = vld [vmem:[%s6588 + $0xf8] sm:$0xff]
        %v6828 = vld [vmem:[%s6588 + $0x110] sm:$0xff]
        %v6829 = vld [vmem:[%s6588 + $0x128] sm:$0xff]
        %v6830 = vld [vmem:[%s6588 + $0x140] sm:$0xff]
        %v6831 = vld [vmem:[%s6588 + $0x158] sm:$0xff]
        %v6832 = vld [vmem:[%s6588 + $0x170] sm:$0xff]
        %v6833 = vld [vmem:[%s6588 + $0x188] sm:$0xff]
        %v6834 = vld [vmem:[%s6588 + $0x1a0] sm:$0xff]
        %s6835 = scalar_lea.vmem %s3, 224
        %v6836 = vld [vmem:[%s6835] sm:$0xff]
        %v6837 = vld [vmem:[%s6835 + $0x8] sm:$0xff]
        %v6838 = vld [vmem:[%s6835 + $0x10] sm:$0xff]
        %v6839 = vld [vmem:[%s6835 + $0x18] sm:$0xff]
        %v6841 = vsel %vm5051, %v6819, 0
        %v6844 = vsel %vm5051, %v6820, 0
        %v6847 = vsel %vm5051, %v6821, 0
        %v6850 = vsel %vm5051, %v6822, 0
        %v6853 = vsel %vm5051, %v6823, 0
        %v6856 = vsel %vm5051, %v6824, 0
        %v6859 = vsel %vm5051, %v6825, 0
        %v6862 = vsel %vm5051, %v6826, 0
        %v6865 = vsel %vm5051, %v6827, 0
        %v6868 = vsel %vm5051, %v6828, 0
        %v6871 = vsel %vm5051, %v6829, 0
        %v6874 = vsel %vm5051, %v6830, 0
        %v6877 = vsel %vm5051, %v6831, 0
        %v6880 = vsel %vm5051, %v6832, 0
        %v6883 = vsel %vm5051, %v6833, 0
        %v6886 = vsel %vm5051, %v6834, 0
        %6888 = vmatprep.subr.mxu0 0.0
        %6889 = vmatpush1.msra.mxu0 0.0
        %6890 = vmatprep.subr.mxu0 0.0
        %6891 = vmatpush1.msra.mxu0 0.0
        %6892 = vmatprep.subr.mxu0 0.0
        %6893 = vmatpush1.msra.mxu0 0.0
        %6894 = vmatprep.subr.mxu0 0.0
        %6895 = vmatpush1.msra.mxu0 0.0
        %6896 = vmatprep.subr.mxu0 0.0
        %6897 = vmatpush1.msra.mxu0 0.0
        %6898 = vmatprep.subr.mxu0 0.0
        %6899 = vmatpush1.msra.mxu0 0.0
        %6900 = vmatprep.subr.mxu0 0.0
        %6901 = vmatpush1.msra.mxu0 0.0
        %6902 = vmatprep.subr.mxu0 0.0
        %6903 = vmatpush1.msra.mxu0 0.0
        %6904 = vmatprep.subr.mxu0 0.0
        %6905 = vmatpush1.msra.mxu0 0.0
        %6906 = vmatprep.subr.mxu0 0.0
        %6907 = vmatpush1.msra.mxu0 0.0
        %6908 = vmatprep.subr.mxu0 0.0
        %6909 = vmatpush1.msra.mxu0 0.0
        %6910 = vmatprep.subr.mxu0 0.0
        %6911 = vmatpush1.msra.mxu0 0.0
        %6912 = vmatprep.subr.mxu0 0.0
        %6913 = vmatpush1.msra.mxu0 %v6839
        %6914 = vmatprep.subr.mxu0 0.0
        %6915 = vmatpush1.msra.mxu0 %v6838
        %6916 = vmatprep.subr.mxu0 0.0
        %6917 = vmatpush1.msra.mxu0 %v6837
        %6918 = vmatprep.subr.mxu0 0.0
        %6919 = vmatpush1.msra.mxu0 %v6836
        %6920 = vmatprep.subr.mxu0 0.0
        %6921 = vmatpush2.msra.mxu0 0.0
        %6922 = vmatprep.subr.mxu0 0.0
        %6923 = vmatpush2.msra.mxu0 0.0
        %6924 = vmatprep.subr.mxu0 0.0
        %6925 = vmatpush2.msra.mxu0 0.0
        %6926 = vmatprep.subr.mxu0 0.0
        %6927 = vmatpush2.msra.mxu0 0.0
        %6928 = vmatprep.subr.mxu0 0.0
        %6929 = vmatpush2.msra.mxu0 0.0
        %6930 = vmatprep.subr.mxu0 0.0
        %6931 = vmatpush2.msra.mxu0 0.0
        %6932 = vmatprep.subr.mxu0 0.0
        %6933 = vmatpush2.msra.mxu0 0.0
        %6934 = vmatprep.subr.mxu0 0.0
        %6935 = vmatpush2.msra.mxu0 0.0
        %6936 = vmatprep.subr.mxu0 0.0
        %6937 = vmatpush2.msra.mxu0 0.0
        %6938 = vmatprep.subr.mxu0 0.0
        %6939 = vmatpush2.msra.mxu0 0.0
        %6940 = vmatprep.subr.mxu0 0.0
        %6941 = vmatpush2.msra.mxu0 0.0
        %6942 = vmatprep.subr.mxu0 0.0
        %6943 = vmatpush2.msra.mxu0 0.0
        %6944 = vmatprep.subr.mxu0 0.0
        %6945 = vmatpush2.msra.mxu0 0.0
        %6946 = vmatprep.subr.mxu0 0.0
        %6947 = vmatpush2.msra.mxu0 0.0
        %6948 = vmatprep.subr.mxu0 0.0
        %6949 = vmatpush2.msra.mxu0 0.0
        %6950 = vmatprep.subr.mxu0 0.0
        %6951 = vmatpush2.msra.mxu0 0.0
        %6952 = vmatprep.mubr.f32.mxu0 0.0
        %6953 = vmatmul.mubr.f32.gmra.mxu0 %v6841
        %v6954 = vpop.f32.mrf.mxu0
        %v6955 = vadd.f32 0.0, %v6954
        %v6956 = vpop.f32.mrf.mxu0
        %6957 = vmatprep.mubr.f32.mxu0 0.0
        %6958 = vmatmul.mubr.f32.gmra.mxu0 %v6844
        %v6959 = vpop.f32.mrf.mxu0
        %v6960 = vadd.f32 0.0, %v6959
        %v6961 = vpop.f32.mrf.mxu0
        %6962 = vmatprep.mubr.f32.mxu0 0.0
        %6963 = vmatmul.mubr.f32.gmra.mxu0 %v6847
        %v6964 = vpop.f32.mrf.mxu0
        %v6965 = vadd.f32 0.0, %v6964
        %v6966 = vpop.f32.mrf.mxu0
        %6967 = vmatprep.mubr.f32.mxu0 0.0
        %6968 = vmatmul.mubr.f32.gmra.mxu0 %v6850
        %v6969 = vpop.f32.mrf.mxu0
        %v6970 = vadd.f32 0.0, %v6969
        %v6971 = vpop.f32.mrf.mxu0
        %6972 = vmatprep.mubr.f32.mxu0 0.0
        %6973 = vmatmul.mubr.f32.gmra.mxu0 %v6853
        %v6974 = vpop.f32.mrf.mxu0
        %v6975 = vadd.f32 0.0, %v6974
        %v6976 = vpop.f32.mrf.mxu0
        %6977 = vmatprep.mubr.f32.mxu0 0.0
        %6978 = vmatmul.mubr.f32.gmra.mxu0 %v6856
        %v6979 = vpop.f32.mrf.mxu0
        %v6980 = vadd.f32 0.0, %v6979
        %v6981 = vpop.f32.mrf.mxu0
        %6982 = vmatprep.mubr.f32.mxu0 0.0
        %6983 = vmatmul.mubr.f32.gmra.mxu0 %v6859
        %v6984 = vpop.f32.mrf.mxu0
        %v6985 = vadd.f32 0.0, %v6984
        %v6986 = vpop.f32.mrf.mxu0
        %6987 = vmatprep.mubr.f32.mxu0 0.0
        %6988 = vmatmul.mubr.f32.gmra.mxu0 %v6862
        %v6989 = vpop.f32.mrf.mxu0
        %v6990 = vadd.f32 0.0, %v6989
        %v6991 = vpop.f32.mrf.mxu0
        %6992 = vmatprep.mubr.f32.mxu0 0.0
        %6993 = vmatmul.mubr.f32.gmra.mxu0 %v6865
        %v6994 = vpop.f32.mrf.mxu0
        %v6995 = vadd.f32 0.0, %v6994
        %v6996 = vpop.f32.mrf.mxu0
        %6997 = vmatprep.mubr.f32.mxu0 0.0
        %6998 = vmatmul.mubr.f32.gmra.mxu0 %v6868
        %v6999 = vpop.f32.mrf.mxu0
        %v7000 = vadd.f32 0.0, %v6999
        %v7001 = vpop.f32.mrf.mxu0
        %7002 = vmatprep.mubr.f32.mxu0 0.0
        %7003 = vmatmul.mubr.f32.gmra.mxu0 %v6871
        %v7004 = vpop.f32.mrf.mxu0
        %v7005 = vadd.f32 0.0, %v7004
        %v7006 = vpop.f32.mrf.mxu0
        %7007 = vmatprep.mubr.f32.mxu0 0.0
        %7008 = vmatmul.mubr.f32.gmra.mxu0 %v6874
        %v7009 = vpop.f32.mrf.mxu0
        %v7010 = vadd.f32 0.0, %v7009
        %v7011 = vpop.f32.mrf.mxu0
        %7012 = vmatprep.mubr.f32.mxu0 0.0
        %7013 = vmatmul.mubr.f32.gmra.mxu0 %v6877
        %v7014 = vpop.f32.mrf.mxu0
        %v7015 = vadd.f32 0.0, %v7014
        %v7016 = vpop.f32.mrf.mxu0
        %7017 = vmatprep.mubr.f32.mxu0 0.0
        %7018 = vmatmul.mubr.f32.gmra.mxu0 %v6880
        %v7019 = vpop.f32.mrf.mxu0
        %v7020 = vadd.f32 0.0, %v7019
        %v7021 = vpop.f32.mrf.mxu0
        %7022 = vmatprep.mubr.f32.mxu0 0.0
        %7023 = vmatmul.mubr.f32.gmra.mxu0 %v6883
        %v7024 = vpop.f32.mrf.mxu0
        %v7025 = vadd.f32 0.0, %v7024
        %v7026 = vpop.f32.mrf.mxu0
        %7027 = vmatprep.mubr.f32.mxu0 0.0
        %7028 = vmatmul.mubr.f32.gmra.mxu0 %v6886
        %v7029 = vpop.f32.mrf.mxu0
        %v7030 = vadd.f32 0.0, %v7029
        %v7031 = vpop.f32.mrf.mxu0
        %7032 = vdwg.mxu0
        %v7033 = vadd.f32 %v6803, %v6955
        %v7034 = vadd.f32 %v6804, %v6960
        %v7035 = vadd.f32 %v6805, %v6965
        %v7036 = vadd.f32 %v6806, %v6970
        %v7037 = vadd.f32 %v6807, %v6975
        %v7038 = vadd.f32 %v6808, %v6980
        %v7039 = vadd.f32 %v6809, %v6985
        %v7040 = vadd.f32 %v6810, %v6990
        %v7041 = vadd.f32 %v6811, %v6995
        %v7042 = vadd.f32 %v6812, %v7000
        %v7043 = vadd.f32 %v6813, %v7005
        %v7044 = vadd.f32 %v6814, %v7010
        %v7045 = vadd.f32 %v6815, %v7015
        %v7046 = vadd.f32 %v6816, %v7020
        %v7047 = vadd.f32 %v6817, %v7025
        %v7048 = vadd.f32 %v6818, %v7030
        %v7049 = vld [vmem:[%s6588 + $0x9] sm:$0xff]
        %v7050 = vld [vmem:[%s6588 + $0x21] sm:$0xff]
        %v7051 = vld [vmem:[%s6588 + $0x39] sm:$0xff]
        %v7052 = vld [vmem:[%s6588 + $0x51] sm:$0xff]
        %v7053 = vld [vmem:[%s6588 + $0x69] sm:$0xff]
        %v7054 = vld [vmem:[%s6588 + $0x81] sm:$0xff]
        %v7055 = vld [vmem:[%s6588 + $0x99] sm:$0xff]
        %v7056 = vld [vmem:[%s6588 + $0xb1] sm:$0xff]
        %v7057 = vld [vmem:[%s6588 + $0xf9] sm:$0xff]
        %v7058 = vld [vmem:[%s6588 + $0x111] sm:$0xff]
        %v7059 = vld [vmem:[%s6588 + $0x129] sm:$0xff]
        %v7060 = vld [vmem:[%s6588 + $0x141] sm:$0xff]
        %v7061 = vld [vmem:[%s6588 + $0x159] sm:$0xff]
        %v7062 = vld [vmem:[%s6588 + $0x171] sm:$0xff]
        %v7063 = vld [vmem:[%s6588 + $0x189] sm:$0xff]
        %v7064 = vld [vmem:[%s6588 + $0x1a1] sm:$0xff]
        %s7065 = scalar_lea.vmem %s3, 256
        %v7066 = vld [vmem:[%s7065] sm:$0xff]
        %v7067 = vld [vmem:[%s7065 + $0x8] sm:$0xff]
        %v7068 = vld [vmem:[%s7065 + $0x10] sm:$0xff]
        %v7069 = vld [vmem:[%s7065 + $0x18] sm:$0xff]
        %v7071 = vsel %vm5051, %v7049, 0
        %v7074 = vsel %vm5051, %v7050, 0
        %v7077 = vsel %vm5051, %v7051, 0
        %v7080 = vsel %vm5051, %v7052, 0
        %v7083 = vsel %vm5051, %v7053, 0
        %v7086 = vsel %vm5051, %v7054, 0
        %v7089 = vsel %vm5051, %v7055, 0
        %v7092 = vsel %vm5051, %v7056, 0
        %v7095 = vsel %vm5051, %v7057, 0
        %v7098 = vsel %vm5051, %v7058, 0
        %v7101 = vsel %vm5051, %v7059, 0
        %v7104 = vsel %vm5051, %v7060, 0
        %v7107 = vsel %vm5051, %v7061, 0
        %v7110 = vsel %vm5051, %v7062, 0
        %v7113 = vsel %vm5051, %v7063, 0
        %v7116 = vsel %vm5051, %v7064, 0
        %7118 = vmatprep.subr.mxu0 0.0
        %7119 = vmatpush1.msra.mxu0 0.0
        %7120 = vmatprep.subr.mxu0 0.0
        %7121 = vmatpush1.msra.mxu0 0.0
        %7122 = vmatprep.subr.mxu0 0.0
        %7123 = vmatpush1.msra.mxu0 0.0
        %7124 = vmatprep.subr.mxu0 0.0
        %7125 = vmatpush1.msra.mxu0 0.0
        %7126 = vmatprep.subr.mxu0 0.0
        %7127 = vmatpush1.msra.mxu0 0.0
        %7128 = vmatprep.subr.mxu0 0.0
        %7129 = vmatpush1.msra.mxu0 0.0
        %7130 = vmatprep.subr.mxu0 0.0
        %7131 = vmatpush1.msra.mxu0 0.0
        %7132 = vmatprep.subr.mxu0 0.0
        %7133 = vmatpush1.msra.mxu0 0.0
        %7134 = vmatprep.subr.mxu0 0.0
        %7135 = vmatpush1.msra.mxu0 0.0
        %7136 = vmatprep.subr.mxu0 0.0
        %7137 = vmatpush1.msra.mxu0 0.0
        %7138 = vmatprep.subr.mxu0 0.0
        %7139 = vmatpush1.msra.mxu0 0.0
        %7140 = vmatprep.subr.mxu0 0.0
        %7141 = vmatpush1.msra.mxu0 0.0
        %7142 = vmatprep.subr.mxu0 0.0
        %7143 = vmatpush1.msra.mxu0 %v7069
        %7144 = vmatprep.subr.mxu0 0.0
        %7145 = vmatpush1.msra.mxu0 %v7068
        %7146 = vmatprep.subr.mxu0 0.0
        %7147 = vmatpush1.msra.mxu0 %v7067
        %7148 = vmatprep.subr.mxu0 0.0
        %7149 = vmatpush1.msra.mxu0 %v7066
        %7150 = vmatprep.subr.mxu0 0.0
        %7151 = vmatpush2.msra.mxu0 0.0
        %7152 = vmatprep.subr.mxu0 0.0
        %7153 = vmatpush2.msra.mxu0 0.0
        %7154 = vmatprep.subr.mxu0 0.0
        %7155 = vmatpush2.msra.mxu0 0.0
        %7156 = vmatprep.subr.mxu0 0.0
        %7157 = vmatpush2.msra.mxu0 0.0
        %7158 = vmatprep.subr.mxu0 0.0
        %7159 = vmatpush2.msra.mxu0 0.0
        %7160 = vmatprep.subr.mxu0 0.0
        %7161 = vmatpush2.msra.mxu0 0.0
        %7162 = vmatprep.subr.mxu0 0.0
        %7163 = vmatpush2.msra.mxu0 0.0
        %7164 = vmatprep.subr.mxu0 0.0
        %7165 = vmatpush2.msra.mxu0 0.0
        %7166 = vmatprep.subr.mxu0 0.0
        %7167 = vmatpush2.msra.mxu0 0.0
        %7168 = vmatprep.subr.mxu0 0.0
        %7169 = vmatpush2.msra.mxu0 0.0
        %7170 = vmatprep.subr.mxu0 0.0
        %7171 = vmatpush2.msra.mxu0 0.0
        %7172 = vmatprep.subr.mxu0 0.0
        %7173 = vmatpush2.msra.mxu0 0.0
        %7174 = vmatprep.subr.mxu0 0.0
        %7175 = vmatpush2.msra.mxu0 0.0
        %7176 = vmatprep.subr.mxu0 0.0
        %7177 = vmatpush2.msra.mxu0 0.0
        %7178 = vmatprep.subr.mxu0 0.0
        %7179 = vmatpush2.msra.mxu0 0.0
        %7180 = vmatprep.subr.mxu0 0.0
        %7181 = vmatpush2.msra.mxu0 0.0
        %7182 = vmatprep.mubr.f32.mxu0 0.0
        %7183 = vmatmul.mubr.f32.gmra.mxu0 %v7071
        %v7184 = vpop.f32.mrf.mxu0
        %v7185 = vadd.f32 0.0, %v7184
        %v7186 = vpop.f32.mrf.mxu0
        %7187 = vmatprep.mubr.f32.mxu0 0.0
        %7188 = vmatmul.mubr.f32.gmra.mxu0 %v7074
        %v7189 = vpop.f32.mrf.mxu0
        %v7190 = vadd.f32 0.0, %v7189
        %v7191 = vpop.f32.mrf.mxu0
        %7192 = vmatprep.mubr.f32.mxu0 0.0
        %7193 = vmatmul.mubr.f32.gmra.mxu0 %v7077
        %v7194 = vpop.f32.mrf.mxu0
        %v7195 = vadd.f32 0.0, %v7194
        %v7196 = vpop.f32.mrf.mxu0
        %7197 = vmatprep.mubr.f32.mxu0 0.0
        %7198 = vmatmul.mubr.f32.gmra.mxu0 %v7080
        %v7199 = vpop.f32.mrf.mxu0
        %v7200 = vadd.f32 0.0, %v7199
        %v7201 = vpop.f32.mrf.mxu0
        %7202 = vmatprep.mubr.f32.mxu0 0.0
        %7203 = vmatmul.mubr.f32.gmra.mxu0 %v7083
        %v7204 = vpop.f32.mrf.mxu0
        %v7205 = vadd.f32 0.0, %v7204
        %v7206 = vpop.f32.mrf.mxu0
        %7207 = vmatprep.mubr.f32.mxu0 0.0
        %7208 = vmatmul.mubr.f32.gmra.mxu0 %v7086
        %v7209 = vpop.f32.mrf.mxu0
        %v7210 = vadd.f32 0.0, %v7209
        %v7211 = vpop.f32.mrf.mxu0
        %7212 = vmatprep.mubr.f32.mxu0 0.0
        %7213 = vmatmul.mubr.f32.gmra.mxu0 %v7089
        %v7214 = vpop.f32.mrf.mxu0
        %v7215 = vadd.f32 0.0, %v7214
        %v7216 = vpop.f32.mrf.mxu0
        %7217 = vmatprep.mubr.f32.mxu0 0.0
        %7218 = vmatmul.mubr.f32.gmra.mxu0 %v7092
        %v7219 = vpop.f32.mrf.mxu0
        %v7220 = vadd.f32 0.0, %v7219
        %v7221 = vpop.f32.mrf.mxu0
        %7222 = vmatprep.mubr.f32.mxu0 0.0
        %7223 = vmatmul.mubr.f32.gmra.mxu0 %v7095
        %v7224 = vpop.f32.mrf.mxu0
        %v7225 = vadd.f32 0.0, %v7224
        %v7226 = vpop.f32.mrf.mxu0
        %7227 = vmatprep.mubr.f32.mxu0 0.0
        %7228 = vmatmul.mubr.f32.gmra.mxu0 %v7098
        %v7229 = vpop.f32.mrf.mxu0
        %v7230 = vadd.f32 0.0, %v7229
        %v7231 = vpop.f32.mrf.mxu0
        %7232 = vmatprep.mubr.f32.mxu0 0.0
        %7233 = vmatmul.mubr.f32.gmra.mxu0 %v7101
        %v7234 = vpop.f32.mrf.mxu0
        %v7235 = vadd.f32 0.0, %v7234
        %v7236 = vpop.f32.mrf.mxu0
        %7237 = vmatprep.mubr.f32.mxu0 0.0
        %7238 = vmatmul.mubr.f32.gmra.mxu0 %v7104
        %v7239 = vpop.f32.mrf.mxu0
        %v7240 = vadd.f32 0.0, %v7239
        %v7241 = vpop.f32.mrf.mxu0
        %7242 = vmatprep.mubr.f32.mxu0 0.0
        %7243 = vmatmul.mubr.f32.gmra.mxu0 %v7107
        %v7244 = vpop.f32.mrf.mxu0
        %v7245 = vadd.f32 0.0, %v7244
        %v7246 = vpop.f32.mrf.mxu0
        %7247 = vmatprep.mubr.f32.mxu0 0.0
        %7248 = vmatmul.mubr.f32.gmra.mxu0 %v7110
        %v7249 = vpop.f32.mrf.mxu0
        %v7250 = vadd.f32 0.0, %v7249
        %v7251 = vpop.f32.mrf.mxu0
        %7252 = vmatprep.mubr.f32.mxu0 0.0
        %7253 = vmatmul.mubr.f32.gmra.mxu0 %v7113
        %v7254 = vpop.f32.mrf.mxu0
        %v7255 = vadd.f32 0.0, %v7254
        %v7256 = vpop.f32.mrf.mxu0
        %7257 = vmatprep.mubr.f32.mxu0 0.0
        %7258 = vmatmul.mubr.f32.gmra.mxu0 %v7116
        %v7259 = vpop.f32.mrf.mxu0
        %v7260 = vadd.f32 0.0, %v7259
        %v7261 = vpop.f32.mrf.mxu0
        %7262 = vdwg.mxu0
        %v7263 = vadd.f32 %v7033, %v7185
        %v7264 = vadd.f32 %v7034, %v7190
        %v7265 = vadd.f32 %v7035, %v7195
        %v7266 = vadd.f32 %v7036, %v7200
        %v7267 = vadd.f32 %v7037, %v7205
        %v7268 = vadd.f32 %v7038, %v7210
        %v7269 = vadd.f32 %v7039, %v7215
        %v7270 = vadd.f32 %v7040, %v7220
        %v7271 = vadd.f32 %v7041, %v7225
        %v7272 = vadd.f32 %v7042, %v7230
        %v7273 = vadd.f32 %v7043, %v7235
        %v7274 = vadd.f32 %v7044, %v7240
        %v7275 = vadd.f32 %v7045, %v7245
        %v7276 = vadd.f32 %v7046, %v7250
        %v7277 = vadd.f32 %v7047, %v7255
        %v7278 = vadd.f32 %v7048, %v7260
        %v7279 = vld [vmem:[%s4] sm:$0x1]
        %v7281 = vlaneseq
        %v7282 = vshrl.u32 %v7281, 7
        %v7283 = vsub.s32 0, %v7282
        %v7284 = vrot.slane %v7279, %v7283
        %v7286 = vadd.f32 %v7263, %v7284
        %v7287 = vadd.f32 %v7264, %v7284
        %v7288 = vadd.f32 %v7265, %v7284
        %v7289 = vadd.f32 %v7266, %v7284
        %v7290 = vadd.f32 %v7267, %v7284
        %v7291 = vadd.f32 %v7268, %v7284
        %v7292 = vadd.f32 %v7269, %v7284
        %v7293 = vadd.f32 %v7270, %v7284
        %v7294 = vadd.f32 %v7271, %v7284
        %v7295 = vadd.f32 %v7272, %v7284
        %v7296 = vadd.f32 %v7273, %v7284
        %v7297 = vadd.f32 %v7274, %v7284
        %v7298 = vadd.f32 %v7275, %v7284
        %v7299 = vadd.f32 %v7276, %v7284
        %v7300 = vadd.f32 %v7277, %v7284
        %v7301 = vadd.f32 %v7278, %v7284
        %v7302 = vmax.f32 %v7286, 0.0
        %v7303 = vmax.f32 %v7287, 0.0
        %v7304 = vmax.f32 %v7288, 0.0
        %v7305 = vmax.f32 %v7289, 0.0
        %v7306 = vmax.f32 %v7290, 0.0
        %v7307 = vmax.f32 %v7291, 0.0
        %v7308 = vmax.f32 %v7292, 0.0
        %v7309 = vmax.f32 %v7293, 0.0
        %v7310 = vmax.f32 %v7294, 0.0
        %v7311 = vmax.f32 %v7295, 0.0
        %v7312 = vmax.f32 %v7296, 0.0
        %v7313 = vmax.f32 %v7297, 0.0
        %v7314 = vmax.f32 %v7298, 0.0
        %v7315 = vmax.f32 %v7299, 0.0
        %v7316 = vmax.f32 %v7300, 0.0
        %v7317 = vmax.f32 %v7301, 0.0
        %v7318 = vmax.f32 %v7302, %v7303
        %v7319 = vmax.f32 %v7304, %v7305
        %v7320 = vmax.f32 %v7306, %v7307
        %v7321 = vmax.f32 %v7308, %v7309
        %v7322 = vmax.f32 %v7310, %v7311
        %v7323 = vmax.f32 %v7312, %v7313
        %v7324 = vmax.f32 %v7314, %v7315
        %v7325 = vmax.f32 %v7316, %v7317
        %vm7326 = vcmask 523264
        %7327 = vst.msk [vmem:[#allocation4] sm:$0xff] %vm7326, %v7318
        %7328 = vst.msk [vmem:[#allocation4 + $0x8] sm:$0xff] %vm7326, %v7319
        %7329 = vst.msk [vmem:[#allocation4 + $0x10] sm:$0xff] %vm7326, %v7320
        %7330 = vst.msk [vmem:[#allocation4 + $0x18] sm:$0xff] %vm7326, %v7321
        %7331 = vst.msk [vmem:[#allocation4 + $0x20] sm:$0xff] %vm7326, %v7322
        %7332 = vst.msk [vmem:[#allocation4 + $0x28] sm:$0xff] %vm7326, %v7323
        %7333 = vst.msk [vmem:[#allocation4 + $0x30] sm:$0xff] %vm7326, %v7324
        %7334 = vst.msk [vmem:[#allocation4 + $0x38] sm:$0xff] %vm7326, %v7325
        %v7335 = vld [vmem:[#allocation4] ss:$2 sm:$0xf]
        %s7336 = scalar_lea.vmem [#allocation4], 8
        %v7337 = vld [vmem:[%s7336] ss:$2 sm:$0xf]
        %s7338 = scalar_lea.vmem [#allocation4], 16
        %v7339 = vld [vmem:[%s7338] ss:$2 sm:$0xf]
        %s7340 = scalar_lea.vmem [#allocation4], 24
        %v7341 = vld [vmem:[%s7340] ss:$2 sm:$0xf]
        %s7342 = scalar_lea.vmem [#allocation4], 32
        %v7343 = vld [vmem:[%s7342] ss:$2 sm:$0xf]
        %s7344 = scalar_lea.vmem [#allocation4], 40
        %v7345 = vld [vmem:[%s7344] ss:$2 sm:$0xf]
        %s7346 = scalar_lea.vmem [#allocation4], 48
        %v7347 = vld [vmem:[%s7346] ss:$2 sm:$0xf]
        %s7348 = scalar_lea.vmem [#allocation4], 56
        %v7349 = vld [vmem:[%s7348] ss:$2 sm:$0xf]
        %s7350 = scalar_lea.vmem [#allocation4], 1
        %v7351 = vld [vmem:[%s7350] ss:$2 sm:$0xf]
        %s7352 = scalar_lea.vmem [#allocation4], 9
        %v7353 = vld [vmem:[%s7352] ss:$2 sm:$0xf]
        %s7354 = scalar_lea.vmem [#allocation4], 17
        %v7355 = vld [vmem:[%s7354] ss:$2 sm:$0xf]
        %s7356 = scalar_lea.vmem [#allocation4], 25
        %v7357 = vld [vmem:[%s7356] ss:$2 sm:$0xf]
        %s7358 = scalar_lea.vmem [#allocation4], 33
        %v7359 = vld [vmem:[%s7358] ss:$2 sm:$0xf]
        %s7360 = scalar_lea.vmem [#allocation4], 41
        %v7361 = vld [vmem:[%s7360] ss:$2 sm:$0xf]
        %s7362 = scalar_lea.vmem [#allocation4], 49
        %v7363 = vld [vmem:[%s7362] ss:$2 sm:$0xf]
        %s7364 = scalar_lea.vmem [#allocation4], 57
        %v7365 = vld [vmem:[%s7364] ss:$2 sm:$0xf]
        %v7366 = vmax.f32 %v7335, %v7351
        %v7367 = vmax.f32 %v7337, %v7353
        %v7368 = vmax.f32 %v7339, %v7355
        %v7369 = vmax.f32 %v7341, %v7357
        %v7370 = vmax.f32 %v7343, %v7359
        %v7371 = vmax.f32 %v7345, %v7361
        %v7372 = vmax.f32 %v7347, %v7363
        %v7373 = vmax.f32 %v7349, %v7365
        %vm7374 = vcmask 519168
        %7375 = vst.msk [vmem:[%s220] sm:$0xf] %vm7374, %v7366
        %7376 = vst.msk [vmem:[%s220 + $0x4] sm:$0xf] %vm7374, %v7367
        %7377 = vst.msk [vmem:[%s220 + $0x8] sm:$0xf] %vm7374, %v7368
        %7378 = vst.msk [vmem:[%s220 + $0xc] sm:$0xf] %vm7374, %v7369
        %7379 = vst.msk [vmem:[%s220 + $0x10] sm:$0xf] %vm7374, %v7370
        %7380 = vst.msk [vmem:[%s220 + $0x14] sm:$0xf] %vm7374, %v7371
        %7381 = vst.msk [vmem:[%s220 + $0x18] sm:$0xf] %vm7374, %v7372
        %7382 = vst.msk [vmem:[%s220 + $0x1c] sm:$0xf] %vm7374, %v7373
        %s7383 = sand.u32 %s137, 1
        %s7384 = scalar_lea.sflag [#allocation6], %s7383
        %s7385 = sand.u32 %s137, 1
        %s7386 = smul.addr %s7385, 32
        %s7387 = scalar_lea.vmem [#allocation5], %s7386
        // Predicated region
        $region41: #{tpu_custom_call.1} parent=39 // pred_check
          %p7388 = pneg %p147
        $region42: #{tpu_custom_call.1} parent=39 // pred_check_branch
          %7390 = sbr.rel (%p7388) target = $region44
        $region43: #{tpu_custom_call.1} parent=39 // pred_region
          %s7391 = smul.u32 2, %s19
          %s7393 = ssub.s32 512, 512
          %7394 = vsyncadd %s7384, %s7393
          %s7395 = smul.addr %s7391, 4
          %s7396 = smul.addr %s7395, 64
          %s7397 = scalar_lea.hbm %s5, %s7396
          %s7398 = sshll.u32 %s7387, 4
          %s7399 = int_to_ptr.vmem [resolvable:$true] %s7398
          %7404 = dma.vmem_to_hbm [thread:$0]  %s7399, 512, %s7397, %s7384, 64, 64, 4
        $region44: #{tpu_custom_call.1} parent=39 // pred_fallthru
          _
      $region40: #{tpu_custom_call.1} parent=5 // pred_fallthru
        _
      %p7405 = scmp.le.s32.totalorder 2, %s14
      // Predicated region
      $region45: #{tpu_custom_call.1} parent=5 // pred_check
        %p7406 = pneg %p7405
      $region46: #{tpu_custom_call.1} parent=5 // pred_check_branch
        %7408 = sbr.rel (%p7406) target = $region48
      $region47: #{tpu_custom_call.1} parent=5 // pred_region
        %s7409 = ssub.s32 %s14, 2
        // Predicated region
        $region49: #{tpu_custom_call.1} parent=47 // pred_check
          %p7410 = pneg %p153
        $region50: #{tpu_custom_call.1} parent=47 // pred_check_branch
          %7412 = sbr.rel (%p7410) target = $region52
        $region51: #{tpu_custom_call.1} parent=47 // pred_region
          %s7413 = sand.u32 %s138, 1
          %s7414 = scalar_lea.sflag [#allocation6], %s7413
          %s7415 = sand.u32 %s138, 1
          %s7416 = smul.addr %s7415, 32
          %s7417 = scalar_lea.vmem [#allocation5], %s7416
          %7418 = dma.done %s7414, 512
        $region52: #{tpu_custom_call.1} parent=47 // pred_fallthru
          _
      $region48: #{tpu_custom_call.1} parent=5 // pred_fallthru
        _
    $region6: #{tpu_custom_call.1} parent=1 // loop_footer
      %s18 = sadd.s32 1, %s14
    $region7: #{tpu_custom_call.1} parent=1 // loop_footer_branch
      %13 = sbr.rel target = $region3
    $region8: #{tpu_custom_call.1} parent=1 // loop_exit
      _
    %7419 = vsyncpa [#allocation6], 1
    %s7420 = scalar_lea.sflag [#allocation6], 1
    %7421 = vsyncpa %s7420, 1

</llo_original>
